<compile_context>
chip_gen: v6e
topology: v6e:2x2x1
jax: 0.10.0
libtpu: 0.0.40
codegen_flags: <defaults>
</compile_context>

<pallas_src>
import functools
import numpy as np
import jax
import jax.numpy as jnp
from jax.experimental import pallas as pl
from jax.experimental.pallas import tpu as pltpu


def _round8(c):
    return ((c + 7) // 8) * 8


# --------------------------------------------------------------------------- #
# Kernel 1: fused (input BN + ReLU) -> tap-product GEMM
#   x_ref : (tm, tk)  raw (pre-BN) activation tile of the previous layer, f32
#   b_ref : (tk, 16*Cp) weight taps, tap-major columns, compute dtype
#   a_ref/s_ref : (1, tk) folded BN scale/shift of the *input* channels
#   o_ref : (tm, 16*Cp) f32 accumulator (revisited across the K grid axis)
# --------------------------------------------------------------------------- #
def _tap_gemm_kernel(x_ref, b_ref, a_ref, s_ref, o_ref, *, fold_input,
                     compute_dtype):
    @pl.when(pl.program_id(1) == 0)
    def _init():
        o_ref[...] = jnp.zeros_like(o_ref)

    x = x_ref[...].astype(jnp.float32)
    if fold_input:
        # BatchNorm (normalize, affine) + ReLU of the previous layer, in f32.
        x = jnp.maximum(x * a_ref[...] + s_ref[...], 0.0)
    o_ref[...] += jnp.dot(x.astype(compute_dtype), b_ref[...],
                          preferred_element_type=jnp.float32)


def tap_gemm(x2d, b_mat, scale, shift, *, fold_input, compute_dtype,
             tm=512, tk=512):
    """relu(x*scale+shift) @ b_mat  (or plain x @ b_mat), f32 accumulation."""
    M, Cin = x2d.shape
    ncols = b_mat.shape[1]
    Mp = _round8(M)
    if Mp != M:                       # only ever triggers for the tiny blk1 GEMM
        x2d = jnp.pad(x2d, ((0, Mp - M), (0, 0)))
    tm = min(tm, Mp)
    tk = Cin if Cin <= tk else tk
    assert Cin % tk == 0, (Cin, tk)
    grid = (pl.cdiv(Mp, tm), Cin // tk)
    out = pl.pallas_call(
        functools.partial(_tap_gemm_kernel, fold_input=fold_input,
                          compute_dtype=compute_dtype),
        out_shape=jax.ShapeDtypeStruct((Mp, ncols), jnp.float32),
        grid=grid,
        in_specs=[
            pl.BlockSpec((tm, tk), lambda i, k: (i, k)),
            pl.BlockSpec((tk, ncols), lambda i, k: (k, 0)),
            pl.BlockSpec((1, tk), lambda i, k: (0, k)),
            pl.BlockSpec((1, tk), lambda i, k: (0, k)),
        ],
        out_specs=pl.BlockSpec((tm, ncols), lambda i, k: (i, 0)),
        compiler_params=pltpu.CompilerParams(
            dimension_semantics=("parallel", "arbitrary")),
    )(x2d, b_mat, scale, shift)
    return out[:M] if Mp != M else out


# --------------------------------------------------------------------------- #
# Kernel 2: BatchNorm batch statistics (sum, sum of squares), tiled accumulator.
# Input is a lane-dense (N*OH, OW*C) view of the raw activation.
# --------------------------------------------------------------------------- #
def _bn_stats_kernel(x_ref, o_ref):
    @pl.when(pl.program_id(0) == 0)
    def _init():
        o_ref[...] = jnp.zeros_like(o_ref)

    x = x_ref[...]
    o_ref[0:1, :] += jnp.sum(x, axis=0, keepdims=True)
    o_ref[1:2, :] += jnp.sum(x * x, axis=0, keepdims=True)


def _stats_tile(m, cap=1024):
    if m <= cap:
        return m
    for t in range(cap, 7, -1):
        if m % t == 0 and t % 8 == 0:
            return t
    return m


def bn_batch_stats(x_nhwc):
    """Per-channel (mean, biased var) of an (N, H, W, C) activation."""
    N, H, W, C = x_nhwc.shape
    x2d = x_nhwc.reshape(N * H, W * C)          # lane-dense view (free reshape)
    M2, L = x2d.shape
    tm = _stats_tile(M2)
    part = pl.pallas_call(
        _bn_stats_kernel,
        out_shape=jax.ShapeDtypeStruct((2, L), jnp.float32),
        grid=(M2 // tm,),
        in_specs=[pl.BlockSpec((tm, L), lambda i: (i, 0))],
        out_specs=pl.BlockSpec((2, L), lambda i: (0, 0)),
        compiler_params=pltpu.CompilerParams(
            dimension_semantics=("arbitrary",)),
    )(x2d)
    sums = part.reshape(2, W, C).sum(axis=1)     # tiny (2, C) finish in glue
    cnt = float(N * H * W)
    mean = sums[0] / cnt
    var = sums[1] / cnt - mean * mean            # biased, matches BN training
    return mean, var


# --------------------------------------------------------------------------- #
# ConvTranspose2d helpers (K=4): weight packing + stride-2 phase recombination
# --------------------------------------------------------------------------- #
def _pack_taps(w, cp, dtype):
    """w: (Cin, Cout, 4, 4) PyTorch ConvTranspose2d layout ->
       (Cin, 16*cp) with columns ordered (kh, kw, cout), cout zero-padded."""
    cin, cout = w.shape[0], w.shape[1]
    wt = jnp.transpose(w, (0, 2, 3, 1))                 # (Cin, 4, 4, Cout)
    if cp > cout:
        wt = jnp.pad(wt, ((0, 0), (0, 0), (0, 0), (0, cp - cout)))
    return wt.reshape(cin, 16 * cp).astype(dtype)


def _recombine_stride2(T, N, H, W, cp, cout):
    """Overlap-add of the 16 tap planes for stride=2, padding=1, K=4.
    out[n, 2i-1+kh, 2j-1+kw, c] += T[n, i, j, kh, kw, c]  (in-range only)."""
    T6 = T.reshape(N, H, W, 4, 4, cp)
    out = jnp.zeros((N, H, 2, W, 2, cp), jnp.float32)
    for kh in range(4):
        py = (kh + 1) % 2
        sy = (kh - 1 - py) // 2              # output row r = i + sy
        r0, r1 = max(0, sy), min(H, H + sy)
        for kw in range(4):
            px = (kw + 1) % 2
            sx = (kw - 1 - px) // 2
            c0, c1 = max(0, sx), min(W, W + sx)
            out = out.at[:, r0:r1, py, c0:c1, px, :].add(
                T6[:, r0 - sy:r1 - sy, c0 - sx:c1 - sx, kh, kw, :])
    out = out.reshape(N, 2 * H, 2 * W, cp)   # (H,2,W,2,C) == (2H,2W,C) row-major
    return out[..., :cout]


# ------------------------------------ forward ------------------------------- #
def generator_forward(x_nchw, params, compute_dtype=jnp.bfloat16, eps=1e-5):
    N = x_nchw.shape[0]
    assert x_nchw.shape[2] == 1 and x_nchw.shape[3] == 1, "DCGAN latent is 1x1"
    x0 = x_nchw.reshape(N, -1)                              # (N, Cin_latent)

    # ---- blk1: ConvT(K=4, s=1, p=0) on a 1x1 input == single GEMM ----------
    w1, g1, b1 = params["blk1"]
    c1 = w1.shape[1]
    cp1 = _round8(c1)
    B1 = _pack_taps(w1, cp1, compute_dtype)
    dummy_a = jnp.ones((1, x0.shape[1]), jnp.float32)
    dummy_s = jnp.zeros((1, x0.shape[1]), jnp.float32)
    T1 = tap_gemm(x0, B1, dummy_a, dummy_s, fold_input=False,
                  compute_dtype=compute_dtype)
    h = T1.reshape(N, 4, 4, cp1)[..., :c1]      # raw (pre-BN) blk1 output, NHWC
    gamma, beta = g1, b1                        # BN of the layer that produced h
    H = W = 4

    # ---- blk2..blk5: ConvT(K=4, s=2, p=1); producer BN+ReLU folded in ------
    for name in ("blk2", "blk3", "blk4", "blk5"):
        w, g, b = params[name]
        cin, cout = w.shape[0], w.shape[1]
        cp = _round8(cout)
        # Batch stats of the raw activation h (unpadded rows / real channels).
        mean, var = bn_batch_stats(h)
        a_vec = (gamma * jax.lax.rsqrt(var + eps)).reshape(1, cin)
        s_vec = (beta - mean * a_vec[0]).reshape(1, cin)
        Bw = _pack_taps(w, cp, compute_dtype)
        T = tap_gemm(h.reshape(-1, cin), Bw,
                     a_vec.astype(jnp.float32), s_vec.astype(jnp.float32),
                     fold_input=True, compute_dtype=compute_dtype)
        h = _recombine_stride2(T, N, H, W, cp, cout)        # raw conv output
        H, W = 2 * H, 2 * W
        gamma, beta = g, b                                  # None for blk5

    y = jnp.tanh(h)                                         # blk5: tanh, f32
    return jnp.transpose(y, (0, 3, 1, 2))                   # NHWC -> NCHW


# ----------------------------- pure-JAX reference --------------------------- #
def _ref_forward(x, params):
    def convT(h, w, s, p):
        K = w.shape[2]
        rhs = jnp.transpose(w, (1, 0, 2, 3))[:, :, ::-1, ::-1]   # (Cout,Cin,K,K)
        return jax.lax.conv_general_dilated(
            h, rhs, window_strides=(1, 1),
            padding=[(K - 1 - p, K - 1 - p)] * 2,
            lhs_dilation=(s, s),
            dimension_numbers=("NCHW", "OIHW", "NCHW"))

    def bn_relu(h, g, b):
        mean = h.mean(axis=(0, 2, 3), keepdims=True)
        var = h.var(axis=(0, 2, 3), keepdims=True)
        y = (h - mean) * jax.lax.rsqrt(var + 1e-5)
        y = y * g.reshape(1, -1, 1, 1) + b.reshape(1, -1, 1, 1)
        return jnp.maximum(y, 0.0)

    cfgs = [(1, 0), (2, 1), (2, 1), (2, 1)]
    h = x
    for i, (s, p) in enumerate(cfgs):
        w, g, b = params[f"blk{i + 1}"]
        h = bn_relu(convT(h, w, s, p), g, b)
    w, _, _ = params["blk5"]
    return jnp.tanh(convT(h, w, 2, 1))


# ----------------------------------- main ----------------------------------- #
if __name__ == "__main__":
    key = jax.random.PRNGKey(0)
    batch, in_channels, out_channels, fm = 2, 8, 3, 8   # small feature_maps
    chans = [in_channels, fm * 16, fm * 8, fm * 4, fm * 2, out_channels]

    params = {}
    for i in range(5):
        key, wk = jax.random.split(key)
        w = 0.02 * jax.random.normal(wk, (chans[i], chans[i + 1], 4, 4),
                                     jnp.float32)
        if i < 4:
            params[f"blk{i + 1}"] = (w,
                                     jnp.ones((chans[i + 1],), jnp.float32),
                                     jnp.zeros((chans[i + 1],), jnp.float32))
        else:
            params[f"blk{i + 1}"] = (w, None, None)

    key, xk = jax.random.split(key)
    x = jax.random.normal(xk, (batch, in_channels, 1, 1), jnp.float32)

    ref = jax.block_until_ready(_ref_forward(x, params))

    # f32 compute path: checks the structural transformation is exact.
    fwd_f32 = jax.jit(functools.partial(generator_forward,
                                        compute_dtype=jnp.float32))
    out_f32 = jax.block_until_ready(fwd_f32(x, params))
    assert out_f32.shape == (batch, out_channels, 64, 64), out_f32.shape
    np.testing.assert_allclose(np.asarray(out_f32), np.asarray(ref),
                               rtol=1e-3, atol=1e-3)

    # bf16 MXU-operand fast path (f32 accumulation / BN / tanh); standard bf16
    # tolerance vs the f32 reference.
    fwd_bf16 = jax.jit(functools.partial(generator_forward,
                                         compute_dtype=jnp.bfloat16))
    out_bf16 = jax.block_until_ready(fwd_bf16(x, params))
    assert out_bf16.shape == (batch, out_channels, 64, 64), out_bf16.shape
    np.testing.assert_allclose(np.asarray(out_bf16), np.asarray(ref),
                               rtol=1e-2, atol=1e-2)

    print("KERNEL_OK")
</pallas_src>

<mosaic_0001>
module attributes {stable_mosaic.version = 11 : i64} {
  func.func @_tap_gemm_kernel(%arg0: i32, %arg1: i32, %arg2: memref<8x8xf32, #tpu.memory_space<vmem>>, %arg3: memref<8x2048xf32, #tpu.memory_space<vmem>>, %arg4: memref<1x8xf32, #tpu.memory_space<vmem>>, %arg5: memref<1x8xf32, #tpu.memory_space<vmem>>, %arg6: memref<8x2048xf32, #tpu.memory_space<vmem>>) attributes {dimension_semantics = [#tpu.dimension_semantics<parallel>, #tpu.dimension_semantics<arbitrary>], iteration_bounds = array<i64: 1, 1>, scalar_prefetch = 0 : i64, scratch_operands = 0 : i64, tpu.core_type = #tpu.core_type<tc>, window_params = [{transform_indices = @transform_0, window_bounds = array<i64: 8, 8>}, {transform_indices = @transform_1, window_bounds = array<i64: 8, 2048>}, {transform_indices = @transform_2, window_bounds = array<i64: 1, 8>}, {transform_indices = @transform_3, window_bounds = array<i64: 1, 8>}, {transform_indices = @transform_4, window_bounds = array<i64: 8, 2048>}]} {
    %c0_i32 = arith.constant 0 : i32
    %0 = arith.cmpi eq, %arg1, %c0_i32 : i32
    %1 = arith.extui %0 : i1 to i32
    %c0_i32_0 = arith.constant 0 : i32
    %2 = arith.cmpi ne, %1, %c0_i32_0 : i32
    scf.if %2 {
      %cst_8 = arith.constant 0.000000e+00 : f32
      %9 = vector.broadcast %cst_8 : f32 to vector<8x2048xf32>
      %c0_9 = arith.constant 0 : index
      %c0_10 = arith.constant 0 : index
      %10 = vector.load %arg6[%c0_9, %c0_10] : memref<8x2048xf32, #tpu.memory_space<vmem>>, vector<8x2048xf32>
      tpu.vector_store %arg6[%c0_9, %c0_10], %9 {strides = array<i32>} : memref<8x2048xf32, #tpu.memory_space<vmem>>, vector<8x2048xf32>,
    } else {
    }
    %c0 = arith.constant 0 : index
    %c0_1 = arith.constant 0 : index
    %3 = vector.load %arg2[%c0, %c0_1] : memref<8x8xf32, #tpu.memory_space<vmem>>, vector<8x8xf32>
    %c0_2 = arith.constant 0 : index
    %c0_3 = arith.constant 0 : index
    %4 = vector.load %arg6[%c0_2, %c0_3] : memref<8x2048xf32, #tpu.memory_space<vmem>>, vector<8x2048xf32>
    %c0_4 = arith.constant 0 : index
    %c0_5 = arith.constant 0 : index
    %5 = vector.load %arg3[%c0_4, %c0_5] : memref<8x2048xf32, #tpu.memory_space<vmem>>, vector<8x2048xf32>
    %cst = arith.constant dense<0.000000e+00> : vector<8x2048xf32>
    %6 = tpu.matmul %3, %5, %cst {dimension_numbers = #tpu.dot_dimension_numbers<[1], [0], [0], [1], [0, 0, 1, 1], [], []>} : vector<8x8xf32>, vector<8x2048xf32>, vector<8x2048xf32> -> vector<8x2048xf32>
    %7 = arith.addf %4, %6 : vector<8x2048xf32>
    %c0_6 = arith.constant 0 : index
    %c0_7 = arith.constant 0 : index
    %8 = vector.load %arg6[%c0_6, %c0_7] : memref<8x2048xf32, #tpu.memory_space<vmem>>, vector<8x2048xf32>
    tpu.vector_store %arg6[%c0_6, %c0_7], %7 {strides = array<i32>} : memref<8x2048xf32, #tpu.memory_space<vmem>>, vector<8x2048xf32>,
    return
  }
  func.func @transform_0(%arg0: i32, %arg1: i32) -> (i32, i32) {
    %c0_i32 = arith.constant 0 : i32
    return %arg0, %arg1 : i32, i32
  }
  func.func @transform_1(%arg0: i32, %arg1: i32) -> (i32, i32) {
    %c0_i32 = arith.constant 0 : i32
    %c0_i32_0 = arith.constant 0 : i32
    return %arg1, %c0_i32 : i32, i32
  }
  func.func @transform_2(%arg0: i32, %arg1: i32) -> (i32, i32) {
    %c0_i32 = arith.constant 0 : i32
    %c0_i32_0 = arith.constant 0 : i32
    return %c0_i32, %arg1 : i32, i32
  }
  func.func @transform_3(%arg0: i32, %arg1: i32) -> (i32, i32) {
    %c0_i32 = arith.constant 0 : i32
    %c0_i32_0 = arith.constant 0 : i32
    return %c0_i32, %arg1 : i32, i32
  }
  func.func @transform_4(%arg0: i32, %arg1: i32) -> (i32, i32) {
    %c0_i32 = arith.constant 0 : i32
    %c0_i32_0 = arith.constant 0 : i32
    return %arg0, %c0_i32 : i32, i32
  }
}

module attributes {stable_mosaic.version = 11 : i64} {
  func.func @_bn_stats_kernel(%arg0: i32, %arg1: memref<8x512xf32, #tpu.memory_space<vmem>>, %arg2: memref<2x512xf32, #tpu.memory_space<vmem>>) attributes {dimension_semantics = [#tpu.dimension_semantics<arbitrary>], iteration_bounds = array<i64: 1>, scalar_prefetch = 0 : i64, scratch_operands = 0 : i64, tpu.core_type = #tpu.core_type<tc>, window_params = [{transform_indices = @transform_0, window_bounds = array<i64: 8, 512>}, {pipeline_mode = #tpu.pipeline_mode<synchronous>, transform_indices = @transform_1, window_bounds = array<i64: 2, 512>}]} {
    %c0_i32 = arith.constant 0 : i32
    %0 = arith.cmpi eq, %arg0, %c0_i32 : i32
    %1 = arith.extui %0 : i1 to i32
    %c0_i32_0 = arith.constant 0 : i32
    %2 = arith.cmpi ne, %1, %c0_i32_0 : i32
    scf.if %2 {
      %cst_10 = arith.constant 0.000000e+00 : f32
      %15 = vector.broadcast %cst_10 : f32 to vector<2x512xf32>
      %c0_11 = arith.constant 0 : index
      %c0_12 = arith.constant 0 : index
      %16 = vector.load %arg2[%c0_11, %c0_12] : memref<2x512xf32, #tpu.memory_space<vmem>>, vector<2x512xf32>
      tpu.vector_store %arg2[%c0_11, %c0_12], %15 {strides = array<i32>} : memref<2x512xf32, #tpu.memory_space<vmem>>, vector<2x512xf32>,
    } else {
    }
    %c0 = arith.constant 0 : index
    %c0_1 = arith.constant 0 : index
    %3 = vector.load %arg1[%c0, %c0_1] : memref<8x512xf32, #tpu.memory_space<vmem>>, vector<8x512xf32>
    %c0_2 = arith.constant 0 : index
    %c0_3 = arith.constant 0 : index
    %4 = vector.load %arg2[%c0_2, %c0_3] : memref<2x512xf32, #tpu.memory_space<vmem>>, vector<1x512xf32>
    %cst = arith.constant dense<0.000000e+00> : vector<512xf32>
    %5 = vector.multi_reduction <add>, %3, %cst [0] : vector<8x512xf32> to vector<512xf32>
    %6 = vector.shape_cast %5 : vector<512xf32> to vector<1x512xf32>
    %7 = arith.addf %4, %6 : vector<1x512xf32>
    %c0_4 = arith.constant 0 : index
    %c0_5 = arith.constant 0 : index
    %8 = vector.load %arg2[%c0_4, %c0_5] : memref<2x512xf32, #tpu.memory_space<vmem>>, vector<1x512xf32>
    tpu.vector_store %arg2[%c0_4, %c0_5], %7 {strides = array<i32>} : memref<2x512xf32, #tpu.memory_space<vmem>>, vector<1x512xf32>,
    %c1 = arith.constant 1 : index
    %c0_6 = arith.constant 0 : index
    %9 = vector.load %arg2[%c1, %c0_6] : memref<2x512xf32, #tpu.memory_space<vmem>>, vector<1x512xf32>
    %10 = arith.mulf %3, %3 : vector<8x512xf32>
    %cst_7 = arith.constant dense<0.000000e+00> : vector<512xf32>
    %11 = vector.multi_reduction <add>, %10, %cst_7 [0] : vector<8x512xf32> to vector<512xf32>
    %12 = vector.shape_cast %11 : vector<512xf32> to vector<1x512xf32>
    %13 = arith.addf %9, %12 : vector<1x512xf32>
    %c1_8 = arith.constant 1 : index
    %c0_9 = arith.constant 0 : index
    %14 = vector.load %arg2[%c1_8, %c0_9] : memref<2x512xf32, #tpu.memory_space<vmem>>, vector<1x512xf32>
    tpu.vector_store %arg2[%c1_8, %c0_9], %13 {strides = array<i32>} : memref<2x512xf32, #tpu.memory_space<vmem>>, vector<1x512xf32>,
    return
  }
  func.func @transform_0(%arg0: i32) -> (i32, i32) {
    %c0_i32 = arith.constant 0 : i32
    %c0_i32_0 = arith.constant 0 : i32
    return %arg0, %c0_i32 : i32, i32
  }
  func.func @transform_1(%arg0: i32) -> (i32, i32) {
    %c0_i32 = arith.constant 0 : i32
    %c0_i32_0 = arith.constant 0 : i32
    %c0_i32_1 = arith.constant 0 : i32
    return %c0_i32, %c0_i32_0 : i32, i32
  }
}

module attributes {stable_mosaic.version = 11 : i64} {
  func.func @_tap_gemm_kernel(%arg0: i32, %arg1: i32, %arg2: memref<32x128xf32, #tpu.memory_space<vmem>>, %arg3: memref<128x1024xf32, #tpu.memory_space<vmem>>, %arg4: memref<1x128xf32, #tpu.memory_space<vmem>>, %arg5: memref<1x128xf32, #tpu.memory_space<vmem>>, %arg6: memref<32x1024xf32, #tpu.memory_space<vmem>>) attributes {dimension_semantics = [#tpu.dimension_semantics<parallel>, #tpu.dimension_semantics<arbitrary>], iteration_bounds = array<i64: 1, 1>, scalar_prefetch = 0 : i64, scratch_operands = 0 : i64, tpu.core_type = #tpu.core_type<tc>, window_params = [{transform_indices = @transform_0, window_bounds = array<i64: 32, 128>}, {transform_indices = @transform_1, window_bounds = array<i64: 128, 1024>}, {transform_indices = @transform_2, window_bounds = array<i64: 1, 128>}, {transform_indices = @transform_3, window_bounds = array<i64: 1, 128>}, {transform_indices = @transform_4, window_bounds = array<i64: 32, 1024>}]} {
    %c0_i32 = arith.constant 0 : i32
    %0 = arith.cmpi eq, %arg1, %c0_i32 : i32
    %1 = arith.extui %0 : i1 to i32
    %c0_i32_0 = arith.constant 0 : i32
    %2 = arith.cmpi ne, %1, %c0_i32_0 : i32
    scf.if %2 {
      %cst_13 = arith.constant 0.000000e+00 : f32
      %17 = vector.broadcast %cst_13 : f32 to vector<32x1024xf32>
      %c0_14 = arith.constant 0 : index
      %c0_15 = arith.constant 0 : index
      %18 = vector.load %arg6[%c0_14, %c0_15] : memref<32x1024xf32, #tpu.memory_space<vmem>>, vector<32x1024xf32>
      tpu.vector_store %arg6[%c0_14, %c0_15], %17 {strides = array<i32>} : memref<32x1024xf32, #tpu.memory_space<vmem>>, vector<32x1024xf32>,
    } else {
    }
    %c0 = arith.constant 0 : index
    %c0_1 = arith.constant 0 : index
    %3 = vector.load %arg2[%c0, %c0_1] : memref<32x128xf32, #tpu.memory_space<vmem>>, vector<32x128xf32>
    %c0_2 = arith.constant 0 : index
    %c0_3 = arith.constant 0 : index
    %4 = vector.load %arg4[%c0_2, %c0_3] : memref<1x128xf32, #tpu.memory_space<vmem>>, vector<1x128xf32>
    %5 = vector.broadcast %4 : vector<1x128xf32> to vector<32x128xf32>
    %6 = arith.mulf %3, %5 : vector<32x128xf32>
    %c0_4 = arith.constant 0 : index
    %c0_5 = arith.constant 0 : index
    %7 = vector.load %arg5[%c0_4, %c0_5] : memref<1x128xf32, #tpu.memory_space<vmem>>, vector<1x128xf32>
    %8 = vector.broadcast %7 : vector<1x128xf32> to vector<32x128xf32>
    %9 = arith.addf %6, %8 : vector<32x128xf32>
    %cst = arith.constant 0.000000e+00 : f32
    %10 = vector.broadcast %cst : f32 to vector<32x128xf32>
    %11 = arith.maximumf %9, %10 : vector<32x128xf32>
    %c0_6 = arith.constant 0 : index
    %c0_7 = arith.constant 0 : index
    %12 = vector.load %arg6[%c0_6, %c0_7] : memref<32x1024xf32, #tpu.memory_space<vmem>>, vector<32x1024xf32>
    %c0_8 = arith.constant 0 : index
    %c0_9 = arith.constant 0 : index
    %13 = vector.load %arg3[%c0_8, %c0_9] : memref<128x1024xf32, #tpu.memory_space<vmem>>, vector<128x1024xf32>
    %cst_10 = arith.constant dense<0.000000e+00> : vector<32x1024xf32>
    %14 = tpu.matmul %11, %13, %cst_10 {dimension_numbers = #tpu.dot_dimension_numbers<[1], [0], [0], [1], [0, 0, 1, 1], [], []>} : vector<32x128xf32>, vector<128x1024xf32>, vector<32x1024xf32> -> vector<32x1024xf32>
    %15 = arith.addf %12, %14 : vector<32x1024xf32>
    %c0_11 = arith.constant 0 : index
    %c0_12 = arith.constant 0 : index
    %16 = vector.load %arg6[%c0_11, %c0_12] : memref<32x1024xf32, #tpu.memory_space<vmem>>, vector<32x1024xf32>
    tpu.vector_store %arg6[%c0_11, %c0_12], %15 {strides = array<i32>} : memref<32x1024xf32, #tpu.memory_space<vmem>>, vector<32x1024xf32>,
    return
  }
  func.func @transform_0(%arg0: i32, %arg1: i32) -> (i32, i32) {
    %c0_i32 = arith.constant 0 : i32
    return %arg0, %arg1 : i32, i32
  }
  func.func @transform_1(%arg0: i32, %arg1: i32) -> (i32, i32) {
    %c0_i32 = arith.constant 0 : i32
    %c0_i32_0 = arith.constant 0 : i32
    return %arg1, %c0_i32 : i32, i32
  }
  func.func @transform_2(%arg0: i32, %arg1: i32) -> (i32, i32) {
    %c0_i32 = arith.constant 0 : i32
    %c0_i32_0 = arith.constant 0 : i32
    return %c0_i32, %arg1 : i32, i32
  }
  func.func @transform_3(%arg0: i32, %arg1: i32) -> (i32, i32) {
    %c0_i32 = arith.constant 0 : i32
    %c0_i32_0 = arith.constant 0 : i32
    return %c0_i32, %arg1 : i32, i32
  }
  func.func @transform_4(%arg0: i32, %arg1: i32) -> (i32, i32) {
    %c0_i32 = arith.constant 0 : i32
    %c0_i32_0 = arith.constant 0 : i32
    return %arg0, %c0_i32 : i32, i32
  }
}

module attributes {stable_mosaic.version = 11 : i64} {
  func.func @_bn_stats_kernel(%arg0: i32, %arg1: memref<16x512xf32, #tpu.memory_space<vmem>>, %arg2: memref<2x512xf32, #tpu.memory_space<vmem>>) attributes {dimension_semantics = [#tpu.dimension_semantics<arbitrary>], iteration_bounds = array<i64: 1>, scalar_prefetch = 0 : i64, scratch_operands = 0 : i64, tpu.core_type = #tpu.core_type<tc>, window_params = [{transform_indices = @transform_0, window_bounds = array<i64: 16, 512>}, {pipeline_mode = #tpu.pipeline_mode<synchronous>, transform_indices = @transform_1, window_bounds = array<i64: 2, 512>}]} {
    %c0_i32 = arith.constant 0 : i32
    %0 = arith.cmpi eq, %arg0, %c0_i32 : i32
    %1 = arith.extui %0 : i1 to i32
    %c0_i32_0 = arith.constant 0 : i32
    %2 = arith.cmpi ne, %1, %c0_i32_0 : i32
    scf.if %2 {
      %cst_10 = arith.constant 0.000000e+00 : f32
      %15 = vector.broadcast %cst_10 : f32 to vector<2x512xf32>
      %c0_11 = arith.constant 0 : index
      %c0_12 = arith.constant 0 : index
      %16 = vector.load %arg2[%c0_11, %c0_12] : memref<2x512xf32, #tpu.memory_space<vmem>>, vector<2x512xf32>
      tpu.vector_store %arg2[%c0_11, %c0_12], %15 {strides = array<i32>} : memref<2x512xf32, #tpu.memory_space<vmem>>, vector<2x512xf32>,
    } else {
    }
    %c0 = arith.constant 0 : index
    %c0_1 = arith.constant 0 : index
    %3 = vector.load %arg1[%c0, %c0_1] : memref<16x512xf32, #tpu.memory_space<vmem>>, vector<16x512xf32>
    %c0_2 = arith.constant 0 : index
    %c0_3 = arith.constant 0 : index
    %4 = vector.load %arg2[%c0_2, %c0_3] : memref<2x512xf32, #tpu.memory_space<vmem>>, vector<1x512xf32>
    %cst = arith.constant dense<0.000000e+00> : vector<512xf32>
    %5 = vector.multi_reduction <add>, %3, %cst [0] : vector<16x512xf32> to vector<512xf32>
    %6 = vector.shape_cast %5 : vector<512xf32> to vector<1x512xf32>
    %7 = arith.addf %4, %6 : vector<1x512xf32>
    %c0_4 = arith.constant 0 : index
    %c0_5 = arith.constant 0 : index
    %8 = vector.load %arg2[%c0_4, %c0_5] : memref<2x512xf32, #tpu.memory_space<vmem>>, vector<1x512xf32>
    tpu.vector_store %arg2[%c0_4, %c0_5], %7 {strides = array<i32>} : memref<2x512xf32, #tpu.memory_space<vmem>>, vector<1x512xf32>,
    %c1 = arith.constant 1 : index
    %c0_6 = arith.constant 0 : index
    %9 = vector.load %arg2[%c1, %c0_6] : memref<2x512xf32, #tpu.memory_space<vmem>>, vector<1x512xf32>
    %10 = arith.mulf %3, %3 : vector<16x512xf32>
    %cst_7 = arith.constant dense<0.000000e+00> : vector<512xf32>
    %11 = vector.multi_reduction <add>, %10, %cst_7 [0] : vector<16x512xf32> to vector<512xf32>
    %12 = vector.shape_cast %11 : vector<512xf32> to vector<1x512xf32>
    %13 = arith.addf %9, %12 : vector<1x512xf32>
    %c1_8 = arith.constant 1 : index
    %c0_9 = arith.constant 0 : index
    %14 = vector.load %arg2[%c1_8, %c0_9] : memref<2x512xf32, #tpu.memory_space<vmem>>, vector<1x512xf32>
    tpu.vector_store %arg2[%c1_8, %c0_9], %13 {strides = array<i32>} : memref<2x512xf32, #tpu.memory_space<vmem>>, vector<1x512xf32>,
    return
  }
  func.func @transform_0(%arg0: i32) -> (i32, i32) {
    %c0_i32 = arith.constant 0 : i32
    %c0_i32_0 = arith.constant 0 : i32
    return %arg0, %c0_i32 : i32, i32
  }
  func.func @transform_1(%arg0: i32) -> (i32, i32) {
    %c0_i32 = arith.constant 0 : i32
    %c0_i32_0 = arith.constant 0 : i32
    %c0_i32_1 = arith.constant 0 : i32
    return %c0_i32, %c0_i32_0 : i32, i32
  }
}

module attributes {stable_mosaic.version = 11 : i64} {
  func.func @_tap_gemm_kernel(%arg0: i32, %arg1: i32, %arg2: memref<128x64xf32, #tpu.memory_space<vmem>>, %arg3: memref<64x512xf32, #tpu.memory_space<vmem>>, %arg4: memref<1x64xf32, #tpu.memory_space<vmem>>, %arg5: memref<1x64xf32, #tpu.memory_space<vmem>>, %arg6: memref<128x512xf32, #tpu.memory_space<vmem>>) attributes {dimension_semantics = [#tpu.dimension_semantics<parallel>, #tpu.dimension_semantics<arbitrary>], iteration_bounds = array<i64: 1, 1>, scalar_prefetch = 0 : i64, scratch_operands = 0 : i64, tpu.core_type = #tpu.core_type<tc>, window_params = [{transform_indices = @transform_0, window_bounds = array<i64: 128, 64>}, {transform_indices = @transform_1, window_bounds = array<i64: 64, 512>}, {transform_indices = @transform_2, window_bounds = array<i64: 1, 64>}, {transform_indices = @transform_3, window_bounds = array<i64: 1, 64>}, {transform_indices = @transform_4, window_bounds = array<i64: 128, 512>}]} {
    %c0_i32 = arith.constant 0 : i32
    %0 = arith.cmpi eq, %arg1, %c0_i32 : i32
    %1 = arith.extui %0 : i1 to i32
    %c0_i32_0 = arith.constant 0 : i32
    %2 = arith.cmpi ne, %1, %c0_i32_0 : i32
    scf.if %2 {
      %cst_13 = arith.constant 0.000000e+00 : f32
      %17 = vector.broadcast %cst_13 : f32 to vector<128x512xf32>
      %c0_14 = arith.constant 0 : index
      %c0_15 = arith.constant 0 : index
      %18 = vector.load %arg6[%c0_14, %c0_15] : memref<128x512xf32, #tpu.memory_space<vmem>>, vector<128x512xf32>
      tpu.vector_store %arg6[%c0_14, %c0_15], %17 {strides = array<i32>} : memref<128x512xf32, #tpu.memory_space<vmem>>, vector<128x512xf32>,
    } else {
    }
    %c0 = arith.constant 0 : index
    %c0_1 = arith.constant 0 : index
    %3 = vector.load %arg2[%c0, %c0_1] : memref<128x64xf32, #tpu.memory_space<vmem>>, vector<128x64xf32>
    %c0_2 = arith.constant 0 : index
    %c0_3 = arith.constant 0 : index
    %4 = vector.load %arg4[%c0_2, %c0_3] : memref<1x64xf32, #tpu.memory_space<vmem>>, vector<1x64xf32>
    %5 = vector.broadcast %4 : vector<1x64xf32> to vector<128x64xf32>
    %6 = arith.mulf %3, %5 : vector<128x64xf32>
    %c0_4 = arith.constant 0 : index
    %c0_5 = arith.constant 0 : index
    %7 = vector.load %arg5[%c0_4, %c0_5] : memref<1x64xf32, #tpu.memory_space<vmem>>, vector<1x64xf32>
    %8 = vector.broadcast %7 : vector<1x64xf32> to vector<128x64xf32>
    %9 = arith.addf %6, %8 : vector<128x64xf32>
    %cst = arith.constant 0.000000e+00 : f32
    %10 = vector.broadcast %cst : f32 to vector<128x64xf32>
    %11 = arith.maximumf %9, %10 : vector<128x64xf32>
    %c0_6 = arith.constant 0 : index
    %c0_7 = arith.constant 0 : index
    %12 = vector.load %arg6[%c0_6, %c0_7] : memref<128x512xf32, #tpu.memory_space<vmem>>, vector<128x512xf32>
    %c0_8 = arith.constant 0 : index
    %c0_9 = arith.constant 0 : index
    %13 = vector.load %arg3[%c0_8, %c0_9] : memref<64x512xf32, #tpu.memory_space<vmem>>, vector<64x512xf32>
    %cst_10 = arith.constant dense<0.000000e+00> : vector<128x512xf32>
    %14 = tpu.matmul %11, %13, %cst_10 {dimension_numbers = #tpu.dot_dimension_numbers<[1], [0], [0], [1], [0, 0, 1, 1], [], []>} : vector<128x64xf32>, vector<64x512xf32>, vector<128x512xf32> -> vector<128x512xf32>
    %15 = arith.addf %12, %14 : vector<128x512xf32>
    %c0_11 = arith.constant 0 : index
    %c0_12 = arith.constant 0 : index
    %16 = vector.load %arg6[%c0_11, %c0_12] : memref<128x512xf32, #tpu.memory_space<vmem>>, vector<128x512xf32>
    tpu.vector_store %arg6[%c0_11, %c0_12], %15 {strides = array<i32>} : memref<128x512xf32, #tpu.memory_space<vmem>>, vector<128x512xf32>,
    return
  }
  func.func @transform_0(%arg0: i32, %arg1: i32) -> (i32, i32) {
    %c0_i32 = arith.constant 0 : i32
    return %arg0, %arg1 : i32, i32
  }
  func.func @transform_1(%arg0: i32, %arg1: i32) -> (i32, i32) {
    %c0_i32 = arith.constant 0 : i32
    %c0_i32_0 = arith.constant 0 : i32
    return %arg1, %c0_i32 : i32, i32
  }
  func.func @transform_2(%arg0: i32, %arg1: i32) -> (i32, i32) {
    %c0_i32 = arith.constant 0 : i32
    %c0_i32_0 = arith.constant 0 : i32
    return %c0_i32, %arg1 : i32, i32
  }
  func.func @transform_3(%arg0: i32, %arg1: i32) -> (i32, i32) {
    %c0_i32 = arith.constant 0 : i32
    %c0_i32_0 = arith.constant 0 : i32
    return %c0_i32, %arg1 : i32, i32
  }
  func.func @transform_4(%arg0: i32, %arg1: i32) -> (i32, i32) {
    %c0_i32 = arith.constant 0 : i32
    %c0_i32_0 = arith.constant 0 : i32
    return %arg0, %c0_i32 : i32, i32
  }
}

module attributes {stable_mosaic.version = 11 : i64} {
  func.func @_bn_stats_kernel(%arg0: i32, %arg1: memref<32x512xf32, #tpu.memory_space<vmem>>, %arg2: memref<2x512xf32, #tpu.memory_space<vmem>>) attributes {dimension_semantics = [#tpu.dimension_semantics<arbitrary>], iteration_bounds = array<i64: 1>, scalar_prefetch = 0 : i64, scratch_operands = 0 : i64, tpu.core_type = #tpu.core_type<tc>, window_params = [{transform_indices = @transform_0, window_bounds = array<i64: 32, 512>}, {pipeline_mode = #tpu.pipeline_mode<synchronous>, transform_indices = @transform_1, window_bounds = array<i64: 2, 512>}]} {
    %c0_i32 = arith.constant 0 : i32
    %0 = arith.cmpi eq, %arg0, %c0_i32 : i32
    %1 = arith.extui %0 : i1 to i32
    %c0_i32_0 = arith.constant 0 : i32
    %2 = arith.cmpi ne, %1, %c0_i32_0 : i32
    scf.if %2 {
      %cst_10 = arith.constant 0.000000e+00 : f32
      %15 = vector.broadcast %cst_10 : f32 to vector<2x512xf32>
      %c0_11 = arith.constant 0 : index
      %c0_12 = arith.constant 0 : index
      %16 = vector.load %arg2[%c0_11, %c0_12] : memref<2x512xf32, #tpu.memory_space<vmem>>, vector<2x512xf32>
      tpu.vector_store %arg2[%c0_11, %c0_12], %15 {strides = array<i32>} : memref<2x512xf32, #tpu.memory_space<vmem>>, vector<2x512xf32>,
    } else {
    }
    %c0 = arith.constant 0 : index
    %c0_1 = arith.constant 0 : index
    %3 = vector.load %arg1[%c0, %c0_1] : memref<32x512xf32, #tpu.memory_space<vmem>>, vector<32x512xf32>
    %c0_2 = arith.constant 0 : index
    %c0_3 = arith.constant 0 : index
    %4 = vector.load %arg2[%c0_2, %c0_3] : memref<2x512xf32, #tpu.memory_space<vmem>>, vector<1x512xf32>
    %cst = arith.constant dense<0.000000e+00> : vector<512xf32>
    %5 = vector.multi_reduction <add>, %3, %cst [0] : vector<32x512xf32> to vector<512xf32>
    %6 = vector.shape_cast %5 : vector<512xf32> to vector<1x512xf32>
    %7 = arith.addf %4, %6 : vector<1x512xf32>
    %c0_4 = arith.constant 0 : index
    %c0_5 = arith.constant 0 : index
    %8 = vector.load %arg2[%c0_4, %c0_5] : memref<2x512xf32, #tpu.memory_space<vmem>>, vector<1x512xf32>
    tpu.vector_store %arg2[%c0_4, %c0_5], %7 {strides = array<i32>} : memref<2x512xf32, #tpu.memory_space<vmem>>, vector<1x512xf32>,
    %c1 = arith.constant 1 : index
    %c0_6 = arith.constant 0 : index
    %9 = vector.load %arg2[%c1, %c0_6] : memref<2x512xf32, #tpu.memory_space<vmem>>, vector<1x512xf32>
    %10 = arith.mulf %3, %3 : vector<32x512xf32>
    %cst_7 = arith.constant dense<0.000000e+00> : vector<512xf32>
    %11 = vector.multi_reduction <add>, %10, %cst_7 [0] : vector<32x512xf32> to vector<512xf32>
    %12 = vector.shape_cast %11 : vector<512xf32> to vector<1x512xf32>
    %13 = arith.addf %9, %12 : vector<1x512xf32>
    %c1_8 = arith.constant 1 : index
    %c0_9 = arith.constant 0 : index
    %14 = vector.load %arg2[%c1_8, %c0_9] : memref<2x512xf32, #tpu.memory_space<vmem>>, vector<1x512xf32>
    tpu.vector_store %arg2[%c1_8, %c0_9], %13 {strides = array<i32>} : memref<2x512xf32, #tpu.memory_space<vmem>>, vector<1x512xf32>,
    return
  }
  func.func @transform_0(%arg0: i32) -> (i32, i32) {
    %c0_i32 = arith.constant 0 : i32
    %c0_i32_0 = arith.constant 0 : i32
    return %arg0, %c0_i32 : i32, i32
  }
  func.func @transform_1(%arg0: i32) -> (i32, i32) {
    %c0_i32 = arith.constant 0 : i32
    %c0_i32_0 = arith.constant 0 : i32
    %c0_i32_1 = arith.constant 0 : i32
    return %c0_i32, %c0_i32_0 : i32, i32
  }
}

module attributes {stable_mosaic.version = 11 : i64} {
  func.func @_tap_gemm_kernel(%arg0: i32, %arg1: i32, %arg2: memref<512x32xf32, #tpu.memory_space<vmem>>, %arg3: memref<32x256xf32, #tpu.memory_space<vmem>>, %arg4: memref<1x32xf32, #tpu.memory_space<vmem>>, %arg5: memref<1x32xf32, #tpu.memory_space<vmem>>, %arg6: memref<512x256xf32, #tpu.memory_space<vmem>>) attributes {dimension_semantics = [#tpu.dimension_semantics<parallel>, #tpu.dimension_semantics<arbitrary>], iteration_bounds = array<i64: 1, 1>, scalar_prefetch = 0 : i64, scratch_operands = 0 : i64, tpu.core_type = #tpu.core_type<tc>, window_params = [{transform_indices = @transform_0, window_bounds = array<i64: 512, 32>}, {transform_indices = @transform_1, window_bounds = array<i64: 32, 256>}, {transform_indices = @transform_2, window_bounds = array<i64: 1, 32>}, {transform_indices = @transform_3, window_bounds = array<i64: 1, 32>}, {transform_indices = @transform_4, window_bounds = array<i64: 512, 256>}]} {
    %c0_i32 = arith.constant 0 : i32
    %0 = arith.cmpi eq, %arg1, %c0_i32 : i32
    %1 = arith.extui %0 : i1 to i32
    %c0_i32_0 = arith.constant 0 : i32
    %2 = arith.cmpi ne, %1, %c0_i32_0 : i32
    scf.if %2 {
      %cst_13 = arith.constant 0.000000e+00 : f32
      %17 = vector.broadcast %cst_13 : f32 to vector<512x256xf32>
      %c0_14 = arith.constant 0 : index
      %c0_15 = arith.constant 0 : index
      %18 = vector.load %arg6[%c0_14, %c0_15] : memref<512x256xf32, #tpu.memory_space<vmem>>, vector<512x256xf32>
      tpu.vector_store %arg6[%c0_14, %c0_15], %17 {strides = array<i32>} : memref<512x256xf32, #tpu.memory_space<vmem>>, vector<512x256xf32>,
    } else {
    }
    %c0 = arith.constant 0 : index
    %c0_1 = arith.constant 0 : index
    %3 = vector.load %arg2[%c0, %c0_1] : memref<512x32xf32, #tpu.memory_space<vmem>>, vector<512x32xf32>
    %c0_2 = arith.constant 0 : index
    %c0_3 = arith.constant 0 : index
    %4 = vector.load %arg4[%c0_2, %c0_3] : memref<1x32xf32, #tpu.memory_space<vmem>>, vector<1x32xf32>
    %5 = vector.broadcast %4 : vector<1x32xf32> to vector<512x32xf32>
    %6 = arith.mulf %3, %5 : vector<512x32xf32>
    %c0_4 = arith.constant 0 : index
    %c0_5 = arith.constant 0 : index
    %7 = vector.load %arg5[%c0_4, %c0_5] : memref<1x32xf32, #tpu.memory_space<vmem>>, vector<1x32xf32>
    %8 = vector.broadcast %7 : vector<1x32xf32> to vector<512x32xf32>
    %9 = arith.addf %6, %8 : vector<512x32xf32>
    %cst = arith.constant 0.000000e+00 : f32
    %10 = vector.broadcast %cst : f32 to vector<512x32xf32>
    %11 = arith.maximumf %9, %10 : vector<512x32xf32>
    %c0_6 = arith.constant 0 : index
    %c0_7 = arith.constant 0 : index
    %12 = vector.load %arg6[%c0_6, %c0_7] : memref<512x256xf32, #tpu.memory_space<vmem>>, vector<512x256xf32>
    %c0_8 = arith.constant 0 : index
    %c0_9 = arith.constant 0 : index
    %13 = vector.load %arg3[%c0_8, %c0_9] : memref<32x256xf32, #tpu.memory_space<vmem>>, vector<32x256xf32>
    %cst_10 = arith.constant dense<0.000000e+00> : vector<512x256xf32>
    %14 = tpu.matmul %11, %13, %cst_10 {dimension_numbers = #tpu.dot_dimension_numbers<[1], [0], [0], [1], [0, 0, 1, 1], [], []>} : vector<512x32xf32>, vector<32x256xf32>, vector<512x256xf32> -> vector<512x256xf32>
    %15 = arith.addf %12, %14 : vector<512x256xf32>
    %c0_11 = arith.constant 0 : index
    %c0_12 = arith.constant 0 : index
    %16 = vector.load %arg6[%c0_11, %c0_12] : memref<512x256xf32, #tpu.memory_space<vmem>>, vector<512x256xf32>
    tpu.vector_store %arg6[%c0_11, %c0_12], %15 {strides = array<i32>} : memref<512x256xf32, #tpu.memory_space<vmem>>, vector<512x256xf32>,
    return
  }
  func.func @transform_0(%arg0: i32, %arg1: i32) -> (i32, i32) {
    %c0_i32 = arith.constant 0 : i32
    return %arg0, %arg1 : i32, i32
  }
  func.func @transform_1(%arg0: i32, %arg1: i32) -> (i32, i32) {
    %c0_i32 = arith.constant 0 : i32
    %c0_i32_0 = arith.constant 0 : i32
    return %arg1, %c0_i32 : i32, i32
  }
  func.func @transform_2(%arg0: i32, %arg1: i32) -> (i32, i32) {
    %c0_i32 = arith.constant 0 : i32
    %c0_i32_0 = arith.constant 0 : i32
    return %c0_i32, %arg1 : i32, i32
  }
  func.func @transform_3(%arg0: i32, %arg1: i32) -> (i32, i32) {
    %c0_i32 = arith.constant 0 : i32
    %c0_i32_0 = arith.constant 0 : i32
    return %c0_i32, %arg1 : i32, i32
  }
  func.func @transform_4(%arg0: i32, %arg1: i32) -> (i32, i32) {
    %c0_i32 = arith.constant 0 : i32
    %c0_i32_0 = arith.constant 0 : i32
    return %arg0, %c0_i32 : i32, i32
  }
}

module attributes {stable_mosaic.version = 11 : i64} {
  func.func @_bn_stats_kernel(%arg0: i32, %arg1: memref<64x512xf32, #tpu.memory_space<vmem>>, %arg2: memref<2x512xf32, #tpu.memory_space<vmem>>) attributes {dimension_semantics = [#tpu.dimension_semantics<arbitrary>], iteration_bounds = array<i64: 1>, scalar_prefetch = 0 : i64, scratch_operands = 0 : i64, tpu.core_type = #tpu.core_type<tc>, window_params = [{transform_indices = @transform_0, window_bounds = array<i64: 64, 512>}, {pipeline_mode = #tpu.pipeline_mode<synchronous>, transform_indices = @transform_1, window_bounds = array<i64: 2, 512>}]} {
    %c0_i32 = arith.constant 0 : i32
    %0 = arith.cmpi eq, %arg0, %c0_i32 : i32
    %1 = arith.extui %0 : i1 to i32
    %c0_i32_0 = arith.constant 0 : i32
    %2 = arith.cmpi ne, %1, %c0_i32_0 : i32
    scf.if %2 {
      %cst_10 = arith.constant 0.000000e+00 : f32
      %15 = vector.broadcast %cst_10 : f32 to vector<2x512xf32>
      %c0_11 = arith.constant 0 : index
      %c0_12 = arith.constant 0 : index
      %16 = vector.load %arg2[%c0_11, %c0_12] : memref<2x512xf32, #tpu.memory_space<vmem>>, vector<2x512xf32>
      tpu.vector_store %arg2[%c0_11, %c0_12], %15 {strides = array<i32>} : memref<2x512xf32, #tpu.memory_space<vmem>>, vector<2x512xf32>,
    } else {
    }
    %c0 = arith.constant 0 : index
    %c0_1 = arith.constant 0 : index
    %3 = vector.load %arg1[%c0, %c0_1] : memref<64x512xf32, #tpu.memory_space<vmem>>, vector<64x512xf32>
    %c0_2 = arith.constant 0 : index
    %c0_3 = arith.constant 0 : index
    %4 = vector.load %arg2[%c0_2, %c0_3] : memref<2x512xf32, #tpu.memory_space<vmem>>, vector<1x512xf32>
    %cst = arith.constant dense<0.000000e+00> : vector<512xf32>
    %5 = vector.multi_reduction <add>, %3, %cst [0] : vector<64x512xf32> to vector<512xf32>
    %6 = vector.shape_cast %5 : vector<512xf32> to vector<1x512xf32>
    %7 = arith.addf %4, %6 : vector<1x512xf32>
    %c0_4 = arith.constant 0 : index
    %c0_5 = arith.constant 0 : index
    %8 = vector.load %arg2[%c0_4, %c0_5] : memref<2x512xf32, #tpu.memory_space<vmem>>, vector<1x512xf32>
    tpu.vector_store %arg2[%c0_4, %c0_5], %7 {strides = array<i32>} : memref<2x512xf32, #tpu.memory_space<vmem>>, vector<1x512xf32>,
    %c1 = arith.constant 1 : index
    %c0_6 = arith.constant 0 : index
    %9 = vector.load %arg2[%c1, %c0_6] : memref<2x512xf32, #tpu.memory_space<vmem>>, vector<1x512xf32>
    %10 = arith.mulf %3, %3 : vector<64x512xf32>
    %cst_7 = arith.constant dense<0.000000e+00> : vector<512xf32>
    %11 = vector.multi_reduction <add>, %10, %cst_7 [0] : vector<64x512xf32> to vector<512xf32>
    %12 = vector.shape_cast %11 : vector<512xf32> to vector<1x512xf32>
    %13 = arith.addf %9, %12 : vector<1x512xf32>
    %c1_8 = arith.constant 1 : index
    %c0_9 = arith.constant 0 : index
    %14 = vector.load %arg2[%c1_8, %c0_9] : memref<2x512xf32, #tpu.memory_space<vmem>>, vector<1x512xf32>
    tpu.vector_store %arg2[%c1_8, %c0_9], %13 {strides = array<i32>} : memref<2x512xf32, #tpu.memory_space<vmem>>, vector<1x512xf32>,
    return
  }
  func.func @transform_0(%arg0: i32) -> (i32, i32) {
    %c0_i32 = arith.constant 0 : i32
    %c0_i32_0 = arith.constant 0 : i32
    return %arg0, %c0_i32 : i32, i32
  }
  func.func @transform_1(%arg0: i32) -> (i32, i32) {
    %c0_i32 = arith.constant 0 : i32
    %c0_i32_0 = arith.constant 0 : i32
    %c0_i32_1 = arith.constant 0 : i32
    return %c0_i32, %c0_i32_0 : i32, i32
  }
}

module attributes {stable_mosaic.version = 11 : i64} {
  func.func @_tap_gemm_kernel(%arg0: i32, %arg1: i32, %arg2: memref<512x16xf32, #tpu.memory_space<vmem>>, %arg3: memref<16x128xf32, #tpu.memory_space<vmem>>, %arg4: memref<1x16xf32, #tpu.memory_space<vmem>>, %arg5: memref<1x16xf32, #tpu.memory_space<vmem>>, %arg6: memref<512x128xf32, #tpu.memory_space<vmem>>) attributes {dimension_semantics = [#tpu.dimension_semantics<parallel>, #tpu.dimension_semantics<arbitrary>], iteration_bounds = array<i64: 4, 1>, scalar_prefetch = 0 : i64, scratch_operands = 0 : i64, tpu.core_type = #tpu.core_type<tc>, window_params = [{transform_indices = @transform_0, window_bounds = array<i64: 512, 16>}, {transform_indices = @transform_1, window_bounds = array<i64: 16, 128>}, {transform_indices = @transform_2, window_bounds = array<i64: 1, 16>}, {transform_indices = @transform_3, window_bounds = array<i64: 1, 16>}, {transform_indices = @transform_4, window_bounds = array<i64: 512, 128>}]} {
    %c0_i32 = arith.constant 0 : i32
    %0 = arith.cmpi eq, %arg1, %c0_i32 : i32
    %1 = arith.extui %0 : i1 to i32
    %c0_i32_0 = arith.constant 0 : i32
    %2 = arith.cmpi ne, %1, %c0_i32_0 : i32
    scf.if %2 {
      %cst_13 = arith.constant 0.000000e+00 : f32
      %17 = vector.broadcast %cst_13 : f32 to vector<512x128xf32>
      %c0_14 = arith.constant 0 : index
      %c0_15 = arith.constant 0 : index
      %18 = vector.load %arg6[%c0_14, %c0_15] : memref<512x128xf32, #tpu.memory_space<vmem>>, vector<512x128xf32>
      tpu.vector_store %arg6[%c0_14, %c0_15], %17 {strides = array<i32>} : memref<512x128xf32, #tpu.memory_space<vmem>>, vector<512x128xf32>,
    } else {
    }
    %c0 = arith.constant 0 : index
    %c0_1 = arith.constant 0 : index
    %3 = vector.load %arg2[%c0, %c0_1] : memref<512x16xf32, #tpu.memory_space<vmem>>, vector<512x16xf32>
    %c0_2 = arith.constant 0 : index
    %c0_3 = arith.constant 0 : index
    %4 = vector.load %arg4[%c0_2, %c0_3] : memref<1x16xf32, #tpu.memory_space<vmem>>, vector<1x16xf32>
    %5 = vector.broadcast %4 : vector<1x16xf32> to vector<512x16xf32>
    %6 = arith.mulf %3, %5 : vector<512x16xf32>
    %c0_4 = arith.constant 0 : index
    %c0_5 = arith.constant 0 : index
    %7 = vector.load %arg5[%c0_4, %c0_5] : memref<1x16xf32, #tpu.memory_space<vmem>>, vector<1x16xf32>
    %8 = vector.broadcast %7 : vector<1x16xf32> to vector<512x16xf32>
    %9 = arith.addf %6, %8 : vector<512x16xf32>
    %cst = arith.constant 0.000000e+00 : f32
    %10 = vector.broadcast %cst : f32 to vector<512x16xf32>
    %11 = arith.maximumf %9, %10 : vector<512x16xf32>
    %c0_6 = arith.constant 0 : index
    %c0_7 = arith.constant 0 : index
    %12 = vector.load %arg6[%c0_6, %c0_7] : memref<512x128xf32, #tpu.memory_space<vmem>>, vector<512x128xf32>
    %c0_8 = arith.constant 0 : index
    %c0_9 = arith.constant 0 : index
    %13 = vector.load %arg3[%c0_8, %c0_9] : memref<16x128xf32, #tpu.memory_space<vmem>>, vector<16x128xf32>
    %cst_10 = arith.constant dense<0.000000e+00> : vector<512x128xf32>
    %14 = tpu.matmul %11, %13, %cst_10 {dimension_numbers = #tpu.dot_dimension_numbers<[1], [0], [0], [1], [0, 0, 1, 1], [], []>} : vector<512x16xf32>, vector<16x128xf32>, vector<512x128xf32> -> vector<512x128xf32>
    %15 = arith.addf %12, %14 : vector<512x128xf32>
    %c0_11 = arith.constant 0 : index
    %c0_12 = arith.constant 0 : index
    %16 = vector.load %arg6[%c0_11, %c0_12] : memref<512x128xf32, #tpu.memory_space<vmem>>, vector<512x128xf32>
    tpu.vector_store %arg6[%c0_11, %c0_12], %15 {strides = array<i32>} : memref<512x128xf32, #tpu.memory_space<vmem>>, vector<512x128xf32>,
    return
  }
  func.func @transform_0(%arg0: i32, %arg1: i32) -> (i32, i32) {
    %c0_i32 = arith.constant 0 : i32
    return %arg0, %arg1 : i32, i32
  }
  func.func @transform_1(%arg0: i32, %arg1: i32) -> (i32, i32) {
    %c0_i32 = arith.constant 0 : i32
    %c0_i32_0 = arith.constant 0 : i32
    return %arg1, %c0_i32 : i32, i32
  }
  func.func @transform_2(%arg0: i32, %arg1: i32) -> (i32, i32) {
    %c0_i32 = arith.constant 0 : i32
    %c0_i32_0 = arith.constant 0 : i32
    return %c0_i32, %arg1 : i32, i32
  }
  func.func @transform_3(%arg0: i32, %arg1: i32) -> (i32, i32) {
    %c0_i32 = arith.constant 0 : i32
    %c0_i32_0 = arith.constant 0 : i32
    return %c0_i32, %arg1 : i32, i32
  }
  func.func @transform_4(%arg0: i32, %arg1: i32) -> (i32, i32) {
    %c0_i32 = arith.constant 0 : i32
    %c0_i32_0 = arith.constant 0 : i32
    return %arg0, %c0_i32 : i32, i32
  }
}

</mosaic_0001>

<llo_original>
// kernel: generator_forward.10
$region0: #{generator_forward.10}
  #allocation0 [shape = 'u32[]', space=smem, size = 0x4, offset = 0x4, fixed_abs, tag = 'smem constant byte address 0x4 - core index']
  #allocation1 [shape = 'u32[144,128]{1,0:T(1,128)}', space=vmem, size = 0x12000, scoped, tag = 'internal scratch']
  %s0 = inlined_call_operand.vmem [shape: f32[8,512], index: 0, kind: input, shape index: {}]
  %s1 = inlined_call_operand.vmem [shape: f32[2,512], index: 1, kind: output, shape index: {}]
  %s2 = sld [smem:[#allocation0]]
  $region18: #{generator_forward.10} parent=0
    _
  %s4 = ssub.s32 1, %s2
  %s5 = scalar_select 0, %s4, %s2
  // Predicated region
  $region2: #{generator_forward.10} parent=0 // pred_check
    _
  $region3: #{generator_forward.10} parent=0 // pred_check_branch
    %7 = sbr.rel (0) target = $region5
  $region4: #{generator_forward.10} parent=0 // pred_region
    _
  $region5: #{generator_forward.10} parent=0 // pred_fallthru
    _
  %p8 = scmp.eq.s32.totalorder 0, 0
  // Predicated region
  $region6: #{generator_forward.10} parent=0 // pred_check
    %p9 = pneg %p8
  $region7: #{generator_forward.10} parent=0 // pred_check_branch
    %11 = sbr.rel (%p9) target = $region9
  $region8: #{generator_forward.10} parent=0 // pred_region
    %12 = vst [vmem:[%s1] sm:$0xff] 0.0
  $region9: #{generator_forward.10} parent=0 // pred_fallthru
    _
  %v13 = vld [vmem:[%s0] sm:$0xff]
  %v14 = vld [vmem:[%s0 + $0x8] sm:$0xff]
  %v15 = vld [vmem:[%s0 + $0x10] sm:$0xff]
  %v16 = vld [vmem:[%s0 + $0x18] sm:$0xff]
  %v17 = vld [vmem:[%s1] ss:$2 sm:$0xf]
  %v18 = vrot.slane %v13, 4
  %v19 = vadd.f32 %v13, %v18
  %v20 = vrot.slane %v19, 2
  %v21 = vadd.f32 %v19, %v20
  %v22 = vrot.slane %v21, 1
  %v23 = vadd.f32 %v21, %v22
  %v24 = vrot.slane %v14, 4
  %v25 = vadd.f32 %v14, %v24
  %v26 = vrot.slane %v25, 2
  %v27 = vadd.f32 %v25, %v26
  %v28 = vrot.slane %v27, 1
  %v29 = vadd.f32 %v27, %v28
  %v30 = vrot.slane %v15, 4
  %v31 = vadd.f32 %v15, %v30
  %v32 = vrot.slane %v31, 2
  %v33 = vadd.f32 %v31, %v32
  %v34 = vrot.slane %v33, 1
  %v35 = vadd.f32 %v33, %v34
  %v36 = vrot.slane %v16, 4
  %v37 = vadd.f32 %v16, %v36
  %v38 = vrot.slane %v37, 2
  %v39 = vadd.f32 %v37, %v38
  %v40 = vrot.slane %v39, 1
  %v41 = vadd.f32 %v39, %v40
  %v46 = vcombine.low %v23, %v29
  %v47 = vcombine.low %v35, %v41
  %v49 = vunpack.c.l.s4 1966171168
  %v50 = vunpack.c.0.s8 %v49
  %v51 = vlaneseq
  %v52 = vshrl.u32 %v51, 7
  %v53 = vsub.s32 %v50, %v52
  %v54 = vrot.slane %v46, %v53
  %v56 = vunpack.c.l.s4 1966171168
  %v57 = vunpack.c.0.s8 %v56
  %v58 = vlaneseq
  %v59 = vshrl.u32 %v58, 7
  %v60 = vsub.s32 %v57, %v59
  %v61 = vrot.slane %v47, %v60
  %v62 = vcombine.low %v54, %v61
  %v64 = vunpack.c.l.s4 1966171168
  %v65 = vunpack.c.0.s8 %v64
  %v66 = vlaneseq
  %v67 = vshrl.u32 %v66, 7
  %v68 = vsub.s32 %v65, %v67
  %v69 = vrot.slane %v62, %v68
  %v71 = vadd.f32 %v17, %v69
  %v72 = vlaneseq
  %vm73 = vcmp.ge.s32.totalorder %v72, 0
  %vm74 = vcmp.lt.s32.totalorder %v72, 512
  %vm75 = vmand %vm73, %vm74
  %76 = vst.msk [vmem:[%s1] ss:$2 sm:$0xf] %vm75, %v71
  %s77 = scalar_lea.vmem %s1, 1
  %v78 = vld [vmem:[%s77] ss:$2 sm:$0xf]
  %v79 = vmul.f32 %v13, %v13
  %v80 = vmul.f32 %v14, %v14
  %v81 = vmul.f32 %v15, %v15
  %v82 = vmul.f32 %v16, %v16
  %v83 = vrot.slane %v79, 4
  %v84 = vadd.f32 %v79, %v83
  %v85 = vrot.slane %v84, 2
  %v86 = vadd.f32 %v84, %v85
  %v87 = vrot.slane %v86, 1
  %v88 = vadd.f32 %v86, %v87
  %v89 = vrot.slane %v80, 4
  %v90 = vadd.f32 %v80, %v89
  %v91 = vrot.slane %v90, 2
  %v92 = vadd.f32 %v90, %v91
  %v93 = vrot.slane %v92, 1
  %v94 = vadd.f32 %v92, %v93
  %v95 = vrot.slane %v81, 4
  %v96 = vadd.f32 %v81, %v95
  %v97 = vrot.slane %v96, 2
  %v98 = vadd.f32 %v96, %v97
  %v99 = vrot.slane %v98, 1
  %v100 = vadd.f32 %v98, %v99
  %v101 = vrot.slane %v82, 4
  %v102 = vadd.f32 %v82, %v101
  %v103 = vrot.slane %v102, 2
  %v104 = vadd.f32 %v102, %v103
  %v105 = vrot.slane %v104, 1
  %v106 = vadd.f32 %v104, %v105
  %v111 = vcombine.low %v88, %v94
  %v112 = vcombine.low %v100, %v106
  %v114 = vunpack.c.l.s4 1966171168
  %v115 = vunpack.c.0.s8 %v114
  %v116 = vlaneseq
  %v117 = vshrl.u32 %v116, 7
  %v118 = vsub.s32 %v115, %v117
  %v119 = vrot.slane %v111, %v118
  %v121 = vunpack.c.l.s4 1966171168
  %v122 = vunpack.c.0.s8 %v121
  %v123 = vlaneseq
  %v124 = vshrl.u32 %v123, 7
  %v125 = vsub.s32 %v122, %v124
  %v126 = vrot.slane %v112, %v125
  %v127 = vcombine.low %v119, %v126
  %v129 = vunpack.c.l.s4 1966171168
  %v130 = vunpack.c.0.s8 %v129
  %v131 = vlaneseq
  %v132 = vshrl.u32 %v131, 7
  %v133 = vsub.s32 %v130, %v132
  %v134 = vrot.slane %v127, %v133
  %v136 = vadd.f32 %v78, %v134
  %137 = vst.msk [vmem:[%s77] ss:$2 sm:$0xf] %vm75, %v136
  // Predicated region
  $region10: #{generator_forward.10} parent=0 // pred_check
    _
  $region11: #{generator_forward.10} parent=0 // pred_check_branch
    %139 = sbr.rel (0) target = $region13
  $region12: #{generator_forward.10} parent=0 // pred_region
    _
  $region13: #{generator_forward.10} parent=0 // pred_fallthru
    _
  // Predicated region
  $region14: #{generator_forward.10} parent=0 // pred_check
    _
  $region15: #{generator_forward.10} parent=0 // pred_check_branch
    %141 = sbr.rel (0) target = $region17
  $region16: #{generator_forward.10} parent=0 // pred_region
    _
  $region17: #{generator_forward.10} parent=0 // pred_fallthru
    _

// kernel: generator_forward.9
$region0: #{generator_forward.9}
  #allocation0 [shape = 'u32[]', space=smem, size = 0x4, offset = 0x4, fixed_abs, tag = 'smem constant byte address 0x4 - core index']
  #allocation1 [shape = 'u32[144,128]{1,0:T(1,128)}', space=vmem, size = 0x12000, scoped, tag = 'internal scratch']
  %s0 = inlined_call_operand.vmem [shape: f32[8,8], index: 0, kind: input, shape index: {}]
  %s1 = inlined_call_operand.vmem [shape: f32[8,2048], index: 1, kind: input, shape index: {}]
  %s2 = inlined_call_operand.vmem [shape: f32[1,8], index: 2, kind: input, shape index: {}]
  %s3 = inlined_call_operand.vmem [shape: f32[1,8], index: 3, kind: input, shape index: {}]
  %s4 = inlined_call_operand.vmem [shape: f32[8,2048], index: 4, kind: output, shape index: {}]
  %s5 = sld [smem:[#allocation0]]
  $region30: #{generator_forward.9} parent=0
    _
  %s7 = ssub.s32 1, %s5
  %s8 = scalar_select 0, %s7, %s5
  // Predicated region
  $region2: #{generator_forward.9} parent=0 // pred_check
    _
  $region3: #{generator_forward.9} parent=0 // pred_check_branch
    %10 = sbr.rel (0) target = $region5
  $region4: #{generator_forward.9} parent=0 // pred_region
    _
  $region5: #{generator_forward.9} parent=0 // pred_fallthru
    _
  // Predicated region
  $region6: #{generator_forward.9} parent=0 // pred_check
    _
  $region7: #{generator_forward.9} parent=0 // pred_check_branch
    %12 = sbr.rel (0) target = $region9
  $region8: #{generator_forward.9} parent=0 // pred_region
    _
  $region9: #{generator_forward.9} parent=0 // pred_fallthru
    _
  // Predicated region
  $region10: #{generator_forward.9} parent=0 // pred_check
    _
  $region11: #{generator_forward.9} parent=0 // pred_check_branch
    %14 = sbr.rel (0) target = $region13
  $region12: #{generator_forward.9} parent=0 // pred_region
    _
  $region13: #{generator_forward.9} parent=0 // pred_fallthru
    _
  // Predicated region
  $region14: #{generator_forward.9} parent=0 // pred_check
    _
  $region15: #{generator_forward.9} parent=0 // pred_check_branch
    %16 = sbr.rel (0) target = $region17
  $region16: #{generator_forward.9} parent=0 // pred_region
    _
  $region17: #{generator_forward.9} parent=0 // pred_fallthru
    _
  %p17 = scmp.eq.s32.totalorder 0, 0
  // Predicated region
  $region18: #{generator_forward.9} parent=0 // pred_check
    %p18 = pneg %p17
  $region19: #{generator_forward.9} parent=0 // pred_check_branch
    %20 = sbr.rel (%p18) target = $region21
  $region20: #{generator_forward.9} parent=0 // pred_region
    %21 = vst [vmem:[%s4] sm:$0xff] 0.0
    %22 = vst [vmem:[%s4 + $0x8] sm:$0xff] 0.0
    %23 = vst [vmem:[%s4 + $0x10] sm:$0xff] 0.0
    %24 = vst [vmem:[%s4 + $0x18] sm:$0xff] 0.0
    %25 = vst [vmem:[%s4 + $0x20] sm:$0xff] 0.0
    %26 = vst [vmem:[%s4 + $0x28] sm:$0xff] 0.0
    %27 = vst [vmem:[%s4 + $0x30] sm:$0xff] 0.0
    %28 = vst [vmem:[%s4 + $0x38] sm:$0xff] 0.0
    %29 = vst [vmem:[%s4 + $0x40] sm:$0xff] 0.0
    %30 = vst [vmem:[%s4 + $0x48] sm:$0xff] 0.0
    %31 = vst [vmem:[%s4 + $0x50] sm:$0xff] 0.0
    %32 = vst [vmem:[%s4 + $0x58] sm:$0xff] 0.0
    %33 = vst [vmem:[%s4 + $0x60] sm:$0xff] 0.0
    %34 = vst [vmem:[%s4 + $0x68] sm:$0xff] 0.0
    %35 = vst [vmem:[%s4 + $0x70] sm:$0xff] 0.0
    %36 = vst [vmem:[%s4 + $0x78] sm:$0xff] 0.0
  $region21: #{generator_forward.9} parent=0 // pred_fallthru
    _
  %v37 = vld [vmem:[%s0] sm:$0xff]
  %v38 = vld [vmem:[%s4] sm:$0xff]
  %v39 = vld [vmem:[%s4 + $0x8] sm:$0xff]
  %v40 = vld [vmem:[%s4 + $0x10] sm:$0xff]
  %v41 = vld [vmem:[%s4 + $0x18] sm:$0xff]
  %v42 = vld [vmem:[%s4 + $0x20] sm:$0xff]
  %v43 = vld [vmem:[%s4 + $0x28] sm:$0xff]
  %v44 = vld [vmem:[%s4 + $0x30] sm:$0xff]
  %v45 = vld [vmem:[%s4 + $0x38] sm:$0xff]
  %v46 = vld [vmem:[%s4 + $0x40] sm:$0xff]
  %v47 = vld [vmem:[%s4 + $0x48] sm:$0xff]
  %v48 = vld [vmem:[%s4 + $0x50] sm:$0xff]
  %v49 = vld [vmem:[%s4 + $0x58] sm:$0xff]
  %v50 = vld [vmem:[%s4 + $0x60] sm:$0xff]
  %v51 = vld [vmem:[%s4 + $0x68] sm:$0xff]
  %v52 = vld [vmem:[%s4 + $0x70] sm:$0xff]
  %v53 = vld [vmem:[%s4 + $0x78] sm:$0xff]
  %v54 = vld [vmem:[%s1] sm:$0xff]
  %v55 = vld [vmem:[%s1 + $0x8] sm:$0xff]
  %v56 = vld [vmem:[%s1 + $0x10] sm:$0xff]
  %v57 = vld [vmem:[%s1 + $0x18] sm:$0xff]
  %v58 = vld [vmem:[%s1 + $0x20] sm:$0xff]
  %v59 = vld [vmem:[%s1 + $0x28] sm:$0xff]
  %v60 = vld [vmem:[%s1 + $0x30] sm:$0xff]
  %v61 = vld [vmem:[%s1 + $0x38] sm:$0xff]
  %v62 = vld [vmem:[%s1 + $0x40] sm:$0xff]
  %v63 = vld [vmem:[%s1 + $0x48] sm:$0xff]
  %v64 = vld [vmem:[%s1 + $0x50] sm:$0xff]
  %v65 = vld [vmem:[%s1 + $0x58] sm:$0xff]
  %v66 = vld [vmem:[%s1 + $0x60] sm:$0xff]
  %v67 = vld [vmem:[%s1 + $0x68] sm:$0xff]
  %v68 = vld [vmem:[%s1 + $0x70] sm:$0xff]
  %v69 = vld [vmem:[%s1 + $0x78] sm:$0xff]
  %vm70 = vcmask 64512
  %v72 = vsel %vm70, %v37, 0
  %74 = vmatprep.subr.mxu0 0.0
  %75 = vmatpush1.msra.mxu0 0.0
  %76 = vmatprep.subr.mxu0 0.0
  %77 = vmatpush1.msra.mxu0 0.0
  %78 = vmatprep.subr.mxu0 0.0
  %79 = vmatpush1.msra.mxu0 0.0
  %80 = vmatprep.subr.mxu0 0.0
  %81 = vmatpush1.msra.mxu0 0.0
  %82 = vmatprep.subr.mxu0 0.0
  %83 = vmatpush1.msra.mxu0 0.0
  %84 = vmatprep.subr.mxu0 0.0
  %85 = vmatpush1.msra.mxu0 0.0
  %86 = vmatprep.subr.mxu0 0.0
  %87 = vmatpush1.msra.mxu0 0.0
  %88 = vmatprep.subr.mxu0 0.0
  %89 = vmatpush1.msra.mxu0 0.0
  %90 = vmatprep.subr.mxu0 0.0
  %91 = vmatpush1.msra.mxu0 0.0
  %92 = vmatprep.subr.mxu0 0.0
  %93 = vmatpush1.msra.mxu0 0.0
  %94 = vmatprep.subr.mxu0 0.0
  %95 = vmatpush1.msra.mxu0 0.0
  %96 = vmatprep.subr.mxu0 0.0
  %97 = vmatpush1.msra.mxu0 0.0
  %98 = vmatprep.subr.mxu0 0.0
  %99 = vmatpush1.msra.mxu0 0.0
  %100 = vmatprep.subr.mxu0 0.0
  %101 = vmatpush1.msra.mxu0 0.0
  %102 = vmatprep.subr.mxu0 0.0
  %103 = vmatpush1.msra.mxu0 0.0
  %104 = vmatprep.subr.mxu0 %v55
  %105 = vmatpush1.msra.mxu0 %v54
  %106 = vmatprep.subr.mxu0 0.0
  %107 = vmatpush2.msra.mxu0 0.0
  %108 = vmatprep.subr.mxu0 0.0
  %109 = vmatpush2.msra.mxu0 0.0
  %110 = vmatprep.subr.mxu0 0.0
  %111 = vmatpush2.msra.mxu0 0.0
  %112 = vmatprep.subr.mxu0 0.0
  %113 = vmatpush2.msra.mxu0 0.0
  %114 = vmatprep.subr.mxu0 0.0
  %115 = vmatpush2.msra.mxu0 0.0
  %116 = vmatprep.subr.mxu0 0.0
  %117 = vmatpush2.msra.mxu0 0.0
  %118 = vmatprep.subr.mxu0 0.0
  %119 = vmatpush2.msra.mxu0 0.0
  %120 = vmatprep.subr.mxu0 0.0
  %121 = vmatpush2.msra.mxu0 0.0
  %122 = vmatprep.subr.mxu0 0.0
  %123 = vmatpush2.msra.mxu0 0.0
  %124 = vmatprep.subr.mxu0 0.0
  %125 = vmatpush2.msra.mxu0 0.0
  %126 = vmatprep.subr.mxu0 0.0
  %127 = vmatpush2.msra.mxu0 0.0
  %128 = vmatprep.subr.mxu0 0.0
  %129 = vmatpush2.msra.mxu0 0.0
  %130 = vmatprep.subr.mxu0 0.0
  %131 = vmatpush2.msra.mxu0 0.0
  %132 = vmatprep.subr.mxu0 0.0
  %133 = vmatpush2.msra.mxu0 0.0
  %134 = vmatprep.subr.mxu0 0.0
  %135 = vmatpush2.msra.mxu0 0.0
  %136 = vmatprep.subr.mxu0 0.0
  %137 = vmatpush2.msra.mxu0 0.0
  %138 = vmatprep.mubr.f32.mxu0 0.0
  %139 = vmatmul.mubr.f32.gmra.mxu0 %v72
  %v140 = vpop.f32.mrf.mxu0
  %v141 = vadd.f32 0.0, %v140
  %v142 = vpop.f32.mrf.mxu0
  %v143 = vadd.f32 0.0, %v142
  %144 = vdwg.mxu0
  %145 = vmatprep.subr.mxu0 0.0
  %146 = vmatpush1.msra.mxu0 0.0
  %147 = vmatprep.subr.mxu0 0.0
  %148 = vmatpush1.msra.mxu0 0.0
  %149 = vmatprep.subr.mxu0 0.0
  %150 = vmatpush1.msra.mxu0 0.0
  %151 = vmatprep.subr.mxu0 0.0
  %152 = vmatpush1.msra.mxu0 0.0
  %153 = vmatprep.subr.mxu0 0.0
  %154 = vmatpush1.msra.mxu0 0.0
  %155 = vmatprep.subr.mxu0 0.0
  %156 = vmatpush1.msra.mxu0 0.0
  %157 = vmatprep.subr.mxu0 0.0
  %158 = vmatpush1.msra.mxu0 0.0
  %159 = vmatprep.subr.mxu0 0.0
  %160 = vmatpush1.msra.mxu0 0.0
  %161 = vmatprep.subr.mxu0 0.0
  %162 = vmatpush1.msra.mxu0 0.0
  %163 = vmatprep.subr.mxu0 0.0
  %164 = vmatpush1.msra.mxu0 0.0
  %165 = vmatprep.subr.mxu0 0.0
  %166 = vmatpush1.msra.mxu0 0.0
  %167 = vmatprep.subr.mxu0 0.0
  %168 = vmatpush1.msra.mxu0 0.0
  %169 = vmatprep.subr.mxu0 0.0
  %170 = vmatpush1.msra.mxu0 0.0
  %171 = vmatprep.subr.mxu0 0.0
  %172 = vmatpush1.msra.mxu0 0.0
  %173 = vmatprep.subr.mxu0 0.0
  %174 = vmatpush1.msra.mxu0 0.0
  %175 = vmatprep.subr.mxu0 %v57
  %176 = vmatpush1.msra.mxu0 %v56
  %177 = vmatprep.subr.mxu0 0.0
  %178 = vmatpush2.msra.mxu0 0.0
  %179 = vmatprep.subr.mxu0 0.0
  %180 = vmatpush2.msra.mxu0 0.0
  %181 = vmatprep.subr.mxu0 0.0
  %182 = vmatpush2.msra.mxu0 0.0
  %183 = vmatprep.subr.mxu0 0.0
  %184 = vmatpush2.msra.mxu0 0.0
  %185 = vmatprep.subr.mxu0 0.0
  %186 = vmatpush2.msra.mxu0 0.0
  %187 = vmatprep.subr.mxu0 0.0
  %188 = vmatpush2.msra.mxu0 0.0
  %189 = vmatprep.subr.mxu0 0.0
  %190 = vmatpush2.msra.mxu0 0.0
  %191 = vmatprep.subr.mxu0 0.0
  %192 = vmatpush2.msra.mxu0 0.0
  %193 = vmatprep.subr.mxu0 0.0
  %194 = vmatpush2.msra.mxu0 0.0
  %195 = vmatprep.subr.mxu0 0.0
  %196 = vmatpush2.msra.mxu0 0.0
  %197 = vmatprep.subr.mxu0 0.0
  %198 = vmatpush2.msra.mxu0 0.0
  %199 = vmatprep.subr.mxu0 0.0
  %200 = vmatpush2.msra.mxu0 0.0
  %201 = vmatprep.subr.mxu0 0.0
  %202 = vmatpush2.msra.mxu0 0.0
  %203 = vmatprep.subr.mxu0 0.0
  %204 = vmatpush2.msra.mxu0 0.0
  %205 = vmatprep.subr.mxu0 0.0
  %206 = vmatpush2.msra.mxu0 0.0
  %207 = vmatprep.subr.mxu0 0.0
  %208 = vmatpush2.msra.mxu0 0.0
  %209 = vmatprep.mubr.f32.mxu0 0.0
  %210 = vmatmul.mubr.f32.gmra.mxu0 %v72
  %v211 = vpop.f32.mrf.mxu0
  %v212 = vadd.f32 0.0, %v211
  %v213 = vpop.f32.mrf.mxu0
  %v214 = vadd.f32 0.0, %v213
  %215 = vdwg.mxu0
  %216 = vmatprep.subr.mxu0 0.0
  %217 = vmatpush1.msra.mxu0 0.0
  %218 = vmatprep.subr.mxu0 0.0
  %219 = vmatpush1.msra.mxu0 0.0
  %220 = vmatprep.subr.mxu0 0.0
  %221 = vmatpush1.msra.mxu0 0.0
  %222 = vmatprep.subr.mxu0 0.0
  %223 = vmatpush1.msra.mxu0 0.0
  %224 = vmatprep.subr.mxu0 0.0
  %225 = vmatpush1.msra.mxu0 0.0
  %226 = vmatprep.subr.mxu0 0.0
  %227 = vmatpush1.msra.mxu0 0.0
  %228 = vmatprep.subr.mxu0 0.0
  %229 = vmatpush1.msra.mxu0 0.0
  %230 = vmatprep.subr.mxu0 0.0
  %231 = vmatpush1.msra.mxu0 0.0
  %232 = vmatprep.subr.mxu0 0.0
  %233 = vmatpush1.msra.mxu0 0.0
  %234 = vmatprep.subr.mxu0 0.0
  %235 = vmatpush1.msra.mxu0 0.0
  %236 = vmatprep.subr.mxu0 0.0
  %237 = vmatpush1.msra.mxu0 0.0
  %238 = vmatprep.subr.mxu0 0.0
  %239 = vmatpush1.msra.mxu0 0.0
  %240 = vmatprep.subr.mxu0 0.0
  %241 = vmatpush1.msra.mxu0 0.0
  %242 = vmatprep.subr.mxu0 0.0
  %243 = vmatpush1.msra.mxu0 0.0
  %244 = vmatprep.subr.mxu0 0.0
  %245 = vmatpush1.msra.mxu0 0.0
  %246 = vmatprep.subr.mxu0 %v59
  %247 = vmatpush1.msra.mxu0 %v58
  %248 = vmatprep.subr.mxu0 0.0
  %249 = vmatpush2.msra.mxu0 0.0
  %250 = vmatprep.subr.mxu0 0.0
  %251 = vmatpush2.msra.mxu0 0.0
  %252 = vmatprep.subr.mxu0 0.0
  %253 = vmatpush2.msra.mxu0 0.0
  %254 = vmatprep.subr.mxu0 0.0
  %255 = vmatpush2.msra.mxu0 0.0
  %256 = vmatprep.subr.mxu0 0.0
  %257 = vmatpush2.msra.mxu0 0.0
  %258 = vmatprep.subr.mxu0 0.0
  %259 = vmatpush2.msra.mxu0 0.0
  %260 = vmatprep.subr.mxu0 0.0
  %261 = vmatpush2.msra.mxu0 0.0
  %262 = vmatprep.subr.mxu0 0.0
  %263 = vmatpush2.msra.mxu0 0.0
  %264 = vmatprep.subr.mxu0 0.0
  %265 = vmatpush2.msra.mxu0 0.0
  %266 = vmatprep.subr.mxu0 0.0
  %267 = vmatpush2.msra.mxu0 0.0
  %268 = vmatprep.subr.mxu0 0.0
  %269 = vmatpush2.msra.mxu0 0.0
  %270 = vmatprep.subr.mxu0 0.0
  %271 = vmatpush2.msra.mxu0 0.0
  %272 = vmatprep.subr.mxu0 0.0
  %273 = vmatpush2.msra.mxu0 0.0
  %274 = vmatprep.subr.mxu0 0.0
  %275 = vmatpush2.msra.mxu0 0.0
  %276 = vmatprep.subr.mxu0 0.0
  %277 = vmatpush2.msra.mxu0 0.0
  %278 = vmatprep.subr.mxu0 0.0
  %279 = vmatpush2.msra.mxu0 0.0
  %280 = vmatprep.mubr.f32.mxu0 0.0
  %281 = vmatmul.mubr.f32.gmra.mxu0 %v72
  %v282 = vpop.f32.mrf.mxu0
  %v283 = vadd.f32 0.0, %v282
  %v284 = vpop.f32.mrf.mxu0
  %v285 = vadd.f32 0.0, %v284
  %286 = vdwg.mxu0
  %287 = vmatprep.subr.mxu0 0.0
  %288 = vmatpush1.msra.mxu0 0.0
  %289 = vmatprep.subr.mxu0 0.0
  %290 = vmatpush1.msra.mxu0 0.0
  %291 = vmatprep.subr.mxu0 0.0
  %292 = vmatpush1.msra.mxu0 0.0
  %293 = vmatprep.subr.mxu0 0.0
  %294 = vmatpush1.msra.mxu0 0.0
  %295 = vmatprep.subr.mxu0 0.0
  %296 = vmatpush1.msra.mxu0 0.0
  %297 = vmatprep.subr.mxu0 0.0
  %298 = vmatpush1.msra.mxu0 0.0
  %299 = vmatprep.subr.mxu0 0.0
  %300 = vmatpush1.msra.mxu0 0.0
  %301 = vmatprep.subr.mxu0 0.0
  %302 = vmatpush1.msra.mxu0 0.0
  %303 = vmatprep.subr.mxu0 0.0
  %304 = vmatpush1.msra.mxu0 0.0
  %305 = vmatprep.subr.mxu0 0.0
  %306 = vmatpush1.msra.mxu0 0.0
  %307 = vmatprep.subr.mxu0 0.0
  %308 = vmatpush1.msra.mxu0 0.0
  %309 = vmatprep.subr.mxu0 0.0
  %310 = vmatpush1.msra.mxu0 0.0
  %311 = vmatprep.subr.mxu0 0.0
  %312 = vmatpush1.msra.mxu0 0.0
  %313 = vmatprep.subr.mxu0 0.0
  %314 = vmatpush1.msra.mxu0 0.0
  %315 = vmatprep.subr.mxu0 0.0
  %316 = vmatpush1.msra.mxu0 0.0
  %317 = vmatprep.subr.mxu0 %v61
  %318 = vmatpush1.msra.mxu0 %v60
  %319 = vmatprep.subr.mxu0 0.0
  %320 = vmatpush2.msra.mxu0 0.0
  %321 = vmatprep.subr.mxu0 0.0
  %322 = vmatpush2.msra.mxu0 0.0
  %323 = vmatprep.subr.mxu0 0.0
  %324 = vmatpush2.msra.mxu0 0.0
  %325 = vmatprep.subr.mxu0 0.0
  %326 = vmatpush2.msra.mxu0 0.0
  %327 = vmatprep.subr.mxu0 0.0
  %328 = vmatpush2.msra.mxu0 0.0
  %329 = vmatprep.subr.mxu0 0.0
  %330 = vmatpush2.msra.mxu0 0.0
  %331 = vmatprep.subr.mxu0 0.0
  %332 = vmatpush2.msra.mxu0 0.0
  %333 = vmatprep.subr.mxu0 0.0
  %334 = vmatpush2.msra.mxu0 0.0
  %335 = vmatprep.subr.mxu0 0.0
  %336 = vmatpush2.msra.mxu0 0.0
  %337 = vmatprep.subr.mxu0 0.0
  %338 = vmatpush2.msra.mxu0 0.0
  %339 = vmatprep.subr.mxu0 0.0
  %340 = vmatpush2.msra.mxu0 0.0
  %341 = vmatprep.subr.mxu0 0.0
  %342 = vmatpush2.msra.mxu0 0.0
  %343 = vmatprep.subr.mxu0 0.0
  %344 = vmatpush2.msra.mxu0 0.0
  %345 = vmatprep.subr.mxu0 0.0
  %346 = vmatpush2.msra.mxu0 0.0
  %347 = vmatprep.subr.mxu0 0.0
  %348 = vmatpush2.msra.mxu0 0.0
  %349 = vmatprep.subr.mxu0 0.0
  %350 = vmatpush2.msra.mxu0 0.0
  %351 = vmatprep.mubr.f32.mxu0 0.0
  %352 = vmatmul.mubr.f32.gmra.mxu0 %v72
  %v353 = vpop.f32.mrf.mxu0
  %v354 = vadd.f32 0.0, %v353
  %v355 = vpop.f32.mrf.mxu0
  %v356 = vadd.f32 0.0, %v355
  %357 = vdwg.mxu0
  %358 = vmatprep.subr.mxu0 0.0
  %359 = vmatpush1.msra.mxu0 0.0
  %360 = vmatprep.subr.mxu0 0.0
  %361 = vmatpush1.msra.mxu0 0.0
  %362 = vmatprep.subr.mxu0 0.0
  %363 = vmatpush1.msra.mxu0 0.0
  %364 = vmatprep.subr.mxu0 0.0
  %365 = vmatpush1.msra.mxu0 0.0
  %366 = vmatprep.subr.mxu0 0.0
  %367 = vmatpush1.msra.mxu0 0.0
  %368 = vmatprep.subr.mxu0 0.0
  %369 = vmatpush1.msra.mxu0 0.0
  %370 = vmatprep.subr.mxu0 0.0
  %371 = vmatpush1.msra.mxu0 0.0
  %372 = vmatprep.subr.mxu0 0.0
  %373 = vmatpush1.msra.mxu0 0.0
  %374 = vmatprep.subr.mxu0 0.0
  %375 = vmatpush1.msra.mxu0 0.0
  %376 = vmatprep.subr.mxu0 0.0
  %377 = vmatpush1.msra.mxu0 0.0
  %378 = vmatprep.subr.mxu0 0.0
  %379 = vmatpush1.msra.mxu0 0.0
  %380 = vmatprep.subr.mxu0 0.0
  %381 = vmatpush1.msra.mxu0 0.0
  %382 = vmatprep.subr.mxu0 0.0
  %383 = vmatpush1.msra.mxu0 0.0
  %384 = vmatprep.subr.mxu0 0.0
  %385 = vmatpush1.msra.mxu0 0.0
  %386 = vmatprep.subr.mxu0 0.0
  %387 = vmatpush1.msra.mxu0 0.0
  %388 = vmatprep.subr.mxu0 %v63
  %389 = vmatpush1.msra.mxu0 %v62
  %390 = vmatprep.subr.mxu0 0.0
  %391 = vmatpush2.msra.mxu0 0.0
  %392 = vmatprep.subr.mxu0 0.0
  %393 = vmatpush2.msra.mxu0 0.0
  %394 = vmatprep.subr.mxu0 0.0
  %395 = vmatpush2.msra.mxu0 0.0
  %396 = vmatprep.subr.mxu0 0.0
  %397 = vmatpush2.msra.mxu0 0.0
  %398 = vmatprep.subr.mxu0 0.0
  %399 = vmatpush2.msra.mxu0 0.0
  %400 = vmatprep.subr.mxu0 0.0
  %401 = vmatpush2.msra.mxu0 0.0
  %402 = vmatprep.subr.mxu0 0.0
  %403 = vmatpush2.msra.mxu0 0.0
  %404 = vmatprep.subr.mxu0 0.0
  %405 = vmatpush2.msra.mxu0 0.0
  %406 = vmatprep.subr.mxu0 0.0
  %407 = vmatpush2.msra.mxu0 0.0
  %408 = vmatprep.subr.mxu0 0.0
  %409 = vmatpush2.msra.mxu0 0.0
  %410 = vmatprep.subr.mxu0 0.0
  %411 = vmatpush2.msra.mxu0 0.0
  %412 = vmatprep.subr.mxu0 0.0
  %413 = vmatpush2.msra.mxu0 0.0
  %414 = vmatprep.subr.mxu0 0.0
  %415 = vmatpush2.msra.mxu0 0.0
  %416 = vmatprep.subr.mxu0 0.0
  %417 = vmatpush2.msra.mxu0 0.0
  %418 = vmatprep.subr.mxu0 0.0
  %419 = vmatpush2.msra.mxu0 0.0
  %420 = vmatprep.subr.mxu0 0.0
  %421 = vmatpush2.msra.mxu0 0.0
  %422 = vmatprep.mubr.f32.mxu0 0.0
  %423 = vmatmul.mubr.f32.gmra.mxu0 %v72
  %v424 = vpop.f32.mrf.mxu0
  %v425 = vadd.f32 0.0, %v424
  %v426 = vpop.f32.mrf.mxu0
  %v427 = vadd.f32 0.0, %v426
  %428 = vdwg.mxu0
  %429 = vmatprep.subr.mxu0 0.0
  %430 = vmatpush1.msra.mxu0 0.0
  %431 = vmatprep.subr.mxu0 0.0
  %432 = vmatpush1.msra.mxu0 0.0
  %433 = vmatprep.subr.mxu0 0.0
  %434 = vmatpush1.msra.mxu0 0.0
  %435 = vmatprep.subr.mxu0 0.0
  %436 = vmatpush1.msra.mxu0 0.0
  %437 = vmatprep.subr.mxu0 0.0
  %438 = vmatpush1.msra.mxu0 0.0
  %439 = vmatprep.subr.mxu0 0.0
  %440 = vmatpush1.msra.mxu0 0.0
  %441 = vmatprep.subr.mxu0 0.0
  %442 = vmatpush1.msra.mxu0 0.0
  %443 = vmatprep.subr.mxu0 0.0
  %444 = vmatpush1.msra.mxu0 0.0
  %445 = vmatprep.subr.mxu0 0.0
  %446 = vmatpush1.msra.mxu0 0.0
  %447 = vmatprep.subr.mxu0 0.0
  %448 = vmatpush1.msra.mxu0 0.0
  %449 = vmatprep.subr.mxu0 0.0
  %450 = vmatpush1.msra.mxu0 0.0
  %451 = vmatprep.subr.mxu0 0.0
  %452 = vmatpush1.msra.mxu0 0.0
  %453 = vmatprep.subr.mxu0 0.0
  %454 = vmatpush1.msra.mxu0 0.0
  %455 = vmatprep.subr.mxu0 0.0
  %456 = vmatpush1.msra.mxu0 0.0
  %457 = vmatprep.subr.mxu0 0.0
  %458 = vmatpush1.msra.mxu0 0.0
  %459 = vmatprep.subr.mxu0 %v65
  %460 = vmatpush1.msra.mxu0 %v64
  %461 = vmatprep.subr.mxu0 0.0
  %462 = vmatpush2.msra.mxu0 0.0
  %463 = vmatprep.subr.mxu0 0.0
  %464 = vmatpush2.msra.mxu0 0.0
  %465 = vmatprep.subr.mxu0 0.0
  %466 = vmatpush2.msra.mxu0 0.0
  %467 = vmatprep.subr.mxu0 0.0
  %468 = vmatpush2.msra.mxu0 0.0
  %469 = vmatprep.subr.mxu0 0.0
  %470 = vmatpush2.msra.mxu0 0.0
  %471 = vmatprep.subr.mxu0 0.0
  %472 = vmatpush2.msra.mxu0 0.0
  %473 = vmatprep.subr.mxu0 0.0
  %474 = vmatpush2.msra.mxu0 0.0
  %475 = vmatprep.subr.mxu0 0.0
  %476 = vmatpush2.msra.mxu0 0.0
  %477 = vmatprep.subr.mxu0 0.0
  %478 = vmatpush2.msra.mxu0 0.0
  %479 = vmatprep.subr.mxu0 0.0
  %480 = vmatpush2.msra.mxu0 0.0
  %481 = vmatprep.subr.mxu0 0.0
  %482 = vmatpush2.msra.mxu0 0.0
  %483 = vmatprep.subr.mxu0 0.0
  %484 = vmatpush2.msra.mxu0 0.0
  %485 = vmatprep.subr.mxu0 0.0
  %486 = vmatpush2.msra.mxu0 0.0
  %487 = vmatprep.subr.mxu0 0.0
  %488 = vmatpush2.msra.mxu0 0.0
  %489 = vmatprep.subr.mxu0 0.0
  %490 = vmatpush2.msra.mxu0 0.0
  %491 = vmatprep.subr.mxu0 0.0
  %492 = vmatpush2.msra.mxu0 0.0
  %493 = vmatprep.mubr.f32.mxu0 0.0
  %494 = vmatmul.mubr.f32.gmra.mxu0 %v72
  %v495 = vpop.f32.mrf.mxu0
  %v496 = vadd.f32 0.0, %v495
  %v497 = vpop.f32.mrf.mxu0
  %v498 = vadd.f32 0.0, %v497
  %499 = vdwg.mxu0
  %500 = vmatprep.subr.mxu0 0.0
  %501 = vmatpush1.msra.mxu0 0.0
  %502 = vmatprep.subr.mxu0 0.0
  %503 = vmatpush1.msra.mxu0 0.0
  %504 = vmatprep.subr.mxu0 0.0
  %505 = vmatpush1.msra.mxu0 0.0
  %506 = vmatprep.subr.mxu0 0.0
  %507 = vmatpush1.msra.mxu0 0.0
  %508 = vmatprep.subr.mxu0 0.0
  %509 = vmatpush1.msra.mxu0 0.0
  %510 = vmatprep.subr.mxu0 0.0
  %511 = vmatpush1.msra.mxu0 0.0
  %512 = vmatprep.subr.mxu0 0.0
  %513 = vmatpush1.msra.mxu0 0.0
  %514 = vmatprep.subr.mxu0 0.0
  %515 = vmatpush1.msra.mxu0 0.0
  %516 = vmatprep.subr.mxu0 0.0
  %517 = vmatpush1.msra.mxu0 0.0
  %518 = vmatprep.subr.mxu0 0.0
  %519 = vmatpush1.msra.mxu0 0.0
  %520 = vmatprep.subr.mxu0 0.0
  %521 = vmatpush1.msra.mxu0 0.0
  %522 = vmatprep.subr.mxu0 0.0
  %523 = vmatpush1.msra.mxu0 0.0
  %524 = vmatprep.subr.mxu0 0.0
  %525 = vmatpush1.msra.mxu0 0.0
  %526 = vmatprep.subr.mxu0 0.0
  %527 = vmatpush1.msra.mxu0 0.0
  %528 = vmatprep.subr.mxu0 0.0
  %529 = vmatpush1.msra.mxu0 0.0
  %530 = vmatprep.subr.mxu0 %v67
  %531 = vmatpush1.msra.mxu0 %v66
  %532 = vmatprep.subr.mxu0 0.0
  %533 = vmatpush2.msra.mxu0 0.0
  %534 = vmatprep.subr.mxu0 0.0
  %535 = vmatpush2.msra.mxu0 0.0
  %536 = vmatprep.subr.mxu0 0.0
  %537 = vmatpush2.msra.mxu0 0.0
  %538 = vmatprep.subr.mxu0 0.0
  %539 = vmatpush2.msra.mxu0 0.0
  %540 = vmatprep.subr.mxu0 0.0
  %541 = vmatpush2.msra.mxu0 0.0
  %542 = vmatprep.subr.mxu0 0.0
  %543 = vmatpush2.msra.mxu0 0.0
  %544 = vmatprep.subr.mxu0 0.0
  %545 = vmatpush2.msra.mxu0 0.0
  %546 = vmatprep.subr.mxu0 0.0
  %547 = vmatpush2.msra.mxu0 0.0
  %548 = vmatprep.subr.mxu0 0.0
  %549 = vmatpush2.msra.mxu0 0.0
  %550 = vmatprep.subr.mxu0 0.0
  %551 = vmatpush2.msra.mxu0 0.0
  %552 = vmatprep.subr.mxu0 0.0
  %553 = vmatpush2.msra.mxu0 0.0
  %554 = vmatprep.subr.mxu0 0.0
  %555 = vmatpush2.msra.mxu0 0.0
  %556 = vmatprep.subr.mxu0 0.0
  %557 = vmatpush2.msra.mxu0 0.0
  %558 = vmatprep.subr.mxu0 0.0
  %559 = vmatpush2.msra.mxu0 0.0
  %560 = vmatprep.subr.mxu0 0.0
  %561 = vmatpush2.msra.mxu0 0.0
  %562 = vmatprep.subr.mxu0 0.0
  %563 = vmatpush2.msra.mxu0 0.0
  %564 = vmatprep.mubr.f32.mxu0 0.0
  %565 = vmatmul.mubr.f32.gmra.mxu0 %v72
  %v566 = vpop.f32.mrf.mxu0
  %v567 = vadd.f32 0.0, %v566
  %v568 = vpop.f32.mrf.mxu0
  %v569 = vadd.f32 0.0, %v568
  %570 = vdwg.mxu0
  %571 = vmatprep.subr.mxu0 0.0
  %572 = vmatpush1.msra.mxu0 0.0
  %573 = vmatprep.subr.mxu0 0.0
  %574 = vmatpush1.msra.mxu0 0.0
  %575 = vmatprep.subr.mxu0 0.0
  %576 = vmatpush1.msra.mxu0 0.0
  %577 = vmatprep.subr.mxu0 0.0
  %578 = vmatpush1.msra.mxu0 0.0
  %579 = vmatprep.subr.mxu0 0.0
  %580 = vmatpush1.msra.mxu0 0.0
  %581 = vmatprep.subr.mxu0 0.0
  %582 = vmatpush1.msra.mxu0 0.0
  %583 = vmatprep.subr.mxu0 0.0
  %584 = vmatpush1.msra.mxu0 0.0
  %585 = vmatprep.subr.mxu0 0.0
  %586 = vmatpush1.msra.mxu0 0.0
  %587 = vmatprep.subr.mxu0 0.0
  %588 = vmatpush1.msra.mxu0 0.0
  %589 = vmatprep.subr.mxu0 0.0
  %590 = vmatpush1.msra.mxu0 0.0
  %591 = vmatprep.subr.mxu0 0.0
  %592 = vmatpush1.msra.mxu0 0.0
  %593 = vmatprep.subr.mxu0 0.0
  %594 = vmatpush1.msra.mxu0 0.0
  %595 = vmatprep.subr.mxu0 0.0
  %596 = vmatpush1.msra.mxu0 0.0
  %597 = vmatprep.subr.mxu0 0.0
  %598 = vmatpush1.msra.mxu0 0.0
  %599 = vmatprep.subr.mxu0 0.0
  %600 = vmatpush1.msra.mxu0 0.0
  %601 = vmatprep.subr.mxu0 %v69
  %602 = vmatpush1.msra.mxu0 %v68
  %603 = vmatprep.subr.mxu0 0.0
  %604 = vmatpush2.msra.mxu0 0.0
  %605 = vmatprep.subr.mxu0 0.0
  %606 = vmatpush2.msra.mxu0 0.0
  %607 = vmatprep.subr.mxu0 0.0
  %608 = vmatpush2.msra.mxu0 0.0
  %609 = vmatprep.subr.mxu0 0.0
  %610 = vmatpush2.msra.mxu0 0.0
  %611 = vmatprep.subr.mxu0 0.0
  %612 = vmatpush2.msra.mxu0 0.0
  %613 = vmatprep.subr.mxu0 0.0
  %614 = vmatpush2.msra.mxu0 0.0
  %615 = vmatprep.subr.mxu0 0.0
  %616 = vmatpush2.msra.mxu0 0.0
  %617 = vmatprep.subr.mxu0 0.0
  %618 = vmatpush2.msra.mxu0 0.0
  %619 = vmatprep.subr.mxu0 0.0
  %620 = vmatpush2.msra.mxu0 0.0
  %621 = vmatprep.subr.mxu0 0.0
  %622 = vmatpush2.msra.mxu0 0.0
  %623 = vmatprep.subr.mxu0 0.0
  %624 = vmatpush2.msra.mxu0 0.0
  %625 = vmatprep.subr.mxu0 0.0
  %626 = vmatpush2.msra.mxu0 0.0
  %627 = vmatprep.subr.mxu0 0.0
  %628 = vmatpush2.msra.mxu0 0.0
  %629 = vmatprep.subr.mxu0 0.0
  %630 = vmatpush2.msra.mxu0 0.0
  %631 = vmatprep.subr.mxu0 0.0
  %632 = vmatpush2.msra.mxu0 0.0
  %633 = vmatprep.subr.mxu0 0.0
  %634 = vmatpush2.msra.mxu0 0.0
  %635 = vmatprep.mubr.f32.mxu0 0.0
  %636 = vmatmul.mubr.f32.gmra.mxu0 %v72
  %v637 = vpop.f32.mrf.mxu0
  %v638 = vadd.f32 0.0, %v637
  %v639 = vpop.f32.mrf.mxu0
  %v640 = vadd.f32 0.0, %v639
  %641 = vdwg.mxu0
  %v642 = vadd.f32 %v38, %v141
  %v643 = vadd.f32 %v39, %v143
  %v644 = vadd.f32 %v40, %v212
  %v645 = vadd.f32 %v41, %v214
  %v646 = vadd.f32 %v42, %v283
  %v647 = vadd.f32 %v43, %v285
  %v648 = vadd.f32 %v44, %v354
  %v649 = vadd.f32 %v45, %v356
  %v650 = vadd.f32 %v46, %v425
  %v651 = vadd.f32 %v47, %v427
  %v652 = vadd.f32 %v48, %v496
  %v653 = vadd.f32 %v49, %v498
  %v654 = vadd.f32 %v50, %v567
  %v655 = vadd.f32 %v51, %v569
  %v656 = vadd.f32 %v52, %v638
  %v657 = vadd.f32 %v53, %v640
  %658 = vst [vmem:[%s4] sm:$0xff] %v642
  %659 = vst [vmem:[%s4 + $0x8] sm:$0xff] %v643
  %660 = vst [vmem:[%s4 + $0x10] sm:$0xff] %v644
  %661 = vst [vmem:[%s4 + $0x18] sm:$0xff] %v645
  %662 = vst [vmem:[%s4 + $0x20] sm:$0xff] %v646
  %663 = vst [vmem:[%s4 + $0x28] sm:$0xff] %v647
  %664 = vst [vmem:[%s4 + $0x30] sm:$0xff] %v648
  %665 = vst [vmem:[%s4 + $0x38] sm:$0xff] %v649
  %666 = vst [vmem:[%s4 + $0x40] sm:$0xff] %v650
  %667 = vst [vmem:[%s4 + $0x48] sm:$0xff] %v651
  %668 = vst [vmem:[%s4 + $0x50] sm:$0xff] %v652
  %669 = vst [vmem:[%s4 + $0x58] sm:$0xff] %v653
  %670 = vst [vmem:[%s4 + $0x60] sm:$0xff] %v654
  %671 = vst [vmem:[%s4 + $0x68] sm:$0xff] %v655
  %672 = vst [vmem:[%s4 + $0x70] sm:$0xff] %v656
  %673 = vst [vmem:[%s4 + $0x78] sm:$0xff] %v657
  // Predicated region
  $region22: #{generator_forward.9} parent=0 // pred_check
    _
  $region23: #{generator_forward.9} parent=0 // pred_check_branch
    %675 = sbr.rel (0) target = $region25
  $region24: #{generator_forward.9} parent=0 // pred_region
    _
  $region25: #{generator_forward.9} parent=0 // pred_fallthru
    _
  // Predicated region
  $region26: #{generator_forward.9} parent=0 // pred_check
    _
  $region27: #{generator_forward.9} parent=0 // pred_check_branch
    %677 = sbr.rel (0) target = $region29
  $region28: #{generator_forward.9} parent=0 // pred_region
    _
  $region29: #{generator_forward.9} parent=0 // pred_fallthru
    _

// kernel: generator_forward.11
$region0: #{generator_forward.11}
  #allocation0 [shape = 'u32[]', space=smem, size = 0x4, offset = 0x4, fixed_abs, tag = 'smem constant byte address 0x4 - core index']
  #allocation1 [shape = 'u32[144,128]{1,0:T(1,128)}', space=vmem, size = 0x12000, scoped, tag = 'internal scratch']
  %s0 = inlined_call_operand.vmem [shape: f32[32,128], index: 0, kind: input, shape index: {}]
  %s1 = inlined_call_operand.vmem [shape: f32[128,1024], index: 1, kind: input, shape index: {}]
  %s2 = inlined_call_operand.vmem [shape: f32[1,128], index: 2, kind: input, shape index: {}]
  %s3 = inlined_call_operand.vmem [shape: f32[1,128], index: 3, kind: input, shape index: {}]
  %s4 = inlined_call_operand.vmem [shape: f32[32,1024], index: 4, kind: output, shape index: {}]
  %s5 = sld [smem:[#allocation0]]
  $region30: #{generator_forward.11} parent=0
    _
  %s7 = ssub.s32 1, %s5
  %s8 = scalar_select 0, %s7, %s5
  // Predicated region
  $region2: #{generator_forward.11} parent=0 // pred_check
    _
  $region3: #{generator_forward.11} parent=0 // pred_check_branch
    %10 = sbr.rel (0) target = $region5
  $region4: #{generator_forward.11} parent=0 // pred_region
    _
  $region5: #{generator_forward.11} parent=0 // pred_fallthru
    _
  // Predicated region
  $region6: #{generator_forward.11} parent=0 // pred_check
    _
  $region7: #{generator_forward.11} parent=0 // pred_check_branch
    %12 = sbr.rel (0) target = $region9
  $region8: #{generator_forward.11} parent=0 // pred_region
    _
  $region9: #{generator_forward.11} parent=0 // pred_fallthru
    _
  // Predicated region
  $region10: #{generator_forward.11} parent=0 // pred_check
    _
  $region11: #{generator_forward.11} parent=0 // pred_check_branch
    %14 = sbr.rel (0) target = $region13
  $region12: #{generator_forward.11} parent=0 // pred_region
    _
  $region13: #{generator_forward.11} parent=0 // pred_fallthru
    _
  // Predicated region
  $region14: #{generator_forward.11} parent=0 // pred_check
    _
  $region15: #{generator_forward.11} parent=0 // pred_check_branch
    %16 = sbr.rel (0) target = $region17
  $region16: #{generator_forward.11} parent=0 // pred_region
    _
  $region17: #{generator_forward.11} parent=0 // pred_fallthru
    _
  %p17 = scmp.eq.s32.totalorder 0, 0
  // Predicated region
  $region18: #{generator_forward.11} parent=0 // pred_check
    %p18 = pneg %p17
  $region19: #{generator_forward.11} parent=0 // pred_check_branch
    %20 = sbr.rel (%p18) target = $region21
  $region20: #{generator_forward.11} parent=0 // pred_region
    %21 = vst [vmem:[%s4] sm:$0xff] 0.0
    %22 = vst [vmem:[%s4 + $0x8] sm:$0xff] 0.0
    %23 = vst [vmem:[%s4 + $0x10] sm:$0xff] 0.0
    %24 = vst [vmem:[%s4 + $0x18] sm:$0xff] 0.0
    %25 = vst [vmem:[%s4 + $0x20] sm:$0xff] 0.0
    %26 = vst [vmem:[%s4 + $0x28] sm:$0xff] 0.0
    %27 = vst [vmem:[%s4 + $0x30] sm:$0xff] 0.0
    %28 = vst [vmem:[%s4 + $0x38] sm:$0xff] 0.0
    %29 = vst [vmem:[%s4 + $0x40] sm:$0xff] 0.0
    %30 = vst [vmem:[%s4 + $0x48] sm:$0xff] 0.0
    %31 = vst [vmem:[%s4 + $0x50] sm:$0xff] 0.0
    %32 = vst [vmem:[%s4 + $0x58] sm:$0xff] 0.0
    %33 = vst [vmem:[%s4 + $0x60] sm:$0xff] 0.0
    %34 = vst [vmem:[%s4 + $0x68] sm:$0xff] 0.0
    %35 = vst [vmem:[%s4 + $0x70] sm:$0xff] 0.0
    %36 = vst [vmem:[%s4 + $0x78] sm:$0xff] 0.0
    %37 = vst [vmem:[%s4 + $0x80] sm:$0xff] 0.0
    %38 = vst [vmem:[%s4 + $0x88] sm:$0xff] 0.0
    %39 = vst [vmem:[%s4 + $0x90] sm:$0xff] 0.0
    %40 = vst [vmem:[%s4 + $0x98] sm:$0xff] 0.0
    %41 = vst [vmem:[%s4 + $0xa0] sm:$0xff] 0.0
    %42 = vst [vmem:[%s4 + $0xa8] sm:$0xff] 0.0
    %43 = vst [vmem:[%s4 + $0xb0] sm:$0xff] 0.0
    %44 = vst [vmem:[%s4 + $0xb8] sm:$0xff] 0.0
    %45 = vst [vmem:[%s4 + $0xc0] sm:$0xff] 0.0
    %46 = vst [vmem:[%s4 + $0xc8] sm:$0xff] 0.0
    %47 = vst [vmem:[%s4 + $0xd0] sm:$0xff] 0.0
    %48 = vst [vmem:[%s4 + $0xd8] sm:$0xff] 0.0
    %49 = vst [vmem:[%s4 + $0xe0] sm:$0xff] 0.0
    %50 = vst [vmem:[%s4 + $0xe8] sm:$0xff] 0.0
    %51 = vst [vmem:[%s4 + $0xf0] sm:$0xff] 0.0
    %52 = vst [vmem:[%s4 + $0xf8] sm:$0xff] 0.0
  $region21: #{generator_forward.11} parent=0 // pred_fallthru
    _
  %v53 = vld [vmem:[%s0] sm:$0xff]
  %v54 = vld [vmem:[%s0 + $0x8] sm:$0xff]
  %v55 = vld [vmem:[%s0 + $0x10] sm:$0xff]
  %v56 = vld [vmem:[%s0 + $0x18] sm:$0xff]
  %v57 = vld [vmem:[%s2] sm:$0x1]
  %v59 = vlaneseq
  %v60 = vshrl.u32 %v59, 7
  %v61 = vsub.s32 0, %v60
  %v62 = vrot.slane %v57, %v61
  %v64 = vmul.f32 %v53, %v62
  %v65 = vmul.f32 %v54, %v62
  %v66 = vmul.f32 %v55, %v62
  %v67 = vmul.f32 %v56, %v62
  %v68 = vld [vmem:[%s3] sm:$0x1]
  %v70 = vlaneseq
  %v71 = vshrl.u32 %v70, 7
  %v72 = vsub.s32 0, %v71
  %v73 = vrot.slane %v68, %v72
  %v75 = vadd.f32 %v64, %v73
  %v76 = vadd.f32 %v65, %v73
  %v77 = vadd.f32 %v66, %v73
  %v78 = vadd.f32 %v67, %v73
  %v79 = vmax.f32 %v75, 0.0
  %v80 = vmax.f32 %v76, 0.0
  %v81 = vmax.f32 %v77, 0.0
  %v82 = vmax.f32 %v78, 0.0
  %v83 = vld [vmem:[%s4] sm:$0xff]
  %v84 = vld [vmem:[%s4 + $0x8] sm:$0xff]
  %v85 = vld [vmem:[%s4 + $0x10] sm:$0xff]
  %v86 = vld [vmem:[%s4 + $0x18] sm:$0xff]
  %v87 = vld [vmem:[%s4 + $0x20] sm:$0xff]
  %v88 = vld [vmem:[%s4 + $0x28] sm:$0xff]
  %v89 = vld [vmem:[%s4 + $0x30] sm:$0xff]
  %v90 = vld [vmem:[%s4 + $0x38] sm:$0xff]
  %v91 = vld [vmem:[%s4 + $0x40] sm:$0xff]
  %v92 = vld [vmem:[%s4 + $0x48] sm:$0xff]
  %v93 = vld [vmem:[%s4 + $0x50] sm:$0xff]
  %v94 = vld [vmem:[%s4 + $0x58] sm:$0xff]
  %v95 = vld [vmem:[%s4 + $0x60] sm:$0xff]
  %v96 = vld [vmem:[%s4 + $0x68] sm:$0xff]
  %v97 = vld [vmem:[%s4 + $0x70] sm:$0xff]
  %v98 = vld [vmem:[%s4 + $0x78] sm:$0xff]
  %v99 = vld [vmem:[%s4 + $0x80] sm:$0xff]
  %v100 = vld [vmem:[%s4 + $0x88] sm:$0xff]
  %v101 = vld [vmem:[%s4 + $0x90] sm:$0xff]
  %v102 = vld [vmem:[%s4 + $0x98] sm:$0xff]
  %v103 = vld [vmem:[%s4 + $0xa0] sm:$0xff]
  %v104 = vld [vmem:[%s4 + $0xa8] sm:$0xff]
  %v105 = vld [vmem:[%s4 + $0xb0] sm:$0xff]
  %v106 = vld [vmem:[%s4 + $0xb8] sm:$0xff]
  %v107 = vld [vmem:[%s4 + $0xc0] sm:$0xff]
  %v108 = vld [vmem:[%s4 + $0xc8] sm:$0xff]
  %v109 = vld [vmem:[%s4 + $0xd0] sm:$0xff]
  %v110 = vld [vmem:[%s4 + $0xd8] sm:$0xff]
  %v111 = vld [vmem:[%s4 + $0xe0] sm:$0xff]
  %v112 = vld [vmem:[%s4 + $0xe8] sm:$0xff]
  %v113 = vld [vmem:[%s4 + $0xf0] sm:$0xff]
  %v114 = vld [vmem:[%s4 + $0xf8] sm:$0xff]
  %v115 = vld [vmem:[%s1] sm:$0xff]
  %v116 = vld [vmem:[%s1 + $0x8] sm:$0xff]
  %v117 = vld [vmem:[%s1 + $0x10] sm:$0xff]
  %v118 = vld [vmem:[%s1 + $0x18] sm:$0xff]
  %v119 = vld [vmem:[%s1 + $0x20] sm:$0xff]
  %v120 = vld [vmem:[%s1 + $0x28] sm:$0xff]
  %v121 = vld [vmem:[%s1 + $0x30] sm:$0xff]
  %v122 = vld [vmem:[%s1 + $0x38] sm:$0xff]
  %v123 = vld [vmem:[%s1 + $0x40] sm:$0xff]
  %v124 = vld [vmem:[%s1 + $0x48] sm:$0xff]
  %v125 = vld [vmem:[%s1 + $0x50] sm:$0xff]
  %v126 = vld [vmem:[%s1 + $0x58] sm:$0xff]
  %v127 = vld [vmem:[%s1 + $0x60] sm:$0xff]
  %v128 = vld [vmem:[%s1 + $0x68] sm:$0xff]
  %v129 = vld [vmem:[%s1 + $0x70] sm:$0xff]
  %v130 = vld [vmem:[%s1 + $0x78] sm:$0xff]
  %v131 = vld [vmem:[%s1 + $0x80] sm:$0xff]
  %v132 = vld [vmem:[%s1 + $0x88] sm:$0xff]
  %v133 = vld [vmem:[%s1 + $0x90] sm:$0xff]
  %v134 = vld [vmem:[%s1 + $0x98] sm:$0xff]
  %v135 = vld [vmem:[%s1 + $0xa0] sm:$0xff]
  %v136 = vld [vmem:[%s1 + $0xa8] sm:$0xff]
  %v137 = vld [vmem:[%s1 + $0xb0] sm:$0xff]
  %v138 = vld [vmem:[%s1 + $0xb8] sm:$0xff]
  %v139 = vld [vmem:[%s1 + $0xc0] sm:$0xff]
  %v140 = vld [vmem:[%s1 + $0xc8] sm:$0xff]
  %v141 = vld [vmem:[%s1 + $0xd0] sm:$0xff]
  %v142 = vld [vmem:[%s1 + $0xd8] sm:$0xff]
  %v143 = vld [vmem:[%s1 + $0xe0] sm:$0xff]
  %v144 = vld [vmem:[%s1 + $0xe8] sm:$0xff]
  %v145 = vld [vmem:[%s1 + $0xf0] sm:$0xff]
  %v146 = vld [vmem:[%s1 + $0xf8] sm:$0xff]
  %v147 = vld [vmem:[%s1 + $0x100] sm:$0xff]
  %v148 = vld [vmem:[%s1 + $0x108] sm:$0xff]
  %v149 = vld [vmem:[%s1 + $0x110] sm:$0xff]
  %v150 = vld [vmem:[%s1 + $0x118] sm:$0xff]
  %v151 = vld [vmem:[%s1 + $0x120] sm:$0xff]
  %v152 = vld [vmem:[%s1 + $0x128] sm:$0xff]
  %v153 = vld [vmem:[%s1 + $0x130] sm:$0xff]
  %v154 = vld [vmem:[%s1 + $0x138] sm:$0xff]
  %v155 = vld [vmem:[%s1 + $0x140] sm:$0xff]
  %v156 = vld [vmem:[%s1 + $0x148] sm:$0xff]
  %v157 = vld [vmem:[%s1 + $0x150] sm:$0xff]
  %v158 = vld [vmem:[%s1 + $0x158] sm:$0xff]
  %v159 = vld [vmem:[%s1 + $0x160] sm:$0xff]
  %v160 = vld [vmem:[%s1 + $0x168] sm:$0xff]
  %v161 = vld [vmem:[%s1 + $0x170] sm:$0xff]
  %v162 = vld [vmem:[%s1 + $0x178] sm:$0xff]
  %v163 = vld [vmem:[%s1 + $0x180] sm:$0xff]
  %v164 = vld [vmem:[%s1 + $0x188] sm:$0xff]
  %v165 = vld [vmem:[%s1 + $0x190] sm:$0xff]
  %v166 = vld [vmem:[%s1 + $0x198] sm:$0xff]
  %v167 = vld [vmem:[%s1 + $0x1a0] sm:$0xff]
  %v168 = vld [vmem:[%s1 + $0x1a8] sm:$0xff]
  %v169 = vld [vmem:[%s1 + $0x1b0] sm:$0xff]
  %v170 = vld [vmem:[%s1 + $0x1b8] sm:$0xff]
  %v171 = vld [vmem:[%s1 + $0x1c0] sm:$0xff]
  %v172 = vld [vmem:[%s1 + $0x1c8] sm:$0xff]
  %v173 = vld [vmem:[%s1 + $0x1d0] sm:$0xff]
  %v174 = vld [vmem:[%s1 + $0x1d8] sm:$0xff]
  %v175 = vld [vmem:[%s1 + $0x1e0] sm:$0xff]
  %v176 = vld [vmem:[%s1 + $0x1e8] sm:$0xff]
  %v177 = vld [vmem:[%s1 + $0x1f0] sm:$0xff]
  %v178 = vld [vmem:[%s1 + $0x1f8] sm:$0xff]
  %v179 = vld [vmem:[%s1 + $0x200] sm:$0xff]
  %v180 = vld [vmem:[%s1 + $0x208] sm:$0xff]
  %v181 = vld [vmem:[%s1 + $0x210] sm:$0xff]
  %v182 = vld [vmem:[%s1 + $0x218] sm:$0xff]
  %v183 = vld [vmem:[%s1 + $0x220] sm:$0xff]
  %v184 = vld [vmem:[%s1 + $0x228] sm:$0xff]
  %v185 = vld [vmem:[%s1 + $0x230] sm:$0xff]
  %v186 = vld [vmem:[%s1 + $0x238] sm:$0xff]
  %v187 = vld [vmem:[%s1 + $0x240] sm:$0xff]
  %v188 = vld [vmem:[%s1 + $0x248] sm:$0xff]
  %v189 = vld [vmem:[%s1 + $0x250] sm:$0xff]
  %v190 = vld [vmem:[%s1 + $0x258] sm:$0xff]
  %v191 = vld [vmem:[%s1 + $0x260] sm:$0xff]
  %v192 = vld [vmem:[%s1 + $0x268] sm:$0xff]
  %v193 = vld [vmem:[%s1 + $0x270] sm:$0xff]
  %v194 = vld [vmem:[%s1 + $0x278] sm:$0xff]
  %v195 = vld [vmem:[%s1 + $0x280] sm:$0xff]
  %v196 = vld [vmem:[%s1 + $0x288] sm:$0xff]
  %v197 = vld [vmem:[%s1 + $0x290] sm:$0xff]
  %v198 = vld [vmem:[%s1 + $0x298] sm:$0xff]
  %v199 = vld [vmem:[%s1 + $0x2a0] sm:$0xff]
  %v200 = vld [vmem:[%s1 + $0x2a8] sm:$0xff]
  %v201 = vld [vmem:[%s1 + $0x2b0] sm:$0xff]
  %v202 = vld [vmem:[%s1 + $0x2b8] sm:$0xff]
  %v203 = vld [vmem:[%s1 + $0x2c0] sm:$0xff]
  %v204 = vld [vmem:[%s1 + $0x2c8] sm:$0xff]
  %v205 = vld [vmem:[%s1 + $0x2d0] sm:$0xff]
  %v206 = vld [vmem:[%s1 + $0x2d8] sm:$0xff]
  %v207 = vld [vmem:[%s1 + $0x2e0] sm:$0xff]
  %v208 = vld [vmem:[%s1 + $0x2e8] sm:$0xff]
  %v209 = vld [vmem:[%s1 + $0x2f0] sm:$0xff]
  %v210 = vld [vmem:[%s1 + $0x2f8] sm:$0xff]
  %v211 = vld [vmem:[%s1 + $0x300] sm:$0xff]
  %v212 = vld [vmem:[%s1 + $0x308] sm:$0xff]
  %v213 = vld [vmem:[%s1 + $0x310] sm:$0xff]
  %v214 = vld [vmem:[%s1 + $0x318] sm:$0xff]
  %v215 = vld [vmem:[%s1 + $0x320] sm:$0xff]
  %v216 = vld [vmem:[%s1 + $0x328] sm:$0xff]
  %v217 = vld [vmem:[%s1 + $0x330] sm:$0xff]
  %v218 = vld [vmem:[%s1 + $0x338] sm:$0xff]
  %v219 = vld [vmem:[%s1 + $0x340] sm:$0xff]
  %v220 = vld [vmem:[%s1 + $0x348] sm:$0xff]
  %v221 = vld [vmem:[%s1 + $0x350] sm:$0xff]
  %v222 = vld [vmem:[%s1 + $0x358] sm:$0xff]
  %v223 = vld [vmem:[%s1 + $0x360] sm:$0xff]
  %v224 = vld [vmem:[%s1 + $0x368] sm:$0xff]
  %v225 = vld [vmem:[%s1 + $0x370] sm:$0xff]
  %v226 = vld [vmem:[%s1 + $0x378] sm:$0xff]
  %v227 = vld [vmem:[%s1 + $0x380] sm:$0xff]
  %v228 = vld [vmem:[%s1 + $0x388] sm:$0xff]
  %v229 = vld [vmem:[%s1 + $0x390] sm:$0xff]
  %v230 = vld [vmem:[%s1 + $0x398] sm:$0xff]
  %v231 = vld [vmem:[%s1 + $0x3a0] sm:$0xff]
  %v232 = vld [vmem:[%s1 + $0x3a8] sm:$0xff]
  %v233 = vld [vmem:[%s1 + $0x3b0] sm:$0xff]
  %v234 = vld [vmem:[%s1 + $0x3b8] sm:$0xff]
  %v235 = vld [vmem:[%s1 + $0x3c0] sm:$0xff]
  %v236 = vld [vmem:[%s1 + $0x3c8] sm:$0xff]
  %v237 = vld [vmem:[%s1 + $0x3d0] sm:$0xff]
  %v238 = vld [vmem:[%s1 + $0x3d8] sm:$0xff]
  %v239 = vld [vmem:[%s1 + $0x3e0] sm:$0xff]
  %v240 = vld [vmem:[%s1 + $0x3e8] sm:$0xff]
  %v241 = vld [vmem:[%s1 + $0x3f0] sm:$0xff]
  %v242 = vld [vmem:[%s1 + $0x3f8] sm:$0xff]
  %243 = vmatprep.subr.mxu0 %v236
  %244 = vmatpush1.msra.mxu0 %v235
  %245 = vmatprep.subr.mxu0 %v228
  %246 = vmatpush1.msra.mxu0 %v227
  %247 = vmatprep.subr.mxu0 %v220
  %248 = vmatpush1.msra.mxu0 %v219
  %249 = vmatprep.subr.mxu0 %v212
  %250 = vmatpush1.msra.mxu0 %v211
  %251 = vmatprep.subr.mxu0 %v204
  %252 = vmatpush1.msra.mxu0 %v203
  %253 = vmatprep.subr.mxu0 %v196
  %254 = vmatpush1.msra.mxu0 %v195
  %255 = vmatprep.subr.mxu0 %v188
  %256 = vmatpush1.msra.mxu0 %v187
  %257 = vmatprep.subr.mxu0 %v180
  %258 = vmatpush1.msra.mxu0 %v179
  %259 = vmatprep.subr.mxu0 %v172
  %260 = vmatpush1.msra.mxu0 %v171
  %261 = vmatprep.subr.mxu0 %v164
  %262 = vmatpush1.msra.mxu0 %v163
  %263 = vmatprep.subr.mxu0 %v156
  %264 = vmatpush1.msra.mxu0 %v155
  %265 = vmatprep.subr.mxu0 %v148
  %266 = vmatpush1.msra.mxu0 %v147
  %267 = vmatprep.subr.mxu0 %v140
  %268 = vmatpush1.msra.mxu0 %v139
  %269 = vmatprep.subr.mxu0 %v132
  %270 = vmatpush1.msra.mxu0 %v131
  %271 = vmatprep.subr.mxu0 %v124
  %272 = vmatpush1.msra.mxu0 %v123
  %273 = vmatprep.subr.mxu0 %v116
  %274 = vmatpush1.msra.mxu0 %v115
  %275 = vmatprep.subr.mxu0 0.0
  %276 = vmatpush2.msra.mxu0 0.0
  %277 = vmatprep.subr.mxu0 0.0
  %278 = vmatpush2.msra.mxu0 0.0
  %279 = vmatprep.subr.mxu0 0.0
  %280 = vmatpush2.msra.mxu0 0.0
  %281 = vmatprep.subr.mxu0 0.0
  %282 = vmatpush2.msra.mxu0 0.0
  %283 = vmatprep.subr.mxu0 0.0
  %284 = vmatpush2.msra.mxu0 0.0
  %285 = vmatprep.subr.mxu0 0.0
  %286 = vmatpush2.msra.mxu0 0.0
  %287 = vmatprep.subr.mxu0 0.0
  %288 = vmatpush2.msra.mxu0 0.0
  %289 = vmatprep.subr.mxu0 0.0
  %290 = vmatpush2.msra.mxu0 0.0
  %291 = vmatprep.subr.mxu0 0.0
  %292 = vmatpush2.msra.mxu0 0.0
  %293 = vmatprep.subr.mxu0 0.0
  %294 = vmatpush2.msra.mxu0 0.0
  %295 = vmatprep.subr.mxu0 0.0
  %296 = vmatpush2.msra.mxu0 0.0
  %297 = vmatprep.subr.mxu0 0.0
  %298 = vmatpush2.msra.mxu0 0.0
  %299 = vmatprep.subr.mxu0 0.0
  %300 = vmatpush2.msra.mxu0 0.0
  %301 = vmatprep.subr.mxu0 0.0
  %302 = vmatpush2.msra.mxu0 0.0
  %303 = vmatprep.subr.mxu0 0.0
  %304 = vmatpush2.msra.mxu0 0.0
  %305 = vmatprep.subr.mxu0 0.0
  %306 = vmatpush2.msra.mxu0 0.0
  %307 = vmatprep.mubr.f32.mxu0 0.0
  %308 = vmatmul.mubr.f32.gmra.mxu0 %v79
  %v309 = vpop.f32.mrf.mxu0
  %v310 = vadd.f32 0.0, %v309
  %v311 = vpop.f32.mrf.mxu0
  %v312 = vadd.f32 0.0, %v311
  %313 = vmatprep.mubr.f32.mxu0 0.0
  %314 = vmatmul.mubr.f32.gmra.mxu0 %v80
  %v315 = vpop.f32.mrf.mxu0
  %v316 = vadd.f32 0.0, %v315
  %v317 = vpop.f32.mrf.mxu0
  %v318 = vadd.f32 0.0, %v317
  %319 = vmatprep.mubr.f32.mxu0 0.0
  %320 = vmatmul.mubr.f32.gmra.mxu0 %v81
  %v321 = vpop.f32.mrf.mxu0
  %v322 = vadd.f32 0.0, %v321
  %v323 = vpop.f32.mrf.mxu0
  %v324 = vadd.f32 0.0, %v323
  %325 = vmatprep.mubr.f32.mxu0 0.0
  %326 = vmatmul.mubr.f32.gmra.mxu0 %v82
  %v327 = vpop.f32.mrf.mxu0
  %v328 = vadd.f32 0.0, %v327
  %v329 = vpop.f32.mrf.mxu0
  %v330 = vadd.f32 0.0, %v329
  %331 = vdwg.mxu0
  %332 = vmatprep.subr.mxu0 %v238
  %333 = vmatpush1.msra.mxu0 %v237
  %334 = vmatprep.subr.mxu0 %v230
  %335 = vmatpush1.msra.mxu0 %v229
  %336 = vmatprep.subr.mxu0 %v222
  %337 = vmatpush1.msra.mxu0 %v221
  %338 = vmatprep.subr.mxu0 %v214
  %339 = vmatpush1.msra.mxu0 %v213
  %340 = vmatprep.subr.mxu0 %v206
  %341 = vmatpush1.msra.mxu0 %v205
  %342 = vmatprep.subr.mxu0 %v198
  %343 = vmatpush1.msra.mxu0 %v197
  %344 = vmatprep.subr.mxu0 %v190
  %345 = vmatpush1.msra.mxu0 %v189
  %346 = vmatprep.subr.mxu0 %v182
  %347 = vmatpush1.msra.mxu0 %v181
  %348 = vmatprep.subr.mxu0 %v174
  %349 = vmatpush1.msra.mxu0 %v173
  %350 = vmatprep.subr.mxu0 %v166
  %351 = vmatpush1.msra.mxu0 %v165
  %352 = vmatprep.subr.mxu0 %v158
  %353 = vmatpush1.msra.mxu0 %v157
  %354 = vmatprep.subr.mxu0 %v150
  %355 = vmatpush1.msra.mxu0 %v149
  %356 = vmatprep.subr.mxu0 %v142
  %357 = vmatpush1.msra.mxu0 %v141
  %358 = vmatprep.subr.mxu0 %v134
  %359 = vmatpush1.msra.mxu0 %v133
  %360 = vmatprep.subr.mxu0 %v126
  %361 = vmatpush1.msra.mxu0 %v125
  %362 = vmatprep.subr.mxu0 %v118
  %363 = vmatpush1.msra.mxu0 %v117
  %364 = vmatprep.subr.mxu0 0.0
  %365 = vmatpush2.msra.mxu0 0.0
  %366 = vmatprep.subr.mxu0 0.0
  %367 = vmatpush2.msra.mxu0 0.0
  %368 = vmatprep.subr.mxu0 0.0
  %369 = vmatpush2.msra.mxu0 0.0
  %370 = vmatprep.subr.mxu0 0.0
  %371 = vmatpush2.msra.mxu0 0.0
  %372 = vmatprep.subr.mxu0 0.0
  %373 = vmatpush2.msra.mxu0 0.0
  %374 = vmatprep.subr.mxu0 0.0
  %375 = vmatpush2.msra.mxu0 0.0
  %376 = vmatprep.subr.mxu0 0.0
  %377 = vmatpush2.msra.mxu0 0.0
  %378 = vmatprep.subr.mxu0 0.0
  %379 = vmatpush2.msra.mxu0 0.0
  %380 = vmatprep.subr.mxu0 0.0
  %381 = vmatpush2.msra.mxu0 0.0
  %382 = vmatprep.subr.mxu0 0.0
  %383 = vmatpush2.msra.mxu0 0.0
  %384 = vmatprep.subr.mxu0 0.0
  %385 = vmatpush2.msra.mxu0 0.0
  %386 = vmatprep.subr.mxu0 0.0
  %387 = vmatpush2.msra.mxu0 0.0
  %388 = vmatprep.subr.mxu0 0.0
  %389 = vmatpush2.msra.mxu0 0.0
  %390 = vmatprep.subr.mxu0 0.0
  %391 = vmatpush2.msra.mxu0 0.0
  %392 = vmatprep.subr.mxu0 0.0
  %393 = vmatpush2.msra.mxu0 0.0
  %394 = vmatprep.subr.mxu0 0.0
  %395 = vmatpush2.msra.mxu0 0.0
  %396 = vmatprep.mubr.f32.mxu0 0.0
  %397 = vmatmul.mubr.f32.gmra.mxu0 %v79
  %v398 = vpop.f32.mrf.mxu0
  %v399 = vadd.f32 0.0, %v398
  %v400 = vpop.f32.mrf.mxu0
  %v401 = vadd.f32 0.0, %v400
  %402 = vmatprep.mubr.f32.mxu0 0.0
  %403 = vmatmul.mubr.f32.gmra.mxu0 %v80
  %v404 = vpop.f32.mrf.mxu0
  %v405 = vadd.f32 0.0, %v404
  %v406 = vpop.f32.mrf.mxu0
  %v407 = vadd.f32 0.0, %v406
  %408 = vmatprep.mubr.f32.mxu0 0.0
  %409 = vmatmul.mubr.f32.gmra.mxu0 %v81
  %v410 = vpop.f32.mrf.mxu0
  %v411 = vadd.f32 0.0, %v410
  %v412 = vpop.f32.mrf.mxu0
  %v413 = vadd.f32 0.0, %v412
  %414 = vmatprep.mubr.f32.mxu0 0.0
  %415 = vmatmul.mubr.f32.gmra.mxu0 %v82
  %v416 = vpop.f32.mrf.mxu0
  %v417 = vadd.f32 0.0, %v416
  %v418 = vpop.f32.mrf.mxu0
  %v419 = vadd.f32 0.0, %v418
  %420 = vdwg.mxu0
  %421 = vmatprep.subr.mxu0 %v240
  %422 = vmatpush1.msra.mxu0 %v239
  %423 = vmatprep.subr.mxu0 %v232
  %424 = vmatpush1.msra.mxu0 %v231
  %425 = vmatprep.subr.mxu0 %v224
  %426 = vmatpush1.msra.mxu0 %v223
  %427 = vmatprep.subr.mxu0 %v216
  %428 = vmatpush1.msra.mxu0 %v215
  %429 = vmatprep.subr.mxu0 %v208
  %430 = vmatpush1.msra.mxu0 %v207
  %431 = vmatprep.subr.mxu0 %v200
  %432 = vmatpush1.msra.mxu0 %v199
  %433 = vmatprep.subr.mxu0 %v192
  %434 = vmatpush1.msra.mxu0 %v191
  %435 = vmatprep.subr.mxu0 %v184
  %436 = vmatpush1.msra.mxu0 %v183
  %437 = vmatprep.subr.mxu0 %v176
  %438 = vmatpush1.msra.mxu0 %v175
  %439 = vmatprep.subr.mxu0 %v168
  %440 = vmatpush1.msra.mxu0 %v167
  %441 = vmatprep.subr.mxu0 %v160
  %442 = vmatpush1.msra.mxu0 %v159
  %443 = vmatprep.subr.mxu0 %v152
  %444 = vmatpush1.msra.mxu0 %v151
  %445 = vmatprep.subr.mxu0 %v144
  %446 = vmatpush1.msra.mxu0 %v143
  %447 = vmatprep.subr.mxu0 %v136
  %448 = vmatpush1.msra.mxu0 %v135
  %449 = vmatprep.subr.mxu0 %v128
  %450 = vmatpush1.msra.mxu0 %v127
  %451 = vmatprep.subr.mxu0 %v120
  %452 = vmatpush1.msra.mxu0 %v119
  %453 = vmatprep.subr.mxu0 0.0
  %454 = vmatpush2.msra.mxu0 0.0
  %455 = vmatprep.subr.mxu0 0.0
  %456 = vmatpush2.msra.mxu0 0.0
  %457 = vmatprep.subr.mxu0 0.0
  %458 = vmatpush2.msra.mxu0 0.0
  %459 = vmatprep.subr.mxu0 0.0
  %460 = vmatpush2.msra.mxu0 0.0
  %461 = vmatprep.subr.mxu0 0.0
  %462 = vmatpush2.msra.mxu0 0.0
  %463 = vmatprep.subr.mxu0 0.0
  %464 = vmatpush2.msra.mxu0 0.0
  %465 = vmatprep.subr.mxu0 0.0
  %466 = vmatpush2.msra.mxu0 0.0
  %467 = vmatprep.subr.mxu0 0.0
  %468 = vmatpush2.msra.mxu0 0.0
  %469 = vmatprep.subr.mxu0 0.0
  %470 = vmatpush2.msra.mxu0 0.0
  %471 = vmatprep.subr.mxu0 0.0
  %472 = vmatpush2.msra.mxu0 0.0
  %473 = vmatprep.subr.mxu0 0.0
  %474 = vmatpush2.msra.mxu0 0.0
  %475 = vmatprep.subr.mxu0 0.0
  %476 = vmatpush2.msra.mxu0 0.0
  %477 = vmatprep.subr.mxu0 0.0
  %478 = vmatpush2.msra.mxu0 0.0
  %479 = vmatprep.subr.mxu0 0.0
  %480 = vmatpush2.msra.mxu0 0.0
  %481 = vmatprep.subr.mxu0 0.0
  %482 = vmatpush2.msra.mxu0 0.0
  %483 = vmatprep.subr.mxu0 0.0
  %484 = vmatpush2.msra.mxu0 0.0
  %485 = vmatprep.mubr.f32.mxu0 0.0
  %486 = vmatmul.mubr.f32.gmra.mxu0 %v79
  %v487 = vpop.f32.mrf.mxu0
  %v488 = vadd.f32 0.0, %v487
  %v489 = vpop.f32.mrf.mxu0
  %v490 = vadd.f32 0.0, %v489
  %491 = vmatprep.mubr.f32.mxu0 0.0
  %492 = vmatmul.mubr.f32.gmra.mxu0 %v80
  %v493 = vpop.f32.mrf.mxu0
  %v494 = vadd.f32 0.0, %v493
  %v495 = vpop.f32.mrf.mxu0
  %v496 = vadd.f32 0.0, %v495
  %497 = vmatprep.mubr.f32.mxu0 0.0
  %498 = vmatmul.mubr.f32.gmra.mxu0 %v81
  %v499 = vpop.f32.mrf.mxu0
  %v500 = vadd.f32 0.0, %v499
  %v501 = vpop.f32.mrf.mxu0
  %v502 = vadd.f32 0.0, %v501
  %503 = vmatprep.mubr.f32.mxu0 0.0
  %504 = vmatmul.mubr.f32.gmra.mxu0 %v82
  %v505 = vpop.f32.mrf.mxu0
  %v506 = vadd.f32 0.0, %v505
  %v507 = vpop.f32.mrf.mxu0
  %v508 = vadd.f32 0.0, %v507
  %509 = vdwg.mxu0
  %510 = vmatprep.subr.mxu0 %v242
  %511 = vmatpush1.msra.mxu0 %v241
  %512 = vmatprep.subr.mxu0 %v234
  %513 = vmatpush1.msra.mxu0 %v233
  %514 = vmatprep.subr.mxu0 %v226
  %515 = vmatpush1.msra.mxu0 %v225
  %516 = vmatprep.subr.mxu0 %v218
  %517 = vmatpush1.msra.mxu0 %v217
  %518 = vmatprep.subr.mxu0 %v210
  %519 = vmatpush1.msra.mxu0 %v209
  %520 = vmatprep.subr.mxu0 %v202
  %521 = vmatpush1.msra.mxu0 %v201
  %522 = vmatprep.subr.mxu0 %v194
  %523 = vmatpush1.msra.mxu0 %v193
  %524 = vmatprep.subr.mxu0 %v186
  %525 = vmatpush1.msra.mxu0 %v185
  %526 = vmatprep.subr.mxu0 %v178
  %527 = vmatpush1.msra.mxu0 %v177
  %528 = vmatprep.subr.mxu0 %v170
  %529 = vmatpush1.msra.mxu0 %v169
  %530 = vmatprep.subr.mxu0 %v162
  %531 = vmatpush1.msra.mxu0 %v161
  %532 = vmatprep.subr.mxu0 %v154
  %533 = vmatpush1.msra.mxu0 %v153
  %534 = vmatprep.subr.mxu0 %v146
  %535 = vmatpush1.msra.mxu0 %v145
  %536 = vmatprep.subr.mxu0 %v138
  %537 = vmatpush1.msra.mxu0 %v137
  %538 = vmatprep.subr.mxu0 %v130
  %539 = vmatpush1.msra.mxu0 %v129
  %540 = vmatprep.subr.mxu0 %v122
  %541 = vmatpush1.msra.mxu0 %v121
  %542 = vmatprep.subr.mxu0 0.0
  %543 = vmatpush2.msra.mxu0 0.0
  %544 = vmatprep.subr.mxu0 0.0
  %545 = vmatpush2.msra.mxu0 0.0
  %546 = vmatprep.subr.mxu0 0.0
  %547 = vmatpush2.msra.mxu0 0.0
  %548 = vmatprep.subr.mxu0 0.0
  %549 = vmatpush2.msra.mxu0 0.0
  %550 = vmatprep.subr.mxu0 0.0
  %551 = vmatpush2.msra.mxu0 0.0
  %552 = vmatprep.subr.mxu0 0.0
  %553 = vmatpush2.msra.mxu0 0.0
  %554 = vmatprep.subr.mxu0 0.0
  %555 = vmatpush2.msra.mxu0 0.0
  %556 = vmatprep.subr.mxu0 0.0
  %557 = vmatpush2.msra.mxu0 0.0
  %558 = vmatprep.subr.mxu0 0.0
  %559 = vmatpush2.msra.mxu0 0.0
  %560 = vmatprep.subr.mxu0 0.0
  %561 = vmatpush2.msra.mxu0 0.0
  %562 = vmatprep.subr.mxu0 0.0
  %563 = vmatpush2.msra.mxu0 0.0
  %564 = vmatprep.subr.mxu0 0.0
  %565 = vmatpush2.msra.mxu0 0.0
  %566 = vmatprep.subr.mxu0 0.0
  %567 = vmatpush2.msra.mxu0 0.0
  %568 = vmatprep.subr.mxu0 0.0
  %569 = vmatpush2.msra.mxu0 0.0
  %570 = vmatprep.subr.mxu0 0.0
  %571 = vmatpush2.msra.mxu0 0.0
  %572 = vmatprep.subr.mxu0 0.0
  %573 = vmatpush2.msra.mxu0 0.0
  %574 = vmatprep.mubr.f32.mxu0 0.0
  %575 = vmatmul.mubr.f32.gmra.mxu0 %v79
  %v576 = vpop.f32.mrf.mxu0
  %v577 = vadd.f32 0.0, %v576
  %v578 = vpop.f32.mrf.mxu0
  %v579 = vadd.f32 0.0, %v578
  %580 = vmatprep.mubr.f32.mxu0 0.0
  %581 = vmatmul.mubr.f32.gmra.mxu0 %v80
  %v582 = vpop.f32.mrf.mxu0
  %v583 = vadd.f32 0.0, %v582
  %v584 = vpop.f32.mrf.mxu0
  %v585 = vadd.f32 0.0, %v584
  %586 = vmatprep.mubr.f32.mxu0 0.0
  %587 = vmatmul.mubr.f32.gmra.mxu0 %v81
  %v588 = vpop.f32.mrf.mxu0
  %v589 = vadd.f32 0.0, %v588
  %v590 = vpop.f32.mrf.mxu0
  %v591 = vadd.f32 0.0, %v590
  %592 = vmatprep.mubr.f32.mxu0 0.0
  %593 = vmatmul.mubr.f32.gmra.mxu0 %v82
  %v594 = vpop.f32.mrf.mxu0
  %v595 = vadd.f32 0.0, %v594
  %v596 = vpop.f32.mrf.mxu0
  %v597 = vadd.f32 0.0, %v596
  %598 = vdwg.mxu0
  %v599 = vadd.f32 %v83, %v310
  %v600 = vadd.f32 %v84, %v312
  %v601 = vadd.f32 %v85, %v399
  %v602 = vadd.f32 %v86, %v401
  %v603 = vadd.f32 %v87, %v488
  %v604 = vadd.f32 %v88, %v490
  %v605 = vadd.f32 %v89, %v577
  %v606 = vadd.f32 %v90, %v579
  %v607 = vadd.f32 %v91, %v316
  %v608 = vadd.f32 %v92, %v318
  %v609 = vadd.f32 %v93, %v405
  %v610 = vadd.f32 %v94, %v407
  %v611 = vadd.f32 %v95, %v494
  %v612 = vadd.f32 %v96, %v496
  %v613 = vadd.f32 %v97, %v583
  %v614 = vadd.f32 %v98, %v585
  %v615 = vadd.f32 %v99, %v322
  %v616 = vadd.f32 %v100, %v324
  %v617 = vadd.f32 %v101, %v411
  %v618 = vadd.f32 %v102, %v413
  %v619 = vadd.f32 %v103, %v500
  %v620 = vadd.f32 %v104, %v502
  %v621 = vadd.f32 %v105, %v589
  %v622 = vadd.f32 %v106, %v591
  %v623 = vadd.f32 %v107, %v328
  %v624 = vadd.f32 %v108, %v330
  %v625 = vadd.f32 %v109, %v417
  %v626 = vadd.f32 %v110, %v419
  %v627 = vadd.f32 %v111, %v506
  %v628 = vadd.f32 %v112, %v508
  %v629 = vadd.f32 %v113, %v595
  %v630 = vadd.f32 %v114, %v597
  %631 = vst [vmem:[%s4] sm:$0xff] %v599
  %632 = vst [vmem:[%s4 + $0x8] sm:$0xff] %v600
  %633 = vst [vmem:[%s4 + $0x10] sm:$0xff] %v601
  %634 = vst [vmem:[%s4 + $0x18] sm:$0xff] %v602
  %635 = vst [vmem:[%s4 + $0x20] sm:$0xff] %v603
  %636 = vst [vmem:[%s4 + $0x28] sm:$0xff] %v604
  %637 = vst [vmem:[%s4 + $0x30] sm:$0xff] %v605
  %638 = vst [vmem:[%s4 + $0x38] sm:$0xff] %v606
  %639 = vst [vmem:[%s4 + $0x40] sm:$0xff] %v607
  %640 = vst [vmem:[%s4 + $0x48] sm:$0xff] %v608
  %641 = vst [vmem:[%s4 + $0x50] sm:$0xff] %v609
  %642 = vst [vmem:[%s4 + $0x58] sm:$0xff] %v610
  %643 = vst [vmem:[%s4 + $0x60] sm:$0xff] %v611
  %644 = vst [vmem:[%s4 + $0x68] sm:$0xff] %v612
  %645 = vst [vmem:[%s4 + $0x70] sm:$0xff] %v613
  %646 = vst [vmem:[%s4 + $0x78] sm:$0xff] %v614
  %647 = vst [vmem:[%s4 + $0x80] sm:$0xff] %v615
  %648 = vst [vmem:[%s4 + $0x88] sm:$0xff] %v616
  %649 = vst [vmem:[%s4 + $0x90] sm:$0xff] %v617
  %650 = vst [vmem:[%s4 + $0x98] sm:$0xff] %v618
  %651 = vst [vmem:[%s4 + $0xa0] sm:$0xff] %v619
  %652 = vst [vmem:[%s4 + $0xa8] sm:$0xff] %v620
  %653 = vst [vmem:[%s4 + $0xb0] sm:$0xff] %v621
  %654 = vst [vmem:[%s4 + $0xb8] sm:$0xff] %v622
  %655 = vst [vmem:[%s4 + $0xc0] sm:$0xff] %v623
  %656 = vst [vmem:[%s4 + $0xc8] sm:$0xff] %v624
  %657 = vst [vmem:[%s4 + $0xd0] sm:$0xff] %v625
  %658 = vst [vmem:[%s4 + $0xd8] sm:$0xff] %v626
  %659 = vst [vmem:[%s4 + $0xe0] sm:$0xff] %v627
  %660 = vst [vmem:[%s4 + $0xe8] sm:$0xff] %v628
  %661 = vst [vmem:[%s4 + $0xf0] sm:$0xff] %v629
  %662 = vst [vmem:[%s4 + $0xf8] sm:$0xff] %v630
  // Predicated region
  $region22: #{generator_forward.11} parent=0 // pred_check
    _
  $region23: #{generator_forward.11} parent=0 // pred_check_branch
    %664 = sbr.rel (0) target = $region25
  $region24: #{generator_forward.11} parent=0 // pred_region
    _
  $region25: #{generator_forward.11} parent=0 // pred_fallthru
    _
  // Predicated region
  $region26: #{generator_forward.11} parent=0 // pred_check
    _
  $region27: #{generator_forward.11} parent=0 // pred_check_branch
    %666 = sbr.rel (0) target = $region29
  $region28: #{generator_forward.11} parent=0 // pred_region
    _
  $region29: #{generator_forward.11} parent=0 // pred_fallthru
    _

// kernel: generator_forward.12
$region0: #{generator_forward.12}
  #allocation0 [shape = 'u32[]', space=smem, size = 0x4, offset = 0x4, fixed_abs, tag = 'smem constant byte address 0x4 - core index']
  #allocation1 [shape = 'u32[144,128]{1,0:T(1,128)}', space=vmem, size = 0x12000, scoped, tag = 'internal scratch']
  %s0 = inlined_call_operand.vmem [shape: f32[16,512], index: 0, kind: input, shape index: {}]
  %s1 = inlined_call_operand.vmem [shape: f32[2,512], index: 1, kind: output, shape index: {}]
  %s2 = sld [smem:[#allocation0]]
  $region18: #{generator_forward.12} parent=0
    _
  %s4 = ssub.s32 1, %s2
  %s5 = scalar_select 0, %s4, %s2
  // Predicated region
  $region2: #{generator_forward.12} parent=0 // pred_check
    _
  $region3: #{generator_forward.12} parent=0 // pred_check_branch
    %7 = sbr.rel (0) target = $region5
  $region4: #{generator_forward.12} parent=0 // pred_region
    _
  $region5: #{generator_forward.12} parent=0 // pred_fallthru
    _
  %p8 = scmp.eq.s32.totalorder 0, 0
  // Predicated region
  $region6: #{generator_forward.12} parent=0 // pred_check
    %p9 = pneg %p8
  $region7: #{generator_forward.12} parent=0 // pred_check_branch
    %11 = sbr.rel (%p9) target = $region9
  $region8: #{generator_forward.12} parent=0 // pred_region
    %12 = vst [vmem:[%s1] sm:$0xff] 0.0
  $region9: #{generator_forward.12} parent=0 // pred_fallthru
    _
  %v13 = vld [vmem:[%s0] sm:$0xff]
  %v14 = vld [vmem:[%s0 + $0x8] sm:$0xff]
  %v15 = vld [vmem:[%s0 + $0x10] sm:$0xff]
  %v16 = vld [vmem:[%s0 + $0x18] sm:$0xff]
  %v17 = vld [vmem:[%s0 + $0x20] sm:$0xff]
  %v18 = vld [vmem:[%s0 + $0x28] sm:$0xff]
  %v19 = vld [vmem:[%s0 + $0x30] sm:$0xff]
  %v20 = vld [vmem:[%s0 + $0x38] sm:$0xff]
  %v21 = vld [vmem:[%s1] ss:$2 sm:$0xf]
  %v22 = vadd.f32 %v13, %v17
  %v23 = vrot.slane %v22, 4
  %v24 = vadd.f32 %v22, %v23
  %v25 = vrot.slane %v24, 2
  %v26 = vadd.f32 %v24, %v25
  %v27 = vrot.slane %v26, 1
  %v28 = vadd.f32 %v26, %v27
  %v29 = vadd.f32 %v14, %v18
  %v30 = vrot.slane %v29, 4
  %v31 = vadd.f32 %v29, %v30
  %v32 = vrot.slane %v31, 2
  %v33 = vadd.f32 %v31, %v32
  %v34 = vrot.slane %v33, 1
  %v35 = vadd.f32 %v33, %v34
  %v36 = vadd.f32 %v15, %v19
  %v37 = vrot.slane %v36, 4
  %v38 = vadd.f32 %v36, %v37
  %v39 = vrot.slane %v38, 2
  %v40 = vadd.f32 %v38, %v39
  %v41 = vrot.slane %v40, 1
  %v42 = vadd.f32 %v40, %v41
  %v43 = vadd.f32 %v16, %v20
  %v44 = vrot.slane %v43, 4
  %v45 = vadd.f32 %v43, %v44
  %v46 = vrot.slane %v45, 2
  %v47 = vadd.f32 %v45, %v46
  %v48 = vrot.slane %v47, 1
  %v49 = vadd.f32 %v47, %v48
  %v54 = vcombine.low %v28, %v35
  %v55 = vcombine.low %v42, %v49
  %v57 = vunpack.c.l.s4 1966171168
  %v58 = vunpack.c.0.s8 %v57
  %v59 = vlaneseq
  %v60 = vshrl.u32 %v59, 7
  %v61 = vsub.s32 %v58, %v60
  %v62 = vrot.slane %v54, %v61
  %v64 = vunpack.c.l.s4 1966171168
  %v65 = vunpack.c.0.s8 %v64
  %v66 = vlaneseq
  %v67 = vshrl.u32 %v66, 7
  %v68 = vsub.s32 %v65, %v67
  %v69 = vrot.slane %v55, %v68
  %v70 = vcombine.low %v62, %v69
  %v72 = vunpack.c.l.s4 1966171168
  %v73 = vunpack.c.0.s8 %v72
  %v74 = vlaneseq
  %v75 = vshrl.u32 %v74, 7
  %v76 = vsub.s32 %v73, %v75
  %v77 = vrot.slane %v70, %v76
  %v79 = vadd.f32 %v21, %v77
  %v80 = vlaneseq
  %vm81 = vcmp.ge.s32.totalorder %v80, 0
  %vm82 = vcmp.lt.s32.totalorder %v80, 512
  %vm83 = vmand %vm81, %vm82
  %84 = vst.msk [vmem:[%s1] ss:$2 sm:$0xf] %vm83, %v79
  %s85 = scalar_lea.vmem %s1, 1
  %v86 = vld [vmem:[%s85] ss:$2 sm:$0xf]
  %v87 = vmul.f32 %v13, %v13
  %v88 = vmul.f32 %v14, %v14
  %v89 = vmul.f32 %v15, %v15
  %v90 = vmul.f32 %v16, %v16
  %v91 = vmul.f32 %v17, %v17
  %v92 = vmul.f32 %v18, %v18
  %v93 = vmul.f32 %v19, %v19
  %v94 = vmul.f32 %v20, %v20
  %v95 = vadd.f32 %v87, %v91
  %v96 = vrot.slane %v95, 4
  %v97 = vadd.f32 %v95, %v96
  %v98 = vrot.slane %v97, 2
  %v99 = vadd.f32 %v97, %v98
  %v100 = vrot.slane %v99, 1
  %v101 = vadd.f32 %v99, %v100
  %v102 = vadd.f32 %v88, %v92
  %v103 = vrot.slane %v102, 4
  %v104 = vadd.f32 %v102, %v103
  %v105 = vrot.slane %v104, 2
  %v106 = vadd.f32 %v104, %v105
  %v107 = vrot.slane %v106, 1
  %v108 = vadd.f32 %v106, %v107
  %v109 = vadd.f32 %v89, %v93
  %v110 = vrot.slane %v109, 4
  %v111 = vadd.f32 %v109, %v110
  %v112 = vrot.slane %v111, 2
  %v113 = vadd.f32 %v111, %v112
  %v114 = vrot.slane %v113, 1
  %v115 = vadd.f32 %v113, %v114
  %v116 = vadd.f32 %v90, %v94
  %v117 = vrot.slane %v116, 4
  %v118 = vadd.f32 %v116, %v117
  %v119 = vrot.slane %v118, 2
  %v120 = vadd.f32 %v118, %v119
  %v121 = vrot.slane %v120, 1
  %v122 = vadd.f32 %v120, %v121
  %v127 = vcombine.low %v101, %v108
  %v128 = vcombine.low %v115, %v122
  %v130 = vunpack.c.l.s4 1966171168
  %v131 = vunpack.c.0.s8 %v130
  %v132 = vlaneseq
  %v133 = vshrl.u32 %v132, 7
  %v134 = vsub.s32 %v131, %v133
  %v135 = vrot.slane %v127, %v134
  %v137 = vunpack.c.l.s4 1966171168
  %v138 = vunpack.c.0.s8 %v137
  %v139 = vlaneseq
  %v140 = vshrl.u32 %v139, 7
  %v141 = vsub.s32 %v138, %v140
  %v142 = vrot.slane %v128, %v141
  %v143 = vcombine.low %v135, %v142
  %v145 = vunpack.c.l.s4 1966171168
  %v146 = vunpack.c.0.s8 %v145
  %v147 = vlaneseq
  %v148 = vshrl.u32 %v147, 7
  %v149 = vsub.s32 %v146, %v148
  %v150 = vrot.slane %v143, %v149
  %v152 = vadd.f32 %v86, %v150
  %153 = vst.msk [vmem:[%s85] ss:$2 sm:$0xf] %vm83, %v152
  // Predicated region
  $region10: #{generator_forward.12} parent=0 // pred_check
    _
  $region11: #{generator_forward.12} parent=0 // pred_check_branch
    %155 = sbr.rel (0) target = $region13
  $region12: #{generator_forward.12} parent=0 // pred_region
    _
  $region13: #{generator_forward.12} parent=0 // pred_fallthru
    _
  // Predicated region
  $region14: #{generator_forward.12} parent=0 // pred_check
    _
  $region15: #{generator_forward.12} parent=0 // pred_check_branch
    %157 = sbr.rel (0) target = $region17
  $region16: #{generator_forward.12} parent=0 // pred_region
    _
  $region17: #{generator_forward.12} parent=0 // pred_fallthru
    _

// kernel: generator_forward.13
$region0: #{generator_forward.13}
  #allocation0 [shape = 'u32[]', space=smem, size = 0x4, offset = 0x4, fixed_abs, tag = 'smem constant byte address 0x4 - core index']
  #allocation1 [shape = 'u32[144,128]{1,0:T(1,128)}', space=vmem, size = 0x12000, scoped, tag = 'internal scratch']
  %s0 = inlined_call_operand.vmem [shape: f32[128,64], index: 0, kind: input, shape index: {}]
  %s1 = inlined_call_operand.vmem [shape: f32[64,512], index: 1, kind: input, shape index: {}]
  %s2 = inlined_call_operand.vmem [shape: f32[1,64], index: 2, kind: input, shape index: {}]
  %s3 = inlined_call_operand.vmem [shape: f32[1,64], index: 3, kind: input, shape index: {}]
  %s4 = inlined_call_operand.vmem [shape: f32[128,512], index: 4, kind: output, shape index: {}]
  %s5 = sld [smem:[#allocation0]]
  $region30: #{generator_forward.13} parent=0
    _
  %s7 = ssub.s32 1, %s5
  %s8 = scalar_select 0, %s7, %s5
  // Predicated region
  $region2: #{generator_forward.13} parent=0 // pred_check
    _
  $region3: #{generator_forward.13} parent=0 // pred_check_branch
    %10 = sbr.rel (0) target = $region5
  $region4: #{generator_forward.13} parent=0 // pred_region
    _
  $region5: #{generator_forward.13} parent=0 // pred_fallthru
    _
  // Predicated region
  $region6: #{generator_forward.13} parent=0 // pred_check
    _
  $region7: #{generator_forward.13} parent=0 // pred_check_branch
    %12 = sbr.rel (0) target = $region9
  $region8: #{generator_forward.13} parent=0 // pred_region
    _
  $region9: #{generator_forward.13} parent=0 // pred_fallthru
    _
  // Predicated region
  $region10: #{generator_forward.13} parent=0 // pred_check
    _
  $region11: #{generator_forward.13} parent=0 // pred_check_branch
    %14 = sbr.rel (0) target = $region13
  $region12: #{generator_forward.13} parent=0 // pred_region
    _
  $region13: #{generator_forward.13} parent=0 // pred_fallthru
    _
  // Predicated region
  $region14: #{generator_forward.13} parent=0 // pred_check
    _
  $region15: #{generator_forward.13} parent=0 // pred_check_branch
    %16 = sbr.rel (0) target = $region17
  $region16: #{generator_forward.13} parent=0 // pred_region
    _
  $region17: #{generator_forward.13} parent=0 // pred_fallthru
    _
  %p17 = scmp.eq.s32.totalorder 0, 0
  // Predicated region
  $region18: #{generator_forward.13} parent=0 // pred_check
    %p18 = pneg %p17
  $region19: #{generator_forward.13} parent=0 // pred_check_branch
    %20 = sbr.rel (%p18) target = $region21
  $region20: #{generator_forward.13} parent=0 // pred_region
    %21 = vst [vmem:[%s4] sm:$0xff] 0.0
    %22 = vst [vmem:[%s4 + $0x8] sm:$0xff] 0.0
    %23 = vst [vmem:[%s4 + $0x10] sm:$0xff] 0.0
    %24 = vst [vmem:[%s4 + $0x18] sm:$0xff] 0.0
    %25 = vst [vmem:[%s4 + $0x20] sm:$0xff] 0.0
    %26 = vst [vmem:[%s4 + $0x28] sm:$0xff] 0.0
    %27 = vst [vmem:[%s4 + $0x30] sm:$0xff] 0.0
    %28 = vst [vmem:[%s4 + $0x38] sm:$0xff] 0.0
    %29 = vst [vmem:[%s4 + $0x40] sm:$0xff] 0.0
    %30 = vst [vmem:[%s4 + $0x48] sm:$0xff] 0.0
    %31 = vst [vmem:[%s4 + $0x50] sm:$0xff] 0.0
    %32 = vst [vmem:[%s4 + $0x58] sm:$0xff] 0.0
    %33 = vst [vmem:[%s4 + $0x60] sm:$0xff] 0.0
    %34 = vst [vmem:[%s4 + $0x68] sm:$0xff] 0.0
    %35 = vst [vmem:[%s4 + $0x70] sm:$0xff] 0.0
    %36 = vst [vmem:[%s4 + $0x78] sm:$0xff] 0.0
    %37 = vst [vmem:[%s4 + $0x80] sm:$0xff] 0.0
    %38 = vst [vmem:[%s4 + $0x88] sm:$0xff] 0.0
    %39 = vst [vmem:[%s4 + $0x90] sm:$0xff] 0.0
    %40 = vst [vmem:[%s4 + $0x98] sm:$0xff] 0.0
    %41 = vst [vmem:[%s4 + $0xa0] sm:$0xff] 0.0
    %42 = vst [vmem:[%s4 + $0xa8] sm:$0xff] 0.0
    %43 = vst [vmem:[%s4 + $0xb0] sm:$0xff] 0.0
    %44 = vst [vmem:[%s4 + $0xb8] sm:$0xff] 0.0
    %45 = vst [vmem:[%s4 + $0xc0] sm:$0xff] 0.0
    %46 = vst [vmem:[%s4 + $0xc8] sm:$0xff] 0.0
    %47 = vst [vmem:[%s4 + $0xd0] sm:$0xff] 0.0
    %48 = vst [vmem:[%s4 + $0xd8] sm:$0xff] 0.0
    %49 = vst [vmem:[%s4 + $0xe0] sm:$0xff] 0.0
    %50 = vst [vmem:[%s4 + $0xe8] sm:$0xff] 0.0
    %51 = vst [vmem:[%s4 + $0xf0] sm:$0xff] 0.0
    %52 = vst [vmem:[%s4 + $0xf8] sm:$0xff] 0.0
    %53 = vst [vmem:[%s4 + $0x100] sm:$0xff] 0.0
    %54 = vst [vmem:[%s4 + $0x108] sm:$0xff] 0.0
    %55 = vst [vmem:[%s4 + $0x110] sm:$0xff] 0.0
    %56 = vst [vmem:[%s4 + $0x118] sm:$0xff] 0.0
    %57 = vst [vmem:[%s4 + $0x120] sm:$0xff] 0.0
    %58 = vst [vmem:[%s4 + $0x128] sm:$0xff] 0.0
    %59 = vst [vmem:[%s4 + $0x130] sm:$0xff] 0.0
    %60 = vst [vmem:[%s4 + $0x138] sm:$0xff] 0.0
    %61 = vst [vmem:[%s4 + $0x140] sm:$0xff] 0.0
    %62 = vst [vmem:[%s4 + $0x148] sm:$0xff] 0.0
    %63 = vst [vmem:[%s4 + $0x150] sm:$0xff] 0.0
    %64 = vst [vmem:[%s4 + $0x158] sm:$0xff] 0.0
    %65 = vst [vmem:[%s4 + $0x160] sm:$0xff] 0.0
    %66 = vst [vmem:[%s4 + $0x168] sm:$0xff] 0.0
    %67 = vst [vmem:[%s4 + $0x170] sm:$0xff] 0.0
    %68 = vst [vmem:[%s4 + $0x178] sm:$0xff] 0.0
    %69 = vst [vmem:[%s4 + $0x180] sm:$0xff] 0.0
    %70 = vst [vmem:[%s4 + $0x188] sm:$0xff] 0.0
    %71 = vst [vmem:[%s4 + $0x190] sm:$0xff] 0.0
    %72 = vst [vmem:[%s4 + $0x198] sm:$0xff] 0.0
    %73 = vst [vmem:[%s4 + $0x1a0] sm:$0xff] 0.0
    %74 = vst [vmem:[%s4 + $0x1a8] sm:$0xff] 0.0
    %75 = vst [vmem:[%s4 + $0x1b0] sm:$0xff] 0.0
    %76 = vst [vmem:[%s4 + $0x1b8] sm:$0xff] 0.0
    %77 = vst [vmem:[%s4 + $0x1c0] sm:$0xff] 0.0
    %78 = vst [vmem:[%s4 + $0x1c8] sm:$0xff] 0.0
    %79 = vst [vmem:[%s4 + $0x1d0] sm:$0xff] 0.0
    %80 = vst [vmem:[%s4 + $0x1d8] sm:$0xff] 0.0
    %81 = vst [vmem:[%s4 + $0x1e0] sm:$0xff] 0.0
    %82 = vst [vmem:[%s4 + $0x1e8] sm:$0xff] 0.0
    %83 = vst [vmem:[%s4 + $0x1f0] sm:$0xff] 0.0
    %84 = vst [vmem:[%s4 + $0x1f8] sm:$0xff] 0.0
  $region21: #{generator_forward.13} parent=0 // pred_fallthru
    _
  %v85 = vld [vmem:[%s0] sm:$0xff]
  %v86 = vld [vmem:[%s0 + $0x8] sm:$0xff]
  %v87 = vld [vmem:[%s0 + $0x10] sm:$0xff]
  %v88 = vld [vmem:[%s0 + $0x18] sm:$0xff]
  %v89 = vld [vmem:[%s0 + $0x20] sm:$0xff]
  %v90 = vld [vmem:[%s0 + $0x28] sm:$0xff]
  %v91 = vld [vmem:[%s0 + $0x30] sm:$0xff]
  %v92 = vld [vmem:[%s0 + $0x38] sm:$0xff]
  %v93 = vld [vmem:[%s0 + $0x40] sm:$0xff]
  %v94 = vld [vmem:[%s0 + $0x48] sm:$0xff]
  %v95 = vld [vmem:[%s0 + $0x50] sm:$0xff]
  %v96 = vld [vmem:[%s0 + $0x58] sm:$0xff]
  %v97 = vld [vmem:[%s0 + $0x60] sm:$0xff]
  %v98 = vld [vmem:[%s0 + $0x68] sm:$0xff]
  %v99 = vld [vmem:[%s0 + $0x70] sm:$0xff]
  %v100 = vld [vmem:[%s0 + $0x78] sm:$0xff]
  %v101 = vld [vmem:[%s2] sm:$0x1]
  %v103 = vlaneseq
  %v104 = vshrl.u32 %v103, 7
  %v105 = vsub.s32 0, %v104
  %v106 = vrot.slane %v101, %v105
  %v108 = vmul.f32 %v85, %v106
  %v109 = vmul.f32 %v86, %v106
  %v110 = vmul.f32 %v87, %v106
  %v111 = vmul.f32 %v88, %v106
  %v112 = vmul.f32 %v89, %v106
  %v113 = vmul.f32 %v90, %v106
  %v114 = vmul.f32 %v91, %v106
  %v115 = vmul.f32 %v92, %v106
  %v116 = vmul.f32 %v93, %v106
  %v117 = vmul.f32 %v94, %v106
  %v118 = vmul.f32 %v95, %v106
  %v119 = vmul.f32 %v96, %v106
  %v120 = vmul.f32 %v97, %v106
  %v121 = vmul.f32 %v98, %v106
  %v122 = vmul.f32 %v99, %v106
  %v123 = vmul.f32 %v100, %v106
  %v124 = vld [vmem:[%s3] sm:$0x1]
  %v126 = vlaneseq
  %v127 = vshrl.u32 %v126, 7
  %v128 = vsub.s32 0, %v127
  %v129 = vrot.slane %v124, %v128
  %v131 = vadd.f32 %v108, %v129
  %v132 = vadd.f32 %v109, %v129
  %v133 = vadd.f32 %v110, %v129
  %v134 = vadd.f32 %v111, %v129
  %v135 = vadd.f32 %v112, %v129
  %v136 = vadd.f32 %v113, %v129
  %v137 = vadd.f32 %v114, %v129
  %v138 = vadd.f32 %v115, %v129
  %v139 = vadd.f32 %v116, %v129
  %v140 = vadd.f32 %v117, %v129
  %v141 = vadd.f32 %v118, %v129
  %v142 = vadd.f32 %v119, %v129
  %v143 = vadd.f32 %v120, %v129
  %v144 = vadd.f32 %v121, %v129
  %v145 = vadd.f32 %v122, %v129
  %v146 = vadd.f32 %v123, %v129
  %v147 = vmax.f32 %v131, 0.0
  %v148 = vmax.f32 %v132, 0.0
  %v149 = vmax.f32 %v133, 0.0
  %v150 = vmax.f32 %v134, 0.0
  %v151 = vmax.f32 %v135, 0.0
  %v152 = vmax.f32 %v136, 0.0
  %v153 = vmax.f32 %v137, 0.0
  %v154 = vmax.f32 %v138, 0.0
  %v155 = vmax.f32 %v139, 0.0
  %v156 = vmax.f32 %v140, 0.0
  %v157 = vmax.f32 %v141, 0.0
  %v158 = vmax.f32 %v142, 0.0
  %v159 = vmax.f32 %v143, 0.0
  %v160 = vmax.f32 %v144, 0.0
  %v161 = vmax.f32 %v145, 0.0
  %v162 = vmax.f32 %v146, 0.0
  %v163 = vld [vmem:[%s4] sm:$0xff]
  %v164 = vld [vmem:[%s4 + $0x8] sm:$0xff]
  %v165 = vld [vmem:[%s4 + $0x10] sm:$0xff]
  %v166 = vld [vmem:[%s4 + $0x18] sm:$0xff]
  %v167 = vld [vmem:[%s4 + $0x20] sm:$0xff]
  %v168 = vld [vmem:[%s4 + $0x28] sm:$0xff]
  %v169 = vld [vmem:[%s4 + $0x30] sm:$0xff]
  %v170 = vld [vmem:[%s4 + $0x38] sm:$0xff]
  %v171 = vld [vmem:[%s4 + $0x40] sm:$0xff]
  %v172 = vld [vmem:[%s4 + $0x48] sm:$0xff]
  %v173 = vld [vmem:[%s4 + $0x50] sm:$0xff]
  %v174 = vld [vmem:[%s4 + $0x58] sm:$0xff]
  %v175 = vld [vmem:[%s4 + $0x60] sm:$0xff]
  %v176 = vld [vmem:[%s4 + $0x68] sm:$0xff]
  %v177 = vld [vmem:[%s4 + $0x70] sm:$0xff]
  %v178 = vld [vmem:[%s4 + $0x78] sm:$0xff]
  %v179 = vld [vmem:[%s4 + $0x80] sm:$0xff]
  %v180 = vld [vmem:[%s4 + $0x88] sm:$0xff]
  %v181 = vld [vmem:[%s4 + $0x90] sm:$0xff]
  %v182 = vld [vmem:[%s4 + $0x98] sm:$0xff]
  %v183 = vld [vmem:[%s4 + $0xa0] sm:$0xff]
  %v184 = vld [vmem:[%s4 + $0xa8] sm:$0xff]
  %v185 = vld [vmem:[%s4 + $0xb0] sm:$0xff]
  %v186 = vld [vmem:[%s4 + $0xb8] sm:$0xff]
  %v187 = vld [vmem:[%s4 + $0xc0] sm:$0xff]
  %v188 = vld [vmem:[%s4 + $0xc8] sm:$0xff]
  %v189 = vld [vmem:[%s4 + $0xd0] sm:$0xff]
  %v190 = vld [vmem:[%s4 + $0xd8] sm:$0xff]
  %v191 = vld [vmem:[%s4 + $0xe0] sm:$0xff]
  %v192 = vld [vmem:[%s4 + $0xe8] sm:$0xff]
  %v193 = vld [vmem:[%s4 + $0xf0] sm:$0xff]
  %v194 = vld [vmem:[%s4 + $0xf8] sm:$0xff]
  %v195 = vld [vmem:[%s4 + $0x100] sm:$0xff]
  %v196 = vld [vmem:[%s4 + $0x108] sm:$0xff]
  %v197 = vld [vmem:[%s4 + $0x110] sm:$0xff]
  %v198 = vld [vmem:[%s4 + $0x118] sm:$0xff]
  %v199 = vld [vmem:[%s4 + $0x120] sm:$0xff]
  %v200 = vld [vmem:[%s4 + $0x128] sm:$0xff]
  %v201 = vld [vmem:[%s4 + $0x130] sm:$0xff]
  %v202 = vld [vmem:[%s4 + $0x138] sm:$0xff]
  %v203 = vld [vmem:[%s4 + $0x140] sm:$0xff]
  %v204 = vld [vmem:[%s4 + $0x148] sm:$0xff]
  %v205 = vld [vmem:[%s4 + $0x150] sm:$0xff]
  %v206 = vld [vmem:[%s4 + $0x158] sm:$0xff]
  %v207 = vld [vmem:[%s4 + $0x160] sm:$0xff]
  %v208 = vld [vmem:[%s4 + $0x168] sm:$0xff]
  %v209 = vld [vmem:[%s4 + $0x170] sm:$0xff]
  %v210 = vld [vmem:[%s4 + $0x178] sm:$0xff]
  %v211 = vld [vmem:[%s4 + $0x180] sm:$0xff]
  %v212 = vld [vmem:[%s4 + $0x188] sm:$0xff]
  %v213 = vld [vmem:[%s4 + $0x190] sm:$0xff]
  %v214 = vld [vmem:[%s4 + $0x198] sm:$0xff]
  %v215 = vld [vmem:[%s4 + $0x1a0] sm:$0xff]
  %v216 = vld [vmem:[%s4 + $0x1a8] sm:$0xff]
  %v217 = vld [vmem:[%s4 + $0x1b0] sm:$0xff]
  %v218 = vld [vmem:[%s4 + $0x1b8] sm:$0xff]
  %v219 = vld [vmem:[%s4 + $0x1c0] sm:$0xff]
  %v220 = vld [vmem:[%s4 + $0x1c8] sm:$0xff]
  %v221 = vld [vmem:[%s4 + $0x1d0] sm:$0xff]
  %v222 = vld [vmem:[%s4 + $0x1d8] sm:$0xff]
  %v223 = vld [vmem:[%s4 + $0x1e0] sm:$0xff]
  %v224 = vld [vmem:[%s4 + $0x1e8] sm:$0xff]
  %v225 = vld [vmem:[%s4 + $0x1f0] sm:$0xff]
  %v226 = vld [vmem:[%s4 + $0x1f8] sm:$0xff]
  %v227 = vld [vmem:[%s1] sm:$0xff]
  %v228 = vld [vmem:[%s1 + $0x8] sm:$0xff]
  %v229 = vld [vmem:[%s1 + $0x10] sm:$0xff]
  %v230 = vld [vmem:[%s1 + $0x18] sm:$0xff]
  %v231 = vld [vmem:[%s1 + $0x20] sm:$0xff]
  %v232 = vld [vmem:[%s1 + $0x28] sm:$0xff]
  %v233 = vld [vmem:[%s1 + $0x30] sm:$0xff]
  %v234 = vld [vmem:[%s1 + $0x38] sm:$0xff]
  %v235 = vld [vmem:[%s1 + $0x40] sm:$0xff]
  %v236 = vld [vmem:[%s1 + $0x48] sm:$0xff]
  %v237 = vld [vmem:[%s1 + $0x50] sm:$0xff]
  %v238 = vld [vmem:[%s1 + $0x58] sm:$0xff]
  %v239 = vld [vmem:[%s1 + $0x60] sm:$0xff]
  %v240 = vld [vmem:[%s1 + $0x68] sm:$0xff]
  %v241 = vld [vmem:[%s1 + $0x70] sm:$0xff]
  %v242 = vld [vmem:[%s1 + $0x78] sm:$0xff]
  %v243 = vld [vmem:[%s1 + $0x80] sm:$0xff]
  %v244 = vld [vmem:[%s1 + $0x88] sm:$0xff]
  %v245 = vld [vmem:[%s1 + $0x90] sm:$0xff]
  %v246 = vld [vmem:[%s1 + $0x98] sm:$0xff]
  %v247 = vld [vmem:[%s1 + $0xa0] sm:$0xff]
  %v248 = vld [vmem:[%s1 + $0xa8] sm:$0xff]
  %v249 = vld [vmem:[%s1 + $0xb0] sm:$0xff]
  %v250 = vld [vmem:[%s1 + $0xb8] sm:$0xff]
  %v251 = vld [vmem:[%s1 + $0xc0] sm:$0xff]
  %v252 = vld [vmem:[%s1 + $0xc8] sm:$0xff]
  %v253 = vld [vmem:[%s1 + $0xd0] sm:$0xff]
  %v254 = vld [vmem:[%s1 + $0xd8] sm:$0xff]
  %v255 = vld [vmem:[%s1 + $0xe0] sm:$0xff]
  %v256 = vld [vmem:[%s1 + $0xe8] sm:$0xff]
  %v257 = vld [vmem:[%s1 + $0xf0] sm:$0xff]
  %v258 = vld [vmem:[%s1 + $0xf8] sm:$0xff]
  %vm259 = vcmask 523264
  %v261 = vsel %vm259, %v147, 0
  %v264 = vsel %vm259, %v148, 0
  %v267 = vsel %vm259, %v149, 0
  %v270 = vsel %vm259, %v150, 0
  %v273 = vsel %vm259, %v151, 0
  %v276 = vsel %vm259, %v152, 0
  %v279 = vsel %vm259, %v153, 0
  %v282 = vsel %vm259, %v154, 0
  %v285 = vsel %vm259, %v155, 0
  %v288 = vsel %vm259, %v156, 0
  %v291 = vsel %vm259, %v157, 0
  %v294 = vsel %vm259, %v158, 0
  %v297 = vsel %vm259, %v159, 0
  %v300 = vsel %vm259, %v160, 0
  %v303 = vsel %vm259, %v161, 0
  %v306 = vsel %vm259, %v162, 0
  %308 = vmatprep.subr.mxu0 0.0
  %309 = vmatpush1.msra.mxu0 0.0
  %310 = vmatprep.subr.mxu0 0.0
  %311 = vmatpush1.msra.mxu0 0.0
  %312 = vmatprep.subr.mxu0 0.0
  %313 = vmatpush1.msra.mxu0 0.0
  %314 = vmatprep.subr.mxu0 0.0
  %315 = vmatpush1.msra.mxu0 0.0
  %316 = vmatprep.subr.mxu0 0.0
  %317 = vmatpush1.msra.mxu0 0.0
  %318 = vmatprep.subr.mxu0 0.0
  %319 = vmatpush1.msra.mxu0 0.0
  %320 = vmatprep.subr.mxu0 0.0
  %321 = vmatpush1.msra.mxu0 0.0
  %322 = vmatprep.subr.mxu0 0.0
  %323 = vmatpush1.msra.mxu0 0.0
  %324 = vmatprep.subr.mxu0 %v256
  %325 = vmatpush1.msra.mxu0 %v255
  %326 = vmatprep.subr.mxu0 %v252
  %327 = vmatpush1.msra.mxu0 %v251
  %328 = vmatprep.subr.mxu0 %v248
  %329 = vmatpush1.msra.mxu0 %v247
  %330 = vmatprep.subr.mxu0 %v244
  %331 = vmatpush1.msra.mxu0 %v243
  %332 = vmatprep.subr.mxu0 %v240
  %333 = vmatpush1.msra.mxu0 %v239
  %334 = vmatprep.subr.mxu0 %v236
  %335 = vmatpush1.msra.mxu0 %v235
  %336 = vmatprep.subr.mxu0 %v232
  %337 = vmatpush1.msra.mxu0 %v231
  %338 = vmatprep.subr.mxu0 %v228
  %339 = vmatpush1.msra.mxu0 %v227
  %340 = vmatprep.subr.mxu0 0.0
  %341 = vmatpush2.msra.mxu0 0.0
  %342 = vmatprep.subr.mxu0 0.0
  %343 = vmatpush2.msra.mxu0 0.0
  %344 = vmatprep.subr.mxu0 0.0
  %345 = vmatpush2.msra.mxu0 0.0
  %346 = vmatprep.subr.mxu0 0.0
  %347 = vmatpush2.msra.mxu0 0.0
  %348 = vmatprep.subr.mxu0 0.0
  %349 = vmatpush2.msra.mxu0 0.0
  %350 = vmatprep.subr.mxu0 0.0
  %351 = vmatpush2.msra.mxu0 0.0
  %352 = vmatprep.subr.mxu0 0.0
  %353 = vmatpush2.msra.mxu0 0.0
  %354 = vmatprep.subr.mxu0 0.0
  %355 = vmatpush2.msra.mxu0 0.0
  %356 = vmatprep.subr.mxu0 0.0
  %357 = vmatpush2.msra.mxu0 0.0
  %358 = vmatprep.subr.mxu0 0.0
  %359 = vmatpush2.msra.mxu0 0.0
  %360 = vmatprep.subr.mxu0 0.0
  %361 = vmatpush2.msra.mxu0 0.0
  %362 = vmatprep.subr.mxu0 0.0
  %363 = vmatpush2.msra.mxu0 0.0
  %364 = vmatprep.subr.mxu0 0.0
  %365 = vmatpush2.msra.mxu0 0.0
  %366 = vmatprep.subr.mxu0 0.0
  %367 = vmatpush2.msra.mxu0 0.0
  %368 = vmatprep.subr.mxu0 0.0
  %369 = vmatpush2.msra.mxu0 0.0
  %370 = vmatprep.subr.mxu0 0.0
  %371 = vmatpush2.msra.mxu0 0.0
  %372 = vmatprep.mubr.f32.mxu0 0.0
  %373 = vmatmul.mubr.f32.gmra.mxu0 %v261
  %v374 = vpop.f32.mrf.mxu0
  %v375 = vadd.f32 0.0, %v374
  %v376 = vpop.f32.mrf.mxu0
  %v377 = vadd.f32 0.0, %v376
  %378 = vmatprep.mubr.f32.mxu0 0.0
  %379 = vmatmul.mubr.f32.gmra.mxu0 %v264
  %v380 = vpop.f32.mrf.mxu0
  %v381 = vadd.f32 0.0, %v380
  %v382 = vpop.f32.mrf.mxu0
  %v383 = vadd.f32 0.0, %v382
  %384 = vmatprep.mubr.f32.mxu0 0.0
  %385 = vmatmul.mubr.f32.gmra.mxu0 %v267
  %v386 = vpop.f32.mrf.mxu0
  %v387 = vadd.f32 0.0, %v386
  %v388 = vpop.f32.mrf.mxu0
  %v389 = vadd.f32 0.0, %v388
  %390 = vmatprep.mubr.f32.mxu0 0.0
  %391 = vmatmul.mubr.f32.gmra.mxu0 %v270
  %v392 = vpop.f32.mrf.mxu0
  %v393 = vadd.f32 0.0, %v392
  %v394 = vpop.f32.mrf.mxu0
  %v395 = vadd.f32 0.0, %v394
  %396 = vmatprep.mubr.f32.mxu0 0.0
  %397 = vmatmul.mubr.f32.gmra.mxu0 %v273
  %v398 = vpop.f32.mrf.mxu0
  %v399 = vadd.f32 0.0, %v398
  %v400 = vpop.f32.mrf.mxu0
  %v401 = vadd.f32 0.0, %v400
  %402 = vmatprep.mubr.f32.mxu0 0.0
  %403 = vmatmul.mubr.f32.gmra.mxu0 %v276
  %v404 = vpop.f32.mrf.mxu0
  %v405 = vadd.f32 0.0, %v404
  %v406 = vpop.f32.mrf.mxu0
  %v407 = vadd.f32 0.0, %v406
  %408 = vmatprep.mubr.f32.mxu0 0.0
  %409 = vmatmul.mubr.f32.gmra.mxu0 %v279
  %v410 = vpop.f32.mrf.mxu0
  %v411 = vadd.f32 0.0, %v410
  %v412 = vpop.f32.mrf.mxu0
  %v413 = vadd.f32 0.0, %v412
  %414 = vmatprep.mubr.f32.mxu0 0.0
  %415 = vmatmul.mubr.f32.gmra.mxu0 %v282
  %v416 = vpop.f32.mrf.mxu0
  %v417 = vadd.f32 0.0, %v416
  %v418 = vpop.f32.mrf.mxu0
  %v419 = vadd.f32 0.0, %v418
  %420 = vmatprep.mubr.f32.mxu0 0.0
  %421 = vmatmul.mubr.f32.gmra.mxu0 %v285
  %v422 = vpop.f32.mrf.mxu0
  %v423 = vadd.f32 0.0, %v422
  %v424 = vpop.f32.mrf.mxu0
  %v425 = vadd.f32 0.0, %v424
  %426 = vmatprep.mubr.f32.mxu0 0.0
  %427 = vmatmul.mubr.f32.gmra.mxu0 %v288
  %v428 = vpop.f32.mrf.mxu0
  %v429 = vadd.f32 0.0, %v428
  %v430 = vpop.f32.mrf.mxu0
  %v431 = vadd.f32 0.0, %v430
  %432 = vmatprep.mubr.f32.mxu0 0.0
  %433 = vmatmul.mubr.f32.gmra.mxu0 %v291
  %v434 = vpop.f32.mrf.mxu0
  %v435 = vadd.f32 0.0, %v434
  %v436 = vpop.f32.mrf.mxu0
  %v437 = vadd.f32 0.0, %v436
  %438 = vmatprep.mubr.f32.mxu0 0.0
  %439 = vmatmul.mubr.f32.gmra.mxu0 %v294
  %v440 = vpop.f32.mrf.mxu0
  %v441 = vadd.f32 0.0, %v440
  %v442 = vpop.f32.mrf.mxu0
  %v443 = vadd.f32 0.0, %v442
  %444 = vmatprep.mubr.f32.mxu0 0.0
  %445 = vmatmul.mubr.f32.gmra.mxu0 %v297
  %v446 = vpop.f32.mrf.mxu0
  %v447 = vadd.f32 0.0, %v446
  %v448 = vpop.f32.mrf.mxu0
  %v449 = vadd.f32 0.0, %v448
  %450 = vmatprep.mubr.f32.mxu0 0.0
  %451 = vmatmul.mubr.f32.gmra.mxu0 %v300
  %v452 = vpop.f32.mrf.mxu0
  %v453 = vadd.f32 0.0, %v452
  %v454 = vpop.f32.mrf.mxu0
  %v455 = vadd.f32 0.0, %v454
  %456 = vmatprep.mubr.f32.mxu0 0.0
  %457 = vmatmul.mubr.f32.gmra.mxu0 %v303
  %v458 = vpop.f32.mrf.mxu0
  %v459 = vadd.f32 0.0, %v458
  %v460 = vpop.f32.mrf.mxu0
  %v461 = vadd.f32 0.0, %v460
  %462 = vmatprep.mubr.f32.mxu0 0.0
  %463 = vmatmul.mubr.f32.gmra.mxu0 %v306
  %v464 = vpop.f32.mrf.mxu0
  %v465 = vadd.f32 0.0, %v464
  %v466 = vpop.f32.mrf.mxu0
  %v467 = vadd.f32 0.0, %v466
  %468 = vdwg.mxu0
  %469 = vmatprep.subr.mxu0 0.0
  %470 = vmatpush1.msra.mxu0 0.0
  %471 = vmatprep.subr.mxu0 0.0
  %472 = vmatpush1.msra.mxu0 0.0
  %473 = vmatprep.subr.mxu0 0.0
  %474 = vmatpush1.msra.mxu0 0.0
  %475 = vmatprep.subr.mxu0 0.0
  %476 = vmatpush1.msra.mxu0 0.0
  %477 = vmatprep.subr.mxu0 0.0
  %478 = vmatpush1.msra.mxu0 0.0
  %479 = vmatprep.subr.mxu0 0.0
  %480 = vmatpush1.msra.mxu0 0.0
  %481 = vmatprep.subr.mxu0 0.0
  %482 = vmatpush1.msra.mxu0 0.0
  %483 = vmatprep.subr.mxu0 0.0
  %484 = vmatpush1.msra.mxu0 0.0
  %485 = vmatprep.subr.mxu0 %v258
  %486 = vmatpush1.msra.mxu0 %v257
  %487 = vmatprep.subr.mxu0 %v254
  %488 = vmatpush1.msra.mxu0 %v253
  %489 = vmatprep.subr.mxu0 %v250
  %490 = vmatpush1.msra.mxu0 %v249
  %491 = vmatprep.subr.mxu0 %v246
  %492 = vmatpush1.msra.mxu0 %v245
  %493 = vmatprep.subr.mxu0 %v242
  %494 = vmatpush1.msra.mxu0 %v241
  %495 = vmatprep.subr.mxu0 %v238
  %496 = vmatpush1.msra.mxu0 %v237
  %497 = vmatprep.subr.mxu0 %v234
  %498 = vmatpush1.msra.mxu0 %v233
  %499 = vmatprep.subr.mxu0 %v230
  %500 = vmatpush1.msra.mxu0 %v229
  %501 = vmatprep.subr.mxu0 0.0
  %502 = vmatpush2.msra.mxu0 0.0
  %503 = vmatprep.subr.mxu0 0.0
  %504 = vmatpush2.msra.mxu0 0.0
  %505 = vmatprep.subr.mxu0 0.0
  %506 = vmatpush2.msra.mxu0 0.0
  %507 = vmatprep.subr.mxu0 0.0
  %508 = vmatpush2.msra.mxu0 0.0
  %509 = vmatprep.subr.mxu0 0.0
  %510 = vmatpush2.msra.mxu0 0.0
  %511 = vmatprep.subr.mxu0 0.0
  %512 = vmatpush2.msra.mxu0 0.0
  %513 = vmatprep.subr.mxu0 0.0
  %514 = vmatpush2.msra.mxu0 0.0
  %515 = vmatprep.subr.mxu0 0.0
  %516 = vmatpush2.msra.mxu0 0.0
  %517 = vmatprep.subr.mxu0 0.0
  %518 = vmatpush2.msra.mxu0 0.0
  %519 = vmatprep.subr.mxu0 0.0
  %520 = vmatpush2.msra.mxu0 0.0
  %521 = vmatprep.subr.mxu0 0.0
  %522 = vmatpush2.msra.mxu0 0.0
  %523 = vmatprep.subr.mxu0 0.0
  %524 = vmatpush2.msra.mxu0 0.0
  %525 = vmatprep.subr.mxu0 0.0
  %526 = vmatpush2.msra.mxu0 0.0
  %527 = vmatprep.subr.mxu0 0.0
  %528 = vmatpush2.msra.mxu0 0.0
  %529 = vmatprep.subr.mxu0 0.0
  %530 = vmatpush2.msra.mxu0 0.0
  %531 = vmatprep.subr.mxu0 0.0
  %532 = vmatpush2.msra.mxu0 0.0
  %533 = vmatprep.mubr.f32.mxu0 0.0
  %534 = vmatmul.mubr.f32.gmra.mxu0 %v261
  %v535 = vpop.f32.mrf.mxu0
  %v536 = vadd.f32 0.0, %v535
  %v537 = vpop.f32.mrf.mxu0
  %v538 = vadd.f32 0.0, %v537
  %539 = vmatprep.mubr.f32.mxu0 0.0
  %540 = vmatmul.mubr.f32.gmra.mxu0 %v264
  %v541 = vpop.f32.mrf.mxu0
  %v542 = vadd.f32 0.0, %v541
  %v543 = vpop.f32.mrf.mxu0
  %v544 = vadd.f32 0.0, %v543
  %545 = vmatprep.mubr.f32.mxu0 0.0
  %546 = vmatmul.mubr.f32.gmra.mxu0 %v267
  %v547 = vpop.f32.mrf.mxu0
  %v548 = vadd.f32 0.0, %v547
  %v549 = vpop.f32.mrf.mxu0
  %v550 = vadd.f32 0.0, %v549
  %551 = vmatprep.mubr.f32.mxu0 0.0
  %552 = vmatmul.mubr.f32.gmra.mxu0 %v270
  %v553 = vpop.f32.mrf.mxu0
  %v554 = vadd.f32 0.0, %v553
  %v555 = vpop.f32.mrf.mxu0
  %v556 = vadd.f32 0.0, %v555
  %557 = vmatprep.mubr.f32.mxu0 0.0
  %558 = vmatmul.mubr.f32.gmra.mxu0 %v273
  %v559 = vpop.f32.mrf.mxu0
  %v560 = vadd.f32 0.0, %v559
  %v561 = vpop.f32.mrf.mxu0
  %v562 = vadd.f32 0.0, %v561
  %563 = vmatprep.mubr.f32.mxu0 0.0
  %564 = vmatmul.mubr.f32.gmra.mxu0 %v276
  %v565 = vpop.f32.mrf.mxu0
  %v566 = vadd.f32 0.0, %v565
  %v567 = vpop.f32.mrf.mxu0
  %v568 = vadd.f32 0.0, %v567
  %569 = vmatprep.mubr.f32.mxu0 0.0
  %570 = vmatmul.mubr.f32.gmra.mxu0 %v279
  %v571 = vpop.f32.mrf.mxu0
  %v572 = vadd.f32 0.0, %v571
  %v573 = vpop.f32.mrf.mxu0
  %v574 = vadd.f32 0.0, %v573
  %575 = vmatprep.mubr.f32.mxu0 0.0
  %576 = vmatmul.mubr.f32.gmra.mxu0 %v282
  %v577 = vpop.f32.mrf.mxu0
  %v578 = vadd.f32 0.0, %v577
  %v579 = vpop.f32.mrf.mxu0
  %v580 = vadd.f32 0.0, %v579
  %581 = vmatprep.mubr.f32.mxu0 0.0
  %582 = vmatmul.mubr.f32.gmra.mxu0 %v285
  %v583 = vpop.f32.mrf.mxu0
  %v584 = vadd.f32 0.0, %v583
  %v585 = vpop.f32.mrf.mxu0
  %v586 = vadd.f32 0.0, %v585
  %587 = vmatprep.mubr.f32.mxu0 0.0
  %588 = vmatmul.mubr.f32.gmra.mxu0 %v288
  %v589 = vpop.f32.mrf.mxu0
  %v590 = vadd.f32 0.0, %v589
  %v591 = vpop.f32.mrf.mxu0
  %v592 = vadd.f32 0.0, %v591
  %593 = vmatprep.mubr.f32.mxu0 0.0
  %594 = vmatmul.mubr.f32.gmra.mxu0 %v291
  %v595 = vpop.f32.mrf.mxu0
  %v596 = vadd.f32 0.0, %v595
  %v597 = vpop.f32.mrf.mxu0
  %v598 = vadd.f32 0.0, %v597
  %599 = vmatprep.mubr.f32.mxu0 0.0
  %600 = vmatmul.mubr.f32.gmra.mxu0 %v294
  %v601 = vpop.f32.mrf.mxu0
  %v602 = vadd.f32 0.0, %v601
  %v603 = vpop.f32.mrf.mxu0
  %v604 = vadd.f32 0.0, %v603
  %605 = vmatprep.mubr.f32.mxu0 0.0
  %606 = vmatmul.mubr.f32.gmra.mxu0 %v297
  %v607 = vpop.f32.mrf.mxu0
  %v608 = vadd.f32 0.0, %v607
  %v609 = vpop.f32.mrf.mxu0
  %v610 = vadd.f32 0.0, %v609
  %611 = vmatprep.mubr.f32.mxu0 0.0
  %612 = vmatmul.mubr.f32.gmra.mxu0 %v300
  %v613 = vpop.f32.mrf.mxu0
  %v614 = vadd.f32 0.0, %v613
  %v615 = vpop.f32.mrf.mxu0
  %v616 = vadd.f32 0.0, %v615
  %617 = vmatprep.mubr.f32.mxu0 0.0
  %618 = vmatmul.mubr.f32.gmra.mxu0 %v303
  %v619 = vpop.f32.mrf.mxu0
  %v620 = vadd.f32 0.0, %v619
  %v621 = vpop.f32.mrf.mxu0
  %v622 = vadd.f32 0.0, %v621
  %623 = vmatprep.mubr.f32.mxu0 0.0
  %624 = vmatmul.mubr.f32.gmra.mxu0 %v306
  %v625 = vpop.f32.mrf.mxu0
  %v626 = vadd.f32 0.0, %v625
  %v627 = vpop.f32.mrf.mxu0
  %v628 = vadd.f32 0.0, %v627
  %629 = vdwg.mxu0
  %v630 = vadd.f32 %v163, %v375
  %v631 = vadd.f32 %v164, %v377
  %v632 = vadd.f32 %v165, %v536
  %v633 = vadd.f32 %v166, %v538
  %v634 = vadd.f32 %v167, %v381
  %v635 = vadd.f32 %v168, %v383
  %v636 = vadd.f32 %v169, %v542
  %v637 = vadd.f32 %v170, %v544
  %v638 = vadd.f32 %v171, %v387
  %v639 = vadd.f32 %v172, %v389
  %v640 = vadd.f32 %v173, %v548
  %v641 = vadd.f32 %v174, %v550
  %v642 = vadd.f32 %v175, %v393
  %v643 = vadd.f32 %v176, %v395
  %v644 = vadd.f32 %v177, %v554
  %v645 = vadd.f32 %v178, %v556
  %v646 = vadd.f32 %v179, %v399
  %v647 = vadd.f32 %v180, %v401
  %v648 = vadd.f32 %v181, %v560
  %v649 = vadd.f32 %v182, %v562
  %v650 = vadd.f32 %v183, %v405
  %v651 = vadd.f32 %v184, %v407
  %v652 = vadd.f32 %v185, %v566
  %v653 = vadd.f32 %v186, %v568
  %v654 = vadd.f32 %v187, %v411
  %v655 = vadd.f32 %v188, %v413
  %v656 = vadd.f32 %v189, %v572
  %v657 = vadd.f32 %v190, %v574
  %v658 = vadd.f32 %v191, %v417
  %v659 = vadd.f32 %v192, %v419
  %v660 = vadd.f32 %v193, %v578
  %v661 = vadd.f32 %v194, %v580
  %v662 = vadd.f32 %v195, %v423
  %v663 = vadd.f32 %v196, %v425
  %v664 = vadd.f32 %v197, %v584
  %v665 = vadd.f32 %v198, %v586
  %v666 = vadd.f32 %v199, %v429
  %v667 = vadd.f32 %v200, %v431
  %v668 = vadd.f32 %v201, %v590
  %v669 = vadd.f32 %v202, %v592
  %v670 = vadd.f32 %v203, %v435
  %v671 = vadd.f32 %v204, %v437
  %v672 = vadd.f32 %v205, %v596
  %v673 = vadd.f32 %v206, %v598
  %v674 = vadd.f32 %v207, %v441
  %v675 = vadd.f32 %v208, %v443
  %v676 = vadd.f32 %v209, %v602
  %v677 = vadd.f32 %v210, %v604
  %v678 = vadd.f32 %v211, %v447
  %v679 = vadd.f32 %v212, %v449
  %v680 = vadd.f32 %v213, %v608
  %v681 = vadd.f32 %v214, %v610
  %v682 = vadd.f32 %v215, %v453
  %v683 = vadd.f32 %v216, %v455
  %v684 = vadd.f32 %v217, %v614
  %v685 = vadd.f32 %v218, %v616
  %v686 = vadd.f32 %v219, %v459
  %v687 = vadd.f32 %v220, %v461
  %v688 = vadd.f32 %v221, %v620
  %v689 = vadd.f32 %v222, %v622
  %v690 = vadd.f32 %v223, %v465
  %v691 = vadd.f32 %v224, %v467
  %v692 = vadd.f32 %v225, %v626
  %v693 = vadd.f32 %v226, %v628
  %694 = vst [vmem:[%s4] sm:$0xff] %v630
  %695 = vst [vmem:[%s4 + $0x8] sm:$0xff] %v631
  %696 = vst [vmem:[%s4 + $0x10] sm:$0xff] %v632
  %697 = vst [vmem:[%s4 + $0x18] sm:$0xff] %v633
  %698 = vst [vmem:[%s4 + $0x20] sm:$0xff] %v634
  %699 = vst [vmem:[%s4 + $0x28] sm:$0xff] %v635
  %700 = vst [vmem:[%s4 + $0x30] sm:$0xff] %v636
  %701 = vst [vmem:[%s4 + $0x38] sm:$0xff] %v637
  %702 = vst [vmem:[%s4 + $0x40] sm:$0xff] %v638
  %703 = vst [vmem:[%s4 + $0x48] sm:$0xff] %v639
  %704 = vst [vmem:[%s4 + $0x50] sm:$0xff] %v640
  %705 = vst [vmem:[%s4 + $0x58] sm:$0xff] %v641
  %706 = vst [vmem:[%s4 + $0x60] sm:$0xff] %v642
  %707 = vst [vmem:[%s4 + $0x68] sm:$0xff] %v643
  %708 = vst [vmem:[%s4 + $0x70] sm:$0xff] %v644
  %709 = vst [vmem:[%s4 + $0x78] sm:$0xff] %v645
  %710 = vst [vmem:[%s4 + $0x80] sm:$0xff] %v646
  %711 = vst [vmem:[%s4 + $0x88] sm:$0xff] %v647
  %712 = vst [vmem:[%s4 + $0x90] sm:$0xff] %v648
  %713 = vst [vmem:[%s4 + $0x98] sm:$0xff] %v649
  %714 = vst [vmem:[%s4 + $0xa0] sm:$0xff] %v650
  %715 = vst [vmem:[%s4 + $0xa8] sm:$0xff] %v651
  %716 = vst [vmem:[%s4 + $0xb0] sm:$0xff] %v652
  %717 = vst [vmem:[%s4 + $0xb8] sm:$0xff] %v653
  %718 = vst [vmem:[%s4 + $0xc0] sm:$0xff] %v654
  %719 = vst [vmem:[%s4 + $0xc8] sm:$0xff] %v655
  %720 = vst [vmem:[%s4 + $0xd0] sm:$0xff] %v656
  %721 = vst [vmem:[%s4 + $0xd8] sm:$0xff] %v657
  %722 = vst [vmem:[%s4 + $0xe0] sm:$0xff] %v658
  %723 = vst [vmem:[%s4 + $0xe8] sm:$0xff] %v659
  %724 = vst [vmem:[%s4 + $0xf0] sm:$0xff] %v660
  %725 = vst [vmem:[%s4 + $0xf8] sm:$0xff] %v661
  %726 = vst [vmem:[%s4 + $0x100] sm:$0xff] %v662
  %727 = vst [vmem:[%s4 + $0x108] sm:$0xff] %v663
  %728 = vst [vmem:[%s4 + $0x110] sm:$0xff] %v664
  %729 = vst [vmem:[%s4 + $0x118] sm:$0xff] %v665
  %730 = vst [vmem:[%s4 + $0x120] sm:$0xff] %v666
  %731 = vst [vmem:[%s4 + $0x128] sm:$0xff] %v667
  %732 = vst [vmem:[%s4 + $0x130] sm:$0xff] %v668
  %733 = vst [vmem:[%s4 + $0x138] sm:$0xff] %v669
  %734 = vst [vmem:[%s4 + $0x140] sm:$0xff] %v670
  %735 = vst [vmem:[%s4 + $0x148] sm:$0xff] %v671
  %736 = vst [vmem:[%s4 + $0x150] sm:$0xff] %v672
  %737 = vst [vmem:[%s4 + $0x158] sm:$0xff] %v673
  %738 = vst [vmem:[%s4 + $0x160] sm:$0xff] %v674
  %739 = vst [vmem:[%s4 + $0x168] sm:$0xff] %v675
  %740 = vst [vmem:[%s4 + $0x170] sm:$0xff] %v676
  %741 = vst [vmem:[%s4 + $0x178] sm:$0xff] %v677
  %742 = vst [vmem:[%s4 + $0x180] sm:$0xff] %v678
  %743 = vst [vmem:[%s4 + $0x188] sm:$0xff] %v679
  %744 = vst [vmem:[%s4 + $0x190] sm:$0xff] %v680
  %745 = vst [vmem:[%s4 + $0x198] sm:$0xff] %v681
  %746 = vst [vmem:[%s4 + $0x1a0] sm:$0xff] %v682
  %747 = vst [vmem:[%s4 + $0x1a8] sm:$0xff] %v683
  %748 = vst [vmem:[%s4 + $0x1b0] sm:$0xff] %v684
  %749 = vst [vmem:[%s4 + $0x1b8] sm:$0xff] %v685
  %750 = vst [vmem:[%s4 + $0x1c0] sm:$0xff] %v686
  %751 = vst [vmem:[%s4 + $0x1c8] sm:$0xff] %v687
  %752 = vst [vmem:[%s4 + $0x1d0] sm:$0xff] %v688
  %753 = vst [vmem:[%s4 + $0x1d8] sm:$0xff] %v689
  %754 = vst [vmem:[%s4 + $0x1e0] sm:$0xff] %v690
  %755 = vst [vmem:[%s4 + $0x1e8] sm:$0xff] %v691
  %756 = vst [vmem:[%s4 + $0x1f0] sm:$0xff] %v692
  %757 = vst [vmem:[%s4 + $0x1f8] sm:$0xff] %v693
  // Predicated region
  $region22: #{generator_forward.13} parent=0 // pred_check
    _
  $region23: #{generator_forward.13} parent=0 // pred_check_branch
    %759 = sbr.rel (0) target = $region25
  $region24: #{generator_forward.13} parent=0 // pred_region
    _
  $region25: #{generator_forward.13} parent=0 // pred_fallthru
    _
  // Predicated region
  $region26: #{generator_forward.13} parent=0 // pred_check
    _
  $region27: #{generator_forward.13} parent=0 // pred_check_branch
    %761 = sbr.rel (0) target = $region29
  $region28: #{generator_forward.13} parent=0 // pred_region
    _
  $region29: #{generator_forward.13} parent=0 // pred_fallthru
    _

// kernel: generator_forward.14
$region0: #{generator_forward.14}
  #allocation0 [shape = 'u32[]', space=smem, size = 0x4, offset = 0x4, fixed_abs, tag = 'smem constant byte address 0x4 - core index']
  #allocation1 [shape = 'u32[144,128]{1,0:T(1,128)}', space=vmem, size = 0x12000, scoped, tag = 'internal scratch']
  %s0 = inlined_call_operand.vmem [shape: f32[32,512], index: 0, kind: input, shape index: {}]
  %s1 = inlined_call_operand.vmem [shape: f32[2,512], index: 1, kind: output, shape index: {}]
  %s2 = sld [smem:[#allocation0]]
  $region18: #{generator_forward.14} parent=0
    _
  %s4 = ssub.s32 1, %s2
  %s5 = scalar_select 0, %s4, %s2
  // Predicated region
  $region2: #{generator_forward.14} parent=0 // pred_check
    _
  $region3: #{generator_forward.14} parent=0 // pred_check_branch
    %7 = sbr.rel (0) target = $region5
  $region4: #{generator_forward.14} parent=0 // pred_region
    _
  $region5: #{generator_forward.14} parent=0 // pred_fallthru
    _
  %p8 = scmp.eq.s32.totalorder 0, 0
  // Predicated region
  $region6: #{generator_forward.14} parent=0 // pred_check
    %p9 = pneg %p8
  $region7: #{generator_forward.14} parent=0 // pred_check_branch
    %11 = sbr.rel (%p9) target = $region9
  $region8: #{generator_forward.14} parent=0 // pred_region
    %12 = vst [vmem:[%s1] sm:$0xff] 0.0
  $region9: #{generator_forward.14} parent=0 // pred_fallthru
    _
  %v13 = vld [vmem:[%s0] sm:$0xff]
  %v14 = vld [vmem:[%s0 + $0x8] sm:$0xff]
  %v15 = vld [vmem:[%s0 + $0x10] sm:$0xff]
  %v16 = vld [vmem:[%s0 + $0x18] sm:$0xff]
  %v17 = vld [vmem:[%s0 + $0x20] sm:$0xff]
  %v18 = vld [vmem:[%s0 + $0x28] sm:$0xff]
  %v19 = vld [vmem:[%s0 + $0x30] sm:$0xff]
  %v20 = vld [vmem:[%s0 + $0x38] sm:$0xff]
  %v21 = vld [vmem:[%s0 + $0x40] sm:$0xff]
  %v22 = vld [vmem:[%s0 + $0x48] sm:$0xff]
  %v23 = vld [vmem:[%s0 + $0x50] sm:$0xff]
  %v24 = vld [vmem:[%s0 + $0x58] sm:$0xff]
  %v25 = vld [vmem:[%s0 + $0x60] sm:$0xff]
  %v26 = vld [vmem:[%s0 + $0x68] sm:$0xff]
  %v27 = vld [vmem:[%s0 + $0x70] sm:$0xff]
  %v28 = vld [vmem:[%s0 + $0x78] sm:$0xff]
  %v29 = vld [vmem:[%s1] ss:$2 sm:$0xf]
  %v30 = vadd.f32 %v13, %v17
  %v31 = vadd.f32 %v30, %v21
  %v32 = vadd.f32 %v31, %v25
  %v33 = vrot.slane %v32, 4
  %v34 = vadd.f32 %v32, %v33
  %v35 = vrot.slane %v34, 2
  %v36 = vadd.f32 %v34, %v35
  %v37 = vrot.slane %v36, 1
  %v38 = vadd.f32 %v36, %v37
  %v39 = vadd.f32 %v14, %v18
  %v40 = vadd.f32 %v39, %v22
  %v41 = vadd.f32 %v40, %v26
  %v42 = vrot.slane %v41, 4
  %v43 = vadd.f32 %v41, %v42
  %v44 = vrot.slane %v43, 2
  %v45 = vadd.f32 %v43, %v44
  %v46 = vrot.slane %v45, 1
  %v47 = vadd.f32 %v45, %v46
  %v48 = vadd.f32 %v15, %v19
  %v49 = vadd.f32 %v48, %v23
  %v50 = vadd.f32 %v49, %v27
  %v51 = vrot.slane %v50, 4
  %v52 = vadd.f32 %v50, %v51
  %v53 = vrot.slane %v52, 2
  %v54 = vadd.f32 %v52, %v53
  %v55 = vrot.slane %v54, 1
  %v56 = vadd.f32 %v54, %v55
  %v57 = vadd.f32 %v16, %v20
  %v58 = vadd.f32 %v57, %v24
  %v59 = vadd.f32 %v58, %v28
  %v60 = vrot.slane %v59, 4
  %v61 = vadd.f32 %v59, %v60
  %v62 = vrot.slane %v61, 2
  %v63 = vadd.f32 %v61, %v62
  %v64 = vrot.slane %v63, 1
  %v65 = vadd.f32 %v63, %v64
  %v70 = vcombine.low %v38, %v47
  %v71 = vcombine.low %v56, %v65
  %v73 = vunpack.c.l.s4 1966171168
  %v74 = vunpack.c.0.s8 %v73
  %v75 = vlaneseq
  %v76 = vshrl.u32 %v75, 7
  %v77 = vsub.s32 %v74, %v76
  %v78 = vrot.slane %v70, %v77
  %v80 = vunpack.c.l.s4 1966171168
  %v81 = vunpack.c.0.s8 %v80
  %v82 = vlaneseq
  %v83 = vshrl.u32 %v82, 7
  %v84 = vsub.s32 %v81, %v83
  %v85 = vrot.slane %v71, %v84
  %v86 = vcombine.low %v78, %v85
  %v88 = vunpack.c.l.s4 1966171168
  %v89 = vunpack.c.0.s8 %v88
  %v90 = vlaneseq
  %v91 = vshrl.u32 %v90, 7
  %v92 = vsub.s32 %v89, %v91
  %v93 = vrot.slane %v86, %v92
  %v95 = vadd.f32 %v29, %v93
  %v96 = vlaneseq
  %vm97 = vcmp.ge.s32.totalorder %v96, 0
  %vm98 = vcmp.lt.s32.totalorder %v96, 512
  %vm99 = vmand %vm97, %vm98
  %100 = vst.msk [vmem:[%s1] ss:$2 sm:$0xf] %vm99, %v95
  %s101 = scalar_lea.vmem %s1, 1
  %v102 = vld [vmem:[%s101] ss:$2 sm:$0xf]
  %v103 = vmul.f32 %v13, %v13
  %v104 = vmul.f32 %v14, %v14
  %v105 = vmul.f32 %v15, %v15
  %v106 = vmul.f32 %v16, %v16
  %v107 = vmul.f32 %v17, %v17
  %v108 = vmul.f32 %v18, %v18
  %v109 = vmul.f32 %v19, %v19
  %v110 = vmul.f32 %v20, %v20
  %v111 = vmul.f32 %v21, %v21
  %v112 = vmul.f32 %v22, %v22
  %v113 = vmul.f32 %v23, %v23
  %v114 = vmul.f32 %v24, %v24
  %v115 = vmul.f32 %v25, %v25
  %v116 = vmul.f32 %v26, %v26
  %v117 = vmul.f32 %v27, %v27
  %v118 = vmul.f32 %v28, %v28
  %v119 = vadd.f32 %v103, %v107
  %v120 = vadd.f32 %v119, %v111
  %v121 = vadd.f32 %v120, %v115
  %v122 = vrot.slane %v121, 4
  %v123 = vadd.f32 %v121, %v122
  %v124 = vrot.slane %v123, 2
  %v125 = vadd.f32 %v123, %v124
  %v126 = vrot.slane %v125, 1
  %v127 = vadd.f32 %v125, %v126
  %v128 = vadd.f32 %v104, %v108
  %v129 = vadd.f32 %v128, %v112
  %v130 = vadd.f32 %v129, %v116
  %v131 = vrot.slane %v130, 4
  %v132 = vadd.f32 %v130, %v131
  %v133 = vrot.slane %v132, 2
  %v134 = vadd.f32 %v132, %v133
  %v135 = vrot.slane %v134, 1
  %v136 = vadd.f32 %v134, %v135
  %v137 = vadd.f32 %v105, %v109
  %v138 = vadd.f32 %v137, %v113
  %v139 = vadd.f32 %v138, %v117
  %v140 = vrot.slane %v139, 4
  %v141 = vadd.f32 %v139, %v140
  %v142 = vrot.slane %v141, 2
  %v143 = vadd.f32 %v141, %v142
  %v144 = vrot.slane %v143, 1
  %v145 = vadd.f32 %v143, %v144
  %v146 = vadd.f32 %v106, %v110
  %v147 = vadd.f32 %v146, %v114
  %v148 = vadd.f32 %v147, %v118
  %v149 = vrot.slane %v148, 4
  %v150 = vadd.f32 %v148, %v149
  %v151 = vrot.slane %v150, 2
  %v152 = vadd.f32 %v150, %v151
  %v153 = vrot.slane %v152, 1
  %v154 = vadd.f32 %v152, %v153
  %v159 = vcombine.low %v127, %v136
  %v160 = vcombine.low %v145, %v154
  %v162 = vunpack.c.l.s4 1966171168
  %v163 = vunpack.c.0.s8 %v162
  %v164 = vlaneseq
  %v165 = vshrl.u32 %v164, 7
  %v166 = vsub.s32 %v163, %v165
  %v167 = vrot.slane %v159, %v166
  %v169 = vunpack.c.l.s4 1966171168
  %v170 = vunpack.c.0.s8 %v169
  %v171 = vlaneseq
  %v172 = vshrl.u32 %v171, 7
  %v173 = vsub.s32 %v170, %v172
  %v174 = vrot.slane %v160, %v173
  %v175 = vcombine.low %v167, %v174
  %v177 = vunpack.c.l.s4 1966171168
  %v178 = vunpack.c.0.s8 %v177
  %v179 = vlaneseq
  %v180 = vshrl.u32 %v179, 7
  %v181 = vsub.s32 %v178, %v180
  %v182 = vrot.slane %v175, %v181
  %v184 = vadd.f32 %v102, %v182
  %185 = vst.msk [vmem:[%s101] ss:$2 sm:$0xf] %vm99, %v184
  // Predicated region
  $region10: #{generator_forward.14} parent=0 // pred_check
    _
  $region11: #{generator_forward.14} parent=0 // pred_check_branch
    %187 = sbr.rel (0) target = $region13
  $region12: #{generator_forward.14} parent=0 // pred_region
    _
  $region13: #{generator_forward.14} parent=0 // pred_fallthru
    _
  // Predicated region
  $region14: #{generator_forward.14} parent=0 // pred_check
    _
  $region15: #{generator_forward.14} parent=0 // pred_check_branch
    %189 = sbr.rel (0) target = $region17
  $region16: #{generator_forward.14} parent=0 // pred_region
    _
  $region17: #{generator_forward.14} parent=0 // pred_fallthru
    _

// kernel: generator_forward.15
$region0: #{generator_forward.15}
  #allocation0 [shape = 'u32[]', space=smem, size = 0x4, offset = 0x4, fixed_abs, tag = 'smem constant byte address 0x4 - core index']
  #allocation1 [shape = 'u32[144,128]{1,0:T(1,128)}', space=vmem, size = 0x12000, scoped, tag = 'internal scratch']
  %s0 = inlined_call_operand.vmem [shape: f32[512,32], index: 0, kind: input, shape index: {}]
  %s1 = inlined_call_operand.vmem [shape: f32[32,256], index: 1, kind: input, shape index: {}]
  %s2 = inlined_call_operand.vmem [shape: f32[1,32], index: 2, kind: input, shape index: {}]
  %s3 = inlined_call_operand.vmem [shape: f32[1,32], index: 3, kind: input, shape index: {}]
  %s4 = inlined_call_operand.vmem [shape: f32[512,256], index: 4, kind: output, shape index: {}]
  %s5 = sld [smem:[#allocation0]]
  $region30: #{generator_forward.15} parent=0
    _
  %s7 = ssub.s32 1, %s5
  %s8 = scalar_select 0, %s7, %s5
  // Predicated region
  $region2: #{generator_forward.15} parent=0 // pred_check
    _
  $region3: #{generator_forward.15} parent=0 // pred_check_branch
    %10 = sbr.rel (0) target = $region5
  $region4: #{generator_forward.15} parent=0 // pred_region
    _
  $region5: #{generator_forward.15} parent=0 // pred_fallthru
    _
  // Predicated region
  $region6: #{generator_forward.15} parent=0 // pred_check
    _
  $region7: #{generator_forward.15} parent=0 // pred_check_branch
    %12 = sbr.rel (0) target = $region9
  $region8: #{generator_forward.15} parent=0 // pred_region
    _
  $region9: #{generator_forward.15} parent=0 // pred_fallthru
    _
  // Predicated region
  $region10: #{generator_forward.15} parent=0 // pred_check
    _
  $region11: #{generator_forward.15} parent=0 // pred_check_branch
    %14 = sbr.rel (0) target = $region13
  $region12: #{generator_forward.15} parent=0 // pred_region
    _
  $region13: #{generator_forward.15} parent=0 // pred_fallthru
    _
  // Predicated region
  $region14: #{generator_forward.15} parent=0 // pred_check
    _
  $region15: #{generator_forward.15} parent=0 // pred_check_branch
    %16 = sbr.rel (0) target = $region17
  $region16: #{generator_forward.15} parent=0 // pred_region
    _
  $region17: #{generator_forward.15} parent=0 // pred_fallthru
    _
  %p17 = scmp.eq.s32.totalorder 0, 0
  // Predicated region
  $region18: #{generator_forward.15} parent=0 // pred_check
    %p18 = pneg %p17
  $region19: #{generator_forward.15} parent=0 // pred_check_branch
    %20 = sbr.rel (%p18) target = $region21
  $region20: #{generator_forward.15} parent=0 // pred_region
    %21 = vst [vmem:[%s4] sm:$0xff] 0.0
    %22 = vst [vmem:[%s4 + $0x8] sm:$0xff] 0.0
    %23 = vst [vmem:[%s4 + $0x10] sm:$0xff] 0.0
    %24 = vst [vmem:[%s4 + $0x18] sm:$0xff] 0.0
    %25 = vst [vmem:[%s4 + $0x20] sm:$0xff] 0.0
    %26 = vst [vmem:[%s4 + $0x28] sm:$0xff] 0.0
    %27 = vst [vmem:[%s4 + $0x30] sm:$0xff] 0.0
    %28 = vst [vmem:[%s4 + $0x38] sm:$0xff] 0.0
    %29 = vst [vmem:[%s4 + $0x40] sm:$0xff] 0.0
    %30 = vst [vmem:[%s4 + $0x48] sm:$0xff] 0.0
    %31 = vst [vmem:[%s4 + $0x50] sm:$0xff] 0.0
    %32 = vst [vmem:[%s4 + $0x58] sm:$0xff] 0.0
    %33 = vst [vmem:[%s4 + $0x60] sm:$0xff] 0.0
    %34 = vst [vmem:[%s4 + $0x68] sm:$0xff] 0.0
    %35 = vst [vmem:[%s4 + $0x70] sm:$0xff] 0.0
    %36 = vst [vmem:[%s4 + $0x78] sm:$0xff] 0.0
    %37 = vst [vmem:[%s4 + $0x80] sm:$0xff] 0.0
    %38 = vst [vmem:[%s4 + $0x88] sm:$0xff] 0.0
    %39 = vst [vmem:[%s4 + $0x90] sm:$0xff] 0.0
    %40 = vst [vmem:[%s4 + $0x98] sm:$0xff] 0.0
    %41 = vst [vmem:[%s4 + $0xa0] sm:$0xff] 0.0
    %42 = vst [vmem:[%s4 + $0xa8] sm:$0xff] 0.0
    %43 = vst [vmem:[%s4 + $0xb0] sm:$0xff] 0.0
    %44 = vst [vmem:[%s4 + $0xb8] sm:$0xff] 0.0
    %45 = vst [vmem:[%s4 + $0xc0] sm:$0xff] 0.0
    %46 = vst [vmem:[%s4 + $0xc8] sm:$0xff] 0.0
    %47 = vst [vmem:[%s4 + $0xd0] sm:$0xff] 0.0
    %48 = vst [vmem:[%s4 + $0xd8] sm:$0xff] 0.0
    %49 = vst [vmem:[%s4 + $0xe0] sm:$0xff] 0.0
    %50 = vst [vmem:[%s4 + $0xe8] sm:$0xff] 0.0
    %51 = vst [vmem:[%s4 + $0xf0] sm:$0xff] 0.0
    %52 = vst [vmem:[%s4 + $0xf8] sm:$0xff] 0.0
    %53 = vst [vmem:[%s4 + $0x100] sm:$0xff] 0.0
    %54 = vst [vmem:[%s4 + $0x108] sm:$0xff] 0.0
    %55 = vst [vmem:[%s4 + $0x110] sm:$0xff] 0.0
    %56 = vst [vmem:[%s4 + $0x118] sm:$0xff] 0.0
    %57 = vst [vmem:[%s4 + $0x120] sm:$0xff] 0.0
    %58 = vst [vmem:[%s4 + $0x128] sm:$0xff] 0.0
    %59 = vst [vmem:[%s4 + $0x130] sm:$0xff] 0.0
    %60 = vst [vmem:[%s4 + $0x138] sm:$0xff] 0.0
    %61 = vst [vmem:[%s4 + $0x140] sm:$0xff] 0.0
    %62 = vst [vmem:[%s4 + $0x148] sm:$0xff] 0.0
    %63 = vst [vmem:[%s4 + $0x150] sm:$0xff] 0.0
    %64 = vst [vmem:[%s4 + $0x158] sm:$0xff] 0.0
    %65 = vst [vmem:[%s4 + $0x160] sm:$0xff] 0.0
    %66 = vst [vmem:[%s4 + $0x168] sm:$0xff] 0.0
    %67 = vst [vmem:[%s4 + $0x170] sm:$0xff] 0.0
    %68 = vst [vmem:[%s4 + $0x178] sm:$0xff] 0.0
    %69 = vst [vmem:[%s4 + $0x180] sm:$0xff] 0.0
    %70 = vst [vmem:[%s4 + $0x188] sm:$0xff] 0.0
    %71 = vst [vmem:[%s4 + $0x190] sm:$0xff] 0.0
    %72 = vst [vmem:[%s4 + $0x198] sm:$0xff] 0.0
    %73 = vst [vmem:[%s4 + $0x1a0] sm:$0xff] 0.0
    %74 = vst [vmem:[%s4 + $0x1a8] sm:$0xff] 0.0
    %75 = vst [vmem:[%s4 + $0x1b0] sm:$0xff] 0.0
    %76 = vst [vmem:[%s4 + $0x1b8] sm:$0xff] 0.0
    %77 = vst [vmem:[%s4 + $0x1c0] sm:$0xff] 0.0
    %78 = vst [vmem:[%s4 + $0x1c8] sm:$0xff] 0.0
    %79 = vst [vmem:[%s4 + $0x1d0] sm:$0xff] 0.0
    %80 = vst [vmem:[%s4 + $0x1d8] sm:$0xff] 0.0
    %81 = vst [vmem:[%s4 + $0x1e0] sm:$0xff] 0.0
    %82 = vst [vmem:[%s4 + $0x1e8] sm:$0xff] 0.0
    %83 = vst [vmem:[%s4 + $0x1f0] sm:$0xff] 0.0
    %84 = vst [vmem:[%s4 + $0x1f8] sm:$0xff] 0.0
    %85 = vst [vmem:[%s4 + $0x200] sm:$0xff] 0.0
    %86 = vst [vmem:[%s4 + $0x208] sm:$0xff] 0.0
    %87 = vst [vmem:[%s4 + $0x210] sm:$0xff] 0.0
    %88 = vst [vmem:[%s4 + $0x218] sm:$0xff] 0.0
    %89 = vst [vmem:[%s4 + $0x220] sm:$0xff] 0.0
    %90 = vst [vmem:[%s4 + $0x228] sm:$0xff] 0.0
    %91 = vst [vmem:[%s4 + $0x230] sm:$0xff] 0.0
    %92 = vst [vmem:[%s4 + $0x238] sm:$0xff] 0.0
    %93 = vst [vmem:[%s4 + $0x240] sm:$0xff] 0.0
    %94 = vst [vmem:[%s4 + $0x248] sm:$0xff] 0.0
    %95 = vst [vmem:[%s4 + $0x250] sm:$0xff] 0.0
    %96 = vst [vmem:[%s4 + $0x258] sm:$0xff] 0.0
    %97 = vst [vmem:[%s4 + $0x260] sm:$0xff] 0.0
    %98 = vst [vmem:[%s4 + $0x268] sm:$0xff] 0.0
    %99 = vst [vmem:[%s4 + $0x270] sm:$0xff] 0.0
    %100 = vst [vmem:[%s4 + $0x278] sm:$0xff] 0.0
    %101 = vst [vmem:[%s4 + $0x280] sm:$0xff] 0.0
    %102 = vst [vmem:[%s4 + $0x288] sm:$0xff] 0.0
    %103 = vst [vmem:[%s4 + $0x290] sm:$0xff] 0.0
    %104 = vst [vmem:[%s4 + $0x298] sm:$0xff] 0.0
    %105 = vst [vmem:[%s4 + $0x2a0] sm:$0xff] 0.0
    %106 = vst [vmem:[%s4 + $0x2a8] sm:$0xff] 0.0
    %107 = vst [vmem:[%s4 + $0x2b0] sm:$0xff] 0.0
    %108 = vst [vmem:[%s4 + $0x2b8] sm:$0xff] 0.0
    %109 = vst [vmem:[%s4 + $0x2c0] sm:$0xff] 0.0
    %110 = vst [vmem:[%s4 + $0x2c8] sm:$0xff] 0.0
    %111 = vst [vmem:[%s4 + $0x2d0] sm:$0xff] 0.0
    %112 = vst [vmem:[%s4 + $0x2d8] sm:$0xff] 0.0
    %113 = vst [vmem:[%s4 + $0x2e0] sm:$0xff] 0.0
    %114 = vst [vmem:[%s4 + $0x2e8] sm:$0xff] 0.0
    %115 = vst [vmem:[%s4 + $0x2f0] sm:$0xff] 0.0
    %116 = vst [vmem:[%s4 + $0x2f8] sm:$0xff] 0.0
    %117 = vst [vmem:[%s4 + $0x300] sm:$0xff] 0.0
    %118 = vst [vmem:[%s4 + $0x308] sm:$0xff] 0.0
    %119 = vst [vmem:[%s4 + $0x310] sm:$0xff] 0.0
    %120 = vst [vmem:[%s4 + $0x318] sm:$0xff] 0.0
    %121 = vst [vmem:[%s4 + $0x320] sm:$0xff] 0.0
    %122 = vst [vmem:[%s4 + $0x328] sm:$0xff] 0.0
    %123 = vst [vmem:[%s4 + $0x330] sm:$0xff] 0.0
    %124 = vst [vmem:[%s4 + $0x338] sm:$0xff] 0.0
    %125 = vst [vmem:[%s4 + $0x340] sm:$0xff] 0.0
    %126 = vst [vmem:[%s4 + $0x348] sm:$0xff] 0.0
    %127 = vst [vmem:[%s4 + $0x350] sm:$0xff] 0.0
    %128 = vst [vmem:[%s4 + $0x358] sm:$0xff] 0.0
    %129 = vst [vmem:[%s4 + $0x360] sm:$0xff] 0.0
    %130 = vst [vmem:[%s4 + $0x368] sm:$0xff] 0.0
    %131 = vst [vmem:[%s4 + $0x370] sm:$0xff] 0.0
    %132 = vst [vmem:[%s4 + $0x378] sm:$0xff] 0.0
    %133 = vst [vmem:[%s4 + $0x380] sm:$0xff] 0.0
    %134 = vst [vmem:[%s4 + $0x388] sm:$0xff] 0.0
    %135 = vst [vmem:[%s4 + $0x390] sm:$0xff] 0.0
    %136 = vst [vmem:[%s4 + $0x398] sm:$0xff] 0.0
    %137 = vst [vmem:[%s4 + $0x3a0] sm:$0xff] 0.0
    %138 = vst [vmem:[%s4 + $0x3a8] sm:$0xff] 0.0
    %139 = vst [vmem:[%s4 + $0x3b0] sm:$0xff] 0.0
    %140 = vst [vmem:[%s4 + $0x3b8] sm:$0xff] 0.0
    %141 = vst [vmem:[%s4 + $0x3c0] sm:$0xff] 0.0
    %142 = vst [vmem:[%s4 + $0x3c8] sm:$0xff] 0.0
    %143 = vst [vmem:[%s4 + $0x3d0] sm:$0xff] 0.0
    %144 = vst [vmem:[%s4 + $0x3d8] sm:$0xff] 0.0
    %145 = vst [vmem:[%s4 + $0x3e0] sm:$0xff] 0.0
    %146 = vst [vmem:[%s4 + $0x3e8] sm:$0xff] 0.0
    %147 = vst [vmem:[%s4 + $0x3f0] sm:$0xff] 0.0
    %148 = vst [vmem:[%s4 + $0x3f8] sm:$0xff] 0.0
  $region21: #{generator_forward.15} parent=0 // pred_fallthru
    _
  %v149 = vld [vmem:[%s0] sm:$0xff]
  %v150 = vld [vmem:[%s0 + $0x8] sm:$0xff]
  %v151 = vld [vmem:[%s0 + $0x10] sm:$0xff]
  %v152 = vld [vmem:[%s0 + $0x18] sm:$0xff]
  %v153 = vld [vmem:[%s0 + $0x20] sm:$0xff]
  %v154 = vld [vmem:[%s0 + $0x28] sm:$0xff]
  %v155 = vld [vmem:[%s0 + $0x30] sm:$0xff]
  %v156 = vld [vmem:[%s0 + $0x38] sm:$0xff]
  %v157 = vld [vmem:[%s0 + $0x40] sm:$0xff]
  %v158 = vld [vmem:[%s0 + $0x48] sm:$0xff]
  %v159 = vld [vmem:[%s0 + $0x50] sm:$0xff]
  %v160 = vld [vmem:[%s0 + $0x58] sm:$0xff]
  %v161 = vld [vmem:[%s0 + $0x60] sm:$0xff]
  %v162 = vld [vmem:[%s0 + $0x68] sm:$0xff]
  %v163 = vld [vmem:[%s0 + $0x70] sm:$0xff]
  %v164 = vld [vmem:[%s0 + $0x78] sm:$0xff]
  %v165 = vld [vmem:[%s0 + $0x80] sm:$0xff]
  %v166 = vld [vmem:[%s0 + $0x88] sm:$0xff]
  %v167 = vld [vmem:[%s0 + $0x90] sm:$0xff]
  %v168 = vld [vmem:[%s0 + $0x98] sm:$0xff]
  %v169 = vld [vmem:[%s0 + $0xa0] sm:$0xff]
  %v170 = vld [vmem:[%s0 + $0xa8] sm:$0xff]
  %v171 = vld [vmem:[%s0 + $0xb0] sm:$0xff]
  %v172 = vld [vmem:[%s0 + $0xb8] sm:$0xff]
  %v173 = vld [vmem:[%s0 + $0xc0] sm:$0xff]
  %v174 = vld [vmem:[%s0 + $0xc8] sm:$0xff]
  %v175 = vld [vmem:[%s0 + $0xd0] sm:$0xff]
  %v176 = vld [vmem:[%s0 + $0xd8] sm:$0xff]
  %v177 = vld [vmem:[%s0 + $0xe0] sm:$0xff]
  %v178 = vld [vmem:[%s0 + $0xe8] sm:$0xff]
  %v179 = vld [vmem:[%s0 + $0xf0] sm:$0xff]
  %v180 = vld [vmem:[%s0 + $0xf8] sm:$0xff]
  %v181 = vld [vmem:[%s0 + $0x100] sm:$0xff]
  %v182 = vld [vmem:[%s0 + $0x108] sm:$0xff]
  %v183 = vld [vmem:[%s0 + $0x110] sm:$0xff]
  %v184 = vld [vmem:[%s0 + $0x118] sm:$0xff]
  %v185 = vld [vmem:[%s0 + $0x120] sm:$0xff]
  %v186 = vld [vmem:[%s0 + $0x128] sm:$0xff]
  %v187 = vld [vmem:[%s0 + $0x130] sm:$0xff]
  %v188 = vld [vmem:[%s0 + $0x138] sm:$0xff]
  %v189 = vld [vmem:[%s0 + $0x140] sm:$0xff]
  %v190 = vld [vmem:[%s0 + $0x148] sm:$0xff]
  %v191 = vld [vmem:[%s0 + $0x150] sm:$0xff]
  %v192 = vld [vmem:[%s0 + $0x158] sm:$0xff]
  %v193 = vld [vmem:[%s0 + $0x160] sm:$0xff]
  %v194 = vld [vmem:[%s0 + $0x168] sm:$0xff]
  %v195 = vld [vmem:[%s0 + $0x170] sm:$0xff]
  %v196 = vld [vmem:[%s0 + $0x178] sm:$0xff]
  %v197 = vld [vmem:[%s0 + $0x180] sm:$0xff]
  %v198 = vld [vmem:[%s0 + $0x188] sm:$0xff]
  %v199 = vld [vmem:[%s0 + $0x190] sm:$0xff]
  %v200 = vld [vmem:[%s0 + $0x198] sm:$0xff]
  %v201 = vld [vmem:[%s0 + $0x1a0] sm:$0xff]
  %v202 = vld [vmem:[%s0 + $0x1a8] sm:$0xff]
  %v203 = vld [vmem:[%s0 + $0x1b0] sm:$0xff]
  %v204 = vld [vmem:[%s0 + $0x1b8] sm:$0xff]
  %v205 = vld [vmem:[%s0 + $0x1c0] sm:$0xff]
  %v206 = vld [vmem:[%s0 + $0x1c8] sm:$0xff]
  %v207 = vld [vmem:[%s0 + $0x1d0] sm:$0xff]
  %v208 = vld [vmem:[%s0 + $0x1d8] sm:$0xff]
  %v209 = vld [vmem:[%s0 + $0x1e0] sm:$0xff]
  %v210 = vld [vmem:[%s0 + $0x1e8] sm:$0xff]
  %v211 = vld [vmem:[%s0 + $0x1f0] sm:$0xff]
  %v212 = vld [vmem:[%s0 + $0x1f8] sm:$0xff]
  %v213 = vld [vmem:[%s2] sm:$0x1]
  %v215 = vlaneseq
  %v216 = vshrl.u32 %v215, 7
  %v217 = vsub.s32 0, %v216
  %v218 = vrot.slane %v213, %v217
  %v220 = vmul.f32 %v149, %v218
  %v221 = vmul.f32 %v150, %v218
  %v222 = vmul.f32 %v151, %v218
  %v223 = vmul.f32 %v152, %v218
  %v224 = vmul.f32 %v153, %v218
  %v225 = vmul.f32 %v154, %v218
  %v226 = vmul.f32 %v155, %v218
  %v227 = vmul.f32 %v156, %v218
  %v228 = vmul.f32 %v157, %v218
  %v229 = vmul.f32 %v158, %v218
  %v230 = vmul.f32 %v159, %v218
  %v231 = vmul.f32 %v160, %v218
  %v232 = vmul.f32 %v161, %v218
  %v233 = vmul.f32 %v162, %v218
  %v234 = vmul.f32 %v163, %v218
  %v235 = vmul.f32 %v164, %v218
  %v236 = vmul.f32 %v165, %v218
  %v237 = vmul.f32 %v166, %v218
  %v238 = vmul.f32 %v167, %v218
  %v239 = vmul.f32 %v168, %v218
  %v240 = vmul.f32 %v169, %v218
  %v241 = vmul.f32 %v170, %v218
  %v242 = vmul.f32 %v171, %v218
  %v243 = vmul.f32 %v172, %v218
  %v244 = vmul.f32 %v173, %v218
  %v245 = vmul.f32 %v174, %v218
  %v246 = vmul.f32 %v175, %v218
  %v247 = vmul.f32 %v176, %v218
  %v248 = vmul.f32 %v177, %v218
  %v249 = vmul.f32 %v178, %v218
  %v250 = vmul.f32 %v179, %v218
  %v251 = vmul.f32 %v180, %v218
  %v252 = vmul.f32 %v181, %v218
  %v253 = vmul.f32 %v182, %v218
  %v254 = vmul.f32 %v183, %v218
  %v255 = vmul.f32 %v184, %v218
  %v256 = vmul.f32 %v185, %v218
  %v257 = vmul.f32 %v186, %v218
  %v258 = vmul.f32 %v187, %v218
  %v259 = vmul.f32 %v188, %v218
  %v260 = vmul.f32 %v189, %v218
  %v261 = vmul.f32 %v190, %v218
  %v262 = vmul.f32 %v191, %v218
  %v263 = vmul.f32 %v192, %v218
  %v264 = vmul.f32 %v193, %v218
  %v265 = vmul.f32 %v194, %v218
  %v266 = vmul.f32 %v195, %v218
  %v267 = vmul.f32 %v196, %v218
  %v268 = vmul.f32 %v197, %v218
  %v269 = vmul.f32 %v198, %v218
  %v270 = vmul.f32 %v199, %v218
  %v271 = vmul.f32 %v200, %v218
  %v272 = vmul.f32 %v201, %v218
  %v273 = vmul.f32 %v202, %v218
  %v274 = vmul.f32 %v203, %v218
  %v275 = vmul.f32 %v204, %v218
  %v276 = vmul.f32 %v205, %v218
  %v277 = vmul.f32 %v206, %v218
  %v278 = vmul.f32 %v207, %v218
  %v279 = vmul.f32 %v208, %v218
  %v280 = vmul.f32 %v209, %v218
  %v281 = vmul.f32 %v210, %v218
  %v282 = vmul.f32 %v211, %v218
  %v283 = vmul.f32 %v212, %v218
  %v284 = vld [vmem:[%s3] sm:$0x1]
  %v286 = vlaneseq
  %v287 = vshrl.u32 %v286, 7
  %v288 = vsub.s32 0, %v287
  %v289 = vrot.slane %v284, %v288
  %v291 = vadd.f32 %v220, %v289
  %v292 = vadd.f32 %v221, %v289
  %v293 = vadd.f32 %v222, %v289
  %v294 = vadd.f32 %v223, %v289
  %v295 = vadd.f32 %v224, %v289
  %v296 = vadd.f32 %v225, %v289
  %v297 = vadd.f32 %v226, %v289
  %v298 = vadd.f32 %v227, %v289
  %v299 = vadd.f32 %v228, %v289
  %v300 = vadd.f32 %v229, %v289
  %v301 = vadd.f32 %v230, %v289
  %v302 = vadd.f32 %v231, %v289
  %v303 = vadd.f32 %v232, %v289
  %v304 = vadd.f32 %v233, %v289
  %v305 = vadd.f32 %v234, %v289
  %v306 = vadd.f32 %v235, %v289
  %v307 = vadd.f32 %v236, %v289
  %v308 = vadd.f32 %v237, %v289
  %v309 = vadd.f32 %v238, %v289
  %v310 = vadd.f32 %v239, %v289
  %v311 = vadd.f32 %v240, %v289
  %v312 = vadd.f32 %v241, %v289
  %v313 = vadd.f32 %v242, %v289
  %v314 = vadd.f32 %v243, %v289
  %v315 = vadd.f32 %v244, %v289
  %v316 = vadd.f32 %v245, %v289
  %v317 = vadd.f32 %v246, %v289
  %v318 = vadd.f32 %v247, %v289
  %v319 = vadd.f32 %v248, %v289
  %v320 = vadd.f32 %v249, %v289
  %v321 = vadd.f32 %v250, %v289
  %v322 = vadd.f32 %v251, %v289
  %v323 = vadd.f32 %v252, %v289
  %v324 = vadd.f32 %v253, %v289
  %v325 = vadd.f32 %v254, %v289
  %v326 = vadd.f32 %v255, %v289
  %v327 = vadd.f32 %v256, %v289
  %v328 = vadd.f32 %v257, %v289
  %v329 = vadd.f32 %v258, %v289
  %v330 = vadd.f32 %v259, %v289
  %v331 = vadd.f32 %v260, %v289
  %v332 = vadd.f32 %v261, %v289
  %v333 = vadd.f32 %v262, %v289
  %v334 = vadd.f32 %v263, %v289
  %v335 = vadd.f32 %v264, %v289
  %v336 = vadd.f32 %v265, %v289
  %v337 = vadd.f32 %v266, %v289
  %v338 = vadd.f32 %v267, %v289
  %v339 = vadd.f32 %v268, %v289
  %v340 = vadd.f32 %v269, %v289
  %v341 = vadd.f32 %v270, %v289
  %v342 = vadd.f32 %v271, %v289
  %v343 = vadd.f32 %v272, %v289
  %v344 = vadd.f32 %v273, %v289
  %v345 = vadd.f32 %v274, %v289
  %v346 = vadd.f32 %v275, %v289
  %v347 = vadd.f32 %v276, %v289
  %v348 = vadd.f32 %v277, %v289
  %v349 = vadd.f32 %v278, %v289
  %v350 = vadd.f32 %v279, %v289
  %v351 = vadd.f32 %v280, %v289
  %v352 = vadd.f32 %v281, %v289
  %v353 = vadd.f32 %v282, %v289
  %v354 = vadd.f32 %v283, %v289
  %v355 = vmax.f32 %v291, 0.0
  %v356 = vmax.f32 %v292, 0.0
  %v357 = vmax.f32 %v293, 0.0
  %v358 = vmax.f32 %v294, 0.0
  %v359 = vmax.f32 %v295, 0.0
  %v360 = vmax.f32 %v296, 0.0
  %v361 = vmax.f32 %v297, 0.0
  %v362 = vmax.f32 %v298, 0.0
  %v363 = vmax.f32 %v299, 0.0
  %v364 = vmax.f32 %v300, 0.0
  %v365 = vmax.f32 %v301, 0.0
  %v366 = vmax.f32 %v302, 0.0
  %v367 = vmax.f32 %v303, 0.0
  %v368 = vmax.f32 %v304, 0.0
  %v369 = vmax.f32 %v305, 0.0
  %v370 = vmax.f32 %v306, 0.0
  %v371 = vmax.f32 %v307, 0.0
  %v372 = vmax.f32 %v308, 0.0
  %v373 = vmax.f32 %v309, 0.0
  %v374 = vmax.f32 %v310, 0.0
  %v375 = vmax.f32 %v311, 0.0
  %v376 = vmax.f32 %v312, 0.0
  %v377 = vmax.f32 %v313, 0.0
  %v378 = vmax.f32 %v314, 0.0
  %v379 = vmax.f32 %v315, 0.0
  %v380 = vmax.f32 %v316, 0.0
  %v381 = vmax.f32 %v317, 0.0
  %v382 = vmax.f32 %v318, 0.0
  %v383 = vmax.f32 %v319, 0.0
  %v384 = vmax.f32 %v320, 0.0
  %v385 = vmax.f32 %v321, 0.0
  %v386 = vmax.f32 %v322, 0.0
  %v387 = vmax.f32 %v323, 0.0
  %v388 = vmax.f32 %v324, 0.0
  %v389 = vmax.f32 %v325, 0.0
  %v390 = vmax.f32 %v326, 0.0
  %v391 = vmax.f32 %v327, 0.0
  %v392 = vmax.f32 %v328, 0.0
  %v393 = vmax.f32 %v329, 0.0
  %v394 = vmax.f32 %v330, 0.0
  %v395 = vmax.f32 %v331, 0.0
  %v396 = vmax.f32 %v332, 0.0
  %v397 = vmax.f32 %v333, 0.0
  %v398 = vmax.f32 %v334, 0.0
  %v399 = vmax.f32 %v335, 0.0
  %v400 = vmax.f32 %v336, 0.0
  %v401 = vmax.f32 %v337, 0.0
  %v402 = vmax.f32 %v338, 0.0
  %v403 = vmax.f32 %v339, 0.0
  %v404 = vmax.f32 %v340, 0.0
  %v405 = vmax.f32 %v341, 0.0
  %v406 = vmax.f32 %v342, 0.0
  %v407 = vmax.f32 %v343, 0.0
  %v408 = vmax.f32 %v344, 0.0
  %v409 = vmax.f32 %v345, 0.0
  %v410 = vmax.f32 %v346, 0.0
  %v411 = vmax.f32 %v347, 0.0
  %v412 = vmax.f32 %v348, 0.0
  %v413 = vmax.f32 %v349, 0.0
  %v414 = vmax.f32 %v350, 0.0
  %v415 = vmax.f32 %v351, 0.0
  %v416 = vmax.f32 %v352, 0.0
  %v417 = vmax.f32 %v353, 0.0
  %v418 = vmax.f32 %v354, 0.0
  %v419 = vld [vmem:[%s4] sm:$0xff]
  %v420 = vld [vmem:[%s4 + $0x8] sm:$0xff]
  %v421 = vld [vmem:[%s4 + $0x10] sm:$0xff]
  %v422 = vld [vmem:[%s4 + $0x18] sm:$0xff]
  %v423 = vld [vmem:[%s4 + $0x20] sm:$0xff]
  %v424 = vld [vmem:[%s4 + $0x28] sm:$0xff]
  %v425 = vld [vmem:[%s4 + $0x30] sm:$0xff]
  %v426 = vld [vmem:[%s4 + $0x38] sm:$0xff]
  %v427 = vld [vmem:[%s4 + $0x40] sm:$0xff]
  %v428 = vld [vmem:[%s4 + $0x48] sm:$0xff]
  %v429 = vld [vmem:[%s4 + $0x50] sm:$0xff]
  %v430 = vld [vmem:[%s4 + $0x58] sm:$0xff]
  %v431 = vld [vmem:[%s4 + $0x60] sm:$0xff]
  %v432 = vld [vmem:[%s4 + $0x68] sm:$0xff]
  %v433 = vld [vmem:[%s4 + $0x70] sm:$0xff]
  %v434 = vld [vmem:[%s4 + $0x78] sm:$0xff]
  %v435 = vld [vmem:[%s4 + $0x80] sm:$0xff]
  %v436 = vld [vmem:[%s4 + $0x88] sm:$0xff]
  %v437 = vld [vmem:[%s4 + $0x90] sm:$0xff]
  %v438 = vld [vmem:[%s4 + $0x98] sm:$0xff]
  %v439 = vld [vmem:[%s4 + $0xa0] sm:$0xff]
  %v440 = vld [vmem:[%s4 + $0xa8] sm:$0xff]
  %v441 = vld [vmem:[%s4 + $0xb0] sm:$0xff]
  %v442 = vld [vmem:[%s4 + $0xb8] sm:$0xff]
  %v443 = vld [vmem:[%s4 + $0xc0] sm:$0xff]
  %v444 = vld [vmem:[%s4 + $0xc8] sm:$0xff]
  %v445 = vld [vmem:[%s4 + $0xd0] sm:$0xff]
  %v446 = vld [vmem:[%s4 + $0xd8] sm:$0xff]
  %v447 = vld [vmem:[%s4 + $0xe0] sm:$0xff]
  %v448 = vld [vmem:[%s4 + $0xe8] sm:$0xff]
  %v449 = vld [vmem:[%s4 + $0xf0] sm:$0xff]
  %v450 = vld [vmem:[%s4 + $0xf8] sm:$0xff]
  %v451 = vld [vmem:[%s4 + $0x100] sm:$0xff]
  %v452 = vld [vmem:[%s4 + $0x108] sm:$0xff]
  %v453 = vld [vmem:[%s4 + $0x110] sm:$0xff]
  %v454 = vld [vmem:[%s4 + $0x118] sm:$0xff]
  %v455 = vld [vmem:[%s4 + $0x120] sm:$0xff]
  %v456 = vld [vmem:[%s4 + $0x128] sm:$0xff]
  %v457 = vld [vmem:[%s4 + $0x130] sm:$0xff]
  %v458 = vld [vmem:[%s4 + $0x138] sm:$0xff]
  %v459 = vld [vmem:[%s4 + $0x140] sm:$0xff]
  %v460 = vld [vmem:[%s4 + $0x148] sm:$0xff]
  %v461 = vld [vmem:[%s4 + $0x150] sm:$0xff]
  %v462 = vld [vmem:[%s4 + $0x158] sm:$0xff]
  %v463 = vld [vmem:[%s4 + $0x160] sm:$0xff]
  %v464 = vld [vmem:[%s4 + $0x168] sm:$0xff]
  %v465 = vld [vmem:[%s4 + $0x170] sm:$0xff]
  %v466 = vld [vmem:[%s4 + $0x178] sm:$0xff]
  %v467 = vld [vmem:[%s4 + $0x180] sm:$0xff]
  %v468 = vld [vmem:[%s4 + $0x188] sm:$0xff]
  %v469 = vld [vmem:[%s4 + $0x190] sm:$0xff]
  %v470 = vld [vmem:[%s4 + $0x198] sm:$0xff]
  %v471 = vld [vmem:[%s4 + $0x1a0] sm:$0xff]
  %v472 = vld [vmem:[%s4 + $0x1a8] sm:$0xff]
  %v473 = vld [vmem:[%s4 + $0x1b0] sm:$0xff]
  %v474 = vld [vmem:[%s4 + $0x1b8] sm:$0xff]
  %v475 = vld [vmem:[%s4 + $0x1c0] sm:$0xff]
  %v476 = vld [vmem:[%s4 + $0x1c8] sm:$0xff]
  %v477 = vld [vmem:[%s4 + $0x1d0] sm:$0xff]
  %v478 = vld [vmem:[%s4 + $0x1d8] sm:$0xff]
  %v479 = vld [vmem:[%s4 + $0x1e0] sm:$0xff]
  %v480 = vld [vmem:[%s4 + $0x1e8] sm:$0xff]
  %v481 = vld [vmem:[%s4 + $0x1f0] sm:$0xff]
  %v482 = vld [vmem:[%s4 + $0x1f8] sm:$0xff]
  %v483 = vld [vmem:[%s4 + $0x200] sm:$0xff]
  %v484 = vld [vmem:[%s4 + $0x208] sm:$0xff]
  %v485 = vld [vmem:[%s4 + $0x210] sm:$0xff]
  %v486 = vld [vmem:[%s4 + $0x218] sm:$0xff]
  %v487 = vld [vmem:[%s4 + $0x220] sm:$0xff]
  %v488 = vld [vmem:[%s4 + $0x228] sm:$0xff]
  %v489 = vld [vmem:[%s4 + $0x230] sm:$0xff]
  %v490 = vld [vmem:[%s4 + $0x238] sm:$0xff]
  %v491 = vld [vmem:[%s4 + $0x240] sm:$0xff]
  %v492 = vld [vmem:[%s4 + $0x248] sm:$0xff]
  %v493 = vld [vmem:[%s4 + $0x250] sm:$0xff]
  %v494 = vld [vmem:[%s4 + $0x258] sm:$0xff]
  %v495 = vld [vmem:[%s4 + $0x260] sm:$0xff]
  %v496 = vld [vmem:[%s4 + $0x268] sm:$0xff]
  %v497 = vld [vmem:[%s4 + $0x270] sm:$0xff]
  %v498 = vld [vmem:[%s4 + $0x278] sm:$0xff]
  %v499 = vld [vmem:[%s4 + $0x280] sm:$0xff]
  %v500 = vld [vmem:[%s4 + $0x288] sm:$0xff]
  %v501 = vld [vmem:[%s4 + $0x290] sm:$0xff]
  %v502 = vld [vmem:[%s4 + $0x298] sm:$0xff]
  %v503 = vld [vmem:[%s4 + $0x2a0] sm:$0xff]
  %v504 = vld [vmem:[%s4 + $0x2a8] sm:$0xff]
  %v505 = vld [vmem:[%s4 + $0x2b0] sm:$0xff]
  %v506 = vld [vmem:[%s4 + $0x2b8] sm:$0xff]
  %v507 = vld [vmem:[%s4 + $0x2c0] sm:$0xff]
  %v508 = vld [vmem:[%s4 + $0x2c8] sm:$0xff]
  %v509 = vld [vmem:[%s4 + $0x2d0] sm:$0xff]
  %v510 = vld [vmem:[%s4 + $0x2d8] sm:$0xff]
  %v511 = vld [vmem:[%s4 + $0x2e0] sm:$0xff]
  %v512 = vld [vmem:[%s4 + $0x2e8] sm:$0xff]
  %v513 = vld [vmem:[%s4 + $0x2f0] sm:$0xff]
  %v514 = vld [vmem:[%s4 + $0x2f8] sm:$0xff]
  %v515 = vld [vmem:[%s4 + $0x300] sm:$0xff]
  %v516 = vld [vmem:[%s4 + $0x308] sm:$0xff]
  %v517 = vld [vmem:[%s4 + $0x310] sm:$0xff]
  %v518 = vld [vmem:[%s4 + $0x318] sm:$0xff]
  %v519 = vld [vmem:[%s4 + $0x320] sm:$0xff]
  %v520 = vld [vmem:[%s4 + $0x328] sm:$0xff]
  %v521 = vld [vmem:[%s4 + $0x330] sm:$0xff]
  %v522 = vld [vmem:[%s4 + $0x338] sm:$0xff]
  %v523 = vld [vmem:[%s4 + $0x340] sm:$0xff]
  %v524 = vld [vmem:[%s4 + $0x348] sm:$0xff]
  %v525 = vld [vmem:[%s4 + $0x350] sm:$0xff]
  %v526 = vld [vmem:[%s4 + $0x358] sm:$0xff]
  %v527 = vld [vmem:[%s4 + $0x360] sm:$0xff]
  %v528 = vld [vmem:[%s4 + $0x368] sm:$0xff]
  %v529 = vld [vmem:[%s4 + $0x370] sm:$0xff]
  %v530 = vld [vmem:[%s4 + $0x378] sm:$0xff]
  %v531 = vld [vmem:[%s4 + $0x380] sm:$0xff]
  %v532 = vld [vmem:[%s4 + $0x388] sm:$0xff]
  %v533 = vld [vmem:[%s4 + $0x390] sm:$0xff]
  %v534 = vld [vmem:[%s4 + $0x398] sm:$0xff]
  %v535 = vld [vmem:[%s4 + $0x3a0] sm:$0xff]
  %v536 = vld [vmem:[%s4 + $0x3a8] sm:$0xff]
  %v537 = vld [vmem:[%s4 + $0x3b0] sm:$0xff]
  %v538 = vld [vmem:[%s4 + $0x3b8] sm:$0xff]
  %v539 = vld [vmem:[%s4 + $0x3c0] sm:$0xff]
  %v540 = vld [vmem:[%s4 + $0x3c8] sm:$0xff]
  %v541 = vld [vmem:[%s4 + $0x3d0] sm:$0xff]
  %v542 = vld [vmem:[%s4 + $0x3d8] sm:$0xff]
  %v543 = vld [vmem:[%s4 + $0x3e0] sm:$0xff]
  %v544 = vld [vmem:[%s4 + $0x3e8] sm:$0xff]
  %v545 = vld [vmem:[%s4 + $0x3f0] sm:$0xff]
  %v546 = vld [vmem:[%s4 + $0x3f8] sm:$0xff]
  %v547 = vld [vmem:[%s1] sm:$0xff]
  %v548 = vld [vmem:[%s1 + $0x8] sm:$0xff]
  %v549 = vld [vmem:[%s1 + $0x10] sm:$0xff]
  %v550 = vld [vmem:[%s1 + $0x18] sm:$0xff]
  %v551 = vld [vmem:[%s1 + $0x20] sm:$0xff]
  %v552 = vld [vmem:[%s1 + $0x28] sm:$0xff]
  %v553 = vld [vmem:[%s1 + $0x30] sm:$0xff]
  %v554 = vld [vmem:[%s1 + $0x38] sm:$0xff]
  %vm555 = vcmask 261120
  %v557 = vsel %vm555, %v355, 0
  %v560 = vsel %vm555, %v356, 0
  %v563 = vsel %vm555, %v357, 0
  %v566 = vsel %vm555, %v358, 0
  %v569 = vsel %vm555, %v359, 0
  %v572 = vsel %vm555, %v360, 0
  %v575 = vsel %vm555, %v361, 0
  %v578 = vsel %vm555, %v362, 0
  %v581 = vsel %vm555, %v363, 0
  %v584 = vsel %vm555, %v364, 0
  %v587 = vsel %vm555, %v365, 0
  %v590 = vsel %vm555, %v366, 0
  %v593 = vsel %vm555, %v367, 0
  %v596 = vsel %vm555, %v368, 0
  %v599 = vsel %vm555, %v369, 0
  %v602 = vsel %vm555, %v370, 0
  %v605 = vsel %vm555, %v371, 0
  %v608 = vsel %vm555, %v372, 0
  %v611 = vsel %vm555, %v373, 0
  %v614 = vsel %vm555, %v374, 0
  %v617 = vsel %vm555, %v375, 0
  %v620 = vsel %vm555, %v376, 0
  %v623 = vsel %vm555, %v377, 0
  %v626 = vsel %vm555, %v378, 0
  %v629 = vsel %vm555, %v379, 0
  %v632 = vsel %vm555, %v380, 0
  %v635 = vsel %vm555, %v381, 0
  %v638 = vsel %vm555, %v382, 0
  %v641 = vsel %vm555, %v383, 0
  %v644 = vsel %vm555, %v384, 0
  %v647 = vsel %vm555, %v385, 0
  %v650 = vsel %vm555, %v386, 0
  %v653 = vsel %vm555, %v387, 0
  %v656 = vsel %vm555, %v388, 0
  %v659 = vsel %vm555, %v389, 0
  %v662 = vsel %vm555, %v390, 0
  %v665 = vsel %vm555, %v391, 0
  %v668 = vsel %vm555, %v392, 0
  %v671 = vsel %vm555, %v393, 0
  %v674 = vsel %vm555, %v394, 0
  %v677 = vsel %vm555, %v395, 0
  %v680 = vsel %vm555, %v396, 0
  %v683 = vsel %vm555, %v397, 0
  %v686 = vsel %vm555, %v398, 0
  %v689 = vsel %vm555, %v399, 0
  %v692 = vsel %vm555, %v400, 0
  %v695 = vsel %vm555, %v401, 0
  %v698 = vsel %vm555, %v402, 0
  %v701 = vsel %vm555, %v403, 0
  %v704 = vsel %vm555, %v404, 0
  %v707 = vsel %vm555, %v405, 0
  %v710 = vsel %vm555, %v406, 0
  %v713 = vsel %vm555, %v407, 0
  %v716 = vsel %vm555, %v408, 0
  %v719 = vsel %vm555, %v409, 0
  %v722 = vsel %vm555, %v410, 0
  %v725 = vsel %vm555, %v411, 0
  %v728 = vsel %vm555, %v412, 0
  %v731 = vsel %vm555, %v413, 0
  %v734 = vsel %vm555, %v414, 0
  %v737 = vsel %vm555, %v415, 0
  %v740 = vsel %vm555, %v416, 0
  %v743 = vsel %vm555, %v417, 0
  %v746 = vsel %vm555, %v418, 0
  %748 = vmatprep.subr.mxu0 0.0
  %749 = vmatpush1.msra.mxu0 0.0
  %750 = vmatprep.subr.mxu0 0.0
  %751 = vmatpush1.msra.mxu0 0.0
  %752 = vmatprep.subr.mxu0 0.0
  %753 = vmatpush1.msra.mxu0 0.0
  %754 = vmatprep.subr.mxu0 0.0
  %755 = vmatpush1.msra.mxu0 0.0
  %756 = vmatprep.subr.mxu0 0.0
  %757 = vmatpush1.msra.mxu0 0.0
  %758 = vmatprep.subr.mxu0 0.0
  %759 = vmatpush1.msra.mxu0 0.0
  %760 = vmatprep.subr.mxu0 0.0
  %761 = vmatpush1.msra.mxu0 0.0
  %762 = vmatprep.subr.mxu0 0.0
  %763 = vmatpush1.msra.mxu0 0.0
  %764 = vmatprep.subr.mxu0 0.0
  %765 = vmatpush1.msra.mxu0 0.0
  %766 = vmatprep.subr.mxu0 0.0
  %767 = vmatpush1.msra.mxu0 0.0
  %768 = vmatprep.subr.mxu0 0.0
  %769 = vmatpush1.msra.mxu0 0.0
  %770 = vmatprep.subr.mxu0 0.0
  %771 = vmatpush1.msra.mxu0 0.0
  %772 = vmatprep.subr.mxu0 %v554
  %773 = vmatpush1.msra.mxu0 %v553
  %774 = vmatprep.subr.mxu0 %v552
  %775 = vmatpush1.msra.mxu0 %v551
  %776 = vmatprep.subr.mxu0 %v550
  %777 = vmatpush1.msra.mxu0 %v549
  %778 = vmatprep.subr.mxu0 %v548
  %779 = vmatpush1.msra.mxu0 %v547
  %780 = vmatprep.subr.mxu0 0.0
  %781 = vmatpush2.msra.mxu0 0.0
  %782 = vmatprep.subr.mxu0 0.0
  %783 = vmatpush2.msra.mxu0 0.0
  %784 = vmatprep.subr.mxu0 0.0
  %785 = vmatpush2.msra.mxu0 0.0
  %786 = vmatprep.subr.mxu0 0.0
  %787 = vmatpush2.msra.mxu0 0.0
  %788 = vmatprep.subr.mxu0 0.0
  %789 = vmatpush2.msra.mxu0 0.0
  %790 = vmatprep.subr.mxu0 0.0
  %791 = vmatpush2.msra.mxu0 0.0
  %792 = vmatprep.subr.mxu0 0.0
  %793 = vmatpush2.msra.mxu0 0.0
  %794 = vmatprep.subr.mxu0 0.0
  %795 = vmatpush2.msra.mxu0 0.0
  %796 = vmatprep.subr.mxu0 0.0
  %797 = vmatpush2.msra.mxu0 0.0
  %798 = vmatprep.subr.mxu0 0.0
  %799 = vmatpush2.msra.mxu0 0.0
  %800 = vmatprep.subr.mxu0 0.0
  %801 = vmatpush2.msra.mxu0 0.0
  %802 = vmatprep.subr.mxu0 0.0
  %803 = vmatpush2.msra.mxu0 0.0
  %804 = vmatprep.subr.mxu0 0.0
  %805 = vmatpush2.msra.mxu0 0.0
  %806 = vmatprep.subr.mxu0 0.0
  %807 = vmatpush2.msra.mxu0 0.0
  %808 = vmatprep.subr.mxu0 0.0
  %809 = vmatpush2.msra.mxu0 0.0
  %810 = vmatprep.subr.mxu0 0.0
  %811 = vmatpush2.msra.mxu0 0.0
  %812 = vmatprep.mubr.f32.mxu0 0.0
  %813 = vmatmul.mubr.f32.gmra.mxu0 %v557
  %v814 = vpop.f32.mrf.mxu0
  %v815 = vadd.f32 0.0, %v814
  %v816 = vpop.f32.mrf.mxu0
  %v817 = vadd.f32 0.0, %v816
  %818 = vmatprep.mubr.f32.mxu0 0.0
  %819 = vmatmul.mubr.f32.gmra.mxu0 %v560
  %v820 = vpop.f32.mrf.mxu0
  %v821 = vadd.f32 0.0, %v820
  %v822 = vpop.f32.mrf.mxu0
  %v823 = vadd.f32 0.0, %v822
  %824 = vmatprep.mubr.f32.mxu0 0.0
  %825 = vmatmul.mubr.f32.gmra.mxu0 %v563
  %v826 = vpop.f32.mrf.mxu0
  %v827 = vadd.f32 0.0, %v826
  %v828 = vpop.f32.mrf.mxu0
  %v829 = vadd.f32 0.0, %v828
  %830 = vmatprep.mubr.f32.mxu0 0.0
  %831 = vmatmul.mubr.f32.gmra.mxu0 %v566
  %v832 = vpop.f32.mrf.mxu0
  %v833 = vadd.f32 0.0, %v832
  %v834 = vpop.f32.mrf.mxu0
  %v835 = vadd.f32 0.0, %v834
  %836 = vmatprep.mubr.f32.mxu0 0.0
  %837 = vmatmul.mubr.f32.gmra.mxu0 %v569
  %v838 = vpop.f32.mrf.mxu0
  %v839 = vadd.f32 0.0, %v838
  %v840 = vpop.f32.mrf.mxu0
  %v841 = vadd.f32 0.0, %v840
  %842 = vmatprep.mubr.f32.mxu0 0.0
  %843 = vmatmul.mubr.f32.gmra.mxu0 %v572
  %v844 = vpop.f32.mrf.mxu0
  %v845 = vadd.f32 0.0, %v844
  %v846 = vpop.f32.mrf.mxu0
  %v847 = vadd.f32 0.0, %v846
  %848 = vmatprep.mubr.f32.mxu0 0.0
  %849 = vmatmul.mubr.f32.gmra.mxu0 %v575
  %v850 = vpop.f32.mrf.mxu0
  %v851 = vadd.f32 0.0, %v850
  %v852 = vpop.f32.mrf.mxu0
  %v853 = vadd.f32 0.0, %v852
  %854 = vmatprep.mubr.f32.mxu0 0.0
  %855 = vmatmul.mubr.f32.gmra.mxu0 %v578
  %v856 = vpop.f32.mrf.mxu0
  %v857 = vadd.f32 0.0, %v856
  %v858 = vpop.f32.mrf.mxu0
  %v859 = vadd.f32 0.0, %v858
  %860 = vmatprep.mubr.f32.mxu0 0.0
  %861 = vmatmul.mubr.f32.gmra.mxu0 %v581
  %v862 = vpop.f32.mrf.mxu0
  %v863 = vadd.f32 0.0, %v862
  %v864 = vpop.f32.mrf.mxu0
  %v865 = vadd.f32 0.0, %v864
  %866 = vmatprep.mubr.f32.mxu0 0.0
  %867 = vmatmul.mubr.f32.gmra.mxu0 %v584
  %v868 = vpop.f32.mrf.mxu0
  %v869 = vadd.f32 0.0, %v868
  %v870 = vpop.f32.mrf.mxu0
  %v871 = vadd.f32 0.0, %v870
  %872 = vmatprep.mubr.f32.mxu0 0.0
  %873 = vmatmul.mubr.f32.gmra.mxu0 %v587
  %v874 = vpop.f32.mrf.mxu0
  %v875 = vadd.f32 0.0, %v874
  %v876 = vpop.f32.mrf.mxu0
  %v877 = vadd.f32 0.0, %v876
  %878 = vmatprep.mubr.f32.mxu0 0.0
  %879 = vmatmul.mubr.f32.gmra.mxu0 %v590
  %v880 = vpop.f32.mrf.mxu0
  %v881 = vadd.f32 0.0, %v880
  %v882 = vpop.f32.mrf.mxu0
  %v883 = vadd.f32 0.0, %v882
  %884 = vmatprep.mubr.f32.mxu0 0.0
  %885 = vmatmul.mubr.f32.gmra.mxu0 %v593
  %v886 = vpop.f32.mrf.mxu0
  %v887 = vadd.f32 0.0, %v886
  %v888 = vpop.f32.mrf.mxu0
  %v889 = vadd.f32 0.0, %v888
  %890 = vmatprep.mubr.f32.mxu0 0.0
  %891 = vmatmul.mubr.f32.gmra.mxu0 %v596
  %v892 = vpop.f32.mrf.mxu0
  %v893 = vadd.f32 0.0, %v892
  %v894 = vpop.f32.mrf.mxu0
  %v895 = vadd.f32 0.0, %v894
  %896 = vmatprep.mubr.f32.mxu0 0.0
  %897 = vmatmul.mubr.f32.gmra.mxu0 %v599
  %v898 = vpop.f32.mrf.mxu0
  %v899 = vadd.f32 0.0, %v898
  %v900 = vpop.f32.mrf.mxu0
  %v901 = vadd.f32 0.0, %v900
  %902 = vmatprep.mubr.f32.mxu0 0.0
  %903 = vmatmul.mubr.f32.gmra.mxu0 %v602
  %v904 = vpop.f32.mrf.mxu0
  %v905 = vadd.f32 0.0, %v904
  %v906 = vpop.f32.mrf.mxu0
  %v907 = vadd.f32 0.0, %v906
  %908 = vmatprep.mubr.f32.mxu0 0.0
  %909 = vmatmul.mubr.f32.gmra.mxu0 %v605
  %v910 = vpop.f32.mrf.mxu0
  %v911 = vadd.f32 0.0, %v910
  %v912 = vpop.f32.mrf.mxu0
  %v913 = vadd.f32 0.0, %v912
  %914 = vmatprep.mubr.f32.mxu0 0.0
  %915 = vmatmul.mubr.f32.gmra.mxu0 %v608
  %v916 = vpop.f32.mrf.mxu0
  %v917 = vadd.f32 0.0, %v916
  %v918 = vpop.f32.mrf.mxu0
  %v919 = vadd.f32 0.0, %v918
  %920 = vmatprep.mubr.f32.mxu0 0.0
  %921 = vmatmul.mubr.f32.gmra.mxu0 %v611
  %v922 = vpop.f32.mrf.mxu0
  %v923 = vadd.f32 0.0, %v922
  %v924 = vpop.f32.mrf.mxu0
  %v925 = vadd.f32 0.0, %v924
  %926 = vmatprep.mubr.f32.mxu0 0.0
  %927 = vmatmul.mubr.f32.gmra.mxu0 %v614
  %v928 = vpop.f32.mrf.mxu0
  %v929 = vadd.f32 0.0, %v928
  %v930 = vpop.f32.mrf.mxu0
  %v931 = vadd.f32 0.0, %v930
  %932 = vmatprep.mubr.f32.mxu0 0.0
  %933 = vmatmul.mubr.f32.gmra.mxu0 %v617
  %v934 = vpop.f32.mrf.mxu0
  %v935 = vadd.f32 0.0, %v934
  %v936 = vpop.f32.mrf.mxu0
  %v937 = vadd.f32 0.0, %v936
  %938 = vmatprep.mubr.f32.mxu0 0.0
  %939 = vmatmul.mubr.f32.gmra.mxu0 %v620
  %v940 = vpop.f32.mrf.mxu0
  %v941 = vadd.f32 0.0, %v940
  %v942 = vpop.f32.mrf.mxu0
  %v943 = vadd.f32 0.0, %v942
  %944 = vmatprep.mubr.f32.mxu0 0.0
  %945 = vmatmul.mubr.f32.gmra.mxu0 %v623
  %v946 = vpop.f32.mrf.mxu0
  %v947 = vadd.f32 0.0, %v946
  %v948 = vpop.f32.mrf.mxu0
  %v949 = vadd.f32 0.0, %v948
  %950 = vmatprep.mubr.f32.mxu0 0.0
  %951 = vmatmul.mubr.f32.gmra.mxu0 %v626
  %v952 = vpop.f32.mrf.mxu0
  %v953 = vadd.f32 0.0, %v952
  %v954 = vpop.f32.mrf.mxu0
  %v955 = vadd.f32 0.0, %v954
  %956 = vmatprep.mubr.f32.mxu0 0.0
  %957 = vmatmul.mubr.f32.gmra.mxu0 %v629
  %v958 = vpop.f32.mrf.mxu0
  %v959 = vadd.f32 0.0, %v958
  %v960 = vpop.f32.mrf.mxu0
  %v961 = vadd.f32 0.0, %v960
  %962 = vmatprep.mubr.f32.mxu0 0.0
  %963 = vmatmul.mubr.f32.gmra.mxu0 %v632
  %v964 = vpop.f32.mrf.mxu0
  %v965 = vadd.f32 0.0, %v964
  %v966 = vpop.f32.mrf.mxu0
  %v967 = vadd.f32 0.0, %v966
  %968 = vmatprep.mubr.f32.mxu0 0.0
  %969 = vmatmul.mubr.f32.gmra.mxu0 %v635
  %v970 = vpop.f32.mrf.mxu0
  %v971 = vadd.f32 0.0, %v970
  %v972 = vpop.f32.mrf.mxu0
  %v973 = vadd.f32 0.0, %v972
  %974 = vmatprep.mubr.f32.mxu0 0.0
  %975 = vmatmul.mubr.f32.gmra.mxu0 %v638
  %v976 = vpop.f32.mrf.mxu0
  %v977 = vadd.f32 0.0, %v976
  %v978 = vpop.f32.mrf.mxu0
  %v979 = vadd.f32 0.0, %v978
  %980 = vmatprep.mubr.f32.mxu0 0.0
  %981 = vmatmul.mubr.f32.gmra.mxu0 %v641
  %v982 = vpop.f32.mrf.mxu0
  %v983 = vadd.f32 0.0, %v982
  %v984 = vpop.f32.mrf.mxu0
  %v985 = vadd.f32 0.0, %v984
  %986 = vmatprep.mubr.f32.mxu0 0.0
  %987 = vmatmul.mubr.f32.gmra.mxu0 %v644
  %v988 = vpop.f32.mrf.mxu0
  %v989 = vadd.f32 0.0, %v988
  %v990 = vpop.f32.mrf.mxu0
  %v991 = vadd.f32 0.0, %v990
  %992 = vmatprep.mubr.f32.mxu0 0.0
  %993 = vmatmul.mubr.f32.gmra.mxu0 %v647
  %v994 = vpop.f32.mrf.mxu0
  %v995 = vadd.f32 0.0, %v994
  %v996 = vpop.f32.mrf.mxu0
  %v997 = vadd.f32 0.0, %v996
  %998 = vmatprep.mubr.f32.mxu0 0.0
  %999 = vmatmul.mubr.f32.gmra.mxu0 %v650
  %v1000 = vpop.f32.mrf.mxu0
  %v1001 = vadd.f32 0.0, %v1000
  %v1002 = vpop.f32.mrf.mxu0
  %v1003 = vadd.f32 0.0, %v1002
  %1004 = vmatprep.mubr.f32.mxu0 0.0
  %1005 = vmatmul.mubr.f32.gmra.mxu0 %v653
  %v1006 = vpop.f32.mrf.mxu0
  %v1007 = vadd.f32 0.0, %v1006
  %v1008 = vpop.f32.mrf.mxu0
  %v1009 = vadd.f32 0.0, %v1008
  %1010 = vmatprep.mubr.f32.mxu0 0.0
  %1011 = vmatmul.mubr.f32.gmra.mxu0 %v656
  %v1012 = vpop.f32.mrf.mxu0
  %v1013 = vadd.f32 0.0, %v1012
  %v1014 = vpop.f32.mrf.mxu0
  %v1015 = vadd.f32 0.0, %v1014
  %1016 = vmatprep.mubr.f32.mxu0 0.0
  %1017 = vmatmul.mubr.f32.gmra.mxu0 %v659
  %v1018 = vpop.f32.mrf.mxu0
  %v1019 = vadd.f32 0.0, %v1018
  %v1020 = vpop.f32.mrf.mxu0
  %v1021 = vadd.f32 0.0, %v1020
  %1022 = vmatprep.mubr.f32.mxu0 0.0
  %1023 = vmatmul.mubr.f32.gmra.mxu0 %v662
  %v1024 = vpop.f32.mrf.mxu0
  %v1025 = vadd.f32 0.0, %v1024
  %v1026 = vpop.f32.mrf.mxu0
  %v1027 = vadd.f32 0.0, %v1026
  %1028 = vmatprep.mubr.f32.mxu0 0.0
  %1029 = vmatmul.mubr.f32.gmra.mxu0 %v665
  %v1030 = vpop.f32.mrf.mxu0
  %v1031 = vadd.f32 0.0, %v1030
  %v1032 = vpop.f32.mrf.mxu0
  %v1033 = vadd.f32 0.0, %v1032
  %1034 = vmatprep.mubr.f32.mxu0 0.0
  %1035 = vmatmul.mubr.f32.gmra.mxu0 %v668
  %v1036 = vpop.f32.mrf.mxu0
  %v1037 = vadd.f32 0.0, %v1036
  %v1038 = vpop.f32.mrf.mxu0
  %v1039 = vadd.f32 0.0, %v1038
  %1040 = vmatprep.mubr.f32.mxu0 0.0
  %1041 = vmatmul.mubr.f32.gmra.mxu0 %v671
  %v1042 = vpop.f32.mrf.mxu0
  %v1043 = vadd.f32 0.0, %v1042
  %v1044 = vpop.f32.mrf.mxu0
  %v1045 = vadd.f32 0.0, %v1044
  %1046 = vmatprep.mubr.f32.mxu0 0.0
  %1047 = vmatmul.mubr.f32.gmra.mxu0 %v674
  %v1048 = vpop.f32.mrf.mxu0
  %v1049 = vadd.f32 0.0, %v1048
  %v1050 = vpop.f32.mrf.mxu0
  %v1051 = vadd.f32 0.0, %v1050
  %1052 = vmatprep.mubr.f32.mxu0 0.0
  %1053 = vmatmul.mubr.f32.gmra.mxu0 %v677
  %v1054 = vpop.f32.mrf.mxu0
  %v1055 = vadd.f32 0.0, %v1054
  %v1056 = vpop.f32.mrf.mxu0
  %v1057 = vadd.f32 0.0, %v1056
  %1058 = vmatprep.mubr.f32.mxu0 0.0
  %1059 = vmatmul.mubr.f32.gmra.mxu0 %v680
  %v1060 = vpop.f32.mrf.mxu0
  %v1061 = vadd.f32 0.0, %v1060
  %v1062 = vpop.f32.mrf.mxu0
  %v1063 = vadd.f32 0.0, %v1062
  %1064 = vmatprep.mubr.f32.mxu0 0.0
  %1065 = vmatmul.mubr.f32.gmra.mxu0 %v683
  %v1066 = vpop.f32.mrf.mxu0
  %v1067 = vadd.f32 0.0, %v1066
  %v1068 = vpop.f32.mrf.mxu0
  %v1069 = vadd.f32 0.0, %v1068
  %1070 = vmatprep.mubr.f32.mxu0 0.0
  %1071 = vmatmul.mubr.f32.gmra.mxu0 %v686
  %v1072 = vpop.f32.mrf.mxu0
  %v1073 = vadd.f32 0.0, %v1072
  %v1074 = vpop.f32.mrf.mxu0
  %v1075 = vadd.f32 0.0, %v1074
  %1076 = vmatprep.mubr.f32.mxu0 0.0
  %1077 = vmatmul.mubr.f32.gmra.mxu0 %v689
  %v1078 = vpop.f32.mrf.mxu0
  %v1079 = vadd.f32 0.0, %v1078
  %v1080 = vpop.f32.mrf.mxu0
  %v1081 = vadd.f32 0.0, %v1080
  %1082 = vmatprep.mubr.f32.mxu0 0.0
  %1083 = vmatmul.mubr.f32.gmra.mxu0 %v692
  %v1084 = vpop.f32.mrf.mxu0
  %v1085 = vadd.f32 0.0, %v1084
  %v1086 = vpop.f32.mrf.mxu0
  %v1087 = vadd.f32 0.0, %v1086
  %1088 = vmatprep.mubr.f32.mxu0 0.0
  %1089 = vmatmul.mubr.f32.gmra.mxu0 %v695
  %v1090 = vpop.f32.mrf.mxu0
  %v1091 = vadd.f32 0.0, %v1090
  %v1092 = vpop.f32.mrf.mxu0
  %v1093 = vadd.f32 0.0, %v1092
  %1094 = vmatprep.mubr.f32.mxu0 0.0
  %1095 = vmatmul.mubr.f32.gmra.mxu0 %v698
  %v1096 = vpop.f32.mrf.mxu0
  %v1097 = vadd.f32 0.0, %v1096
  %v1098 = vpop.f32.mrf.mxu0
  %v1099 = vadd.f32 0.0, %v1098
  %1100 = vmatprep.mubr.f32.mxu0 0.0
  %1101 = vmatmul.mubr.f32.gmra.mxu0 %v701
  %v1102 = vpop.f32.mrf.mxu0
  %v1103 = vadd.f32 0.0, %v1102
  %v1104 = vpop.f32.mrf.mxu0
  %v1105 = vadd.f32 0.0, %v1104
  %1106 = vmatprep.mubr.f32.mxu0 0.0
  %1107 = vmatmul.mubr.f32.gmra.mxu0 %v704
  %v1108 = vpop.f32.mrf.mxu0
  %v1109 = vadd.f32 0.0, %v1108
  %v1110 = vpop.f32.mrf.mxu0
  %v1111 = vadd.f32 0.0, %v1110
  %1112 = vmatprep.mubr.f32.mxu0 0.0
  %1113 = vmatmul.mubr.f32.gmra.mxu0 %v707
  %v1114 = vpop.f32.mrf.mxu0
  %v1115 = vadd.f32 0.0, %v1114
  %v1116 = vpop.f32.mrf.mxu0
  %v1117 = vadd.f32 0.0, %v1116
  %1118 = vmatprep.mubr.f32.mxu0 0.0
  %1119 = vmatmul.mubr.f32.gmra.mxu0 %v710
  %v1120 = vpop.f32.mrf.mxu0
  %v1121 = vadd.f32 0.0, %v1120
  %v1122 = vpop.f32.mrf.mxu0
  %v1123 = vadd.f32 0.0, %v1122
  %1124 = vmatprep.mubr.f32.mxu0 0.0
  %1125 = vmatmul.mubr.f32.gmra.mxu0 %v713
  %v1126 = vpop.f32.mrf.mxu0
  %v1127 = vadd.f32 0.0, %v1126
  %v1128 = vpop.f32.mrf.mxu0
  %v1129 = vadd.f32 0.0, %v1128
  %1130 = vmatprep.mubr.f32.mxu0 0.0
  %1131 = vmatmul.mubr.f32.gmra.mxu0 %v716
  %v1132 = vpop.f32.mrf.mxu0
  %v1133 = vadd.f32 0.0, %v1132
  %v1134 = vpop.f32.mrf.mxu0
  %v1135 = vadd.f32 0.0, %v1134
  %1136 = vmatprep.mubr.f32.mxu0 0.0
  %1137 = vmatmul.mubr.f32.gmra.mxu0 %v719
  %v1138 = vpop.f32.mrf.mxu0
  %v1139 = vadd.f32 0.0, %v1138
  %v1140 = vpop.f32.mrf.mxu0
  %v1141 = vadd.f32 0.0, %v1140
  %1142 = vmatprep.mubr.f32.mxu0 0.0
  %1143 = vmatmul.mubr.f32.gmra.mxu0 %v722
  %v1144 = vpop.f32.mrf.mxu0
  %v1145 = vadd.f32 0.0, %v1144
  %v1146 = vpop.f32.mrf.mxu0
  %v1147 = vadd.f32 0.0, %v1146
  %1148 = vmatprep.mubr.f32.mxu0 0.0
  %1149 = vmatmul.mubr.f32.gmra.mxu0 %v725
  %v1150 = vpop.f32.mrf.mxu0
  %v1151 = vadd.f32 0.0, %v1150
  %v1152 = vpop.f32.mrf.mxu0
  %v1153 = vadd.f32 0.0, %v1152
  %1154 = vmatprep.mubr.f32.mxu0 0.0
  %1155 = vmatmul.mubr.f32.gmra.mxu0 %v728
  %v1156 = vpop.f32.mrf.mxu0
  %v1157 = vadd.f32 0.0, %v1156
  %v1158 = vpop.f32.mrf.mxu0
  %v1159 = vadd.f32 0.0, %v1158
  %1160 = vmatprep.mubr.f32.mxu0 0.0
  %1161 = vmatmul.mubr.f32.gmra.mxu0 %v731
  %v1162 = vpop.f32.mrf.mxu0
  %v1163 = vadd.f32 0.0, %v1162
  %v1164 = vpop.f32.mrf.mxu0
  %v1165 = vadd.f32 0.0, %v1164
  %1166 = vmatprep.mubr.f32.mxu0 0.0
  %1167 = vmatmul.mubr.f32.gmra.mxu0 %v734
  %v1168 = vpop.f32.mrf.mxu0
  %v1169 = vadd.f32 0.0, %v1168
  %v1170 = vpop.f32.mrf.mxu0
  %v1171 = vadd.f32 0.0, %v1170
  %1172 = vmatprep.mubr.f32.mxu0 0.0
  %1173 = vmatmul.mubr.f32.gmra.mxu0 %v737
  %v1174 = vpop.f32.mrf.mxu0
  %v1175 = vadd.f32 0.0, %v1174
  %v1176 = vpop.f32.mrf.mxu0
  %v1177 = vadd.f32 0.0, %v1176
  %1178 = vmatprep.mubr.f32.mxu0 0.0
  %1179 = vmatmul.mubr.f32.gmra.mxu0 %v740
  %v1180 = vpop.f32.mrf.mxu0
  %v1181 = vadd.f32 0.0, %v1180
  %v1182 = vpop.f32.mrf.mxu0
  %v1183 = vadd.f32 0.0, %v1182
  %1184 = vmatprep.mubr.f32.mxu0 0.0
  %1185 = vmatmul.mubr.f32.gmra.mxu0 %v743
  %v1186 = vpop.f32.mrf.mxu0
  %v1187 = vadd.f32 0.0, %v1186
  %v1188 = vpop.f32.mrf.mxu0
  %v1189 = vadd.f32 0.0, %v1188
  %1190 = vmatprep.mubr.f32.mxu0 0.0
  %1191 = vmatmul.mubr.f32.gmra.mxu0 %v746
  %v1192 = vpop.f32.mrf.mxu0
  %v1193 = vadd.f32 0.0, %v1192
  %v1194 = vpop.f32.mrf.mxu0
  %v1195 = vadd.f32 0.0, %v1194
  %1196 = vdwg.mxu0
  %v1197 = vadd.f32 %v419, %v815
  %v1198 = vadd.f32 %v420, %v817
  %v1199 = vadd.f32 %v421, %v821
  %v1200 = vadd.f32 %v422, %v823
  %v1201 = vadd.f32 %v423, %v827
  %v1202 = vadd.f32 %v424, %v829
  %v1203 = vadd.f32 %v425, %v833
  %v1204 = vadd.f32 %v426, %v835
  %v1205 = vadd.f32 %v427, %v839
  %v1206 = vadd.f32 %v428, %v841
  %v1207 = vadd.f32 %v429, %v845
  %v1208 = vadd.f32 %v430, %v847
  %v1209 = vadd.f32 %v431, %v851
  %v1210 = vadd.f32 %v432, %v853
  %v1211 = vadd.f32 %v433, %v857
  %v1212 = vadd.f32 %v434, %v859
  %v1213 = vadd.f32 %v435, %v863
  %v1214 = vadd.f32 %v436, %v865
  %v1215 = vadd.f32 %v437, %v869
  %v1216 = vadd.f32 %v438, %v871
  %v1217 = vadd.f32 %v439, %v875
  %v1218 = vadd.f32 %v440, %v877
  %v1219 = vadd.f32 %v441, %v881
  %v1220 = vadd.f32 %v442, %v883
  %v1221 = vadd.f32 %v443, %v887
  %v1222 = vadd.f32 %v444, %v889
  %v1223 = vadd.f32 %v445, %v893
  %v1224 = vadd.f32 %v446, %v895
  %v1225 = vadd.f32 %v447, %v899
  %v1226 = vadd.f32 %v448, %v901
  %v1227 = vadd.f32 %v449, %v905
  %v1228 = vadd.f32 %v450, %v907
  %v1229 = vadd.f32 %v451, %v911
  %v1230 = vadd.f32 %v452, %v913
  %v1231 = vadd.f32 %v453, %v917
  %v1232 = vadd.f32 %v454, %v919
  %v1233 = vadd.f32 %v455, %v923
  %v1234 = vadd.f32 %v456, %v925
  %v1235 = vadd.f32 %v457, %v929
  %v1236 = vadd.f32 %v458, %v931
  %v1237 = vadd.f32 %v459, %v935
  %v1238 = vadd.f32 %v460, %v937
  %v1239 = vadd.f32 %v461, %v941
  %v1240 = vadd.f32 %v462, %v943
  %v1241 = vadd.f32 %v463, %v947
  %v1242 = vadd.f32 %v464, %v949
  %v1243 = vadd.f32 %v465, %v953
  %v1244 = vadd.f32 %v466, %v955
  %v1245 = vadd.f32 %v467, %v959
  %v1246 = vadd.f32 %v468, %v961
  %v1247 = vadd.f32 %v469, %v965
  %v1248 = vadd.f32 %v470, %v967
  %v1249 = vadd.f32 %v471, %v971
  %v1250 = vadd.f32 %v472, %v973
  %v1251 = vadd.f32 %v473, %v977
  %v1252 = vadd.f32 %v474, %v979
  %v1253 = vadd.f32 %v475, %v983
  %v1254 = vadd.f32 %v476, %v985
  %v1255 = vadd.f32 %v477, %v989
  %v1256 = vadd.f32 %v478, %v991
  %v1257 = vadd.f32 %v479, %v995
  %v1258 = vadd.f32 %v480, %v997
  %v1259 = vadd.f32 %v481, %v1001
  %v1260 = vadd.f32 %v482, %v1003
  %v1261 = vadd.f32 %v483, %v1007
  %v1262 = vadd.f32 %v484, %v1009
  %v1263 = vadd.f32 %v485, %v1013
  %v1264 = vadd.f32 %v486, %v1015
  %v1265 = vadd.f32 %v487, %v1019
  %v1266 = vadd.f32 %v488, %v1021
  %v1267 = vadd.f32 %v489, %v1025
  %v1268 = vadd.f32 %v490, %v1027
  %v1269 = vadd.f32 %v491, %v1031
  %v1270 = vadd.f32 %v492, %v1033
  %v1271 = vadd.f32 %v493, %v1037
  %v1272 = vadd.f32 %v494, %v1039
  %v1273 = vadd.f32 %v495, %v1043
  %v1274 = vadd.f32 %v496, %v1045
  %v1275 = vadd.f32 %v497, %v1049
  %v1276 = vadd.f32 %v498, %v1051
  %v1277 = vadd.f32 %v499, %v1055
  %v1278 = vadd.f32 %v500, %v1057
  %v1279 = vadd.f32 %v501, %v1061
  %v1280 = vadd.f32 %v502, %v1063
  %v1281 = vadd.f32 %v503, %v1067
  %v1282 = vadd.f32 %v504, %v1069
  %v1283 = vadd.f32 %v505, %v1073
  %v1284 = vadd.f32 %v506, %v1075
  %v1285 = vadd.f32 %v507, %v1079
  %v1286 = vadd.f32 %v508, %v1081
  %v1287 = vadd.f32 %v509, %v1085
  %v1288 = vadd.f32 %v510, %v1087
  %v1289 = vadd.f32 %v511, %v1091
  %v1290 = vadd.f32 %v512, %v1093
  %v1291 = vadd.f32 %v513, %v1097
  %v1292 = vadd.f32 %v514, %v1099
  %v1293 = vadd.f32 %v515, %v1103
  %v1294 = vadd.f32 %v516, %v1105
  %v1295 = vadd.f32 %v517, %v1109
  %v1296 = vadd.f32 %v518, %v1111
  %v1297 = vadd.f32 %v519, %v1115
  %v1298 = vadd.f32 %v520, %v1117
  %v1299 = vadd.f32 %v521, %v1121
  %v1300 = vadd.f32 %v522, %v1123
  %v1301 = vadd.f32 %v523, %v1127
  %v1302 = vadd.f32 %v524, %v1129
  %v1303 = vadd.f32 %v525, %v1133
  %v1304 = vadd.f32 %v526, %v1135
  %v1305 = vadd.f32 %v527, %v1139
  %v1306 = vadd.f32 %v528, %v1141
  %v1307 = vadd.f32 %v529, %v1145
  %v1308 = vadd.f32 %v530, %v1147
  %v1309 = vadd.f32 %v531, %v1151
  %v1310 = vadd.f32 %v532, %v1153
  %v1311 = vadd.f32 %v533, %v1157
  %v1312 = vadd.f32 %v534, %v1159
  %v1313 = vadd.f32 %v535, %v1163
  %v1314 = vadd.f32 %v536, %v1165
  %v1315 = vadd.f32 %v537, %v1169
  %v1316 = vadd.f32 %v538, %v1171
  %v1317 = vadd.f32 %v539, %v1175
  %v1318 = vadd.f32 %v540, %v1177
  %v1319 = vadd.f32 %v541, %v1181
  %v1320 = vadd.f32 %v542, %v1183
  %v1321 = vadd.f32 %v543, %v1187
  %v1322 = vadd.f32 %v544, %v1189
  %v1323 = vadd.f32 %v545, %v1193
  %v1324 = vadd.f32 %v546, %v1195
  %1325 = vst [vmem:[%s4] sm:$0xff] %v1197
  %1326 = vst [vmem:[%s4 + $0x8] sm:$0xff] %v1198
  %1327 = vst [vmem:[%s4 + $0x10] sm:$0xff] %v1199
  %1328 = vst [vmem:[%s4 + $0x18] sm:$0xff] %v1200
  %1329 = vst [vmem:[%s4 + $0x20] sm:$0xff] %v1201
  %1330 = vst [vmem:[%s4 + $0x28] sm:$0xff] %v1202
  %1331 = vst [vmem:[%s4 + $0x30] sm:$0xff] %v1203
  %1332 = vst [vmem:[%s4 + $0x38] sm:$0xff] %v1204
  %1333 = vst [vmem:[%s4 + $0x40] sm:$0xff] %v1205
  %1334 = vst [vmem:[%s4 + $0x48] sm:$0xff] %v1206
  %1335 = vst [vmem:[%s4 + $0x50] sm:$0xff] %v1207
  %1336 = vst [vmem:[%s4 + $0x58] sm:$0xff] %v1208
  %1337 = vst [vmem:[%s4 + $0x60] sm:$0xff] %v1209
  %1338 = vst [vmem:[%s4 + $0x68] sm:$0xff] %v1210
  %1339 = vst [vmem:[%s4 + $0x70] sm:$0xff] %v1211
  %1340 = vst [vmem:[%s4 + $0x78] sm:$0xff] %v1212
  %1341 = vst [vmem:[%s4 + $0x80] sm:$0xff] %v1213
  %1342 = vst [vmem:[%s4 + $0x88] sm:$0xff] %v1214
  %1343 = vst [vmem:[%s4 + $0x90] sm:$0xff] %v1215
  %1344 = vst [vmem:[%s4 + $0x98] sm:$0xff] %v1216
  %1345 = vst [vmem:[%s4 + $0xa0] sm:$0xff] %v1217
  %1346 = vst [vmem:[%s4 + $0xa8] sm:$0xff] %v1218
  %1347 = vst [vmem:[%s4 + $0xb0] sm:$0xff] %v1219
  %1348 = vst [vmem:[%s4 + $0xb8] sm:$0xff] %v1220
  %1349 = vst [vmem:[%s4 + $0xc0] sm:$0xff] %v1221
  %1350 = vst [vmem:[%s4 + $0xc8] sm:$0xff] %v1222
  %1351 = vst [vmem:[%s4 + $0xd0] sm:$0xff] %v1223
  %1352 = vst [vmem:[%s4 + $0xd8] sm:$0xff] %v1224
  %1353 = vst [vmem:[%s4 + $0xe0] sm:$0xff] %v1225
  %1354 = vst [vmem:[%s4 + $0xe8] sm:$0xff] %v1226
  %1355 = vst [vmem:[%s4 + $0xf0] sm:$0xff] %v1227
  %1356 = vst [vmem:[%s4 + $0xf8] sm:$0xff] %v1228
  %1357 = vst [vmem:[%s4 + $0x100] sm:$0xff] %v1229
  %1358 = vst [vmem:[%s4 + $0x108] sm:$0xff] %v1230
  %1359 = vst [vmem:[%s4 + $0x110] sm:$0xff] %v1231
  %1360 = vst [vmem:[%s4 + $0x118] sm:$0xff] %v1232
  %1361 = vst [vmem:[%s4 + $0x120] sm:$0xff] %v1233
  %1362 = vst [vmem:[%s4 + $0x128] sm:$0xff] %v1234
  %1363 = vst [vmem:[%s4 + $0x130] sm:$0xff] %v1235
  %1364 = vst [vmem:[%s4 + $0x138] sm:$0xff] %v1236
  %1365 = vst [vmem:[%s4 + $0x140] sm:$0xff] %v1237
  %1366 = vst [vmem:[%s4 + $0x148] sm:$0xff] %v1238
  %1367 = vst [vmem:[%s4 + $0x150] sm:$0xff] %v1239
  %1368 = vst [vmem:[%s4 + $0x158] sm:$0xff] %v1240
  %1369 = vst [vmem:[%s4 + $0x160] sm:$0xff] %v1241
  %1370 = vst [vmem:[%s4 + $0x168] sm:$0xff] %v1242
  %1371 = vst [vmem:[%s4 + $0x170] sm:$0xff] %v1243
  %1372 = vst [vmem:[%s4 + $0x178] sm:$0xff] %v1244
  %1373 = vst [vmem:[%s4 + $0x180] sm:$0xff] %v1245
  %1374 = vst [vmem:[%s4 + $0x188] sm:$0xff] %v1246
  %1375 = vst [vmem:[%s4 + $0x190] sm:$0xff] %v1247
  %1376 = vst [vmem:[%s4 + $0x198] sm:$0xff] %v1248
  %1377 = vst [vmem:[%s4 + $0x1a0] sm:$0xff] %v1249
  %1378 = vst [vmem:[%s4 + $0x1a8] sm:$0xff] %v1250
  %1379 = vst [vmem:[%s4 + $0x1b0] sm:$0xff] %v1251
  %1380 = vst [vmem:[%s4 + $0x1b8] sm:$0xff] %v1252
  %1381 = vst [vmem:[%s4 + $0x1c0] sm:$0xff] %v1253
  %1382 = vst [vmem:[%s4 + $0x1c8] sm:$0xff] %v1254
  %1383 = vst [vmem:[%s4 + $0x1d0] sm:$0xff] %v1255
  %1384 = vst [vmem:[%s4 + $0x1d8] sm:$0xff] %v1256
  %1385 = vst [vmem:[%s4 + $0x1e0] sm:$0xff] %v1257
  %1386 = vst [vmem:[%s4 + $0x1e8] sm:$0xff] %v1258
  %1387 = vst [vmem:[%s4 + $0x1f0] sm:$0xff] %v1259
  %1388 = vst [vmem:[%s4 + $0x1f8] sm:$0xff] %v1260
  %1389 = vst [vmem:[%s4 + $0x200] sm:$0xff] %v1261
  %1390 = vst [vmem:[%s4 + $0x208] sm:$0xff] %v1262
  %1391 = vst [vmem:[%s4 + $0x210] sm:$0xff] %v1263
  %1392 = vst [vmem:[%s4 + $0x218] sm:$0xff] %v1264
  %1393 = vst [vmem:[%s4 + $0x220] sm:$0xff] %v1265
  %1394 = vst [vmem:[%s4 + $0x228] sm:$0xff] %v1266
  %1395 = vst [vmem:[%s4 + $0x230] sm:$0xff] %v1267
  %1396 = vst [vmem:[%s4 + $0x238] sm:$0xff] %v1268
  %1397 = vst [vmem:[%s4 + $0x240] sm:$0xff] %v1269
  %1398 = vst [vmem:[%s4 + $0x248] sm:$0xff] %v1270
  %1399 = vst [vmem:[%s4 + $0x250] sm:$0xff] %v1271
  %1400 = vst [vmem:[%s4 + $0x258] sm:$0xff] %v1272
  %1401 = vst [vmem:[%s4 + $0x260] sm:$0xff] %v1273
  %1402 = vst [vmem:[%s4 + $0x268] sm:$0xff] %v1274
  %1403 = vst [vmem:[%s4 + $0x270] sm:$0xff] %v1275
  %1404 = vst [vmem:[%s4 + $0x278] sm:$0xff] %v1276
  %1405 = vst [vmem:[%s4 + $0x280] sm:$0xff] %v1277
  %1406 = vst [vmem:[%s4 + $0x288] sm:$0xff] %v1278
  %1407 = vst [vmem:[%s4 + $0x290] sm:$0xff] %v1279
  %1408 = vst [vmem:[%s4 + $0x298] sm:$0xff] %v1280
  %1409 = vst [vmem:[%s4 + $0x2a0] sm:$0xff] %v1281
  %1410 = vst [vmem:[%s4 + $0x2a8] sm:$0xff] %v1282
  %1411 = vst [vmem:[%s4 + $0x2b0] sm:$0xff] %v1283
  %1412 = vst [vmem:[%s4 + $0x2b8] sm:$0xff] %v1284
  %1413 = vst [vmem:[%s4 + $0x2c0] sm:$0xff] %v1285
  %1414 = vst [vmem:[%s4 + $0x2c8] sm:$0xff] %v1286
  %1415 = vst [vmem:[%s4 + $0x2d0] sm:$0xff] %v1287
  %1416 = vst [vmem:[%s4 + $0x2d8] sm:$0xff] %v1288
  %1417 = vst [vmem:[%s4 + $0x2e0] sm:$0xff] %v1289
  %1418 = vst [vmem:[%s4 + $0x2e8] sm:$0xff] %v1290
  %1419 = vst [vmem:[%s4 + $0x2f0] sm:$0xff] %v1291
  %1420 = vst [vmem:[%s4 + $0x2f8] sm:$0xff] %v1292
  %1421 = vst [vmem:[%s4 + $0x300] sm:$0xff] %v1293
  %1422 = vst [vmem:[%s4 + $0x308] sm:$0xff] %v1294
  %1423 = vst [vmem:[%s4 + $0x310] sm:$0xff] %v1295
  %1424 = vst [vmem:[%s4 + $0x318] sm:$0xff] %v1296
  %1425 = vst [vmem:[%s4 + $0x320] sm:$0xff] %v1297
  %1426 = vst [vmem:[%s4 + $0x328] sm:$0xff] %v1298
  %1427 = vst [vmem:[%s4 + $0x330] sm:$0xff] %v1299
  %1428 = vst [vmem:[%s4 + $0x338] sm:$0xff] %v1300
  %1429 = vst [vmem:[%s4 + $0x340] sm:$0xff] %v1301
  %1430 = vst [vmem:[%s4 + $0x348] sm:$0xff] %v1302
  %1431 = vst [vmem:[%s4 + $0x350] sm:$0xff] %v1303
  %1432 = vst [vmem:[%s4 + $0x358] sm:$0xff] %v1304
  %1433 = vst [vmem:[%s4 + $0x360] sm:$0xff] %v1305
  %1434 = vst [vmem:[%s4 + $0x368] sm:$0xff] %v1306
  %1435 = vst [vmem:[%s4 + $0x370] sm:$0xff] %v1307
  %1436 = vst [vmem:[%s4 + $0x378] sm:$0xff] %v1308
  %1437 = vst [vmem:[%s4 + $0x380] sm:$0xff] %v1309
  %1438 = vst [vmem:[%s4 + $0x388] sm:$0xff] %v1310
  %1439 = vst [vmem:[%s4 + $0x390] sm:$0xff] %v1311
  %1440 = vst [vmem:[%s4 + $0x398] sm:$0xff] %v1312
  %1441 = vst [vmem:[%s4 + $0x3a0] sm:$0xff] %v1313
  %1442 = vst [vmem:[%s4 + $0x3a8] sm:$0xff] %v1314
  %1443 = vst [vmem:[%s4 + $0x3b0] sm:$0xff] %v1315
  %1444 = vst [vmem:[%s4 + $0x3b8] sm:$0xff] %v1316
  %1445 = vst [vmem:[%s4 + $0x3c0] sm:$0xff] %v1317
  %1446 = vst [vmem:[%s4 + $0x3c8] sm:$0xff] %v1318
  %1447 = vst [vmem:[%s4 + $0x3d0] sm:$0xff] %v1319
  %1448 = vst [vmem:[%s4 + $0x3d8] sm:$0xff] %v1320
  %1449 = vst [vmem:[%s4 + $0x3e0] sm:$0xff] %v1321
  %1450 = vst [vmem:[%s4 + $0x3e8] sm:$0xff] %v1322
  %1451 = vst [vmem:[%s4 + $0x3f0] sm:$0xff] %v1323
  %1452 = vst [vmem:[%s4 + $0x3f8] sm:$0xff] %v1324
  // Predicated region
  $region22: #{generator_forward.15} parent=0 // pred_check
    _
  $region23: #{generator_forward.15} parent=0 // pred_check_branch
    %1454 = sbr.rel (0) target = $region25
  $region24: #{generator_forward.15} parent=0 // pred_region
    _
  $region25: #{generator_forward.15} parent=0 // pred_fallthru
    _
  // Predicated region
  $region26: #{generator_forward.15} parent=0 // pred_check
    _
  $region27: #{generator_forward.15} parent=0 // pred_check_branch
    %1456 = sbr.rel (0) target = $region29
  $region28: #{generator_forward.15} parent=0 // pred_region
    _
  $region29: #{generator_forward.15} parent=0 // pred_fallthru
    _

// kernel: generator_forward.16
$region0: #{generator_forward.16}
  #allocation0 [shape = 'u32[]', space=smem, size = 0x4, offset = 0x4, fixed_abs, tag = 'smem constant byte address 0x4 - core index']
  #allocation1 [shape = 'u32[144,128]{1,0:T(1,128)}', space=vmem, size = 0x12000, scoped, tag = 'internal scratch']
  %s0 = inlined_call_operand.vmem [shape: f32[64,512], index: 0, kind: input, shape index: {}]
  %s1 = inlined_call_operand.vmem [shape: f32[2,512], index: 1, kind: output, shape index: {}]
  %s2 = sld [smem:[#allocation0]]
  $region18: #{generator_forward.16} parent=0
    _
  %s4 = ssub.s32 1, %s2
  %s5 = scalar_select 0, %s4, %s2
  // Predicated region
  $region2: #{generator_forward.16} parent=0 // pred_check
    _
  $region3: #{generator_forward.16} parent=0 // pred_check_branch
    %7 = sbr.rel (0) target = $region5
  $region4: #{generator_forward.16} parent=0 // pred_region
    _
  $region5: #{generator_forward.16} parent=0 // pred_fallthru
    _
  %p8 = scmp.eq.s32.totalorder 0, 0
  // Predicated region
  $region6: #{generator_forward.16} parent=0 // pred_check
    %p9 = pneg %p8
  $region7: #{generator_forward.16} parent=0 // pred_check_branch
    %11 = sbr.rel (%p9) target = $region9
  $region8: #{generator_forward.16} parent=0 // pred_region
    %12 = vst [vmem:[%s1] sm:$0xff] 0.0
  $region9: #{generator_forward.16} parent=0 // pred_fallthru
    _
  %v13 = vld [vmem:[%s0] sm:$0xff]
  %v14 = vld [vmem:[%s0 + $0x8] sm:$0xff]
  %v15 = vld [vmem:[%s0 + $0x10] sm:$0xff]
  %v16 = vld [vmem:[%s0 + $0x18] sm:$0xff]
  %v17 = vld [vmem:[%s0 + $0x20] sm:$0xff]
  %v18 = vld [vmem:[%s0 + $0x28] sm:$0xff]
  %v19 = vld [vmem:[%s0 + $0x30] sm:$0xff]
  %v20 = vld [vmem:[%s0 + $0x38] sm:$0xff]
  %v21 = vld [vmem:[%s0 + $0x40] sm:$0xff]
  %v22 = vld [vmem:[%s0 + $0x48] sm:$0xff]
  %v23 = vld [vmem:[%s0 + $0x50] sm:$0xff]
  %v24 = vld [vmem:[%s0 + $0x58] sm:$0xff]
  %v25 = vld [vmem:[%s0 + $0x60] sm:$0xff]
  %v26 = vld [vmem:[%s0 + $0x68] sm:$0xff]
  %v27 = vld [vmem:[%s0 + $0x70] sm:$0xff]
  %v28 = vld [vmem:[%s0 + $0x78] sm:$0xff]
  %v29 = vld [vmem:[%s0 + $0x80] sm:$0xff]
  %v30 = vld [vmem:[%s0 + $0x88] sm:$0xff]
  %v31 = vld [vmem:[%s0 + $0x90] sm:$0xff]
  %v32 = vld [vmem:[%s0 + $0x98] sm:$0xff]
  %v33 = vld [vmem:[%s0 + $0xa0] sm:$0xff]
  %v34 = vld [vmem:[%s0 + $0xa8] sm:$0xff]
  %v35 = vld [vmem:[%s0 + $0xb0] sm:$0xff]
  %v36 = vld [vmem:[%s0 + $0xb8] sm:$0xff]
  %v37 = vld [vmem:[%s0 + $0xc0] sm:$0xff]
  %v38 = vld [vmem:[%s0 + $0xc8] sm:$0xff]
  %v39 = vld [vmem:[%s0 + $0xd0] sm:$0xff]
  %v40 = vld [vmem:[%s0 + $0xd8] sm:$0xff]
  %v41 = vld [vmem:[%s0 + $0xe0] sm:$0xff]
  %v42 = vld [vmem:[%s0 + $0xe8] sm:$0xff]
  %v43 = vld [vmem:[%s0 + $0xf0] sm:$0xff]
  %v44 = vld [vmem:[%s0 + $0xf8] sm:$0xff]
  %v45 = vld [vmem:[%s1] ss:$2 sm:$0xf]
  %v46 = vadd.f32 %v13, %v17
  %v47 = vadd.f32 %v46, %v21
  %v48 = vadd.f32 %v47, %v25
  %v49 = vadd.f32 %v48, %v29
  %v50 = vadd.f32 %v49, %v33
  %v51 = vadd.f32 %v50, %v37
  %v52 = vadd.f32 %v51, %v41
  %v53 = vrot.slane %v52, 4
  %v54 = vadd.f32 %v52, %v53
  %v55 = vrot.slane %v54, 2
  %v56 = vadd.f32 %v54, %v55
  %v57 = vrot.slane %v56, 1
  %v58 = vadd.f32 %v56, %v57
  %v59 = vadd.f32 %v14, %v18
  %v60 = vadd.f32 %v59, %v22
  %v61 = vadd.f32 %v60, %v26
  %v62 = vadd.f32 %v61, %v30
  %v63 = vadd.f32 %v62, %v34
  %v64 = vadd.f32 %v63, %v38
  %v65 = vadd.f32 %v64, %v42
  %v66 = vrot.slane %v65, 4
  %v67 = vadd.f32 %v65, %v66
  %v68 = vrot.slane %v67, 2
  %v69 = vadd.f32 %v67, %v68
  %v70 = vrot.slane %v69, 1
  %v71 = vadd.f32 %v69, %v70
  %v72 = vadd.f32 %v15, %v19
  %v73 = vadd.f32 %v72, %v23
  %v74 = vadd.f32 %v73, %v27
  %v75 = vadd.f32 %v74, %v31
  %v76 = vadd.f32 %v75, %v35
  %v77 = vadd.f32 %v76, %v39
  %v78 = vadd.f32 %v77, %v43
  %v79 = vrot.slane %v78, 4
  %v80 = vadd.f32 %v78, %v79
  %v81 = vrot.slane %v80, 2
  %v82 = vadd.f32 %v80, %v81
  %v83 = vrot.slane %v82, 1
  %v84 = vadd.f32 %v82, %v83
  %v85 = vadd.f32 %v16, %v20
  %v86 = vadd.f32 %v85, %v24
  %v87 = vadd.f32 %v86, %v28
  %v88 = vadd.f32 %v87, %v32
  %v89 = vadd.f32 %v88, %v36
  %v90 = vadd.f32 %v89, %v40
  %v91 = vadd.f32 %v90, %v44
  %v92 = vrot.slane %v91, 4
  %v93 = vadd.f32 %v91, %v92
  %v94 = vrot.slane %v93, 2
  %v95 = vadd.f32 %v93, %v94
  %v96 = vrot.slane %v95, 1
  %v97 = vadd.f32 %v95, %v96
  %v102 = vcombine.low %v58, %v71
  %v103 = vcombine.low %v84, %v97
  %v105 = vunpack.c.l.s4 1966171168
  %v106 = vunpack.c.0.s8 %v105
  %v107 = vlaneseq
  %v108 = vshrl.u32 %v107, 7
  %v109 = vsub.s32 %v106, %v108
  %v110 = vrot.slane %v102, %v109
  %v112 = vunpack.c.l.s4 1966171168
  %v113 = vunpack.c.0.s8 %v112
  %v114 = vlaneseq
  %v115 = vshrl.u32 %v114, 7
  %v116 = vsub.s32 %v113, %v115
  %v117 = vrot.slane %v103, %v116
  %v118 = vcombine.low %v110, %v117
  %v120 = vunpack.c.l.s4 1966171168
  %v121 = vunpack.c.0.s8 %v120
  %v122 = vlaneseq
  %v123 = vshrl.u32 %v122, 7
  %v124 = vsub.s32 %v121, %v123
  %v125 = vrot.slane %v118, %v124
  %v127 = vadd.f32 %v45, %v125
  %v128 = vlaneseq
  %vm129 = vcmp.ge.s32.totalorder %v128, 0
  %vm130 = vcmp.lt.s32.totalorder %v128, 512
  %vm131 = vmand %vm129, %vm130
  %132 = vst.msk [vmem:[%s1] ss:$2 sm:$0xf] %vm131, %v127
  %s133 = scalar_lea.vmem %s1, 1
  %v134 = vld [vmem:[%s133] ss:$2 sm:$0xf]
  %v135 = vmul.f32 %v13, %v13
  %v136 = vmul.f32 %v14, %v14
  %v137 = vmul.f32 %v15, %v15
  %v138 = vmul.f32 %v16, %v16
  %v139 = vmul.f32 %v17, %v17
  %v140 = vmul.f32 %v18, %v18
  %v141 = vmul.f32 %v19, %v19
  %v142 = vmul.f32 %v20, %v20
  %v143 = vmul.f32 %v21, %v21
  %v144 = vmul.f32 %v22, %v22
  %v145 = vmul.f32 %v23, %v23
  %v146 = vmul.f32 %v24, %v24
  %v147 = vmul.f32 %v25, %v25
  %v148 = vmul.f32 %v26, %v26
  %v149 = vmul.f32 %v27, %v27
  %v150 = vmul.f32 %v28, %v28
  %v151 = vmul.f32 %v29, %v29
  %v152 = vmul.f32 %v30, %v30
  %v153 = vmul.f32 %v31, %v31
  %v154 = vmul.f32 %v32, %v32
  %v155 = vmul.f32 %v33, %v33
  %v156 = vmul.f32 %v34, %v34
  %v157 = vmul.f32 %v35, %v35
  %v158 = vmul.f32 %v36, %v36
  %v159 = vmul.f32 %v37, %v37
  %v160 = vmul.f32 %v38, %v38
  %v161 = vmul.f32 %v39, %v39
  %v162 = vmul.f32 %v40, %v40
  %v163 = vmul.f32 %v41, %v41
  %v164 = vmul.f32 %v42, %v42
  %v165 = vmul.f32 %v43, %v43
  %v166 = vmul.f32 %v44, %v44
  %v167 = vadd.f32 %v135, %v139
  %v168 = vadd.f32 %v167, %v143
  %v169 = vadd.f32 %v168, %v147
  %v170 = vadd.f32 %v169, %v151
  %v171 = vadd.f32 %v170, %v155
  %v172 = vadd.f32 %v171, %v159
  %v173 = vadd.f32 %v172, %v163
  %v174 = vrot.slane %v173, 4
  %v175 = vadd.f32 %v173, %v174
  %v176 = vrot.slane %v175, 2
  %v177 = vadd.f32 %v175, %v176
  %v178 = vrot.slane %v177, 1
  %v179 = vadd.f32 %v177, %v178
  %v180 = vadd.f32 %v136, %v140
  %v181 = vadd.f32 %v180, %v144
  %v182 = vadd.f32 %v181, %v148
  %v183 = vadd.f32 %v182, %v152
  %v184 = vadd.f32 %v183, %v156
  %v185 = vadd.f32 %v184, %v160
  %v186 = vadd.f32 %v185, %v164
  %v187 = vrot.slane %v186, 4
  %v188 = vadd.f32 %v186, %v187
  %v189 = vrot.slane %v188, 2
  %v190 = vadd.f32 %v188, %v189
  %v191 = vrot.slane %v190, 1
  %v192 = vadd.f32 %v190, %v191
  %v193 = vadd.f32 %v137, %v141
  %v194 = vadd.f32 %v193, %v145
  %v195 = vadd.f32 %v194, %v149
  %v196 = vadd.f32 %v195, %v153
  %v197 = vadd.f32 %v196, %v157
  %v198 = vadd.f32 %v197, %v161
  %v199 = vadd.f32 %v198, %v165
  %v200 = vrot.slane %v199, 4
  %v201 = vadd.f32 %v199, %v200
  %v202 = vrot.slane %v201, 2
  %v203 = vadd.f32 %v201, %v202
  %v204 = vrot.slane %v203, 1
  %v205 = vadd.f32 %v203, %v204
  %v206 = vadd.f32 %v138, %v142
  %v207 = vadd.f32 %v206, %v146
  %v208 = vadd.f32 %v207, %v150
  %v209 = vadd.f32 %v208, %v154
  %v210 = vadd.f32 %v209, %v158
  %v211 = vadd.f32 %v210, %v162
  %v212 = vadd.f32 %v211, %v166
  %v213 = vrot.slane %v212, 4
  %v214 = vadd.f32 %v212, %v213
  %v215 = vrot.slane %v214, 2
  %v216 = vadd.f32 %v214, %v215
  %v217 = vrot.slane %v216, 1
  %v218 = vadd.f32 %v216, %v217
  %v223 = vcombine.low %v179, %v192
  %v224 = vcombine.low %v205, %v218
  %v226 = vunpack.c.l.s4 1966171168
  %v227 = vunpack.c.0.s8 %v226
  %v228 = vlaneseq
  %v229 = vshrl.u32 %v228, 7
  %v230 = vsub.s32 %v227, %v229
  %v231 = vrot.slane %v223, %v230
  %v233 = vunpack.c.l.s4 1966171168
  %v234 = vunpack.c.0.s8 %v233
  %v235 = vlaneseq
  %v236 = vshrl.u32 %v235, 7
  %v237 = vsub.s32 %v234, %v236
  %v238 = vrot.slane %v224, %v237
  %v239 = vcombine.low %v231, %v238
  %v241 = vunpack.c.l.s4 1966171168
  %v242 = vunpack.c.0.s8 %v241
  %v243 = vlaneseq
  %v244 = vshrl.u32 %v243, 7
  %v245 = vsub.s32 %v242, %v244
  %v246 = vrot.slane %v239, %v245
  %v248 = vadd.f32 %v134, %v246
  %249 = vst.msk [vmem:[%s133] ss:$2 sm:$0xf] %vm131, %v248
  // Predicated region
  $region10: #{generator_forward.16} parent=0 // pred_check
    _
  $region11: #{generator_forward.16} parent=0 // pred_check_branch
    %251 = sbr.rel (0) target = $region13
  $region12: #{generator_forward.16} parent=0 // pred_region
    _
  $region13: #{generator_forward.16} parent=0 // pred_fallthru
    _
  // Predicated region
  $region14: #{generator_forward.16} parent=0 // pred_check
    _
  $region15: #{generator_forward.16} parent=0 // pred_check_branch
    %253 = sbr.rel (0) target = $region17
  $region16: #{generator_forward.16} parent=0 // pred_region
    _
  $region17: #{generator_forward.16} parent=0 // pred_fallthru
    _

// kernel: generator_forward.17
$region0: #{generator_forward.17}
  #allocation0 [shape = 'u32[]', space=smem, size = 0x4, offset = 0x4, fixed_abs, tag = 'smem constant byte address 0x4 - core index']
  #allocation1 [shape = 'u32[144,128]{1,0:T(1,128)}', space=vmem, size = 0x12000, scoped, tag = 'internal scratch']
  %s0 = inlined_call_operand.vmem [shape: f32[2048,16], index: 0, kind: input, shape index: {}]
  %s1 = inlined_call_operand.vmem [shape: f32[16,128], index: 1, kind: input, shape index: {}]
  %s2 = inlined_call_operand.vmem [shape: f32[1,16], index: 2, kind: input, shape index: {}]
  %s3 = inlined_call_operand.vmem [shape: f32[1,16], index: 3, kind: input, shape index: {}]
  %s4 = inlined_call_operand.vmem [shape: f32[2048,128], index: 4, kind: output, shape index: {}]
  %s5 = sld [smem:[#allocation0]]
  $region53: #{generator_forward.17} parent=0
    _
  %s7 = ssub.s32 1, %s5
  %s8 = scalar_select 0, %s7, %s5
  loop: start=0, step=1, limit=6
  $region2: #{generator_forward.17} parent=0 // loop_pre_header
    _
  $region3: #{generator_forward.17} parent=0 // loop_header
    %s10 = sphi 0, %s14
    %p11 = scmp.ge.s32.totalorder %s10, 6
    %s17 = sphi 0, %s29
    %s18 = sphi 0, %s25
    %s19 = sphi 0, %s17
    %s20 = sphi 0, %s18
    %s21 = sphi 0, %s19
    %s22 = sphi 0, %s20
    %s34 = sphi 0, %s36
    %s37 = sphi 0, %s34
    %s38 = sphi 0, %s37
    %s54 = sphi 0, %s38
    %s60 = sphi 0, %s62
    %s63 = sphi 0, %s60
    %s64 = sphi 0, %s63
    %s80 = sphi 0, %s64
    %s86 = sphi 0, %s88
    %s89 = sphi 0, %s86
    %s90 = sphi 0, %s89
    %s106 = sphi 0, %s90
    %s112 = sphi 0, %s114
    %s115 = sphi 0, %s112
    %s116 = sphi 0, %s115
    %s132 = sphi 0, %s116
    %s138 = sphi 0, %s140
    %s141 = sphi 0, %s138
    %s142 = sphi 0, %s141
    %s158 = sphi 0, %s142
  $region4: #{generator_forward.17} parent=0 // loop_header_branch
    %13 = sbr.rel (%p11) target = $region8
  $region5: #{generator_forward.17} parent=0 // loop_body
    %s15 = ssub.s32 %s10, 1
    %s16 = ssub.s32 %s10, 2
    %s23 = sadd.s32 1, %s18
    %p24 = scmp.ge.s32.totalorder %s23, 1
    %s25 = scalar_select %p24, 0, %s23
    %s26 = sadd.s32 1, %s17
    %s27 = scalar_select %p24, %s26, %s17
    %p28 = scmp.ge.s32.totalorder %s27, 4
    %s29 = scalar_select %p28, 0, %s27
    %s30 = ssub.s32 %s17, %s29
    %s31 = ssub.s32 %s18, %s25
    %s32 = sor.u32 %s30, %s31
    %p33 = scmp.eq.s32.totalorder %s32, 0
    %s35 = sadd.s32 %s34, 1
    %s36 = scalar_select %p33, %s34, %s35
    %p39 = pneg %p33
    %p40 = scmp.eq.s32.totalorder %s10, 3
    %p41 = por %p39, %p40
    %p42 = scmp.ne.s32.totalorder %s34, %s37
    %p43 = scmp.eq.s32.totalorder %s10, 0
    %p44 = por %p42, %p43
    %p45 = scmp.ne.s32.totalorder %s34, %s37
    %p46 = scmp.eq.s32.totalorder %s15, 3
    %p47 = por %p45, %p46
    %p48 = scmp.ne.s32.totalorder %s37, %s38
    %p49 = scmp.eq.s32.totalorder %s15, 0
    %p50 = por %p48, %p49
    %p51 = scmp.ne.s32.totalorder %s37, %s38
    %p52 = scmp.eq.s32.totalorder %s16, 3
    %p53 = por %p51, %p52
    %p55 = scmp.ne.s32.totalorder %s38, %s54
    %p56 = scmp.eq.s32.totalorder %s16, 0
    %p57 = por %p55, %p56
    %s58 = ssub.s32 %s18, %s25
    %p59 = scmp.eq.s32.totalorder %s58, 0
    %s61 = sadd.s32 %s60, 1
    %s62 = scalar_select %p59, %s60, %s61
    %p65 = pneg %p59
    %p66 = scmp.eq.s32.totalorder %s10, 3
    %p67 = por %p65, %p66
    %p68 = scmp.ne.s32.totalorder %s60, %s63
    %p69 = scmp.eq.s32.totalorder %s10, 0
    %p70 = por %p68, %p69
    %p71 = scmp.ne.s32.totalorder %s60, %s63
    %p72 = scmp.eq.s32.totalorder %s15, 3
    %p73 = por %p71, %p72
    %p74 = scmp.ne.s32.totalorder %s63, %s64
    %p75 = scmp.eq.s32.totalorder %s15, 0
    %p76 = por %p74, %p75
    %p77 = scmp.ne.s32.totalorder %s63, %s64
    %p78 = scmp.eq.s32.totalorder %s16, 3
    %p79 = por %p77, %p78
    %p81 = scmp.ne.s32.totalorder %s64, %s80
    %p82 = scmp.eq.s32.totalorder %s16, 0
    %p83 = por %p81, %p82
    %s84 = ssub.s32 %s18, %s25
    %p85 = scmp.eq.s32.totalorder %s84, 0
    %s87 = sadd.s32 %s86, 1
    %s88 = scalar_select %p85, %s86, %s87
    %p91 = pneg %p85
    %p92 = scmp.eq.s32.totalorder %s10, 3
    %p93 = por %p91, %p92
    %p94 = scmp.ne.s32.totalorder %s86, %s89
    %p95 = scmp.eq.s32.totalorder %s10, 0
    %p96 = por %p94, %p95
    %p97 = scmp.ne.s32.totalorder %s86, %s89
    %p98 = scmp.eq.s32.totalorder %s15, 3
    %p99 = por %p97, %p98
    %p100 = scmp.ne.s32.totalorder %s89, %s90
    %p101 = scmp.eq.s32.totalorder %s15, 0
    %p102 = por %p100, %p101
    %p103 = scmp.ne.s32.totalorder %s89, %s90
    %p104 = scmp.eq.s32.totalorder %s16, 3
    %p105 = por %p103, %p104
    %p107 = scmp.ne.s32.totalorder %s90, %s106
    %p108 = scmp.eq.s32.totalorder %s16, 0
    %p109 = por %p107, %p108
    %s110 = ssub.s32 %s18, %s25
    %p111 = scmp.eq.s32.totalorder %s110, 0
    %s113 = sadd.s32 %s112, 1
    %s114 = scalar_select %p111, %s112, %s113
    %p117 = pneg %p111
    %p118 = scmp.eq.s32.totalorder %s10, 3
    %p119 = por %p117, %p118
    %p120 = scmp.ne.s32.totalorder %s112, %s115
    %p121 = scmp.eq.s32.totalorder %s10, 0
    %p122 = por %p120, %p121
    %p123 = scmp.ne.s32.totalorder %s112, %s115
    %p124 = scmp.eq.s32.totalorder %s15, 3
    %p125 = por %p123, %p124
    %p126 = scmp.ne.s32.totalorder %s115, %s116
    %p127 = scmp.eq.s32.totalorder %s15, 0
    %p128 = por %p126, %p127
    %p129 = scmp.ne.s32.totalorder %s115, %s116
    %p130 = scmp.eq.s32.totalorder %s16, 3
    %p131 = por %p129, %p130
    %p133 = scmp.ne.s32.totalorder %s116, %s132
    %p134 = scmp.eq.s32.totalorder %s16, 0
    %p135 = por %p133, %p134
    %s136 = ssub.s32 %s17, %s29
    %p137 = scmp.eq.s32.totalorder %s136, 0
    %s139 = sadd.s32 %s138, 1
    %s140 = scalar_select %p137, %s138, %s139
    %p143 = pneg %p137
    %p144 = scmp.eq.s32.totalorder %s10, 3
    %p145 = por %p143, %p144
    %p146 = scmp.ne.s32.totalorder %s138, %s141
    %p147 = scmp.eq.s32.totalorder %s10, 0
    %p148 = por %p146, %p147
    %p149 = scmp.ne.s32.totalorder %s138, %s141
    %p150 = scmp.eq.s32.totalorder %s15, 3
    %p151 = por %p149, %p150
    %p152 = scmp.ne.s32.totalorder %s141, %s142
    %p153 = scmp.eq.s32.totalorder %s15, 0
    %p154 = por %p152, %p153
    %p155 = scmp.ne.s32.totalorder %s141, %s142
    %p156 = scmp.eq.s32.totalorder %s16, 3
    %p157 = por %p155, %p156
    %p159 = scmp.ne.s32.totalorder %s142, %s158
    %p160 = scmp.eq.s32.totalorder %s16, 0
    %p161 = por %p159, %p160
    %p162 = scmp.le.s32.totalorder 1, %s10
    %p163 = scmp.lt.s32.totalorder %s10, 5
    %p164 = pnand %p162, %p163
    %p165 = pneg %p164
    // Predicated region
    $region9: #{generator_forward.17} parent=5 // pred_check
      _
    $region10: #{generator_forward.17} parent=5 // pred_check_branch
      %167 = sbr.rel (%p164) target = $region12
    $region11: #{generator_forward.17} parent=5 // pred_region
      %s168 = ssub.s32 %s10, 1
      // Predicated region
      $region13: #{generator_forward.17} parent=11 // pred_check
        %p169 = pneg %p76
      $region14: #{generator_forward.17} parent=11 // pred_check_branch
        %171 = sbr.rel (%p169) target = $region16
      $region15: #{generator_forward.17} parent=11 // pred_region
        %s172 = smul.u32 2, %s20
        %p173 = scmp.lt.s32.totalorder %s172, 1
        %s174 = scalar_select %p173, %s172, 1
        %s175 = smul.addr %s174, 8
        %s176 = scalar_lea.vmem %s1, %s175
        %s177 = smul.u32 2, %s20
      $region16: #{generator_forward.17} parent=11 // pred_fallthru
        _
      // Predicated region
      $region17: #{generator_forward.17} parent=11 // pred_check
        %p178 = pneg %p102
      $region18: #{generator_forward.17} parent=11 // pred_check_branch
        %180 = sbr.rel (%p178) target = $region20
      $region19: #{generator_forward.17} parent=11 // pred_region
        %p181 = scmp.lt.s32.totalorder %s20, 0
        %s182 = scalar_select %p181, %s20, 0
        %s183 = scalar_lea.vmem %s2, %s182
      $region20: #{generator_forward.17} parent=11 // pred_fallthru
        _
      // Predicated region
      $region21: #{generator_forward.17} parent=11 // pred_check
        %p184 = pneg %p128
      $region22: #{generator_forward.17} parent=11 // pred_check_branch
        %186 = sbr.rel (%p184) target = $region24
      $region23: #{generator_forward.17} parent=11 // pred_region
        %p187 = scmp.lt.s32.totalorder %s20, 0
        %s188 = scalar_select %p187, %s20, 0
        %s189 = scalar_lea.vmem %s3, %s188
      $region24: #{generator_forward.17} parent=11 // pred_fallthru
        _
    $region12: #{generator_forward.17} parent=5 // pred_fallthru
      _
    %p190 = scmp.lt.s32.totalorder %s10, 4
    // Predicated region
    $region25: #{generator_forward.17} parent=5 // pred_check
      %p191 = pneg %p190
    $region26: #{generator_forward.17} parent=5 // pred_check_branch
      %193 = sbr.rel (%p191) target = $region28
    $region27: #{generator_forward.17} parent=5 // pred_region
      // Predicated region
      $region29: #{generator_forward.17} parent=27 // pred_check
        %p194 = pneg %p44
      $region30: #{generator_forward.17} parent=27 // pred_check_branch
        %196 = sbr.rel (%p194) target = $region32
      $region31: #{generator_forward.17} parent=27 // pred_region
        %s197 = smul.u32 64, %s17
        %p198 = scmp.lt.s32.totalorder %s197, 255
        %s199 = scalar_select %p198, %s197, 255
        %p200 = scmp.lt.s32.totalorder %s18, 0
        %s201 = scalar_select %p200, %s18, 0
        %s202 = sadd.s32 %s201, %s199
        %s203 = smul.addr %s202, 8
        %s204 = scalar_lea.vmem %s0, %s203
        %s205 = smul.u32 64, %s17
      $region32: #{generator_forward.17} parent=27 // pred_fallthru
        _
    $region28: #{generator_forward.17} parent=5 // pred_fallthru
      _
    %p206 = scmp.le.s32.totalorder 1, %s10
    %p207 = scmp.lt.s32.totalorder %s10, 5
    %p208 = pnand %p206, %p207
    %p209 = pneg %p208
    // Predicated region
    $region33: #{generator_forward.17} parent=5 // pred_check
      _
    $region34: #{generator_forward.17} parent=5 // pred_check_branch
      %211 = sbr.rel (%p208) target = $region36
    $region35: #{generator_forward.17} parent=5 // pred_region
      %s212 = ssub.s32 %s10, 1
      %s213 = smul.u32 64, %s19
      %p214 = scmp.lt.s32.totalorder %s213, 255
      %s215 = scalar_select %p214, %s213, 255
      %p216 = scmp.lt.s32.totalorder %s20, 0
      %s217 = scalar_select %p216, %s20, 0
      %s218 = sadd.s32 %s217, %s215
      %s219 = smul.addr %s218, 8
      %s220 = scalar_lea.vmem %s0, %s219
      %p221 = pneg %p50
      %p222 = pneg %p47
      %s223 = smul.u32 2, %s20
      %p224 = scmp.lt.s32.totalorder %s223, 1
      %s225 = scalar_select %p224, %s223, 1
      %s226 = smul.addr %s225, 8
      %s227 = scalar_lea.vmem %s1, %s226
      %p228 = pneg %p76
      %p229 = pneg %p73
      %p230 = scmp.lt.s32.totalorder %s20, 0
      %s231 = scalar_select %p230, %s20, 0
      %s232 = scalar_lea.vmem %s2, %s231
      %p233 = pneg %p102
      %p234 = pneg %p99
      %p235 = scmp.lt.s32.totalorder %s20, 0
      %s236 = scalar_select %p235, %s20, 0
      %s237 = scalar_lea.vmem %s3, %s236
      %p238 = pneg %p128
      %p239 = pneg %p125
      %p240 = pneg %p154
      %p241 = pneg %p151
      %s242 = smul.u32 64, %s19
      %p243 = scmp.lt.s32.totalorder %s242, 255
      %s244 = scalar_select %p243, %s242, 255
      %s245 = smul.addr %s244, 8
      %s246 = scalar_lea.vmem %s4, %s245
      %s247 = smul.u32 64, %s19
      %p248 = scmp.lt.s32.totalorder %s247, 255
      %s249 = scalar_select %p248, %s247, 255
      %p250 = scmp.lt.s32.totalorder %s20, 0
      %s251 = scalar_select %p250, %s20, 0
      %s252 = sadd.s32 %s251, %s249
      %s253 = smul.addr %s252, 8
      %s254 = scalar_lea.vmem %s0, %s253
      %s255 = smul.u32 64, %s19
      %s256 = smul.u32 2, %s20
      %p257 = scmp.lt.s32.totalorder %s256, 1
      %s258 = scalar_select %p257, %s256, 1
      %s259 = smul.addr %s258, 8
      %s260 = scalar_lea.vmem %s1, %s259
      %s261 = smul.u32 2, %s20
      %p262 = scmp.lt.s32.totalorder %s20, 0
      %s263 = scalar_select %p262, %s20, 0
      %s264 = scalar_lea.vmem %s2, %s263
      %p265 = scmp.lt.s32.totalorder %s20, 0
      %s266 = scalar_select %p265, %s20, 0
      %s267 = scalar_lea.vmem %s3, %s266
      %s268 = smul.u32 64, %s19
      %p269 = scmp.lt.s32.totalorder %s268, 255
      %s270 = scalar_select %p269, %s268, 255
      %s271 = smul.addr %s270, 8
      %s272 = scalar_lea.vmem %s4, %s271
      %s273 = smul.u32 64, %s19
      %p274 = scmp.eq.s32.totalorder %s20, 0
      // Predicated region
      $region37: #{generator_forward.17} parent=35 // pred_check
        %p275 = pneg %p274
      $region38: #{generator_forward.17} parent=35 // pred_check_branch
        %277 = sbr.rel (%p275) target = $region40
      $region39: #{generator_forward.17} parent=35 // pred_region
        %278 = vst [vmem:[%s272] sm:$0xff] 0.0
        %279 = vst [vmem:[%s272 + $0x8] sm:$0xff] 0.0
        %280 = vst [vmem:[%s272 + $0x10] sm:$0xff] 0.0
        %281 = vst [vmem:[%s272 + $0x18] sm:$0xff] 0.0
        %282 = vst [vmem:[%s272 + $0x20] sm:$0xff] 0.0
        %283 = vst [vmem:[%s272 + $0x28] sm:$0xff] 0.0
        %284 = vst [vmem:[%s272 + $0x30] sm:$0xff] 0.0
        %285 = vst [vmem:[%s272 + $0x38] sm:$0xff] 0.0
        %286 = vst [vmem:[%s272 + $0x40] sm:$0xff] 0.0
        %287 = vst [vmem:[%s272 + $0x48] sm:$0xff] 0.0
        %288 = vst [vmem:[%s272 + $0x50] sm:$0xff] 0.0
        %289 = vst [vmem:[%s272 + $0x58] sm:$0xff] 0.0
        %290 = vst [vmem:[%s272 + $0x60] sm:$0xff] 0.0
        %291 = vst [vmem:[%s272 + $0x68] sm:$0xff] 0.0
        %292 = vst [vmem:[%s272 + $0x70] sm:$0xff] 0.0
        %293 = vst [vmem:[%s272 + $0x78] sm:$0xff] 0.0
        %294 = vst [vmem:[%s272 + $0x80] sm:$0xff] 0.0
        %295 = vst [vmem:[%s272 + $0x88] sm:$0xff] 0.0
        %296 = vst [vmem:[%s272 + $0x90] sm:$0xff] 0.0
        %297 = vst [vmem:[%s272 + $0x98] sm:$0xff] 0.0
        %298 = vst [vmem:[%s272 + $0xa0] sm:$0xff] 0.0
        %299 = vst [vmem:[%s272 + $0xa8] sm:$0xff] 0.0
        %300 = vst [vmem:[%s272 + $0xb0] sm:$0xff] 0.0
        %301 = vst [vmem:[%s272 + $0xb8] sm:$0xff] 0.0
        %302 = vst [vmem:[%s272 + $0xc0] sm:$0xff] 0.0
        %303 = vst [vmem:[%s272 + $0xc8] sm:$0xff] 0.0
        %304 = vst [vmem:[%s272 + $0xd0] sm:$0xff] 0.0
        %305 = vst [vmem:[%s272 + $0xd8] sm:$0xff] 0.0
        %306 = vst [vmem:[%s272 + $0xe0] sm:$0xff] 0.0
        %307 = vst [vmem:[%s272 + $0xe8] sm:$0xff] 0.0
        %308 = vst [vmem:[%s272 + $0xf0] sm:$0xff] 0.0
        %309 = vst [vmem:[%s272 + $0xf8] sm:$0xff] 0.0
        %310 = vst [vmem:[%s272 + $0x100] sm:$0xff] 0.0
        %311 = vst [vmem:[%s272 + $0x108] sm:$0xff] 0.0
        %312 = vst [vmem:[%s272 + $0x110] sm:$0xff] 0.0
        %313 = vst [vmem:[%s272 + $0x118] sm:$0xff] 0.0
        %314 = vst [vmem:[%s272 + $0x120] sm:$0xff] 0.0
        %315 = vst [vmem:[%s272 + $0x128] sm:$0xff] 0.0
        %316 = vst [vmem:[%s272 + $0x130] sm:$0xff] 0.0
        %317 = vst [vmem:[%s272 + $0x138] sm:$0xff] 0.0
        %318 = vst [vmem:[%s272 + $0x140] sm:$0xff] 0.0
        %319 = vst [vmem:[%s272 + $0x148] sm:$0xff] 0.0
        %320 = vst [vmem:[%s272 + $0x150] sm:$0xff] 0.0
        %321 = vst [vmem:[%s272 + $0x158] sm:$0xff] 0.0
        %322 = vst [vmem:[%s272 + $0x160] sm:$0xff] 0.0
        %323 = vst [vmem:[%s272 + $0x168] sm:$0xff] 0.0
        %324 = vst [vmem:[%s272 + $0x170] sm:$0xff] 0.0
        %325 = vst [vmem:[%s272 + $0x178] sm:$0xff] 0.0
        %326 = vst [vmem:[%s272 + $0x180] sm:$0xff] 0.0
        %327 = vst [vmem:[%s272 + $0x188] sm:$0xff] 0.0
        %328 = vst [vmem:[%s272 + $0x190] sm:$0xff] 0.0
        %329 = vst [vmem:[%s272 + $0x198] sm:$0xff] 0.0
        %330 = vst [vmem:[%s272 + $0x1a0] sm:$0xff] 0.0
        %331 = vst [vmem:[%s272 + $0x1a8] sm:$0xff] 0.0
        %332 = vst [vmem:[%s272 + $0x1b0] sm:$0xff] 0.0
        %333 = vst [vmem:[%s272 + $0x1b8] sm:$0xff] 0.0
        %334 = vst [vmem:[%s272 + $0x1c0] sm:$0xff] 0.0
        %335 = vst [vmem:[%s272 + $0x1c8] sm:$0xff] 0.0
        %336 = vst [vmem:[%s272 + $0x1d0] sm:$0xff] 0.0
        %337 = vst [vmem:[%s272 + $0x1d8] sm:$0xff] 0.0
        %338 = vst [vmem:[%s272 + $0x1e0] sm:$0xff] 0.0
        %339 = vst [vmem:[%s272 + $0x1e8] sm:$0xff] 0.0
        %340 = vst [vmem:[%s272 + $0x1f0] sm:$0xff] 0.0
        %341 = vst [vmem:[%s272 + $0x1f8] sm:$0xff] 0.0
      $region40: #{generator_forward.17} parent=35 // pred_fallthru
        _
      %v342 = vld [vmem:[%s254] sm:$0xff]
      %v343 = vld [vmem:[%s254 + $0x8] sm:$0xff]
      %v344 = vld [vmem:[%s254 + $0x10] sm:$0xff]
      %v345 = vld [vmem:[%s254 + $0x18] sm:$0xff]
      %v346 = vld [vmem:[%s254 + $0x20] sm:$0xff]
      %v347 = vld [vmem:[%s254 + $0x28] sm:$0xff]
      %v348 = vld [vmem:[%s254 + $0x30] sm:$0xff]
      %v349 = vld [vmem:[%s254 + $0x38] sm:$0xff]
      %v350 = vld [vmem:[%s254 + $0x40] sm:$0xff]
      %v351 = vld [vmem:[%s254 + $0x48] sm:$0xff]
      %v352 = vld [vmem:[%s254 + $0x50] sm:$0xff]
      %v353 = vld [vmem:[%s254 + $0x58] sm:$0xff]
      %v354 = vld [vmem:[%s254 + $0x60] sm:$0xff]
      %v355 = vld [vmem:[%s254 + $0x68] sm:$0xff]
      %v356 = vld [vmem:[%s254 + $0x70] sm:$0xff]
      %v357 = vld [vmem:[%s254 + $0x78] sm:$0xff]
      %v358 = vld [vmem:[%s254 + $0x80] sm:$0xff]
      %v359 = vld [vmem:[%s254 + $0x88] sm:$0xff]
      %v360 = vld [vmem:[%s254 + $0x90] sm:$0xff]
      %v361 = vld [vmem:[%s254 + $0x98] sm:$0xff]
      %v362 = vld [vmem:[%s254 + $0xa0] sm:$0xff]
      %v363 = vld [vmem:[%s254 + $0xa8] sm:$0xff]
      %v364 = vld [vmem:[%s254 + $0xb0] sm:$0xff]
      %v365 = vld [vmem:[%s254 + $0xb8] sm:$0xff]
      %v366 = vld [vmem:[%s254 + $0xc0] sm:$0xff]
      %v367 = vld [vmem:[%s254 + $0xc8] sm:$0xff]
      %v368 = vld [vmem:[%s254 + $0xd0] sm:$0xff]
      %v369 = vld [vmem:[%s254 + $0xd8] sm:$0xff]
      %v370 = vld [vmem:[%s254 + $0xe0] sm:$0xff]
      %v371 = vld [vmem:[%s254 + $0xe8] sm:$0xff]
      %v372 = vld [vmem:[%s254 + $0xf0] sm:$0xff]
      %v373 = vld [vmem:[%s254 + $0xf8] sm:$0xff]
      %v374 = vld [vmem:[%s254 + $0x100] sm:$0xff]
      %v375 = vld [vmem:[%s254 + $0x108] sm:$0xff]
      %v376 = vld [vmem:[%s254 + $0x110] sm:$0xff]
      %v377 = vld [vmem:[%s254 + $0x118] sm:$0xff]
      %v378 = vld [vmem:[%s254 + $0x120] sm:$0xff]
      %v379 = vld [vmem:[%s254 + $0x128] sm:$0xff]
      %v380 = vld [vmem:[%s254 + $0x130] sm:$0xff]
      %v381 = vld [vmem:[%s254 + $0x138] sm:$0xff]
      %v382 = vld [vmem:[%s254 + $0x140] sm:$0xff]
      %v383 = vld [vmem:[%s254 + $0x148] sm:$0xff]
      %v384 = vld [vmem:[%s254 + $0x150] sm:$0xff]
      %v385 = vld [vmem:[%s254 + $0x158] sm:$0xff]
      %v386 = vld [vmem:[%s254 + $0x160] sm:$0xff]
      %v387 = vld [vmem:[%s254 + $0x168] sm:$0xff]
      %v388 = vld [vmem:[%s254 + $0x170] sm:$0xff]
      %v389 = vld [vmem:[%s254 + $0x178] sm:$0xff]
      %v390 = vld [vmem:[%s254 + $0x180] sm:$0xff]
      %v391 = vld [vmem:[%s254 + $0x188] sm:$0xff]
      %v392 = vld [vmem:[%s254 + $0x190] sm:$0xff]
      %v393 = vld [vmem:[%s254 + $0x198] sm:$0xff]
      %v394 = vld [vmem:[%s254 + $0x1a0] sm:$0xff]
      %v395 = vld [vmem:[%s254 + $0x1a8] sm:$0xff]
      %v396 = vld [vmem:[%s254 + $0x1b0] sm:$0xff]
      %v397 = vld [vmem:[%s254 + $0x1b8] sm:$0xff]
      %v398 = vld [vmem:[%s254 + $0x1c0] sm:$0xff]
      %v399 = vld [vmem:[%s254 + $0x1c8] sm:$0xff]
      %v400 = vld [vmem:[%s254 + $0x1d0] sm:$0xff]
      %v401 = vld [vmem:[%s254 + $0x1d8] sm:$0xff]
      %v402 = vld [vmem:[%s254 + $0x1e0] sm:$0xff]
      %v403 = vld [vmem:[%s254 + $0x1e8] sm:$0xff]
      %v404 = vld [vmem:[%s254 + $0x1f0] sm:$0xff]
      %v405 = vld [vmem:[%s254 + $0x1f8] sm:$0xff]
      %v406 = vld [vmem:[%s264] sm:$0x1]
      %v408 = vlaneseq
      %v409 = vshrl.u32 %v408, 7
      %v410 = vsub.s32 0, %v409
      %v411 = vrot.slane %v406, %v410
      %v413 = vmul.f32 %v342, %v411
      %v414 = vmul.f32 %v343, %v411
      %v415 = vmul.f32 %v344, %v411
      %v416 = vmul.f32 %v345, %v411
      %v417 = vmul.f32 %v346, %v411
      %v418 = vmul.f32 %v347, %v411
      %v419 = vmul.f32 %v348, %v411
      %v420 = vmul.f32 %v349, %v411
      %v421 = vmul.f32 %v350, %v411
      %v422 = vmul.f32 %v351, %v411
      %v423 = vmul.f32 %v352, %v411
      %v424 = vmul.f32 %v353, %v411
      %v425 = vmul.f32 %v354, %v411
      %v426 = vmul.f32 %v355, %v411
      %v427 = vmul.f32 %v356, %v411
      %v428 = vmul.f32 %v357, %v411
      %v429 = vmul.f32 %v358, %v411
      %v430 = vmul.f32 %v359, %v411
      %v431 = vmul.f32 %v360, %v411
      %v432 = vmul.f32 %v361, %v411
      %v433 = vmul.f32 %v362, %v411
      %v434 = vmul.f32 %v363, %v411
      %v435 = vmul.f32 %v364, %v411
      %v436 = vmul.f32 %v365, %v411
      %v437 = vmul.f32 %v366, %v411
      %v438 = vmul.f32 %v367, %v411
      %v439 = vmul.f32 %v368, %v411
      %v440 = vmul.f32 %v369, %v411
      %v441 = vmul.f32 %v370, %v411
      %v442 = vmul.f32 %v371, %v411
      %v443 = vmul.f32 %v372, %v411
      %v444 = vmul.f32 %v373, %v411
      %v445 = vmul.f32 %v374, %v411
      %v446 = vmul.f32 %v375, %v411
      %v447 = vmul.f32 %v376, %v411
      %v448 = vmul.f32 %v377, %v411
      %v449 = vmul.f32 %v378, %v411
      %v450 = vmul.f32 %v379, %v411
      %v451 = vmul.f32 %v380, %v411
      %v452 = vmul.f32 %v381, %v411
      %v453 = vmul.f32 %v382, %v411
      %v454 = vmul.f32 %v383, %v411
      %v455 = vmul.f32 %v384, %v411
      %v456 = vmul.f32 %v385, %v411
      %v457 = vmul.f32 %v386, %v411
      %v458 = vmul.f32 %v387, %v411
      %v459 = vmul.f32 %v388, %v411
      %v460 = vmul.f32 %v389, %v411
      %v461 = vmul.f32 %v390, %v411
      %v462 = vmul.f32 %v391, %v411
      %v463 = vmul.f32 %v392, %v411
      %v464 = vmul.f32 %v393, %v411
      %v465 = vmul.f32 %v394, %v411
      %v466 = vmul.f32 %v395, %v411
      %v467 = vmul.f32 %v396, %v411
      %v468 = vmul.f32 %v397, %v411
      %v469 = vmul.f32 %v398, %v411
      %v470 = vmul.f32 %v399, %v411
      %v471 = vmul.f32 %v400, %v411
      %v472 = vmul.f32 %v401, %v411
      %v473 = vmul.f32 %v402, %v411
      %v474 = vmul.f32 %v403, %v411
      %v475 = vmul.f32 %v404, %v411
      %v476 = vmul.f32 %v405, %v411
      %v477 = vld [vmem:[%s267] sm:$0x1]
      %v479 = vlaneseq
      %v480 = vshrl.u32 %v479, 7
      %v481 = vsub.s32 0, %v480
      %v482 = vrot.slane %v477, %v481
      %v484 = vadd.f32 %v413, %v482
      %v485 = vadd.f32 %v414, %v482
      %v486 = vadd.f32 %v415, %v482
      %v487 = vadd.f32 %v416, %v482
      %v488 = vadd.f32 %v417, %v482
      %v489 = vadd.f32 %v418, %v482
      %v490 = vadd.f32 %v419, %v482
      %v491 = vadd.f32 %v420, %v482
      %v492 = vadd.f32 %v421, %v482
      %v493 = vadd.f32 %v422, %v482
      %v494 = vadd.f32 %v423, %v482
      %v495 = vadd.f32 %v424, %v482
      %v496 = vadd.f32 %v425, %v482
      %v497 = vadd.f32 %v426, %v482
      %v498 = vadd.f32 %v427, %v482
      %v499 = vadd.f32 %v428, %v482
      %v500 = vadd.f32 %v429, %v482
      %v501 = vadd.f32 %v430, %v482
      %v502 = vadd.f32 %v431, %v482
      %v503 = vadd.f32 %v432, %v482
      %v504 = vadd.f32 %v433, %v482
      %v505 = vadd.f32 %v434, %v482
      %v506 = vadd.f32 %v435, %v482
      %v507 = vadd.f32 %v436, %v482
      %v508 = vadd.f32 %v437, %v482
      %v509 = vadd.f32 %v438, %v482
      %v510 = vadd.f32 %v439, %v482
      %v511 = vadd.f32 %v440, %v482
      %v512 = vadd.f32 %v441, %v482
      %v513 = vadd.f32 %v442, %v482
      %v514 = vadd.f32 %v443, %v482
      %v515 = vadd.f32 %v444, %v482
      %v516 = vadd.f32 %v445, %v482
      %v517 = vadd.f32 %v446, %v482
      %v518 = vadd.f32 %v447, %v482
      %v519 = vadd.f32 %v448, %v482
      %v520 = vadd.f32 %v449, %v482
      %v521 = vadd.f32 %v450, %v482
      %v522 = vadd.f32 %v451, %v482
      %v523 = vadd.f32 %v452, %v482
      %v524 = vadd.f32 %v453, %v482
      %v525 = vadd.f32 %v454, %v482
      %v526 = vadd.f32 %v455, %v482
      %v527 = vadd.f32 %v456, %v482
      %v528 = vadd.f32 %v457, %v482
      %v529 = vadd.f32 %v458, %v482
      %v530 = vadd.f32 %v459, %v482
      %v531 = vadd.f32 %v460, %v482
      %v532 = vadd.f32 %v461, %v482
      %v533 = vadd.f32 %v462, %v482
      %v534 = vadd.f32 %v463, %v482
      %v535 = vadd.f32 %v464, %v482
      %v536 = vadd.f32 %v465, %v482
      %v537 = vadd.f32 %v466, %v482
      %v538 = vadd.f32 %v467, %v482
      %v539 = vadd.f32 %v468, %v482
      %v540 = vadd.f32 %v469, %v482
      %v541 = vadd.f32 %v470, %v482
      %v542 = vadd.f32 %v471, %v482
      %v543 = vadd.f32 %v472, %v482
      %v544 = vadd.f32 %v473, %v482
      %v545 = vadd.f32 %v474, %v482
      %v546 = vadd.f32 %v475, %v482
      %v547 = vadd.f32 %v476, %v482
      %v548 = vmax.f32 %v484, 0.0
      %v549 = vmax.f32 %v485, 0.0
      %v550 = vmax.f32 %v486, 0.0
      %v551 = vmax.f32 %v487, 0.0
      %v552 = vmax.f32 %v488, 0.0
      %v553 = vmax.f32 %v489, 0.0
      %v554 = vmax.f32 %v490, 0.0
      %v555 = vmax.f32 %v491, 0.0
      %v556 = vmax.f32 %v492, 0.0
      %v557 = vmax.f32 %v493, 0.0
      %v558 = vmax.f32 %v494, 0.0
      %v559 = vmax.f32 %v495, 0.0
      %v560 = vmax.f32 %v496, 0.0
      %v561 = vmax.f32 %v497, 0.0
      %v562 = vmax.f32 %v498, 0.0
      %v563 = vmax.f32 %v499, 0.0
      %v564 = vmax.f32 %v500, 0.0
      %v565 = vmax.f32 %v501, 0.0
      %v566 = vmax.f32 %v502, 0.0
      %v567 = vmax.f32 %v503, 0.0
      %v568 = vmax.f32 %v504, 0.0
      %v569 = vmax.f32 %v505, 0.0
      %v570 = vmax.f32 %v506, 0.0
      %v571 = vmax.f32 %v507, 0.0
      %v572 = vmax.f32 %v508, 0.0
      %v573 = vmax.f32 %v509, 0.0
      %v574 = vmax.f32 %v510, 0.0
      %v575 = vmax.f32 %v511, 0.0
      %v576 = vmax.f32 %v512, 0.0
      %v577 = vmax.f32 %v513, 0.0
      %v578 = vmax.f32 %v514, 0.0
      %v579 = vmax.f32 %v515, 0.0
      %v580 = vmax.f32 %v516, 0.0
      %v581 = vmax.f32 %v517, 0.0
      %v582 = vmax.f32 %v518, 0.0
      %v583 = vmax.f32 %v519, 0.0
      %v584 = vmax.f32 %v520, 0.0
      %v585 = vmax.f32 %v521, 0.0
      %v586 = vmax.f32 %v522, 0.0
      %v587 = vmax.f32 %v523, 0.0
      %v588 = vmax.f32 %v524, 0.0
      %v589 = vmax.f32 %v525, 0.0
      %v590 = vmax.f32 %v526, 0.0
      %v591 = vmax.f32 %v527, 0.0
      %v592 = vmax.f32 %v528, 0.0
      %v593 = vmax.f32 %v529, 0.0
      %v594 = vmax.f32 %v530, 0.0
      %v595 = vmax.f32 %v531, 0.0
      %v596 = vmax.f32 %v532, 0.0
      %v597 = vmax.f32 %v533, 0.0
      %v598 = vmax.f32 %v534, 0.0
      %v599 = vmax.f32 %v535, 0.0
      %v600 = vmax.f32 %v536, 0.0
      %v601 = vmax.f32 %v537, 0.0
      %v602 = vmax.f32 %v538, 0.0
      %v603 = vmax.f32 %v539, 0.0
      %v604 = vmax.f32 %v540, 0.0
      %v605 = vmax.f32 %v541, 0.0
      %v606 = vmax.f32 %v542, 0.0
      %v607 = vmax.f32 %v543, 0.0
      %v608 = vmax.f32 %v544, 0.0
      %v609 = vmax.f32 %v545, 0.0
      %v610 = vmax.f32 %v546, 0.0
      %v611 = vmax.f32 %v547, 0.0
      %v612 = vld [vmem:[%s272] sm:$0xff]
      %v613 = vld [vmem:[%s272 + $0x8] sm:$0xff]
      %v614 = vld [vmem:[%s272 + $0x10] sm:$0xff]
      %v615 = vld [vmem:[%s272 + $0x18] sm:$0xff]
      %v616 = vld [vmem:[%s272 + $0x20] sm:$0xff]
      %v617 = vld [vmem:[%s272 + $0x28] sm:$0xff]
      %v618 = vld [vmem:[%s272 + $0x30] sm:$0xff]
      %v619 = vld [vmem:[%s272 + $0x38] sm:$0xff]
      %v620 = vld [vmem:[%s272 + $0x40] sm:$0xff]
      %v621 = vld [vmem:[%s272 + $0x48] sm:$0xff]
      %v622 = vld [vmem:[%s272 + $0x50] sm:$0xff]
      %v623 = vld [vmem:[%s272 + $0x58] sm:$0xff]
      %v624 = vld [vmem:[%s272 + $0x60] sm:$0xff]
      %v625 = vld [vmem:[%s272 + $0x68] sm:$0xff]
      %v626 = vld [vmem:[%s272 + $0x70] sm:$0xff]
      %v627 = vld [vmem:[%s272 + $0x78] sm:$0xff]
      %v628 = vld [vmem:[%s272 + $0x80] sm:$0xff]
      %v629 = vld [vmem:[%s272 + $0x88] sm:$0xff]
      %v630 = vld [vmem:[%s272 + $0x90] sm:$0xff]
      %v631 = vld [vmem:[%s272 + $0x98] sm:$0xff]
      %v632 = vld [vmem:[%s272 + $0xa0] sm:$0xff]
      %v633 = vld [vmem:[%s272 + $0xa8] sm:$0xff]
      %v634 = vld [vmem:[%s272 + $0xb0] sm:$0xff]
      %v635 = vld [vmem:[%s272 + $0xb8] sm:$0xff]
      %v636 = vld [vmem:[%s272 + $0xc0] sm:$0xff]
      %v637 = vld [vmem:[%s272 + $0xc8] sm:$0xff]
      %v638 = vld [vmem:[%s272 + $0xd0] sm:$0xff]
      %v639 = vld [vmem:[%s272 + $0xd8] sm:$0xff]
      %v640 = vld [vmem:[%s272 + $0xe0] sm:$0xff]
      %v641 = vld [vmem:[%s272 + $0xe8] sm:$0xff]
      %v642 = vld [vmem:[%s272 + $0xf0] sm:$0xff]
      %v643 = vld [vmem:[%s272 + $0xf8] sm:$0xff]
      %v644 = vld [vmem:[%s272 + $0x100] sm:$0xff]
      %v645 = vld [vmem:[%s272 + $0x108] sm:$0xff]
      %v646 = vld [vmem:[%s272 + $0x110] sm:$0xff]
      %v647 = vld [vmem:[%s272 + $0x118] sm:$0xff]
      %v648 = vld [vmem:[%s272 + $0x120] sm:$0xff]
      %v649 = vld [vmem:[%s272 + $0x128] sm:$0xff]
      %v650 = vld [vmem:[%s272 + $0x130] sm:$0xff]
      %v651 = vld [vmem:[%s272 + $0x138] sm:$0xff]
      %v652 = vld [vmem:[%s272 + $0x140] sm:$0xff]
      %v653 = vld [vmem:[%s272 + $0x148] sm:$0xff]
      %v654 = vld [vmem:[%s272 + $0x150] sm:$0xff]
      %v655 = vld [vmem:[%s272 + $0x158] sm:$0xff]
      %v656 = vld [vmem:[%s272 + $0x160] sm:$0xff]
      %v657 = vld [vmem:[%s272 + $0x168] sm:$0xff]
      %v658 = vld [vmem:[%s272 + $0x170] sm:$0xff]
      %v659 = vld [vmem:[%s272 + $0x178] sm:$0xff]
      %v660 = vld [vmem:[%s272 + $0x180] sm:$0xff]
      %v661 = vld [vmem:[%s272 + $0x188] sm:$0xff]
      %v662 = vld [vmem:[%s272 + $0x190] sm:$0xff]
      %v663 = vld [vmem:[%s272 + $0x198] sm:$0xff]
      %v664 = vld [vmem:[%s272 + $0x1a0] sm:$0xff]
      %v665 = vld [vmem:[%s272 + $0x1a8] sm:$0xff]
      %v666 = vld [vmem:[%s272 + $0x1b0] sm:$0xff]
      %v667 = vld [vmem:[%s272 + $0x1b8] sm:$0xff]
      %v668 = vld [vmem:[%s272 + $0x1c0] sm:$0xff]
      %v669 = vld [vmem:[%s272 + $0x1c8] sm:$0xff]
      %v670 = vld [vmem:[%s272 + $0x1d0] sm:$0xff]
      %v671 = vld [vmem:[%s272 + $0x1d8] sm:$0xff]
      %v672 = vld [vmem:[%s272 + $0x1e0] sm:$0xff]
      %v673 = vld [vmem:[%s272 + $0x1e8] sm:$0xff]
      %v674 = vld [vmem:[%s272 + $0x1f0] sm:$0xff]
      %v675 = vld [vmem:[%s272 + $0x1f8] sm:$0xff]
      %v676 = vld [vmem:[%s260] sm:$0xff]
      %v677 = vld [vmem:[%s260 + $0x8] sm:$0xff]
      %vm678 = vcmask 130048
      %v680 = vsel %vm678, %v548, 0
      %v683 = vsel %vm678, %v549, 0
      %v686 = vsel %vm678, %v550, 0
      %v689 = vsel %vm678, %v551, 0
      %v692 = vsel %vm678, %v552, 0
      %v695 = vsel %vm678, %v553, 0
      %v698 = vsel %vm678, %v554, 0
      %v701 = vsel %vm678, %v555, 0
      %v704 = vsel %vm678, %v556, 0
      %v707 = vsel %vm678, %v557, 0
      %v710 = vsel %vm678, %v558, 0
      %v713 = vsel %vm678, %v559, 0
      %v716 = vsel %vm678, %v560, 0
      %v719 = vsel %vm678, %v561, 0
      %v722 = vsel %vm678, %v562, 0
      %v725 = vsel %vm678, %v563, 0
      %v728 = vsel %vm678, %v564, 0
      %v731 = vsel %vm678, %v565, 0
      %v734 = vsel %vm678, %v566, 0
      %v737 = vsel %vm678, %v567, 0
      %v740 = vsel %vm678, %v568, 0
      %v743 = vsel %vm678, %v569, 0
      %v746 = vsel %vm678, %v570, 0
      %v749 = vsel %vm678, %v571, 0
      %v752 = vsel %vm678, %v572, 0
      %v755 = vsel %vm678, %v573, 0
      %v758 = vsel %vm678, %v574, 0
      %v761 = vsel %vm678, %v575, 0
      %v764 = vsel %vm678, %v576, 0
      %v767 = vsel %vm678, %v577, 0
      %v770 = vsel %vm678, %v578, 0
      %v773 = vsel %vm678, %v579, 0
      %v776 = vsel %vm678, %v580, 0
      %v779 = vsel %vm678, %v581, 0
      %v782 = vsel %vm678, %v582, 0
      %v785 = vsel %vm678, %v583, 0
      %v788 = vsel %vm678, %v584, 0
      %v791 = vsel %vm678, %v585, 0
      %v794 = vsel %vm678, %v586, 0
      %v797 = vsel %vm678, %v587, 0
      %v800 = vsel %vm678, %v588, 0
      %v803 = vsel %vm678, %v589, 0
      %v806 = vsel %vm678, %v590, 0
      %v809 = vsel %vm678, %v591, 0
      %v812 = vsel %vm678, %v592, 0
      %v815 = vsel %vm678, %v593, 0
      %v818 = vsel %vm678, %v594, 0
      %v821 = vsel %vm678, %v595, 0
      %v824 = vsel %vm678, %v596, 0
      %v827 = vsel %vm678, %v597, 0
      %v830 = vsel %vm678, %v598, 0
      %v833 = vsel %vm678, %v599, 0
      %v836 = vsel %vm678, %v600, 0
      %v839 = vsel %vm678, %v601, 0
      %v842 = vsel %vm678, %v602, 0
      %v845 = vsel %vm678, %v603, 0
      %v848 = vsel %vm678, %v604, 0
      %v851 = vsel %vm678, %v605, 0
      %v854 = vsel %vm678, %v606, 0
      %v857 = vsel %vm678, %v607, 0
      %v860 = vsel %vm678, %v608, 0
      %v863 = vsel %vm678, %v609, 0
      %v866 = vsel %vm678, %v610, 0
      %v869 = vsel %vm678, %v611, 0
      %871 = vmatprep.subr.mxu0 0.0
      %872 = vmatpush1.msra.mxu0 0.0
      %873 = vmatprep.subr.mxu0 0.0
      %874 = vmatpush1.msra.mxu0 0.0
      %875 = vmatprep.subr.mxu0 0.0
      %876 = vmatpush1.msra.mxu0 0.0
      %877 = vmatprep.subr.mxu0 0.0
      %878 = vmatpush1.msra.mxu0 0.0
      %879 = vmatprep.subr.mxu0 0.0
      %880 = vmatpush1.msra.mxu0 0.0
      %881 = vmatprep.subr.mxu0 0.0
      %882 = vmatpush1.msra.mxu0 0.0
      %883 = vmatprep.subr.mxu0 0.0
      %884 = vmatpush1.msra.mxu0 0.0
      %885 = vmatprep.subr.mxu0 0.0
      %886 = vmatpush1.msra.mxu0 0.0
      %887 = vmatprep.subr.mxu0 0.0
      %888 = vmatpush1.msra.mxu0 0.0
      %889 = vmatprep.subr.mxu0 0.0
      %890 = vmatpush1.msra.mxu0 0.0
      %891 = vmatprep.subr.mxu0 0.0
      %892 = vmatpush1.msra.mxu0 0.0
      %893 = vmatprep.subr.mxu0 0.0
      %894 = vmatpush1.msra.mxu0 0.0
      %895 = vmatprep.subr.mxu0 0.0
      %896 = vmatpush1.msra.mxu0 0.0
      %897 = vmatprep.subr.mxu0 0.0
      %898 = vmatpush1.msra.mxu0 0.0
      %899 = vmatprep.subr.mxu0 0.0
      %900 = vmatpush1.msra.mxu0 %v677
      %901 = vmatprep.subr.mxu0 0.0
      %902 = vmatpush1.msra.mxu0 %v676
      %903 = vmatprep.subr.mxu0 0.0
      %904 = vmatpush2.msra.mxu0 0.0
      %905 = vmatprep.subr.mxu0 0.0
      %906 = vmatpush2.msra.mxu0 0.0
      %907 = vmatprep.subr.mxu0 0.0
      %908 = vmatpush2.msra.mxu0 0.0
      %909 = vmatprep.subr.mxu0 0.0
      %910 = vmatpush2.msra.mxu0 0.0
      %911 = vmatprep.subr.mxu0 0.0
      %912 = vmatpush2.msra.mxu0 0.0
      %913 = vmatprep.subr.mxu0 0.0
      %914 = vmatpush2.msra.mxu0 0.0
      %915 = vmatprep.subr.mxu0 0.0
      %916 = vmatpush2.msra.mxu0 0.0
      %917 = vmatprep.subr.mxu0 0.0
      %918 = vmatpush2.msra.mxu0 0.0
      %919 = vmatprep.subr.mxu0 0.0
      %920 = vmatpush2.msra.mxu0 0.0
      %921 = vmatprep.subr.mxu0 0.0
      %922 = vmatpush2.msra.mxu0 0.0
      %923 = vmatprep.subr.mxu0 0.0
      %924 = vmatpush2.msra.mxu0 0.0
      %925 = vmatprep.subr.mxu0 0.0
      %926 = vmatpush2.msra.mxu0 0.0
      %927 = vmatprep.subr.mxu0 0.0
      %928 = vmatpush2.msra.mxu0 0.0
      %929 = vmatprep.subr.mxu0 0.0
      %930 = vmatpush2.msra.mxu0 0.0
      %931 = vmatprep.subr.mxu0 0.0
      %932 = vmatpush2.msra.mxu0 0.0
      %933 = vmatprep.subr.mxu0 0.0
      %934 = vmatpush2.msra.mxu0 0.0
      %935 = vmatprep.mubr.f32.mxu0 0.0
      %936 = vmatmul.mubr.f32.gmra.mxu0 %v680
      %v937 = vpop.f32.mrf.mxu0
      %v938 = vadd.f32 0.0, %v937
      %v939 = vpop.f32.mrf.mxu0
      %940 = vmatprep.mubr.f32.mxu0 0.0
      %941 = vmatmul.mubr.f32.gmra.mxu0 %v683
      %v942 = vpop.f32.mrf.mxu0
      %v943 = vadd.f32 0.0, %v942
      %v944 = vpop.f32.mrf.mxu0
      %945 = vmatprep.mubr.f32.mxu0 0.0
      %946 = vmatmul.mubr.f32.gmra.mxu0 %v686
      %v947 = vpop.f32.mrf.mxu0
      %v948 = vadd.f32 0.0, %v947
      %v949 = vpop.f32.mrf.mxu0
      %950 = vmatprep.mubr.f32.mxu0 0.0
      %951 = vmatmul.mubr.f32.gmra.mxu0 %v689
      %v952 = vpop.f32.mrf.mxu0
      %v953 = vadd.f32 0.0, %v952
      %v954 = vpop.f32.mrf.mxu0
      %955 = vmatprep.mubr.f32.mxu0 0.0
      %956 = vmatmul.mubr.f32.gmra.mxu0 %v692
      %v957 = vpop.f32.mrf.mxu0
      %v958 = vadd.f32 0.0, %v957
      %v959 = vpop.f32.mrf.mxu0
      %960 = vmatprep.mubr.f32.mxu0 0.0
      %961 = vmatmul.mubr.f32.gmra.mxu0 %v695
      %v962 = vpop.f32.mrf.mxu0
      %v963 = vadd.f32 0.0, %v962
      %v964 = vpop.f32.mrf.mxu0
      %965 = vmatprep.mubr.f32.mxu0 0.0
      %966 = vmatmul.mubr.f32.gmra.mxu0 %v698
      %v967 = vpop.f32.mrf.mxu0
      %v968 = vadd.f32 0.0, %v967
      %v969 = vpop.f32.mrf.mxu0
      %970 = vmatprep.mubr.f32.mxu0 0.0
      %971 = vmatmul.mubr.f32.gmra.mxu0 %v701
      %v972 = vpop.f32.mrf.mxu0
      %v973 = vadd.f32 0.0, %v972
      %v974 = vpop.f32.mrf.mxu0
      %975 = vmatprep.mubr.f32.mxu0 0.0
      %976 = vmatmul.mubr.f32.gmra.mxu0 %v704
      %v977 = vpop.f32.mrf.mxu0
      %v978 = vadd.f32 0.0, %v977
      %v979 = vpop.f32.mrf.mxu0
      %980 = vmatprep.mubr.f32.mxu0 0.0
      %981 = vmatmul.mubr.f32.gmra.mxu0 %v707
      %v982 = vpop.f32.mrf.mxu0
      %v983 = vadd.f32 0.0, %v982
      %v984 = vpop.f32.mrf.mxu0
      %985 = vmatprep.mubr.f32.mxu0 0.0
      %986 = vmatmul.mubr.f32.gmra.mxu0 %v710
      %v987 = vpop.f32.mrf.mxu0
      %v988 = vadd.f32 0.0, %v987
      %v989 = vpop.f32.mrf.mxu0
      %990 = vmatprep.mubr.f32.mxu0 0.0
      %991 = vmatmul.mubr.f32.gmra.mxu0 %v713
      %v992 = vpop.f32.mrf.mxu0
      %v993 = vadd.f32 0.0, %v992
      %v994 = vpop.f32.mrf.mxu0
      %995 = vmatprep.mubr.f32.mxu0 0.0
      %996 = vmatmul.mubr.f32.gmra.mxu0 %v716
      %v997 = vpop.f32.mrf.mxu0
      %v998 = vadd.f32 0.0, %v997
      %v999 = vpop.f32.mrf.mxu0
      %1000 = vmatprep.mubr.f32.mxu0 0.0
      %1001 = vmatmul.mubr.f32.gmra.mxu0 %v719
      %v1002 = vpop.f32.mrf.mxu0
      %v1003 = vadd.f32 0.0, %v1002
      %v1004 = vpop.f32.mrf.mxu0
      %1005 = vmatprep.mubr.f32.mxu0 0.0
      %1006 = vmatmul.mubr.f32.gmra.mxu0 %v722
      %v1007 = vpop.f32.mrf.mxu0
      %v1008 = vadd.f32 0.0, %v1007
      %v1009 = vpop.f32.mrf.mxu0
      %1010 = vmatprep.mubr.f32.mxu0 0.0
      %1011 = vmatmul.mubr.f32.gmra.mxu0 %v725
      %v1012 = vpop.f32.mrf.mxu0
      %v1013 = vadd.f32 0.0, %v1012
      %v1014 = vpop.f32.mrf.mxu0
      %1015 = vmatprep.mubr.f32.mxu0 0.0
      %1016 = vmatmul.mubr.f32.gmra.mxu0 %v728
      %v1017 = vpop.f32.mrf.mxu0
      %v1018 = vadd.f32 0.0, %v1017
      %v1019 = vpop.f32.mrf.mxu0
      %1020 = vmatprep.mubr.f32.mxu0 0.0
      %1021 = vmatmul.mubr.f32.gmra.mxu0 %v731
      %v1022 = vpop.f32.mrf.mxu0
      %v1023 = vadd.f32 0.0, %v1022
      %v1024 = vpop.f32.mrf.mxu0
      %1025 = vmatprep.mubr.f32.mxu0 0.0
      %1026 = vmatmul.mubr.f32.gmra.mxu0 %v734
      %v1027 = vpop.f32.mrf.mxu0
      %v1028 = vadd.f32 0.0, %v1027
      %v1029 = vpop.f32.mrf.mxu0
      %1030 = vmatprep.mubr.f32.mxu0 0.0
      %1031 = vmatmul.mubr.f32.gmra.mxu0 %v737
      %v1032 = vpop.f32.mrf.mxu0
      %v1033 = vadd.f32 0.0, %v1032
      %v1034 = vpop.f32.mrf.mxu0
      %1035 = vmatprep.mubr.f32.mxu0 0.0
      %1036 = vmatmul.mubr.f32.gmra.mxu0 %v740
      %v1037 = vpop.f32.mrf.mxu0
      %v1038 = vadd.f32 0.0, %v1037
      %v1039 = vpop.f32.mrf.mxu0
      %1040 = vmatprep.mubr.f32.mxu0 0.0
      %1041 = vmatmul.mubr.f32.gmra.mxu0 %v743
      %v1042 = vpop.f32.mrf.mxu0
      %v1043 = vadd.f32 0.0, %v1042
      %v1044 = vpop.f32.mrf.mxu0
      %1045 = vmatprep.mubr.f32.mxu0 0.0
      %1046 = vmatmul.mubr.f32.gmra.mxu0 %v746
      %v1047 = vpop.f32.mrf.mxu0
      %v1048 = vadd.f32 0.0, %v1047
      %v1049 = vpop.f32.mrf.mxu0
      %1050 = vmatprep.mubr.f32.mxu0 0.0
      %1051 = vmatmul.mubr.f32.gmra.mxu0 %v749
      %v1052 = vpop.f32.mrf.mxu0
      %v1053 = vadd.f32 0.0, %v1052
      %v1054 = vpop.f32.mrf.mxu0
      %1055 = vmatprep.mubr.f32.mxu0 0.0
      %1056 = vmatmul.mubr.f32.gmra.mxu0 %v752
      %v1057 = vpop.f32.mrf.mxu0
      %v1058 = vadd.f32 0.0, %v1057
      %v1059 = vpop.f32.mrf.mxu0
      %1060 = vmatprep.mubr.f32.mxu0 0.0
      %1061 = vmatmul.mubr.f32.gmra.mxu0 %v755
      %v1062 = vpop.f32.mrf.mxu0
      %v1063 = vadd.f32 0.0, %v1062
      %v1064 = vpop.f32.mrf.mxu0
      %1065 = vmatprep.mubr.f32.mxu0 0.0
      %1066 = vmatmul.mubr.f32.gmra.mxu0 %v758
      %v1067 = vpop.f32.mrf.mxu0
      %v1068 = vadd.f32 0.0, %v1067
      %v1069 = vpop.f32.mrf.mxu0
      %1070 = vmatprep.mubr.f32.mxu0 0.0
      %1071 = vmatmul.mubr.f32.gmra.mxu0 %v761
      %v1072 = vpop.f32.mrf.mxu0
      %v1073 = vadd.f32 0.0, %v1072
      %v1074 = vpop.f32.mrf.mxu0
      %1075 = vmatprep.mubr.f32.mxu0 0.0
      %1076 = vmatmul.mubr.f32.gmra.mxu0 %v764
      %v1077 = vpop.f32.mrf.mxu0
      %v1078 = vadd.f32 0.0, %v1077
      %v1079 = vpop.f32.mrf.mxu0
      %1080 = vmatprep.mubr.f32.mxu0 0.0
      %1081 = vmatmul.mubr.f32.gmra.mxu0 %v767
      %v1082 = vpop.f32.mrf.mxu0
      %v1083 = vadd.f32 0.0, %v1082
      %v1084 = vpop.f32.mrf.mxu0
      %1085 = vmatprep.mubr.f32.mxu0 0.0
      %1086 = vmatmul.mubr.f32.gmra.mxu0 %v770
      %v1087 = vpop.f32.mrf.mxu0
      %v1088 = vadd.f32 0.0, %v1087
      %v1089 = vpop.f32.mrf.mxu0
      %1090 = vmatprep.mubr.f32.mxu0 0.0
      %1091 = vmatmul.mubr.f32.gmra.mxu0 %v773
      %v1092 = vpop.f32.mrf.mxu0
      %v1093 = vadd.f32 0.0, %v1092
      %v1094 = vpop.f32.mrf.mxu0
      %1095 = vmatprep.mubr.f32.mxu0 0.0
      %1096 = vmatmul.mubr.f32.gmra.mxu0 %v776
      %v1097 = vpop.f32.mrf.mxu0
      %v1098 = vadd.f32 0.0, %v1097
      %v1099 = vpop.f32.mrf.mxu0
      %1100 = vmatprep.mubr.f32.mxu0 0.0
      %1101 = vmatmul.mubr.f32.gmra.mxu0 %v779
      %v1102 = vpop.f32.mrf.mxu0
      %v1103 = vadd.f32 0.0, %v1102
      %v1104 = vpop.f32.mrf.mxu0
      %1105 = vmatprep.mubr.f32.mxu0 0.0
      %1106 = vmatmul.mubr.f32.gmra.mxu0 %v782
      %v1107 = vpop.f32.mrf.mxu0
      %v1108 = vadd.f32 0.0, %v1107
      %v1109 = vpop.f32.mrf.mxu0
      %1110 = vmatprep.mubr.f32.mxu0 0.0
      %1111 = vmatmul.mubr.f32.gmra.mxu0 %v785
      %v1112 = vpop.f32.mrf.mxu0
      %v1113 = vadd.f32 0.0, %v1112
      %v1114 = vpop.f32.mrf.mxu0
      %1115 = vmatprep.mubr.f32.mxu0 0.0
      %1116 = vmatmul.mubr.f32.gmra.mxu0 %v788
      %v1117 = vpop.f32.mrf.mxu0
      %v1118 = vadd.f32 0.0, %v1117
      %v1119 = vpop.f32.mrf.mxu0
      %1120 = vmatprep.mubr.f32.mxu0 0.0
      %1121 = vmatmul.mubr.f32.gmra.mxu0 %v791
      %v1122 = vpop.f32.mrf.mxu0
      %v1123 = vadd.f32 0.0, %v1122
      %v1124 = vpop.f32.mrf.mxu0
      %1125 = vmatprep.mubr.f32.mxu0 0.0
      %1126 = vmatmul.mubr.f32.gmra.mxu0 %v794
      %v1127 = vpop.f32.mrf.mxu0
      %v1128 = vadd.f32 0.0, %v1127
      %v1129 = vpop.f32.mrf.mxu0
      %1130 = vmatprep.mubr.f32.mxu0 0.0
      %1131 = vmatmul.mubr.f32.gmra.mxu0 %v797
      %v1132 = vpop.f32.mrf.mxu0
      %v1133 = vadd.f32 0.0, %v1132
      %v1134 = vpop.f32.mrf.mxu0
      %1135 = vmatprep.mubr.f32.mxu0 0.0
      %1136 = vmatmul.mubr.f32.gmra.mxu0 %v800
      %v1137 = vpop.f32.mrf.mxu0
      %v1138 = vadd.f32 0.0, %v1137
      %v1139 = vpop.f32.mrf.mxu0
      %1140 = vmatprep.mubr.f32.mxu0 0.0
      %1141 = vmatmul.mubr.f32.gmra.mxu0 %v803
      %v1142 = vpop.f32.mrf.mxu0
      %v1143 = vadd.f32 0.0, %v1142
      %v1144 = vpop.f32.mrf.mxu0
      %1145 = vmatprep.mubr.f32.mxu0 0.0
      %1146 = vmatmul.mubr.f32.gmra.mxu0 %v806
      %v1147 = vpop.f32.mrf.mxu0
      %v1148 = vadd.f32 0.0, %v1147
      %v1149 = vpop.f32.mrf.mxu0
      %1150 = vmatprep.mubr.f32.mxu0 0.0
      %1151 = vmatmul.mubr.f32.gmra.mxu0 %v809
      %v1152 = vpop.f32.mrf.mxu0
      %v1153 = vadd.f32 0.0, %v1152
      %v1154 = vpop.f32.mrf.mxu0
      %1155 = vmatprep.mubr.f32.mxu0 0.0
      %1156 = vmatmul.mubr.f32.gmra.mxu0 %v812
      %v1157 = vpop.f32.mrf.mxu0
      %v1158 = vadd.f32 0.0, %v1157
      %v1159 = vpop.f32.mrf.mxu0
      %1160 = vmatprep.mubr.f32.mxu0 0.0
      %1161 = vmatmul.mubr.f32.gmra.mxu0 %v815
      %v1162 = vpop.f32.mrf.mxu0
      %v1163 = vadd.f32 0.0, %v1162
      %v1164 = vpop.f32.mrf.mxu0
      %1165 = vmatprep.mubr.f32.mxu0 0.0
      %1166 = vmatmul.mubr.f32.gmra.mxu0 %v818
      %v1167 = vpop.f32.mrf.mxu0
      %v1168 = vadd.f32 0.0, %v1167
      %v1169 = vpop.f32.mrf.mxu0
      %1170 = vmatprep.mubr.f32.mxu0 0.0
      %1171 = vmatmul.mubr.f32.gmra.mxu0 %v821
      %v1172 = vpop.f32.mrf.mxu0
      %v1173 = vadd.f32 0.0, %v1172
      %v1174 = vpop.f32.mrf.mxu0
      %1175 = vmatprep.mubr.f32.mxu0 0.0
      %1176 = vmatmul.mubr.f32.gmra.mxu0 %v824
      %v1177 = vpop.f32.mrf.mxu0
      %v1178 = vadd.f32 0.0, %v1177
      %v1179 = vpop.f32.mrf.mxu0
      %1180 = vmatprep.mubr.f32.mxu0 0.0
      %1181 = vmatmul.mubr.f32.gmra.mxu0 %v827
      %v1182 = vpop.f32.mrf.mxu0
      %v1183 = vadd.f32 0.0, %v1182
      %v1184 = vpop.f32.mrf.mxu0
      %1185 = vmatprep.mubr.f32.mxu0 0.0
      %1186 = vmatmul.mubr.f32.gmra.mxu0 %v830
      %v1187 = vpop.f32.mrf.mxu0
      %v1188 = vadd.f32 0.0, %v1187
      %v1189 = vpop.f32.mrf.mxu0
      %1190 = vmatprep.mubr.f32.mxu0 0.0
      %1191 = vmatmul.mubr.f32.gmra.mxu0 %v833
      %v1192 = vpop.f32.mrf.mxu0
      %v1193 = vadd.f32 0.0, %v1192
      %v1194 = vpop.f32.mrf.mxu0
      %1195 = vmatprep.mubr.f32.mxu0 0.0
      %1196 = vmatmul.mubr.f32.gmra.mxu0 %v836
      %v1197 = vpop.f32.mrf.mxu0
      %v1198 = vadd.f32 0.0, %v1197
      %v1199 = vpop.f32.mrf.mxu0
      %1200 = vmatprep.mubr.f32.mxu0 0.0
      %1201 = vmatmul.mubr.f32.gmra.mxu0 %v839
      %v1202 = vpop.f32.mrf.mxu0
      %v1203 = vadd.f32 0.0, %v1202
      %v1204 = vpop.f32.mrf.mxu0
      %1205 = vmatprep.mubr.f32.mxu0 0.0
      %1206 = vmatmul.mubr.f32.gmra.mxu0 %v842
      %v1207 = vpop.f32.mrf.mxu0
      %v1208 = vadd.f32 0.0, %v1207
      %v1209 = vpop.f32.mrf.mxu0
      %1210 = vmatprep.mubr.f32.mxu0 0.0
      %1211 = vmatmul.mubr.f32.gmra.mxu0 %v845
      %v1212 = vpop.f32.mrf.mxu0
      %v1213 = vadd.f32 0.0, %v1212
      %v1214 = vpop.f32.mrf.mxu0
      %1215 = vmatprep.mubr.f32.mxu0 0.0
      %1216 = vmatmul.mubr.f32.gmra.mxu0 %v848
      %v1217 = vpop.f32.mrf.mxu0
      %v1218 = vadd.f32 0.0, %v1217
      %v1219 = vpop.f32.mrf.mxu0
      %1220 = vmatprep.mubr.f32.mxu0 0.0
      %1221 = vmatmul.mubr.f32.gmra.mxu0 %v851
      %v1222 = vpop.f32.mrf.mxu0
      %v1223 = vadd.f32 0.0, %v1222
      %v1224 = vpop.f32.mrf.mxu0
      %1225 = vmatprep.mubr.f32.mxu0 0.0
      %1226 = vmatmul.mubr.f32.gmra.mxu0 %v854
      %v1227 = vpop.f32.mrf.mxu0
      %v1228 = vadd.f32 0.0, %v1227
      %v1229 = vpop.f32.mrf.mxu0
      %1230 = vmatprep.mubr.f32.mxu0 0.0
      %1231 = vmatmul.mubr.f32.gmra.mxu0 %v857
      %v1232 = vpop.f32.mrf.mxu0
      %v1233 = vadd.f32 0.0, %v1232
      %v1234 = vpop.f32.mrf.mxu0
      %1235 = vmatprep.mubr.f32.mxu0 0.0
      %1236 = vmatmul.mubr.f32.gmra.mxu0 %v860
      %v1237 = vpop.f32.mrf.mxu0
      %v1238 = vadd.f32 0.0, %v1237
      %v1239 = vpop.f32.mrf.mxu0
      %1240 = vmatprep.mubr.f32.mxu0 0.0
      %1241 = vmatmul.mubr.f32.gmra.mxu0 %v863
      %v1242 = vpop.f32.mrf.mxu0
      %v1243 = vadd.f32 0.0, %v1242
      %v1244 = vpop.f32.mrf.mxu0
      %1245 = vmatprep.mubr.f32.mxu0 0.0
      %1246 = vmatmul.mubr.f32.gmra.mxu0 %v866
      %v1247 = vpop.f32.mrf.mxu0
      %v1248 = vadd.f32 0.0, %v1247
      %v1249 = vpop.f32.mrf.mxu0
      %1250 = vmatprep.mubr.f32.mxu0 0.0
      %1251 = vmatmul.mubr.f32.gmra.mxu0 %v869
      %v1252 = vpop.f32.mrf.mxu0
      %v1253 = vadd.f32 0.0, %v1252
      %v1254 = vpop.f32.mrf.mxu0
      %1255 = vdwg.mxu0
      %v1256 = vadd.f32 %v612, %v938
      %v1257 = vadd.f32 %v613, %v943
      %v1258 = vadd.f32 %v614, %v948
      %v1259 = vadd.f32 %v615, %v953
      %v1260 = vadd.f32 %v616, %v958
      %v1261 = vadd.f32 %v617, %v963
      %v1262 = vadd.f32 %v618, %v968
      %v1263 = vadd.f32 %v619, %v973
      %v1264 = vadd.f32 %v620, %v978
      %v1265 = vadd.f32 %v621, %v983
      %v1266 = vadd.f32 %v622, %v988
      %v1267 = vadd.f32 %v623, %v993
      %v1268 = vadd.f32 %v624, %v998
      %v1269 = vadd.f32 %v625, %v1003
      %v1270 = vadd.f32 %v626, %v1008
      %v1271 = vadd.f32 %v627, %v1013
      %v1272 = vadd.f32 %v628, %v1018
      %v1273 = vadd.f32 %v629, %v1023
      %v1274 = vadd.f32 %v630, %v1028
      %v1275 = vadd.f32 %v631, %v1033
      %v1276 = vadd.f32 %v632, %v1038
      %v1277 = vadd.f32 %v633, %v1043
      %v1278 = vadd.f32 %v634, %v1048
      %v1279 = vadd.f32 %v635, %v1053
      %v1280 = vadd.f32 %v636, %v1058
      %v1281 = vadd.f32 %v637, %v1063
      %v1282 = vadd.f32 %v638, %v1068
      %v1283 = vadd.f32 %v639, %v1073
      %v1284 = vadd.f32 %v640, %v1078
      %v1285 = vadd.f32 %v641, %v1083
      %v1286 = vadd.f32 %v642, %v1088
      %v1287 = vadd.f32 %v643, %v1093
      %v1288 = vadd.f32 %v644, %v1098
      %v1289 = vadd.f32 %v645, %v1103
      %v1290 = vadd.f32 %v646, %v1108
      %v1291 = vadd.f32 %v647, %v1113
      %v1292 = vadd.f32 %v648, %v1118
      %v1293 = vadd.f32 %v649, %v1123
      %v1294 = vadd.f32 %v650, %v1128
      %v1295 = vadd.f32 %v651, %v1133
      %v1296 = vadd.f32 %v652, %v1138
      %v1297 = vadd.f32 %v653, %v1143
      %v1298 = vadd.f32 %v654, %v1148
      %v1299 = vadd.f32 %v655, %v1153
      %v1300 = vadd.f32 %v656, %v1158
      %v1301 = vadd.f32 %v657, %v1163
      %v1302 = vadd.f32 %v658, %v1168
      %v1303 = vadd.f32 %v659, %v1173
      %v1304 = vadd.f32 %v660, %v1178
      %v1305 = vadd.f32 %v661, %v1183
      %v1306 = vadd.f32 %v662, %v1188
      %v1307 = vadd.f32 %v663, %v1193
      %v1308 = vadd.f32 %v664, %v1198
      %v1309 = vadd.f32 %v665, %v1203
      %v1310 = vadd.f32 %v666, %v1208
      %v1311 = vadd.f32 %v667, %v1213
      %v1312 = vadd.f32 %v668, %v1218
      %v1313 = vadd.f32 %v669, %v1223
      %v1314 = vadd.f32 %v670, %v1228
      %v1315 = vadd.f32 %v671, %v1233
      %v1316 = vadd.f32 %v672, %v1238
      %v1317 = vadd.f32 %v673, %v1243
      %v1318 = vadd.f32 %v674, %v1248
      %v1319 = vadd.f32 %v675, %v1253
      %1320 = vst [vmem:[%s272] sm:$0xff] %v1256
      %1321 = vst [vmem:[%s272 + $0x8] sm:$0xff] %v1257
      %1322 = vst [vmem:[%s272 + $0x10] sm:$0xff] %v1258
      %1323 = vst [vmem:[%s272 + $0x18] sm:$0xff] %v1259
      %1324 = vst [vmem:[%s272 + $0x20] sm:$0xff] %v1260
      %1325 = vst [vmem:[%s272 + $0x28] sm:$0xff] %v1261
      %1326 = vst [vmem:[%s272 + $0x30] sm:$0xff] %v1262
      %1327 = vst [vmem:[%s272 + $0x38] sm:$0xff] %v1263
      %1328 = vst [vmem:[%s272 + $0x40] sm:$0xff] %v1264
      %1329 = vst [vmem:[%s272 + $0x48] sm:$0xff] %v1265
      %1330 = vst [vmem:[%s272 + $0x50] sm:$0xff] %v1266
      %1331 = vst [vmem:[%s272 + $0x58] sm:$0xff] %v1267
      %1332 = vst [vmem:[%s272 + $0x60] sm:$0xff] %v1268
      %1333 = vst [vmem:[%s272 + $0x68] sm:$0xff] %v1269
      %1334 = vst [vmem:[%s272 + $0x70] sm:$0xff] %v1270
      %1335 = vst [vmem:[%s272 + $0x78] sm:$0xff] %v1271
      %1336 = vst [vmem:[%s272 + $0x80] sm:$0xff] %v1272
      %1337 = vst [vmem:[%s272 + $0x88] sm:$0xff] %v1273
      %1338 = vst [vmem:[%s272 + $0x90] sm:$0xff] %v1274
      %1339 = vst [vmem:[%s272 + $0x98] sm:$0xff] %v1275
      %1340 = vst [vmem:[%s272 + $0xa0] sm:$0xff] %v1276
      %1341 = vst [vmem:[%s272 + $0xa8] sm:$0xff] %v1277
      %1342 = vst [vmem:[%s272 + $0xb0] sm:$0xff] %v1278
      %1343 = vst [vmem:[%s272 + $0xb8] sm:$0xff] %v1279
      %1344 = vst [vmem:[%s272 + $0xc0] sm:$0xff] %v1280
      %1345 = vst [vmem:[%s272 + $0xc8] sm:$0xff] %v1281
      %1346 = vst [vmem:[%s272 + $0xd0] sm:$0xff] %v1282
      %1347 = vst [vmem:[%s272 + $0xd8] sm:$0xff] %v1283
      %1348 = vst [vmem:[%s272 + $0xe0] sm:$0xff] %v1284
      %1349 = vst [vmem:[%s272 + $0xe8] sm:$0xff] %v1285
      %1350 = vst [vmem:[%s272 + $0xf0] sm:$0xff] %v1286
      %1351 = vst [vmem:[%s272 + $0xf8] sm:$0xff] %v1287
      %1352 = vst [vmem:[%s272 + $0x100] sm:$0xff] %v1288
      %1353 = vst [vmem:[%s272 + $0x108] sm:$0xff] %v1289
      %1354 = vst [vmem:[%s272 + $0x110] sm:$0xff] %v1290
      %1355 = vst [vmem:[%s272 + $0x118] sm:$0xff] %v1291
      %1356 = vst [vmem:[%s272 + $0x120] sm:$0xff] %v1292
      %1357 = vst [vmem:[%s272 + $0x128] sm:$0xff] %v1293
      %1358 = vst [vmem:[%s272 + $0x130] sm:$0xff] %v1294
      %1359 = vst [vmem:[%s272 + $0x138] sm:$0xff] %v1295
      %1360 = vst [vmem:[%s272 + $0x140] sm:$0xff] %v1296
      %1361 = vst [vmem:[%s272 + $0x148] sm:$0xff] %v1297
      %1362 = vst [vmem:[%s272 + $0x150] sm:$0xff] %v1298
      %1363 = vst [vmem:[%s272 + $0x158] sm:$0xff] %v1299
      %1364 = vst [vmem:[%s272 + $0x160] sm:$0xff] %v1300
      %1365 = vst [vmem:[%s272 + $0x168] sm:$0xff] %v1301
      %1366 = vst [vmem:[%s272 + $0x170] sm:$0xff] %v1302
      %1367 = vst [vmem:[%s272 + $0x178] sm:$0xff] %v1303
      %1368 = vst [vmem:[%s272 + $0x180] sm:$0xff] %v1304
      %1369 = vst [vmem:[%s272 + $0x188] sm:$0xff] %v1305
      %1370 = vst [vmem:[%s272 + $0x190] sm:$0xff] %v1306
      %1371 = vst [vmem:[%s272 + $0x198] sm:$0xff] %v1307
      %1372 = vst [vmem:[%s272 + $0x1a0] sm:$0xff] %v1308
      %1373 = vst [vmem:[%s272 + $0x1a8] sm:$0xff] %v1309
      %1374 = vst [vmem:[%s272 + $0x1b0] sm:$0xff] %v1310
      %1375 = vst [vmem:[%s272 + $0x1b8] sm:$0xff] %v1311
      %1376 = vst [vmem:[%s272 + $0x1c0] sm:$0xff] %v1312
      %1377 = vst [vmem:[%s272 + $0x1c8] sm:$0xff] %v1313
      %1378 = vst [vmem:[%s272 + $0x1d0] sm:$0xff] %v1314
      %1379 = vst [vmem:[%s272 + $0x1d8] sm:$0xff] %v1315
      %1380 = vst [vmem:[%s272 + $0x1e0] sm:$0xff] %v1316
      %1381 = vst [vmem:[%s272 + $0x1e8] sm:$0xff] %v1317
      %1382 = vst [vmem:[%s272 + $0x1f0] sm:$0xff] %v1318
      %1383 = vst [vmem:[%s272 + $0x1f8] sm:$0xff] %v1319
      %s1384 = smul.u32 64, %s19
      %p1385 = scmp.lt.s32.totalorder %s1384, 255
      %s1386 = scalar_select %p1385, %s1384, 255
      %s1387 = smul.addr %s1386, 8
      %s1388 = scalar_lea.vmem %s4, %s1387
      // Predicated region
      $region41: #{generator_forward.17} parent=35 // pred_check
        %p1389 = pneg %p151
      $region42: #{generator_forward.17} parent=35 // pred_check_branch
        %1391 = sbr.rel (%p1389) target = $region44
      $region43: #{generator_forward.17} parent=35 // pred_region
        %s1392 = smul.u32 64, %s19
      $region44: #{generator_forward.17} parent=35 // pred_fallthru
        _
    $region36: #{generator_forward.17} parent=5 // pred_fallthru
      _
    %p1393 = scmp.le.s32.totalorder 2, %s10
    // Predicated region
    $region45: #{generator_forward.17} parent=5 // pred_check
      %p1394 = pneg %p1393
    $region46: #{generator_forward.17} parent=5 // pred_check_branch
      %1396 = sbr.rel (%p1394) target = $region48
    $region47: #{generator_forward.17} parent=5 // pred_region
      %s1397 = ssub.s32 %s10, 2
      // Predicated region
      $region49: #{generator_forward.17} parent=47 // pred_check
        %p1398 = pneg %p157
      $region50: #{generator_forward.17} parent=47 // pred_check_branch
        %1400 = sbr.rel (%p1398) target = $region52
      $region51: #{generator_forward.17} parent=47 // pred_region
        %s1401 = smul.u32 64, %s21
        %p1402 = scmp.lt.s32.totalorder %s1401, 255
        %s1403 = scalar_select %p1402, %s1401, 255
        %s1404 = smul.addr %s1403, 8
        %s1405 = scalar_lea.vmem %s4, %s1404
      $region52: #{generator_forward.17} parent=47 // pred_fallthru
        _
    $region48: #{generator_forward.17} parent=5 // pred_fallthru
      _
  $region6: #{generator_forward.17} parent=0 // loop_footer
    %s14 = sadd.s32 1, %s10
  $region7: #{generator_forward.17} parent=0 // loop_footer_branch
    %9 = sbr.rel target = $region3
  $region8: #{generator_forward.17} parent=0 // loop_exit
    _

</llo_original>
